<compile_context>
chip_gen: v5e
topology: v5e:2x2
jax: 0.10.0
libtpu: 0.0.40
codegen_flags: <defaults>
</compile_context>

<pallas_src>
import functools

import jax
import jax.numpy as jnp
from jax import lax
from jax.experimental import pallas as pl
from jax.experimental.pallas import tpu as pltpu


# ----------------------------------------------------------------------------
# Pallas kernel (fused encoder + predictor rollout)
# ----------------------------------------------------------------------------
def _row_roll(x, s):
    """out[i] = x[(i + s) % N] along axis 0; s is a static Python int."""
    n = x.shape[0]
    s = s % n
    if s == 0:
        return x
    return jnp.concatenate([x[s:], x[:s]], axis=0)


def fused_kernel(Wo,
                 patches_ref, w1_ref, s1_ref, b1_ref, masks_ref,
                 rw1_ref, rs1_ref, rb1_ref, rw2_ref, rs2_ref, rb2_ref,
                 pool_ref, fcw_ref, fcb_ref,
                 act_ref, pw1s_ref, pw1a_ref, ps1_ref, pb1_ref,
                 pw2_ref, ps2_ref, pb2_ref, pw3_ref, pb3_ref,
                 out_ref):
    # ---------------- encoder ----------------
    # conv1 (7x7, stride 2) as one bf16 im2col matmul, fused BN + ReLU
    h = jnp.dot(patches_ref[...], w1_ref[...],
                preferred_element_type=jnp.float32)
    y = jnp.maximum(h * s1_ref[...] + b1_ref[...], 0.0)       # [B*HW, 64] f32

    masks = masks_ref[...]                                     # [B*HW, 9] f32

    def im2col_3x3(x):
        # x: [B*HW, C] f32, rows ordered (b, h, w).  Build the 9 shifted taps
        # via static row-rolls + SAME-padding masks -> [B*HW, 9*C] bf16.
        taps = []
        for k in range(9):
            dh, dw = k // 3 - 1, k % 3 - 1
            t = _row_roll(x, dh * Wo + dw)
            taps.append(t * masks[:, k:k + 1])
        return jnp.concatenate(taps, axis=-1).astype(jnp.bfloat16)

    n_res = rw1_ref.shape[0]
    for r in range(n_res):
        # conv 3x3, C1 -> C2 : single long-K matmul, fused BN + ReLU
        m = jnp.dot(im2col_3x3(y), rw1_ref[r],
                    preferred_element_type=jnp.float32)
        m = jnp.maximum(m * rs1_ref[r] + rb1_ref[r], 0.0)      # [B*HW, 128]
        # conv 3x3, C2 -> C1 : single long-K matmul, fused BN + residual + ReLU
        o = jnp.dot(im2col_3x3(m), rw2_ref[r],
                    preferred_element_type=jnp.float32)
        y = jnp.maximum(o * rs2_ref[r] + rb2_ref[r] + y, 0.0)  # [B*HW, 64]

    # global average pool as one matmul with a per-batch pooling matrix,
    # then the final Linear(64 -> repr_dim)
    pooled = jnp.dot(pool_ref[...], y, preferred_element_type=jnp.float32)
    s = jnp.dot(pooled, fcw_ref[...],
                preferred_element_type=jnp.float32) + fcb_ref[...]   # [B, D]

    # ---------------- predictor rollout (serial, latency-bound; f32) --------
    T = act_ref.shape[1]
    preds = [s]
    for t in range(T):
        a = act_ref[:, t, :]                                   # [B, A_pad]
        # cat([s, a]) @ W1  ==  s @ W1[:D] + a @ W1[D:]   (avoids concat)
        z = (jnp.dot(s, pw1s_ref[...], preferred_element_type=jnp.float32)
             + jnp.dot(a, pw1a_ref[...], preferred_element_type=jnp.float32))
        z = jnp.maximum(z * ps1_ref[...] + pb1_ref[...], 0.0)
        z = jnp.dot(z, pw2_ref[...], preferred_element_type=jnp.float32)
        z = jnp.maximum(z * ps2_ref[...] + pb2_ref[...], 0.0)
        s = jnp.dot(z, pw3_ref[...],
                    preferred_element_type=jnp.float32) + pb3_ref[...]
        preds.append(s)

    # single lane-dense store of all T+1 predicted states
    out_ref[...] = jnp.concatenate(preds, axis=-1)             # [B, (T+1)*D]


# ----------------------------------------------------------------------------
# Wrapper: layout glue (im2col for the stride-2 conv, masks, pooling matrix)
# ----------------------------------------------------------------------------
def jepa_forward(states, actions, P):
    B, _, C, H, W = states.shape
    T = actions.shape[1]
    D = P['fcw'].shape[1]
    A_pad = P['pw1a'].shape[0]
    Kpad = P['w1'].shape[0]

    # NCHW -> NHWC, pad=3, im2col for 7x7 stride-2 conv (pure data layout glue)
    x = jnp.transpose(states[:, 0], (0, 2, 3, 1)).astype(jnp.float32)
    xp = jnp.pad(x, ((0, 0), (3, 3), (3, 3), (0, 0)))
    Ho = (H + 6 - 7) // 2 + 1
    Wo = (W + 6 - 7) // 2 + 1
    HW = Ho * Wo
    cols = []
    for kh in range(7):
        for kw in range(7):
            cols.append(xp[:, kh:kh + 2 * Ho - 1:2, kw:kw + 2 * Wo - 1:2, :])
    patches = jnp.concatenate(cols, axis=-1).reshape(B * HW, 49 * C)
    patches = jnp.pad(patches, ((0, 0), (0, Kpad - 49 * C))).astype(jnp.bfloat16)

    # SAME-padding validity masks for the 9 taps of a 3x3 conv (rows = (b,h,w))
    idx = jnp.arange(B * HW, dtype=jnp.int32)
    hh = (idx % HW) // Wo
    ww = idx % Wo
    mk = []
    for k in range(9):
        dh, dw = k // 3 - 1, k % 3 - 1
        mk.append((hh + dh >= 0) & (hh + dh < Ho) &
                  (ww + dw >= 0) & (ww + dw < Wo))
    masks = jnp.stack(mk, axis=1).astype(jnp.float32)          # [B*HW, 9]

    # per-batch global-average-pool matrix
    pool = jnp.kron(jnp.eye(B, dtype=jnp.float32),
                    jnp.full((1, HW), 1.0 / HW, jnp.float32))  # [B, B*HW]

    acts = jnp.pad(actions.astype(jnp.float32),
                   ((0, 0), (0, 0), (0, A_pad - actions.shape[2])))

    vm = pl.BlockSpec(memory_space=pltpu.MemorySpace.VMEM)

    out = pl.pallas_call(
        functools.partial(fused_kernel, Wo),
        out_shape=jax.ShapeDtypeStruct((B, (T + 1) * D), jnp.float32),
        in_specs=[vm] * 24,
        out_specs=vm,
    )(patches, P['w1'], P['s1'], P['b1'], masks,
      P['rw1'], P['rs1'], P['rb1'], P['rw2'], P['rs2'], P['rb2'],
      pool, P['fcw'], P['fcb'],
      acts, P['pw1s'], P['pw1a'], P['ps1'], P['pb1'],
      P['pw2'], P['ps2'], P['pb2'], P['pw3'], P['pb3'])
    return out.reshape(B, T + 1, D)


# ----------------------------------------------------------------------------
# Deterministic parameter construction (BN folded into scale/bias, eval mode)
# ----------------------------------------------------------------------------
def make_params(key, cin=1, repr_dim=32, action_dim=2, hidden_dims=(64, 32)):
    eps = 1e-5
    keys = iter(jax.random.split(key, 128))

    def nrm(shape, scale=0.1):
        return scale * jax.random.normal(next(keys), shape, jnp.float32)

    def bn_fold(c, conv_bias):
        gamma = 1.0 + nrm((c,))
        beta = nrm((c,))
        mean = nrm((c,))
        var = 0.5 + jax.random.uniform(next(keys), (c,), jnp.float32)
        scale = gamma / jnp.sqrt(var + eps)
        bias = (conv_bias - mean) * scale + beta
        return scale, bias

    # encoder: Conv2d(cin, 64, 7, 2, 3) + BN + ReLU
    w1 = nrm((7, 7, cin, 64))                       # HWIO
    cb1 = nrm((64,))
    s1, b1 = bn_fold(64, cb1)

    rw1, rs1, rb1, rw2, rs2, rb2 = [], [], [], [], [], []
    for _ in range(2):                              # two DeepResBlock(64)
        w = nrm((3, 3, 64, 128)); cb = nrm((128,))
        sc, bi = bn_fold(128, cb)
        rw1.append(w); rs1.append(sc); rb1.append(bi)
        w = nrm((3, 3, 128, 64)); cb = nrm((64,))
        sc, bi = bn_fold(64, cb)
        rw2.append(w); rs2.append(sc); rb2.append(bi)

    fcw = nrm((64, repr_dim)); fcb = nrm((repr_dim,))

    # predictor MLP: [D+A, h1, h2, D]  (Linear+BN+ReLU, Linear+BN+ReLU, Linear)
    dims = [repr_dim + action_dim] + list(hidden_dims) + [repr_dim]
    pw1 = nrm((dims[0], dims[1])); pbias1 = nrm((dims[1],))
    ps1, pb1 = bn_fold(dims[1], pbias1)
    pw2 = nrm((dims[1], dims[2])); pbias2 = nrm((dims[2],))
    ps2, pb2 = bn_fold(dims[2], pbias2)
    pw3 = nrm((dims[2], dims[3])); pb3 = nrm((dims[3],))

    A_pad = 8
    Kpad = ((49 * cin + 63) // 64) * 64             # pad conv1 K (49 -> 64)
    w1_flat = jnp.pad(w1.reshape(49 * cin, 64), ((0, Kpad - 49 * cin), (0, 0)))

    P = dict(
        # encoder (bf16 matmul weights, f32 folded BN scale/bias)
        w1=w1_flat.astype(jnp.bfloat16), s1=s1[None, :], b1=b1[None, :],
        rw1=jnp.stack(rw1).reshape(2, 9 * 64, 128).astype(jnp.bfloat16),
        rs1=jnp.stack(rs1)[:, None, :], rb1=jnp.stack(rb1)[:, None, :],
        rw2=jnp.stack(rw2).reshape(2, 9 * 128, 64).astype(jnp.bfloat16),
        rs2=jnp.stack(rs2)[:, None, :], rb2=jnp.stack(rb2)[:, None, :],
        fcw=fcw, fcb=fcb[None, :],
        # predictor (f32: tiny serial latency chain; no bf16 benefit)
        pw1s=pw1[:repr_dim],
        pw1a=jnp.concatenate(
            [pw1[repr_dim:], jnp.zeros((A_pad - action_dim, dims[1]), jnp.float32)],
            axis=0),
        ps1=ps1[None, :], pb1=pb1[None, :],
        pw2=pw2, ps2=ps2[None, :], pb2=pb2[None, :],
        pw3=pw3, pb3=pb3[None, :],
        # un-flattened f32 copies for the pure-JAX reference only
        w1_hwio=w1, rw1_hwio=jnp.stack(rw1), rw2_hwio=jnp.stack(rw2), pw1=pw1,
    )
    return P


# ----------------------------------------------------------------------------
# Pure-JAX reference (for correctness verification only)
# ----------------------------------------------------------------------------
def ref_forward(states, actions, P):
    dn = ('NHWC', 'HWIO', 'NHWC')
    x = jnp.transpose(states[:, 0], (0, 2, 3, 1)).astype(jnp.float32)
    y = lax.conv_general_dilated(x, P['w1_hwio'], (2, 2), [(3, 3), (3, 3)],
                                 dimension_numbers=dn)
    y = jnp.maximum(y * P['s1'][0] + P['b1'][0], 0.0)
    for r in range(2):
        m = lax.conv_general_dilated(y, P['rw1_hwio'][r], (1, 1),
                                     [(1, 1), (1, 1)], dimension_numbers=dn)
        m = jnp.maximum(m * P['rs1'][r, 0] + P['rb1'][r, 0], 0.0)
        o = lax.conv_general_dilated(m, P['rw2_hwio'][r], (1, 1),
                                     [(1, 1), (1, 1)], dimension_numbers=dn)
        o = o * P['rs2'][r, 0] + P['rb2'][r, 0]
        y = jnp.maximum(o + y, 0.0)
    pooled = jnp.mean(y, axis=(1, 2))
    s = pooled @ P['fcw'] + P['fcb'][0]
    preds = [s]
    for t in range(actions.shape[1]):
        inp = jnp.concatenate([s, actions[:, t].astype(jnp.float32)], axis=1)
        h = jnp.maximum((inp @ P['pw1']) * P['ps1'][0] + P['pb1'][0], 0.0)
        h = jnp.maximum((h @ P['pw2']) * P['ps2'][0] + P['pb2'][0], 0.0)
        s = h @ P['pw3'] + P['pb3'][0]
        preds.append(s)
    return jnp.stack(preds, axis=1)


# ----------------------------------------------------------------------------
if __name__ == "__main__":
    key = jax.random.PRNGKey(0)
    kp, ks, ka = jax.random.split(key, 3)

    B, Ts, C, H, W = 2, 5, 1, 16, 16      # states: [B, T+1, C, H, W]
    T, A = 4, 2                           # actions: [B, T, action_dim]
    D = 32                                # repr_dim

    params = make_params(kp, cin=C, repr_dim=D, action_dim=A, hidden_dims=(64, 32))
    states = jax.random.normal(ks, (B, Ts, C, H, W), jnp.float32)
    actions = jax.random.normal(ka, (B, T, A), jnp.float32)

    fwd = jax.jit(jepa_forward)
    preds = jax.block_until_ready(fwd(states, actions, params))
    assert preds.shape == (B, T + 1, D), preds.shape

    ref = ref_forward(states, actions, params)
    err = float(jnp.max(jnp.abs(preds - ref)))
    if not bool(jnp.allclose(preds, ref, rtol=2e-2, atol=2e-2)):
        raise AssertionError(f"Pallas output mismatch vs reference, max abs err={err}")

    print("KERNEL_OK")
</pallas_src>

<mosaic_0001>
module attributes {stable_mosaic.version = 11 : i64} {
  func.func @fused_kernel(%arg0: memref<128x64xbf16, #tpu.memory_space<vmem>>, %arg1: memref<64x64xbf16, #tpu.memory_space<vmem>>, %arg2: memref<1x64xf32, #tpu.memory_space<vmem>>, %arg3: memref<1x64xf32, #tpu.memory_space<vmem>>, %arg4: memref<128x9xf32, #tpu.memory_space<vmem>>, %arg5: memref<2x576x128xbf16, #tpu.memory_space<vmem>>, %arg6: memref<2x1x128xf32, #tpu.memory_space<vmem>>, %arg7: memref<2x1x128xf32, #tpu.memory_space<vmem>>, %arg8: memref<2x1152x64xbf16, #tpu.memory_space<vmem>>, %arg9: memref<2x1x64xf32, #tpu.memory_space<vmem>>, %arg10: memref<2x1x64xf32, #tpu.memory_space<vmem>>, %arg11: memref<2x128xf32, #tpu.memory_space<vmem>>, %arg12: memref<64x32xf32, #tpu.memory_space<vmem>>, %arg13: memref<1x32xf32, #tpu.memory_space<vmem>>, %arg14: memref<2x4x8xf32, #tpu.memory_space<vmem>>, %arg15: memref<32x64xf32, #tpu.memory_space<vmem>>, %arg16: memref<8x64xf32, #tpu.memory_space<vmem>>, %arg17: memref<1x64xf32, #tpu.memory_space<vmem>>, %arg18: memref<1x64xf32, #tpu.memory_space<vmem>>, %arg19: memref<64x32xf32, #tpu.memory_space<vmem>>, %arg20: memref<1x32xf32, #tpu.memory_space<vmem>>, %arg21: memref<1x32xf32, #tpu.memory_space<vmem>>, %arg22: memref<32x32xf32, #tpu.memory_space<vmem>>, %arg23: memref<1x32xf32, #tpu.memory_space<vmem>>, %arg24: memref<2x160xf32, #tpu.memory_space<vmem>>) attributes {dimension_semantics = [], scalar_prefetch = 0 : i64, scratch_operands = 0 : i64, tpu.core_type = #tpu.core_type<tc>} {
    %c0 = arith.constant 0 : index
    %c0_0 = arith.constant 0 : index
    %0 = vector.load %arg0[%c0, %c0_0] : memref<128x64xbf16, #tpu.memory_space<vmem>>, vector<128x64xbf16>
    %c0_1 = arith.constant 0 : index
    %c0_2 = arith.constant 0 : index
    %1 = vector.load %arg1[%c0_1, %c0_2] : memref<64x64xbf16, #tpu.memory_space<vmem>>, vector<64x64xbf16>
    %cst = arith.constant dense<0.000000e+00> : vector<128x64xf32>
    %2 = tpu.matmul %0, %1, %cst {dimension_numbers = #tpu.dot_dimension_numbers<[1], [0], [0], [1], [0, 0, 1, 1], [], []>} : vector<128x64xbf16>, vector<64x64xbf16>, vector<128x64xf32> -> vector<128x64xf32>
    %c0_3 = arith.constant 0 : index
    %c0_4 = arith.constant 0 : index
    %3 = vector.load %arg2[%c0_3, %c0_4] : memref<1x64xf32, #tpu.memory_space<vmem>>, vector<1x64xf32>
    %4 = vector.broadcast %3 : vector<1x64xf32> to vector<128x64xf32>
    %5 = arith.mulf %2, %4 : vector<128x64xf32>
    %c0_5 = arith.constant 0 : index
    %c0_6 = arith.constant 0 : index
    %6 = vector.load %arg3[%c0_5, %c0_6] : memref<1x64xf32, #tpu.memory_space<vmem>>, vector<1x64xf32>
    %7 = vector.broadcast %6 : vector<1x64xf32> to vector<128x64xf32>
    %8 = arith.addf %5, %7 : vector<128x64xf32>
    %cst_7 = arith.constant 0.000000e+00 : f32
    %9 = vector.broadcast %cst_7 : f32 to vector<128x64xf32>
    %10 = arith.maximumf %8, %9 : vector<128x64xf32>
    %c0_8 = arith.constant 0 : index
    %c0_9 = arith.constant 0 : index
    %11 = vector.load %arg4[%c0_8, %c0_9] : memref<128x9xf32, #tpu.memory_space<vmem>>, vector<128x9xf32>
    %12 = vector.extract_strided_slice %10 {offsets = [119, 0], sizes = [9, 64], strides = [1, 1]} : vector<128x64xf32> to vector<9x64xf32>
    %13 = vector.extract_strided_slice %10 {offsets = [0, 0], sizes = [119, 64], strides = [1, 1]} : vector<128x64xf32> to vector<119x64xf32>
    %14 = tpu.concatenate %12, %13 in 0 : vector<9x64xf32>, vector<119x64xf32> -> vector<128x64xf32>
    %15 = vector.extract_strided_slice %11 {offsets = [0, 0], sizes = [128, 1], strides = [1, 1]} : vector<128x9xf32> to vector<128x1xf32>
    %16 = vector.broadcast %15 : vector<128x1xf32> to vector<128x64xf32>
    %17 = arith.mulf %14, %16 : vector<128x64xf32>
    %18 = vector.extract_strided_slice %10 {offsets = [120, 0], sizes = [8, 64], strides = [1, 1]} : vector<128x64xf32> to vector<8x64xf32>
    %19 = vector.extract_strided_slice %10 {offsets = [0, 0], sizes = [120, 64], strides = [1, 1]} : vector<128x64xf32> to vector<120x64xf32>
    %20 = tpu.concatenate %18, %19 in 0 : vector<8x64xf32>, vector<120x64xf32> -> vector<128x64xf32>
    %21 = vector.extract_strided_slice %11 {offsets = [0, 1], sizes = [128, 1], strides = [1, 1]} : vector<128x9xf32> to vector<128x1xf32>
    %22 = vector.broadcast %21 : vector<128x1xf32> to vector<128x64xf32>
    %23 = arith.mulf %20, %22 : vector<128x64xf32>
    %24 = vector.extract_strided_slice %10 {offsets = [121, 0], sizes = [7, 64], strides = [1, 1]} : vector<128x64xf32> to vector<7x64xf32>
    %25 = vector.extract_strided_slice %10 {offsets = [0, 0], sizes = [121, 64], strides = [1, 1]} : vector<128x64xf32> to vector<121x64xf32>
    %26 = tpu.concatenate %24, %25 in 0 : vector<7x64xf32>, vector<121x64xf32> -> vector<128x64xf32>
    %27 = vector.extract_strided_slice %11 {offsets = [0, 2], sizes = [128, 1], strides = [1, 1]} : vector<128x9xf32> to vector<128x1xf32>
    %28 = vector.broadcast %27 : vector<128x1xf32> to vector<128x64xf32>
    %29 = arith.mulf %26, %28 : vector<128x64xf32>
    %30 = vector.extract_strided_slice %10 {offsets = [127, 0], sizes = [1, 64], strides = [1, 1]} : vector<128x64xf32> to vector<1x64xf32>
    %31 = vector.extract_strided_slice %10 {offsets = [0, 0], sizes = [127, 64], strides = [1, 1]} : vector<128x64xf32> to vector<127x64xf32>
    %32 = tpu.concatenate %30, %31 in 0 : vector<1x64xf32>, vector<127x64xf32> -> vector<128x64xf32>
    %33 = vector.extract_strided_slice %11 {offsets = [0, 3], sizes = [128, 1], strides = [1, 1]} : vector<128x9xf32> to vector<128x1xf32>
    %34 = vector.broadcast %33 : vector<128x1xf32> to vector<128x64xf32>
    %35 = arith.mulf %32, %34 : vector<128x64xf32>
    %36 = vector.extract_strided_slice %11 {offsets = [0, 4], sizes = [128, 1], strides = [1, 1]} : vector<128x9xf32> to vector<128x1xf32>
    %37 = vector.broadcast %36 : vector<128x1xf32> to vector<128x64xf32>
    %38 = arith.mulf %10, %37 : vector<128x64xf32>
    %39 = vector.extract_strided_slice %10 {offsets = [1, 0], sizes = [127, 64], strides = [1, 1]} : vector<128x64xf32> to vector<127x64xf32>
    %40 = vector.extract_strided_slice %10 {offsets = [0, 0], sizes = [1, 64], strides = [1, 1]} : vector<128x64xf32> to vector<1x64xf32>
    %41 = tpu.concatenate %39, %40 in 0 : vector<127x64xf32>, vector<1x64xf32> -> vector<128x64xf32>
    %42 = vector.extract_strided_slice %11 {offsets = [0, 5], sizes = [128, 1], strides = [1, 1]} : vector<128x9xf32> to vector<128x1xf32>
    %43 = vector.broadcast %42 : vector<128x1xf32> to vector<128x64xf32>
    %44 = arith.mulf %41, %43 : vector<128x64xf32>
    %45 = vector.extract_strided_slice %10 {offsets = [7, 0], sizes = [121, 64], strides = [1, 1]} : vector<128x64xf32> to vector<121x64xf32>
    %46 = vector.extract_strided_slice %10 {offsets = [0, 0], sizes = [7, 64], strides = [1, 1]} : vector<128x64xf32> to vector<7x64xf32>
    %47 = tpu.concatenate %45, %46 in 0 : vector<121x64xf32>, vector<7x64xf32> -> vector<128x64xf32>
    %48 = vector.extract_strided_slice %11 {offsets = [0, 6], sizes = [128, 1], strides = [1, 1]} : vector<128x9xf32> to vector<128x1xf32>
    %49 = vector.broadcast %48 : vector<128x1xf32> to vector<128x64xf32>
    %50 = arith.mulf %47, %49 : vector<128x64xf32>
    %51 = vector.extract_strided_slice %10 {offsets = [8, 0], sizes = [120, 64], strides = [1, 1]} : vector<128x64xf32> to vector<120x64xf32>
    %52 = vector.extract_strided_slice %10 {offsets = [0, 0], sizes = [8, 64], strides = [1, 1]} : vector<128x64xf32> to vector<8x64xf32>
    %53 = tpu.concatenate %51, %52 in 0 : vector<120x64xf32>, vector<8x64xf32> -> vector<128x64xf32>
    %54 = vector.extract_strided_slice %11 {offsets = [0, 7], sizes = [128, 1], strides = [1, 1]} : vector<128x9xf32> to vector<128x1xf32>
    %55 = vector.broadcast %54 : vector<128x1xf32> to vector<128x64xf32>
    %56 = arith.mulf %53, %55 : vector<128x64xf32>
    %57 = vector.extract_strided_slice %10 {offsets = [9, 0], sizes = [119, 64], strides = [1, 1]} : vector<128x64xf32> to vector<119x64xf32>
    %58 = vector.extract_strided_slice %10 {offsets = [0, 0], sizes = [9, 64], strides = [1, 1]} : vector<128x64xf32> to vector<9x64xf32>
    %59 = tpu.concatenate %57, %58 in 0 : vector<119x64xf32>, vector<9x64xf32> -> vector<128x64xf32>
    %60 = vector.extract_strided_slice %11 {offsets = [0, 8], sizes = [128, 1], strides = [1, 1]} : vector<128x9xf32> to vector<128x1xf32>
    %61 = vector.broadcast %60 : vector<128x1xf32> to vector<128x64xf32>
    %62 = arith.mulf %59, %61 : vector<128x64xf32>
    %63 = tpu.concatenate %17, %23, %29, %35, %38, %44, %50, %56, %62 in 1 : vector<128x64xf32>, vector<128x64xf32>, vector<128x64xf32>, vector<128x64xf32>, vector<128x64xf32>, vector<128x64xf32>, vector<128x64xf32>, vector<128x64xf32>, vector<128x64xf32> -> vector<128x576xf32>
    %64 = arith.truncf %63 : vector<128x576xf32> to vector<128x576xbf16>
    %c0_10 = arith.constant 0 : index
    %c0_11 = arith.constant 0 : index
    %c0_12 = arith.constant 0 : index
    %65 = vector.load %arg5[%c0_10, %c0_11, %c0_12] : memref<2x576x128xbf16, #tpu.memory_space<vmem>>, vector<1x576x128xbf16>
    %66 = vector.shape_cast %65 : vector<1x576x128xbf16> to vector<576x128xbf16>
    %cst_13 = arith.constant dense<0.000000e+00> : vector<128x128xf32>
    %67 = tpu.matmul %64, %66, %cst_13 {dimension_numbers = #tpu.dot_dimension_numbers<[1], [0], [0], [1], [0, 0, 1, 1], [], []>} : vector<128x576xbf16>, vector<576x128xbf16>, vector<128x128xf32> -> vector<128x128xf32>
    %c0_14 = arith.constant 0 : index
    %c0_15 = arith.constant 0 : index
    %c0_16 = arith.constant 0 : index
    %68 = vector.load %arg6[%c0_14, %c0_15, %c0_16] : memref<2x1x128xf32, #tpu.memory_space<vmem>>, vector<1x1x128xf32>
    %69 = vector.shape_cast %68 : vector<1x1x128xf32> to vector<1x128xf32>
    %70 = vector.broadcast %69 : vector<1x128xf32> to vector<128x128xf32>
    %71 = arith.mulf %67, %70 : vector<128x128xf32>
    %c0_17 = arith.constant 0 : index
    %c0_18 = arith.constant 0 : index
    %c0_19 = arith.constant 0 : index
    %72 = vector.load %arg7[%c0_17, %c0_18, %c0_19] : memref<2x1x128xf32, #tpu.memory_space<vmem>>, vector<1x1x128xf32>
    %73 = vector.shape_cast %72 : vector<1x1x128xf32> to vector<1x128xf32>
    %74 = vector.broadcast %73 : vector<1x128xf32> to vector<128x128xf32>
    %75 = arith.addf %71, %74 : vector<128x128xf32>
    %cst_20 = arith.constant 0.000000e+00 : f32
    %76 = vector.broadcast %cst_20 : f32 to vector<128x128xf32>
    %77 = arith.maximumf %75, %76 : vector<128x128xf32>
    %78 = vector.extract_strided_slice %77 {offsets = [119, 0], sizes = [9, 128], strides = [1, 1]} : vector<128x128xf32> to vector<9x128xf32>
    %79 = vector.extract_strided_slice %77 {offsets = [0, 0], sizes = [119, 128], strides = [1, 1]} : vector<128x128xf32> to vector<119x128xf32>
    %80 = tpu.concatenate %78, %79 in 0 : vector<9x128xf32>, vector<119x128xf32> -> vector<128x128xf32>
    %81 = vector.extract_strided_slice %11 {offsets = [0, 0], sizes = [128, 1], strides = [1, 1]} : vector<128x9xf32> to vector<128x1xf32>
    %82 = vector.broadcast %81 : vector<128x1xf32> to vector<128x128xf32>
    %83 = arith.mulf %80, %82 : vector<128x128xf32>
    %84 = vector.extract_strided_slice %77 {offsets = [120, 0], sizes = [8, 128], strides = [1, 1]} : vector<128x128xf32> to vector<8x128xf32>
    %85 = vector.extract_strided_slice %77 {offsets = [0, 0], sizes = [120, 128], strides = [1, 1]} : vector<128x128xf32> to vector<120x128xf32>
    %86 = tpu.concatenate %84, %85 in 0 : vector<8x128xf32>, vector<120x128xf32> -> vector<128x128xf32>
    %87 = vector.extract_strided_slice %11 {offsets = [0, 1], sizes = [128, 1], strides = [1, 1]} : vector<128x9xf32> to vector<128x1xf32>
    %88 = vector.broadcast %87 : vector<128x1xf32> to vector<128x128xf32>
    %89 = arith.mulf %86, %88 : vector<128x128xf32>
    %90 = vector.extract_strided_slice %77 {offsets = [121, 0], sizes = [7, 128], strides = [1, 1]} : vector<128x128xf32> to vector<7x128xf32>
    %91 = vector.extract_strided_slice %77 {offsets = [0, 0], sizes = [121, 128], strides = [1, 1]} : vector<128x128xf32> to vector<121x128xf32>
    %92 = tpu.concatenate %90, %91 in 0 : vector<7x128xf32>, vector<121x128xf32> -> vector<128x128xf32>
    %93 = vector.extract_strided_slice %11 {offsets = [0, 2], sizes = [128, 1], strides = [1, 1]} : vector<128x9xf32> to vector<128x1xf32>
    %94 = vector.broadcast %93 : vector<128x1xf32> to vector<128x128xf32>
    %95 = arith.mulf %92, %94 : vector<128x128xf32>
    %96 = vector.extract_strided_slice %77 {offsets = [127, 0], sizes = [1, 128], strides = [1, 1]} : vector<128x128xf32> to vector<1x128xf32>
    %97 = vector.extract_strided_slice %77 {offsets = [0, 0], sizes = [127, 128], strides = [1, 1]} : vector<128x128xf32> to vector<127x128xf32>
    %98 = tpu.concatenate %96, %97 in 0 : vector<1x128xf32>, vector<127x128xf32> -> vector<128x128xf32>
    %99 = vector.extract_strided_slice %11 {offsets = [0, 3], sizes = [128, 1], strides = [1, 1]} : vector<128x9xf32> to vector<128x1xf32>
    %100 = vector.broadcast %99 : vector<128x1xf32> to vector<128x128xf32>
    %101 = arith.mulf %98, %100 : vector<128x128xf32>
    %102 = vector.extract_strided_slice %11 {offsets = [0, 4], sizes = [128, 1], strides = [1, 1]} : vector<128x9xf32> to vector<128x1xf32>
    %103 = vector.broadcast %102 : vector<128x1xf32> to vector<128x128xf32>
    %104 = arith.mulf %77, %103 : vector<128x128xf32>
    %105 = vector.extract_strided_slice %77 {offsets = [1, 0], sizes = [127, 128], strides = [1, 1]} : vector<128x128xf32> to vector<127x128xf32>
    %106 = vector.extract_strided_slice %77 {offsets = [0, 0], sizes = [1, 128], strides = [1, 1]} : vector<128x128xf32> to vector<1x128xf32>
    %107 = tpu.concatenate %105, %106 in 0 : vector<127x128xf32>, vector<1x128xf32> -> vector<128x128xf32>
    %108 = vector.extract_strided_slice %11 {offsets = [0, 5], sizes = [128, 1], strides = [1, 1]} : vector<128x9xf32> to vector<128x1xf32>
    %109 = vector.broadcast %108 : vector<128x1xf32> to vector<128x128xf32>
    %110 = arith.mulf %107, %109 : vector<128x128xf32>
    %111 = vector.extract_strided_slice %77 {offsets = [7, 0], sizes = [121, 128], strides = [1, 1]} : vector<128x128xf32> to vector<121x128xf32>
    %112 = vector.extract_strided_slice %77 {offsets = [0, 0], sizes = [7, 128], strides = [1, 1]} : vector<128x128xf32> to vector<7x128xf32>
    %113 = tpu.concatenate %111, %112 in 0 : vector<121x128xf32>, vector<7x128xf32> -> vector<128x128xf32>
    %114 = vector.extract_strided_slice %11 {offsets = [0, 6], sizes = [128, 1], strides = [1, 1]} : vector<128x9xf32> to vector<128x1xf32>
    %115 = vector.broadcast %114 : vector<128x1xf32> to vector<128x128xf32>
    %116 = arith.mulf %113, %115 : vector<128x128xf32>
    %117 = vector.extract_strided_slice %77 {offsets = [8, 0], sizes = [120, 128], strides = [1, 1]} : vector<128x128xf32> to vector<120x128xf32>
    %118 = vector.extract_strided_slice %77 {offsets = [0, 0], sizes = [8, 128], strides = [1, 1]} : vector<128x128xf32> to vector<8x128xf32>
    %119 = tpu.concatenate %117, %118 in 0 : vector<120x128xf32>, vector<8x128xf32> -> vector<128x128xf32>
    %120 = vector.extract_strided_slice %11 {offsets = [0, 7], sizes = [128, 1], strides = [1, 1]} : vector<128x9xf32> to vector<128x1xf32>
    %121 = vector.broadcast %120 : vector<128x1xf32> to vector<128x128xf32>
    %122 = arith.mulf %119, %121 : vector<128x128xf32>
    %123 = vector.extract_strided_slice %77 {offsets = [9, 0], sizes = [119, 128], strides = [1, 1]} : vector<128x128xf32> to vector<119x128xf32>
    %124 = vector.extract_strided_slice %77 {offsets = [0, 0], sizes = [9, 128], strides = [1, 1]} : vector<128x128xf32> to vector<9x128xf32>
    %125 = tpu.concatenate %123, %124 in 0 : vector<119x128xf32>, vector<9x128xf32> -> vector<128x128xf32>
    %126 = vector.extract_strided_slice %11 {offsets = [0, 8], sizes = [128, 1], strides = [1, 1]} : vector<128x9xf32> to vector<128x1xf32>
    %127 = vector.broadcast %126 : vector<128x1xf32> to vector<128x128xf32>
    %128 = arith.mulf %125, %127 : vector<128x128xf32>
    %129 = tpu.concatenate %83, %89, %95, %101, %104, %110, %116, %122, %128 in 1 : vector<128x128xf32>, vector<128x128xf32>, vector<128x128xf32>, vector<128x128xf32>, vector<128x128xf32>, vector<128x128xf32>, vector<128x128xf32>, vector<128x128xf32>, vector<128x128xf32> -> vector<128x1152xf32>
    %130 = arith.truncf %129 : vector<128x1152xf32> to vector<128x1152xbf16>
    %c0_21 = arith.constant 0 : index
    %c0_22 = arith.constant 0 : index
    %c0_23 = arith.constant 0 : index
    %131 = vector.load %arg8[%c0_21, %c0_22, %c0_23] : memref<2x1152x64xbf16, #tpu.memory_space<vmem>>, vector<1x1152x64xbf16>
    %132 = vector.shape_cast %131 : vector<1x1152x64xbf16> to vector<1152x64xbf16>
    %cst_24 = arith.constant dense<0.000000e+00> : vector<128x64xf32>
    %133 = tpu.matmul %130, %132, %cst_24 {dimension_numbers = #tpu.dot_dimension_numbers<[1], [0], [0], [1], [0, 0, 1, 1], [], []>} : vector<128x1152xbf16>, vector<1152x64xbf16>, vector<128x64xf32> -> vector<128x64xf32>
    %c0_25 = arith.constant 0 : index
    %c0_26 = arith.constant 0 : index
    %c0_27 = arith.constant 0 : index
    %134 = vector.load %arg9[%c0_25, %c0_26, %c0_27] : memref<2x1x64xf32, #tpu.memory_space<vmem>>, vector<1x1x64xf32>
    %135 = vector.shape_cast %134 : vector<1x1x64xf32> to vector<1x64xf32>
    %136 = vector.broadcast %135 : vector<1x64xf32> to vector<128x64xf32>
    %137 = arith.mulf %133, %136 : vector<128x64xf32>
    %c0_28 = arith.constant 0 : index
    %c0_29 = arith.constant 0 : index
    %c0_30 = arith.constant 0 : index
    %138 = vector.load %arg10[%c0_28, %c0_29, %c0_30] : memref<2x1x64xf32, #tpu.memory_space<vmem>>, vector<1x1x64xf32>
    %139 = vector.shape_cast %138 : vector<1x1x64xf32> to vector<1x64xf32>
    %140 = vector.broadcast %139 : vector<1x64xf32> to vector<128x64xf32>
    %141 = arith.addf %137, %140 : vector<128x64xf32>
    %142 = arith.addf %141, %10 : vector<128x64xf32>
    %cst_31 = arith.constant 0.000000e+00 : f32
    %143 = vector.broadcast %cst_31 : f32 to vector<128x64xf32>
    %144 = arith.maximumf %142, %143 : vector<128x64xf32>
    %145 = vector.extract_strided_slice %144 {offsets = [119, 0], sizes = [9, 64], strides = [1, 1]} : vector<128x64xf32> to vector<9x64xf32>
    %146 = vector.extract_strided_slice %144 {offsets = [0, 0], sizes = [119, 64], strides = [1, 1]} : vector<128x64xf32> to vector<119x64xf32>
    %147 = tpu.concatenate %145, %146 in 0 : vector<9x64xf32>, vector<119x64xf32> -> vector<128x64xf32>
    %148 = vector.extract_strided_slice %11 {offsets = [0, 0], sizes = [128, 1], strides = [1, 1]} : vector<128x9xf32> to vector<128x1xf32>
    %149 = vector.broadcast %148 : vector<128x1xf32> to vector<128x64xf32>
    %150 = arith.mulf %147, %149 : vector<128x64xf32>
    %151 = vector.extract_strided_slice %144 {offsets = [120, 0], sizes = [8, 64], strides = [1, 1]} : vector<128x64xf32> to vector<8x64xf32>
    %152 = vector.extract_strided_slice %144 {offsets = [0, 0], sizes = [120, 64], strides = [1, 1]} : vector<128x64xf32> to vector<120x64xf32>
    %153 = tpu.concatenate %151, %152 in 0 : vector<8x64xf32>, vector<120x64xf32> -> vector<128x64xf32>
    %154 = vector.extract_strided_slice %11 {offsets = [0, 1], sizes = [128, 1], strides = [1, 1]} : vector<128x9xf32> to vector<128x1xf32>
    %155 = vector.broadcast %154 : vector<128x1xf32> to vector<128x64xf32>
    %156 = arith.mulf %153, %155 : vector<128x64xf32>
    %157 = vector.extract_strided_slice %144 {offsets = [121, 0], sizes = [7, 64], strides = [1, 1]} : vector<128x64xf32> to vector<7x64xf32>
    %158 = vector.extract_strided_slice %144 {offsets = [0, 0], sizes = [121, 64], strides = [1, 1]} : vector<128x64xf32> to vector<121x64xf32>
    %159 = tpu.concatenate %157, %158 in 0 : vector<7x64xf32>, vector<121x64xf32> -> vector<128x64xf32>
    %160 = vector.extract_strided_slice %11 {offsets = [0, 2], sizes = [128, 1], strides = [1, 1]} : vector<128x9xf32> to vector<128x1xf32>
    %161 = vector.broadcast %160 : vector<128x1xf32> to vector<128x64xf32>
    %162 = arith.mulf %159, %161 : vector<128x64xf32>
    %163 = vector.extract_strided_slice %144 {offsets = [127, 0], sizes = [1, 64], strides = [1, 1]} : vector<128x64xf32> to vector<1x64xf32>
    %164 = vector.extract_strided_slice %144 {offsets = [0, 0], sizes = [127, 64], strides = [1, 1]} : vector<128x64xf32> to vector<127x64xf32>
    %165 = tpu.concatenate %163, %164 in 0 : vector<1x64xf32>, vector<127x64xf32> -> vector<128x64xf32>
    %166 = vector.extract_strided_slice %11 {offsets = [0, 3], sizes = [128, 1], strides = [1, 1]} : vector<128x9xf32> to vector<128x1xf32>
    %167 = vector.broadcast %166 : vector<128x1xf32> to vector<128x64xf32>
    %168 = arith.mulf %165, %167 : vector<128x64xf32>
    %169 = vector.extract_strided_slice %11 {offsets = [0, 4], sizes = [128, 1], strides = [1, 1]} : vector<128x9xf32> to vector<128x1xf32>
    %170 = vector.broadcast %169 : vector<128x1xf32> to vector<128x64xf32>
    %171 = arith.mulf %144, %170 : vector<128x64xf32>
    %172 = vector.extract_strided_slice %144 {offsets = [1, 0], sizes = [127, 64], strides = [1, 1]} : vector<128x64xf32> to vector<127x64xf32>
    %173 = vector.extract_strided_slice %144 {offsets = [0, 0], sizes = [1, 64], strides = [1, 1]} : vector<128x64xf32> to vector<1x64xf32>
    %174 = tpu.concatenate %172, %173 in 0 : vector<127x64xf32>, vector<1x64xf32> -> vector<128x64xf32>
    %175 = vector.extract_strided_slice %11 {offsets = [0, 5], sizes = [128, 1], strides = [1, 1]} : vector<128x9xf32> to vector<128x1xf32>
    %176 = vector.broadcast %175 : vector<128x1xf32> to vector<128x64xf32>
    %177 = arith.mulf %174, %176 : vector<128x64xf32>
    %178 = vector.extract_strided_slice %144 {offsets = [7, 0], sizes = [121, 64], strides = [1, 1]} : vector<128x64xf32> to vector<121x64xf32>
    %179 = vector.extract_strided_slice %144 {offsets = [0, 0], sizes = [7, 64], strides = [1, 1]} : vector<128x64xf32> to vector<7x64xf32>
    %180 = tpu.concatenate %178, %179 in 0 : vector<121x64xf32>, vector<7x64xf32> -> vector<128x64xf32>
    %181 = vector.extract_strided_slice %11 {offsets = [0, 6], sizes = [128, 1], strides = [1, 1]} : vector<128x9xf32> to vector<128x1xf32>
    %182 = vector.broadcast %181 : vector<128x1xf32> to vector<128x64xf32>
    %183 = arith.mulf %180, %182 : vector<128x64xf32>
    %184 = vector.extract_strided_slice %144 {offsets = [8, 0], sizes = [120, 64], strides = [1, 1]} : vector<128x64xf32> to vector<120x64xf32>
    %185 = vector.extract_strided_slice %144 {offsets = [0, 0], sizes = [8, 64], strides = [1, 1]} : vector<128x64xf32> to vector<8x64xf32>
    %186 = tpu.concatenate %184, %185 in 0 : vector<120x64xf32>, vector<8x64xf32> -> vector<128x64xf32>
    %187 = vector.extract_strided_slice %11 {offsets = [0, 7], sizes = [128, 1], strides = [1, 1]} : vector<128x9xf32> to vector<128x1xf32>
    %188 = vector.broadcast %187 : vector<128x1xf32> to vector<128x64xf32>
    %189 = arith.mulf %186, %188 : vector<128x64xf32>
    %190 = vector.extract_strided_slice %144 {offsets = [9, 0], sizes = [119, 64], strides = [1, 1]} : vector<128x64xf32> to vector<119x64xf32>
    %191 = vector.extract_strided_slice %144 {offsets = [0, 0], sizes = [9, 64], strides = [1, 1]} : vector<128x64xf32> to vector<9x64xf32>
    %192 = tpu.concatenate %190, %191 in 0 : vector<119x64xf32>, vector<9x64xf32> -> vector<128x64xf32>
    %193 = vector.extract_strided_slice %11 {offsets = [0, 8], sizes = [128, 1], strides = [1, 1]} : vector<128x9xf32> to vector<128x1xf32>
    %194 = vector.broadcast %193 : vector<128x1xf32> to vector<128x64xf32>
    %195 = arith.mulf %192, %194 : vector<128x64xf32>
    %196 = tpu.concatenate %150, %156, %162, %168, %171, %177, %183, %189, %195 in 1 : vector<128x64xf32>, vector<128x64xf32>, vector<128x64xf32>, vector<128x64xf32>, vector<128x64xf32>, vector<128x64xf32>, vector<128x64xf32>, vector<128x64xf32>, vector<128x64xf32> -> vector<128x576xf32>
    %197 = arith.truncf %196 : vector<128x576xf32> to vector<128x576xbf16>
    %c1 = arith.constant 1 : index
    %c0_32 = arith.constant 0 : index
    %c0_33 = arith.constant 0 : index
    %198 = vector.load %arg5[%c1, %c0_32, %c0_33] : memref<2x576x128xbf16, #tpu.memory_space<vmem>>, vector<1x576x128xbf16>
    %199 = vector.shape_cast %198 : vector<1x576x128xbf16> to vector<576x128xbf16>
    %cst_34 = arith.constant dense<0.000000e+00> : vector<128x128xf32>
    %200 = tpu.matmul %197, %199, %cst_34 {dimension_numbers = #tpu.dot_dimension_numbers<[1], [0], [0], [1], [0, 0, 1, 1], [], []>} : vector<128x576xbf16>, vector<576x128xbf16>, vector<128x128xf32> -> vector<128x128xf32>
    %c1_35 = arith.constant 1 : index
    %c0_36 = arith.constant 0 : index
    %c0_37 = arith.constant 0 : index
    %201 = vector.load %arg6[%c1_35, %c0_36, %c0_37] : memref<2x1x128xf32, #tpu.memory_space<vmem>>, vector<1x1x128xf32>
    %202 = vector.shape_cast %201 : vector<1x1x128xf32> to vector<1x128xf32>
    %203 = vector.broadcast %202 : vector<1x128xf32> to vector<128x128xf32>
    %204 = arith.mulf %200, %203 : vector<128x128xf32>
    %c1_38 = arith.constant 1 : index
    %c0_39 = arith.constant 0 : index
    %c0_40 = arith.constant 0 : index
    %205 = vector.load %arg7[%c1_38, %c0_39, %c0_40] : memref<2x1x128xf32, #tpu.memory_space<vmem>>, vector<1x1x128xf32>
    %206 = vector.shape_cast %205 : vector<1x1x128xf32> to vector<1x128xf32>
    %207 = vector.broadcast %206 : vector<1x128xf32> to vector<128x128xf32>
    %208 = arith.addf %204, %207 : vector<128x128xf32>
    %cst_41 = arith.constant 0.000000e+00 : f32
    %209 = vector.broadcast %cst_41 : f32 to vector<128x128xf32>
    %210 = arith.maximumf %208, %209 : vector<128x128xf32>
    %211 = vector.extract_strided_slice %210 {offsets = [119, 0], sizes = [9, 128], strides = [1, 1]} : vector<128x128xf32> to vector<9x128xf32>
    %212 = vector.extract_strided_slice %210 {offsets = [0, 0], sizes = [119, 128], strides = [1, 1]} : vector<128x128xf32> to vector<119x128xf32>
    %213 = tpu.concatenate %211, %212 in 0 : vector<9x128xf32>, vector<119x128xf32> -> vector<128x128xf32>
    %214 = vector.extract_strided_slice %11 {offsets = [0, 0], sizes = [128, 1], strides = [1, 1]} : vector<128x9xf32> to vector<128x1xf32>
    %215 = vector.broadcast %214 : vector<128x1xf32> to vector<128x128xf32>
    %216 = arith.mulf %213, %215 : vector<128x128xf32>
    %217 = vector.extract_strided_slice %210 {offsets = [120, 0], sizes = [8, 128], strides = [1, 1]} : vector<128x128xf32> to vector<8x128xf32>
    %218 = vector.extract_strided_slice %210 {offsets = [0, 0], sizes = [120, 128], strides = [1, 1]} : vector<128x128xf32> to vector<120x128xf32>
    %219 = tpu.concatenate %217, %218 in 0 : vector<8x128xf32>, vector<120x128xf32> -> vector<128x128xf32>
    %220 = vector.extract_strided_slice %11 {offsets = [0, 1], sizes = [128, 1], strides = [1, 1]} : vector<128x9xf32> to vector<128x1xf32>
    %221 = vector.broadcast %220 : vector<128x1xf32> to vector<128x128xf32>
    %222 = arith.mulf %219, %221 : vector<128x128xf32>
    %223 = vector.extract_strided_slice %210 {offsets = [121, 0], sizes = [7, 128], strides = [1, 1]} : vector<128x128xf32> to vector<7x128xf32>
    %224 = vector.extract_strided_slice %210 {offsets = [0, 0], sizes = [121, 128], strides = [1, 1]} : vector<128x128xf32> to vector<121x128xf32>
    %225 = tpu.concatenate %223, %224 in 0 : vector<7x128xf32>, vector<121x128xf32> -> vector<128x128xf32>
    %226 = vector.extract_strided_slice %11 {offsets = [0, 2], sizes = [128, 1], strides = [1, 1]} : vector<128x9xf32> to vector<128x1xf32>
    %227 = vector.broadcast %226 : vector<128x1xf32> to vector<128x128xf32>
    %228 = arith.mulf %225, %227 : vector<128x128xf32>
    %229 = vector.extract_strided_slice %210 {offsets = [127, 0], sizes = [1, 128], strides = [1, 1]} : vector<128x128xf32> to vector<1x128xf32>
    %230 = vector.extract_strided_slice %210 {offsets = [0, 0], sizes = [127, 128], strides = [1, 1]} : vector<128x128xf32> to vector<127x128xf32>
    %231 = tpu.concatenate %229, %230 in 0 : vector<1x128xf32>, vector<127x128xf32> -> vector<128x128xf32>
    %232 = vector.extract_strided_slice %11 {offsets = [0, 3], sizes = [128, 1], strides = [1, 1]} : vector<128x9xf32> to vector<128x1xf32>
    %233 = vector.broadcast %232 : vector<128x1xf32> to vector<128x128xf32>
    %234 = arith.mulf %231, %233 : vector<128x128xf32>
    %235 = vector.extract_strided_slice %11 {offsets = [0, 4], sizes = [128, 1], strides = [1, 1]} : vector<128x9xf32> to vector<128x1xf32>
    %236 = vector.broadcast %235 : vector<128x1xf32> to vector<128x128xf32>
    %237 = arith.mulf %210, %236 : vector<128x128xf32>
    %238 = vector.extract_strided_slice %210 {offsets = [1, 0], sizes = [127, 128], strides = [1, 1]} : vector<128x128xf32> to vector<127x128xf32>
    %239 = vector.extract_strided_slice %210 {offsets = [0, 0], sizes = [1, 128], strides = [1, 1]} : vector<128x128xf32> to vector<1x128xf32>
    %240 = tpu.concatenate %238, %239 in 0 : vector<127x128xf32>, vector<1x128xf32> -> vector<128x128xf32>
    %241 = vector.extract_strided_slice %11 {offsets = [0, 5], sizes = [128, 1], strides = [1, 1]} : vector<128x9xf32> to vector<128x1xf32>
    %242 = vector.broadcast %241 : vector<128x1xf32> to vector<128x128xf32>
    %243 = arith.mulf %240, %242 : vector<128x128xf32>
    %244 = vector.extract_strided_slice %210 {offsets = [7, 0], sizes = [121, 128], strides = [1, 1]} : vector<128x128xf32> to vector<121x128xf32>
    %245 = vector.extract_strided_slice %210 {offsets = [0, 0], sizes = [7, 128], strides = [1, 1]} : vector<128x128xf32> to vector<7x128xf32>
    %246 = tpu.concatenate %244, %245 in 0 : vector<121x128xf32>, vector<7x128xf32> -> vector<128x128xf32>
    %247 = vector.extract_strided_slice %11 {offsets = [0, 6], sizes = [128, 1], strides = [1, 1]} : vector<128x9xf32> to vector<128x1xf32>
    %248 = vector.broadcast %247 : vector<128x1xf32> to vector<128x128xf32>
    %249 = arith.mulf %246, %248 : vector<128x128xf32>
    %250 = vector.extract_strided_slice %210 {offsets = [8, 0], sizes = [120, 128], strides = [1, 1]} : vector<128x128xf32> to vector<120x128xf32>
    %251 = vector.extract_strided_slice %210 {offsets = [0, 0], sizes = [8, 128], strides = [1, 1]} : vector<128x128xf32> to vector<8x128xf32>
    %252 = tpu.concatenate %250, %251 in 0 : vector<120x128xf32>, vector<8x128xf32> -> vector<128x128xf32>
    %253 = vector.extract_strided_slice %11 {offsets = [0, 7], sizes = [128, 1], strides = [1, 1]} : vector<128x9xf32> to vector<128x1xf32>
    %254 = vector.broadcast %253 : vector<128x1xf32> to vector<128x128xf32>
    %255 = arith.mulf %252, %254 : vector<128x128xf32>
    %256 = vector.extract_strided_slice %210 {offsets = [9, 0], sizes = [119, 128], strides = [1, 1]} : vector<128x128xf32> to vector<119x128xf32>
    %257 = vector.extract_strided_slice %210 {offsets = [0, 0], sizes = [9, 128], strides = [1, 1]} : vector<128x128xf32> to vector<9x128xf32>
    %258 = tpu.concatenate %256, %257 in 0 : vector<119x128xf32>, vector<9x128xf32> -> vector<128x128xf32>
    %259 = vector.extract_strided_slice %11 {offsets = [0, 8], sizes = [128, 1], strides = [1, 1]} : vector<128x9xf32> to vector<128x1xf32>
    %260 = vector.broadcast %259 : vector<128x1xf32> to vector<128x128xf32>
    %261 = arith.mulf %258, %260 : vector<128x128xf32>
    %262 = tpu.concatenate %216, %222, %228, %234, %237, %243, %249, %255, %261 in 1 : vector<128x128xf32>, vector<128x128xf32>, vector<128x128xf32>, vector<128x128xf32>, vector<128x128xf32>, vector<128x128xf32>, vector<128x128xf32>, vector<128x128xf32>, vector<128x128xf32> -> vector<128x1152xf32>
    %263 = arith.truncf %262 : vector<128x1152xf32> to vector<128x1152xbf16>
    %c1_42 = arith.constant 1 : index
    %c0_43 = arith.constant 0 : index
    %c0_44 = arith.constant 0 : index
    %264 = vector.load %arg8[%c1_42, %c0_43, %c0_44] : memref<2x1152x64xbf16, #tpu.memory_space<vmem>>, vector<1x1152x64xbf16>
    %265 = vector.shape_cast %264 : vector<1x1152x64xbf16> to vector<1152x64xbf16>
    %cst_45 = arith.constant dense<0.000000e+00> : vector<128x64xf32>
    %266 = tpu.matmul %263, %265, %cst_45 {dimension_numbers = #tpu.dot_dimension_numbers<[1], [0], [0], [1], [0, 0, 1, 1], [], []>} : vector<128x1152xbf16>, vector<1152x64xbf16>, vector<128x64xf32> -> vector<128x64xf32>
    %c1_46 = arith.constant 1 : index
    %c0_47 = arith.constant 0 : index
    %c0_48 = arith.constant 0 : index
    %267 = vector.load %arg9[%c1_46, %c0_47, %c0_48] : memref<2x1x64xf32, #tpu.memory_space<vmem>>, vector<1x1x64xf32>
    %268 = vector.shape_cast %267 : vector<1x1x64xf32> to vector<1x64xf32>
    %269 = vector.broadcast %268 : vector<1x64xf32> to vector<128x64xf32>
    %270 = arith.mulf %266, %269 : vector<128x64xf32>
    %c1_49 = arith.constant 1 : index
    %c0_50 = arith.constant 0 : index
    %c0_51 = arith.constant 0 : index
    %271 = vector.load %arg10[%c1_49, %c0_50, %c0_51] : memref<2x1x64xf32, #tpu.memory_space<vmem>>, vector<1x1x64xf32>
    %272 = vector.shape_cast %271 : vector<1x1x64xf32> to vector<1x64xf32>
    %273 = vector.broadcast %272 : vector<1x64xf32> to vector<128x64xf32>
    %274 = arith.addf %270, %273 : vector<128x64xf32>
    %275 = arith.addf %274, %144 : vector<128x64xf32>
    %cst_52 = arith.constant 0.000000e+00 : f32
    %276 = vector.broadcast %cst_52 : f32 to vector<128x64xf32>
    %277 = arith.maximumf %275, %276 : vector<128x64xf32>
    %c0_53 = arith.constant 0 : index
    %c0_54 = arith.constant 0 : index
    %278 = vector.load %arg11[%c0_53, %c0_54] : memref<2x128xf32, #tpu.memory_space<vmem>>, vector<2x128xf32>
    %cst_55 = arith.constant dense<0.000000e+00> : vector<2x64xf32>
    %279 = tpu.matmul %278, %277, %cst_55 {dimension_numbers = #tpu.dot_dimension_numbers<[1], [0], [0], [1], [0, 0, 1, 1], [], []>} : vector<2x128xf32>, vector<128x64xf32>, vector<2x64xf32> -> vector<2x64xf32>
    %c0_56 = arith.constant 0 : index
    %c0_57 = arith.constant 0 : index
    %280 = vector.load %arg12[%c0_56, %c0_57] : memref<64x32xf32, #tpu.memory_space<vmem>>, vector<64x32xf32>
    %cst_58 = arith.constant dense<0.000000e+00> : vector<2x32xf32>
    %281 = tpu.matmul %279, %280, %cst_58 {dimension_numbers = #tpu.dot_dimension_numbers<[1], [0], [0], [1], [0, 0, 1, 1], [], []>} : vector<2x64xf32>, vector<64x32xf32>, vector<2x32xf32> -> vector<2x32xf32>
    %c0_59 = arith.constant 0 : index
    %c0_60 = arith.constant 0 : index
    %282 = vector.load %arg13[%c0_59, %c0_60] : memref<1x32xf32, #tpu.memory_space<vmem>>, vector<1x32xf32>
    %283 = vector.broadcast %282 : vector<1x32xf32> to vector<2x32xf32>
    %284 = arith.addf %281, %283 : vector<2x32xf32>
    %c0_61 = arith.constant 0 : index
    %c0_62 = arith.constant 0 : index
    %c0_63 = arith.constant 0 : index
    %285 = vector.load %arg14[%c0_61, %c0_62, %c0_63] : memref<2x4x8xf32, #tpu.memory_space<vmem>>, vector<2x1x8xf32>
    %286 = vector.shape_cast %285 : vector<2x1x8xf32> to vector<2x8xf32>
    %c0_64 = arith.constant 0 : index
    %c0_65 = arith.constant 0 : index
    %287 = vector.load %arg15[%c0_64, %c0_65] : memref<32x64xf32, #tpu.memory_space<vmem>>, vector<32x64xf32>
    %cst_66 = arith.constant dense<0.000000e+00> : vector<2x64xf32>
    %288 = tpu.matmul %284, %287, %cst_66 {dimension_numbers = #tpu.dot_dimension_numbers<[1], [0], [0], [1], [0, 0, 1, 1], [], []>} : vector<2x32xf32>, vector<32x64xf32>, vector<2x64xf32> -> vector<2x64xf32>
    %c0_67 = arith.constant 0 : index
    %c0_68 = arith.constant 0 : index
    %289 = vector.load %arg16[%c0_67, %c0_68] : memref<8x64xf32, #tpu.memory_space<vmem>>, vector<8x64xf32>
    %cst_69 = arith.constant dense<0.000000e+00> : vector<2x64xf32>
    %290 = tpu.matmul %286, %289, %cst_69 {dimension_numbers = #tpu.dot_dimension_numbers<[1], [0], [0], [1], [0, 0, 1, 1], [], []>} : vector<2x8xf32>, vector<8x64xf32>, vector<2x64xf32> -> vector<2x64xf32>
    %291 = arith.addf %288, %290 : vector<2x64xf32>
    %c0_70 = arith.constant 0 : index
    %c0_71 = arith.constant 0 : index
    %292 = vector.load %arg17[%c0_70, %c0_71] : memref<1x64xf32, #tpu.memory_space<vmem>>, vector<1x64xf32>
    %293 = vector.broadcast %292 : vector<1x64xf32> to vector<2x64xf32>
    %294 = arith.mulf %291, %293 : vector<2x64xf32>
    %c0_72 = arith.constant 0 : index
    %c0_73 = arith.constant 0 : index
    %295 = vector.load %arg18[%c0_72, %c0_73] : memref<1x64xf32, #tpu.memory_space<vmem>>, vector<1x64xf32>
    %296 = vector.broadcast %295 : vector<1x64xf32> to vector<2x64xf32>
    %297 = arith.addf %294, %296 : vector<2x64xf32>
    %cst_74 = arith.constant 0.000000e+00 : f32
    %298 = vector.broadcast %cst_74 : f32 to vector<2x64xf32>
    %299 = arith.maximumf %297, %298 : vector<2x64xf32>
    %c0_75 = arith.constant 0 : index
    %c0_76 = arith.constant 0 : index
    %300 = vector.load %arg19[%c0_75, %c0_76] : memref<64x32xf32, #tpu.memory_space<vmem>>, vector<64x32xf32>
    %cst_77 = arith.constant dense<0.000000e+00> : vector<2x32xf32>
    %301 = tpu.matmul %299, %300, %cst_77 {dimension_numbers = #tpu.dot_dimension_numbers<[1], [0], [0], [1], [0, 0, 1, 1], [], []>} : vector<2x64xf32>, vector<64x32xf32>, vector<2x32xf32> -> vector<2x32xf32>
    %c0_78 = arith.constant 0 : index
    %c0_79 = arith.constant 0 : index
    %302 = vector.load %arg20[%c0_78, %c0_79] : memref<1x32xf32, #tpu.memory_space<vmem>>, vector<1x32xf32>
    %303 = vector.broadcast %302 : vector<1x32xf32> to vector<2x32xf32>
    %304 = arith.mulf %301, %303 : vector<2x32xf32>
    %c0_80 = arith.constant 0 : index
    %c0_81 = arith.constant 0 : index
    %305 = vector.load %arg21[%c0_80, %c0_81] : memref<1x32xf32, #tpu.memory_space<vmem>>, vector<1x32xf32>
    %306 = vector.broadcast %305 : vector<1x32xf32> to vector<2x32xf32>
    %307 = arith.addf %304, %306 : vector<2x32xf32>
    %cst_82 = arith.constant 0.000000e+00 : f32
    %308 = vector.broadcast %cst_82 : f32 to vector<2x32xf32>
    %309 = arith.maximumf %307, %308 : vector<2x32xf32>
    %c0_83 = arith.constant 0 : index
    %c0_84 = arith.constant 0 : index
    %310 = vector.load %arg22[%c0_83, %c0_84] : memref<32x32xf32, #tpu.memory_space<vmem>>, vector<32x32xf32>
    %cst_85 = arith.constant dense<0.000000e+00> : vector<2x32xf32>
    %311 = tpu.matmul %309, %310, %cst_85 {dimension_numbers = #tpu.dot_dimension_numbers<[1], [0], [0], [1], [0, 0, 1, 1], [], []>} : vector<2x32xf32>, vector<32x32xf32>, vector<2x32xf32> -> vector<2x32xf32>
    %c0_86 = arith.constant 0 : index
    %c0_87 = arith.constant 0 : index
    %312 = vector.load %arg23[%c0_86, %c0_87] : memref<1x32xf32, #tpu.memory_space<vmem>>, vector<1x32xf32>
    %313 = vector.broadcast %312 : vector<1x32xf32> to vector<2x32xf32>
    %314 = arith.addf %311, %313 : vector<2x32xf32>
    %c0_88 = arith.constant 0 : index
    %c1_89 = arith.constant 1 : index
    %c0_90 = arith.constant 0 : index
    %315 = vector.load %arg14[%c0_88, %c1_89, %c0_90] : memref<2x4x8xf32, #tpu.memory_space<vmem>>, vector<2x1x8xf32>
    %316 = vector.shape_cast %315 : vector<2x1x8xf32> to vector<2x8xf32>
    %c0_91 = arith.constant 0 : index
    %c0_92 = arith.constant 0 : index
    %317 = vector.load %arg15[%c0_91, %c0_92] : memref<32x64xf32, #tpu.memory_space<vmem>>, vector<32x64xf32>
    %cst_93 = arith.constant dense<0.000000e+00> : vector<2x64xf32>
    %318 = tpu.matmul %314, %317, %cst_93 {dimension_numbers = #tpu.dot_dimension_numbers<[1], [0], [0], [1], [0, 0, 1, 1], [], []>} : vector<2x32xf32>, vector<32x64xf32>, vector<2x64xf32> -> vector<2x64xf32>
    %c0_94 = arith.constant 0 : index
    %c0_95 = arith.constant 0 : index
    %319 = vector.load %arg16[%c0_94, %c0_95] : memref<8x64xf32, #tpu.memory_space<vmem>>, vector<8x64xf32>
    %cst_96 = arith.constant dense<0.000000e+00> : vector<2x64xf32>
    %320 = tpu.matmul %316, %319, %cst_96 {dimension_numbers = #tpu.dot_dimension_numbers<[1], [0], [0], [1], [0, 0, 1, 1], [], []>} : vector<2x8xf32>, vector<8x64xf32>, vector<2x64xf32> -> vector<2x64xf32>
    %321 = arith.addf %318, %320 : vector<2x64xf32>
    %c0_97 = arith.constant 0 : index
    %c0_98 = arith.constant 0 : index
    %322 = vector.load %arg17[%c0_97, %c0_98] : memref<1x64xf32, #tpu.memory_space<vmem>>, vector<1x64xf32>
    %323 = vector.broadcast %322 : vector<1x64xf32> to vector<2x64xf32>
    %324 = arith.mulf %321, %323 : vector<2x64xf32>
    %c0_99 = arith.constant 0 : index
    %c0_100 = arith.constant 0 : index
    %325 = vector.load %arg18[%c0_99, %c0_100] : memref<1x64xf32, #tpu.memory_space<vmem>>, vector<1x64xf32>
    %326 = vector.broadcast %325 : vector<1x64xf32> to vector<2x64xf32>
    %327 = arith.addf %324, %326 : vector<2x64xf32>
    %cst_101 = arith.constant 0.000000e+00 : f32
    %328 = vector.broadcast %cst_101 : f32 to vector<2x64xf32>
    %329 = arith.maximumf %327, %328 : vector<2x64xf32>
    %c0_102 = arith.constant 0 : index
    %c0_103 = arith.constant 0 : index
    %330 = vector.load %arg19[%c0_102, %c0_103] : memref<64x32xf32, #tpu.memory_space<vmem>>, vector<64x32xf32>
    %cst_104 = arith.constant dense<0.000000e+00> : vector<2x32xf32>
    %331 = tpu.matmul %329, %330, %cst_104 {dimension_numbers = #tpu.dot_dimension_numbers<[1], [0], [0], [1], [0, 0, 1, 1], [], []>} : vector<2x64xf32>, vector<64x32xf32>, vector<2x32xf32> -> vector<2x32xf32>
    %c0_105 = arith.constant 0 : index
    %c0_106 = arith.constant 0 : index
    %332 = vector.load %arg20[%c0_105, %c0_106] : memref<1x32xf32, #tpu.memory_space<vmem>>, vector<1x32xf32>
    %333 = vector.broadcast %332 : vector<1x32xf32> to vector<2x32xf32>
    %334 = arith.mulf %331, %333 : vector<2x32xf32>
    %c0_107 = arith.constant 0 : index
    %c0_108 = arith.constant 0 : index
    %335 = vector.load %arg21[%c0_107, %c0_108] : memref<1x32xf32, #tpu.memory_space<vmem>>, vector<1x32xf32>
    %336 = vector.broadcast %335 : vector<1x32xf32> to vector<2x32xf32>
    %337 = arith.addf %334, %336 : vector<2x32xf32>
    %cst_109 = arith.constant 0.000000e+00 : f32
    %338 = vector.broadcast %cst_109 : f32 to vector<2x32xf32>
    %339 = arith.maximumf %337, %338 : vector<2x32xf32>
    %c0_110 = arith.constant 0 : index
    %c0_111 = arith.constant 0 : index
    %340 = vector.load %arg22[%c0_110, %c0_111] : memref<32x32xf32, #tpu.memory_space<vmem>>, vector<32x32xf32>
    %cst_112 = arith.constant dense<0.000000e+00> : vector<2x32xf32>
    %341 = tpu.matmul %339, %340, %cst_112 {dimension_numbers = #tpu.dot_dimension_numbers<[1], [0], [0], [1], [0, 0, 1, 1], [], []>} : vector<2x32xf32>, vector<32x32xf32>, vector<2x32xf32> -> vector<2x32xf32>
    %c0_113 = arith.constant 0 : index
    %c0_114 = arith.constant 0 : index
    %342 = vector.load %arg23[%c0_113, %c0_114] : memref<1x32xf32, #tpu.memory_space<vmem>>, vector<1x32xf32>
    %343 = vector.broadcast %342 : vector<1x32xf32> to vector<2x32xf32>
    %344 = arith.addf %341, %343 : vector<2x32xf32>
    %c0_115 = arith.constant 0 : index
    %c2 = arith.constant 2 : index
    %c0_116 = arith.constant 0 : index
    %345 = vector.load %arg14[%c0_115, %c2, %c0_116] : memref<2x4x8xf32, #tpu.memory_space<vmem>>, vector<2x1x8xf32>
    %346 = vector.shape_cast %345 : vector<2x1x8xf32> to vector<2x8xf32>
    %c0_117 = arith.constant 0 : index
    %c0_118 = arith.constant 0 : index
    %347 = vector.load %arg15[%c0_117, %c0_118] : memref<32x64xf32, #tpu.memory_space<vmem>>, vector<32x64xf32>
    %cst_119 = arith.constant dense<0.000000e+00> : vector<2x64xf32>
    %348 = tpu.matmul %344, %347, %cst_119 {dimension_numbers = #tpu.dot_dimension_numbers<[1], [0], [0], [1], [0, 0, 1, 1], [], []>} : vector<2x32xf32>, vector<32x64xf32>, vector<2x64xf32> -> vector<2x64xf32>
    %c0_120 = arith.constant 0 : index
    %c0_121 = arith.constant 0 : index
    %349 = vector.load %arg16[%c0_120, %c0_121] : memref<8x64xf32, #tpu.memory_space<vmem>>, vector<8x64xf32>
    %cst_122 = arith.constant dense<0.000000e+00> : vector<2x64xf32>
    %350 = tpu.matmul %346, %349, %cst_122 {dimension_numbers = #tpu.dot_dimension_numbers<[1], [0], [0], [1], [0, 0, 1, 1], [], []>} : vector<2x8xf32>, vector<8x64xf32>, vector<2x64xf32> -> vector<2x64xf32>
    %351 = arith.addf %348, %350 : vector<2x64xf32>
    %c0_123 = arith.constant 0 : index
    %c0_124 = arith.constant 0 : index
    %352 = vector.load %arg17[%c0_123, %c0_124] : memref<1x64xf32, #tpu.memory_space<vmem>>, vector<1x64xf32>
    %353 = vector.broadcast %352 : vector<1x64xf32> to vector<2x64xf32>
    %354 = arith.mulf %351, %353 : vector<2x64xf32>
    %c0_125 = arith.constant 0 : index
    %c0_126 = arith.constant 0 : index
    %355 = vector.load %arg18[%c0_125, %c0_126] : memref<1x64xf32, #tpu.memory_space<vmem>>, vector<1x64xf32>
    %356 = vector.broadcast %355 : vector<1x64xf32> to vector<2x64xf32>
    %357 = arith.addf %354, %356 : vector<2x64xf32>
    %cst_127 = arith.constant 0.000000e+00 : f32
    %358 = vector.broadcast %cst_127 : f32 to vector<2x64xf32>
    %359 = arith.maximumf %357, %358 : vector<2x64xf32>
    %c0_128 = arith.constant 0 : index
    %c0_129 = arith.constant 0 : index
    %360 = vector.load %arg19[%c0_128, %c0_129] : memref<64x32xf32, #tpu.memory_space<vmem>>, vector<64x32xf32>
    %cst_130 = arith.constant dense<0.000000e+00> : vector<2x32xf32>
    %361 = tpu.matmul %359, %360, %cst_130 {dimension_numbers = #tpu.dot_dimension_numbers<[1], [0], [0], [1], [0, 0, 1, 1], [], []>} : vector<2x64xf32>, vector<64x32xf32>, vector<2x32xf32> -> vector<2x32xf32>
    %c0_131 = arith.constant 0 : index
    %c0_132 = arith.constant 0 : index
    %362 = vector.load %arg20[%c0_131, %c0_132] : memref<1x32xf32, #tpu.memory_space<vmem>>, vector<1x32xf32>
    %363 = vector.broadcast %362 : vector<1x32xf32> to vector<2x32xf32>
    %364 = arith.mulf %361, %363 : vector<2x32xf32>
    %c0_133 = arith.constant 0 : index
    %c0_134 = arith.constant 0 : index
    %365 = vector.load %arg21[%c0_133, %c0_134] : memref<1x32xf32, #tpu.memory_space<vmem>>, vector<1x32xf32>
    %366 = vector.broadcast %365 : vector<1x32xf32> to vector<2x32xf32>
    %367 = arith.addf %364, %366 : vector<2x32xf32>
    %cst_135 = arith.constant 0.000000e+00 : f32
    %368 = vector.broadcast %cst_135 : f32 to vector<2x32xf32>
    %369 = arith.maximumf %367, %368 : vector<2x32xf32>
    %c0_136 = arith.constant 0 : index
    %c0_137 = arith.constant 0 : index
    %370 = vector.load %arg22[%c0_136, %c0_137] : memref<32x32xf32, #tpu.memory_space<vmem>>, vector<32x32xf32>
    %cst_138 = arith.constant dense<0.000000e+00> : vector<2x32xf32>
    %371 = tpu.matmul %369, %370, %cst_138 {dimension_numbers = #tpu.dot_dimension_numbers<[1], [0], [0], [1], [0, 0, 1, 1], [], []>} : vector<2x32xf32>, vector<32x32xf32>, vector<2x32xf32> -> vector<2x32xf32>
    %c0_139 = arith.constant 0 : index
    %c0_140 = arith.constant 0 : index
    %372 = vector.load %arg23[%c0_139, %c0_140] : memref<1x32xf32, #tpu.memory_space<vmem>>, vector<1x32xf32>
    %373 = vector.broadcast %372 : vector<1x32xf32> to vector<2x32xf32>
    %374 = arith.addf %371, %373 : vector<2x32xf32>
    %c0_141 = arith.constant 0 : index
    %c3 = arith.constant 3 : index
    %c0_142 = arith.constant 0 : index
    %375 = vector.load %arg14[%c0_141, %c3, %c0_142] : memref<2x4x8xf32, #tpu.memory_space<vmem>>, vector<2x1x8xf32>
    %376 = vector.shape_cast %375 : vector<2x1x8xf32> to vector<2x8xf32>
    %c0_143 = arith.constant 0 : index
    %c0_144 = arith.constant 0 : index
    %377 = vector.load %arg15[%c0_143, %c0_144] : memref<32x64xf32, #tpu.memory_space<vmem>>, vector<32x64xf32>
    %cst_145 = arith.constant dense<0.000000e+00> : vector<2x64xf32>
    %378 = tpu.matmul %374, %377, %cst_145 {dimension_numbers = #tpu.dot_dimension_numbers<[1], [0], [0], [1], [0, 0, 1, 1], [], []>} : vector<2x32xf32>, vector<32x64xf32>, vector<2x64xf32> -> vector<2x64xf32>
    %c0_146 = arith.constant 0 : index
    %c0_147 = arith.constant 0 : index
    %379 = vector.load %arg16[%c0_146, %c0_147] : memref<8x64xf32, #tpu.memory_space<vmem>>, vector<8x64xf32>
    %cst_148 = arith.constant dense<0.000000e+00> : vector<2x64xf32>
    %380 = tpu.matmul %376, %379, %cst_148 {dimension_numbers = #tpu.dot_dimension_numbers<[1], [0], [0], [1], [0, 0, 1, 1], [], []>} : vector<2x8xf32>, vector<8x64xf32>, vector<2x64xf32> -> vector<2x64xf32>
    %381 = arith.addf %378, %380 : vector<2x64xf32>
    %c0_149 = arith.constant 0 : index
    %c0_150 = arith.constant 0 : index
    %382 = vector.load %arg17[%c0_149, %c0_150] : memref<1x64xf32, #tpu.memory_space<vmem>>, vector<1x64xf32>
    %383 = vector.broadcast %382 : vector<1x64xf32> to vector<2x64xf32>
    %384 = arith.mulf %381, %383 : vector<2x64xf32>
    %c0_151 = arith.constant 0 : index
    %c0_152 = arith.constant 0 : index
    %385 = vector.load %arg18[%c0_151, %c0_152] : memref<1x64xf32, #tpu.memory_space<vmem>>, vector<1x64xf32>
    %386 = vector.broadcast %385 : vector<1x64xf32> to vector<2x64xf32>
    %387 = arith.addf %384, %386 : vector<2x64xf32>
    %cst_153 = arith.constant 0.000000e+00 : f32
    %388 = vector.broadcast %cst_153 : f32 to vector<2x64xf32>
    %389 = arith.maximumf %387, %388 : vector<2x64xf32>
    %c0_154 = arith.constant 0 : index
    %c0_155 = arith.constant 0 : index
    %390 = vector.load %arg19[%c0_154, %c0_155] : memref<64x32xf32, #tpu.memory_space<vmem>>, vector<64x32xf32>
    %cst_156 = arith.constant dense<0.000000e+00> : vector<2x32xf32>
    %391 = tpu.matmul %389, %390, %cst_156 {dimension_numbers = #tpu.dot_dimension_numbers<[1], [0], [0], [1], [0, 0, 1, 1], [], []>} : vector<2x64xf32>, vector<64x32xf32>, vector<2x32xf32> -> vector<2x32xf32>
    %c0_157 = arith.constant 0 : index
    %c0_158 = arith.constant 0 : index
    %392 = vector.load %arg20[%c0_157, %c0_158] : memref<1x32xf32, #tpu.memory_space<vmem>>, vector<1x32xf32>
    %393 = vector.broadcast %392 : vector<1x32xf32> to vector<2x32xf32>
    %394 = arith.mulf %391, %393 : vector<2x32xf32>
    %c0_159 = arith.constant 0 : index
    %c0_160 = arith.constant 0 : index
    %395 = vector.load %arg21[%c0_159, %c0_160] : memref<1x32xf32, #tpu.memory_space<vmem>>, vector<1x32xf32>
    %396 = vector.broadcast %395 : vector<1x32xf32> to vector<2x32xf32>
    %397 = arith.addf %394, %396 : vector<2x32xf32>
    %cst_161 = arith.constant 0.000000e+00 : f32
    %398 = vector.broadcast %cst_161 : f32 to vector<2x32xf32>
    %399 = arith.maximumf %397, %398 : vector<2x32xf32>
    %c0_162 = arith.constant 0 : index
    %c0_163 = arith.constant 0 : index
    %400 = vector.load %arg22[%c0_162, %c0_163] : memref<32x32xf32, #tpu.memory_space<vmem>>, vector<32x32xf32>
    %cst_164 = arith.constant dense<0.000000e+00> : vector<2x32xf32>
    %401 = tpu.matmul %399, %400, %cst_164 {dimension_numbers = #tpu.dot_dimension_numbers<[1], [0], [0], [1], [0, 0, 1, 1], [], []>} : vector<2x32xf32>, vector<32x32xf32>, vector<2x32xf32> -> vector<2x32xf32>
    %c0_165 = arith.constant 0 : index
    %c0_166 = arith.constant 0 : index
    %402 = vector.load %arg23[%c0_165, %c0_166] : memref<1x32xf32, #tpu.memory_space<vmem>>, vector<1x32xf32>
    %403 = vector.broadcast %402 : vector<1x32xf32> to vector<2x32xf32>
    %404 = arith.addf %401, %403 : vector<2x32xf32>
    %405 = tpu.concatenate %284, %314, %344, %374, %404 in 1 : vector<2x32xf32>, vector<2x32xf32>, vector<2x32xf32>, vector<2x32xf32>, vector<2x32xf32> -> vector<2x160xf32>
    %c0_167 = arith.constant 0 : index
    %c0_168 = arith.constant 0 : index
    %406 = vector.load %arg24[%c0_167, %c0_168] : memref<2x160xf32, #tpu.memory_space<vmem>>, vector<2x160xf32>
    tpu.vector_store %arg24[%c0_167, %c0_168], %405 {strides = array<i32>} : memref<2x160xf32, #tpu.memory_space<vmem>>, vector<2x160xf32>,
    return
  }
}

</mosaic_0001>

<llo_original>
// kernel: jepa_forward.1
$region0: #{jepa_forward.1}
  #allocation0 [shape = 'u32[]', space=smem, size = 0x4, offset = 0x4, fixed_abs, tag = 'smem constant byte address 0x4 - core index']
  #allocation1 [shape = 'u32[72,128]{1,0:T(1,128)}', space=vmem, size = 0x9000, scoped, tag = 'internal scratch']
  %s0 = inlined_call_operand.vmem [shape: bf16[128,64], index: 0, kind: input, shape index: {}]
  %s1 = inlined_call_operand.vmem [shape: bf16[64,64], index: 1, kind: input, shape index: {}]
  %s2 = inlined_call_operand.vmem [shape: f32[1,64], index: 2, kind: input, shape index: {}]
  %s3 = inlined_call_operand.vmem [shape: f32[1,64], index: 3, kind: input, shape index: {}]
  %s4 = inlined_call_operand.vmem [shape: f32[128,9], index: 4, kind: input, shape index: {}]
  %s5 = inlined_call_operand.vmem [shape: bf16[2,576,128], index: 5, kind: input, shape index: {}]
  %s6 = inlined_call_operand.vmem [shape: f32[2,1,128], index: 6, kind: input, shape index: {}]
  %s7 = inlined_call_operand.vmem [shape: f32[2,1,128], index: 7, kind: input, shape index: {}]
  %s8 = inlined_call_operand.vmem [shape: bf16[2,1152,64], index: 8, kind: input, shape index: {}]
  %s9 = inlined_call_operand.vmem [shape: f32[2,1,64], index: 9, kind: input, shape index: {}]
  %s10 = inlined_call_operand.vmem [shape: f32[2,1,64], index: 10, kind: input, shape index: {}]
  %s11 = inlined_call_operand.vmem [shape: f32[2,128], index: 11, kind: input, shape index: {}]
  %s12 = inlined_call_operand.vmem [shape: f32[64,32], index: 12, kind: input, shape index: {}]
  %s13 = inlined_call_operand.vmem [shape: f32[1,32], index: 13, kind: input, shape index: {}]
  %s14 = inlined_call_operand.vmem [shape: f32[2,4,8], index: 14, kind: input, shape index: {}]
  %s15 = inlined_call_operand.vmem [shape: f32[32,64], index: 15, kind: input, shape index: {}]
  %s16 = inlined_call_operand.vmem [shape: f32[8,64], index: 16, kind: input, shape index: {}]
  %s17 = inlined_call_operand.vmem [shape: f32[1,64], index: 17, kind: input, shape index: {}]
  %s18 = inlined_call_operand.vmem [shape: f32[1,64], index: 18, kind: input, shape index: {}]
  %s19 = inlined_call_operand.vmem [shape: f32[64,32], index: 19, kind: input, shape index: {}]
  %s20 = inlined_call_operand.vmem [shape: f32[1,32], index: 20, kind: input, shape index: {}]
  %s21 = inlined_call_operand.vmem [shape: f32[1,32], index: 21, kind: input, shape index: {}]
  %s22 = inlined_call_operand.vmem [shape: f32[32,32], index: 22, kind: input, shape index: {}]
  %s23 = inlined_call_operand.vmem [shape: f32[1,32], index: 23, kind: input, shape index: {}]
  %s24 = inlined_call_operand.vmem [shape: f32[2,160], index: 24, kind: output, shape index: {}]
  %s25 = sld [smem:[#allocation0]]
  $region106: #{jepa_forward.1} parent=0
    _
  %s27 = ssub.s32 1, %s25
  %s28 = scalar_select 0, %s27, %s25
  // Predicated region
  $region2: #{jepa_forward.1} parent=0 // pred_check
    _
  $region3: #{jepa_forward.1} parent=0 // pred_check_branch
    %30 = sbr.rel (0) target = $region5
  $region4: #{jepa_forward.1} parent=0 // pred_region
    _
  $region5: #{jepa_forward.1} parent=0 // pred_fallthru
    _
  // Predicated region
  $region6: #{jepa_forward.1} parent=0 // pred_check
    _
  $region7: #{jepa_forward.1} parent=0 // pred_check_branch
    %32 = sbr.rel (0) target = $region9
  $region8: #{jepa_forward.1} parent=0 // pred_region
    _
  $region9: #{jepa_forward.1} parent=0 // pred_fallthru
    _
  // Predicated region
  $region10: #{jepa_forward.1} parent=0 // pred_check
    _
  $region11: #{jepa_forward.1} parent=0 // pred_check_branch
    %34 = sbr.rel (0) target = $region13
  $region12: #{jepa_forward.1} parent=0 // pred_region
    _
  $region13: #{jepa_forward.1} parent=0 // pred_fallthru
    _
  // Predicated region
  $region14: #{jepa_forward.1} parent=0 // pred_check
    _
  $region15: #{jepa_forward.1} parent=0 // pred_check_branch
    %36 = sbr.rel (0) target = $region17
  $region16: #{jepa_forward.1} parent=0 // pred_region
    _
  $region17: #{jepa_forward.1} parent=0 // pred_fallthru
    _
  // Predicated region
  $region18: #{jepa_forward.1} parent=0 // pred_check
    _
  $region19: #{jepa_forward.1} parent=0 // pred_check_branch
    %38 = sbr.rel (0) target = $region21
  $region20: #{jepa_forward.1} parent=0 // pred_region
    _
  $region21: #{jepa_forward.1} parent=0 // pred_fallthru
    _
  // Predicated region
  $region22: #{jepa_forward.1} parent=0 // pred_check
    _
  $region23: #{jepa_forward.1} parent=0 // pred_check_branch
    %40 = sbr.rel (0) target = $region25
  $region24: #{jepa_forward.1} parent=0 // pred_region
    _
  $region25: #{jepa_forward.1} parent=0 // pred_fallthru
    _
  // Predicated region
  $region26: #{jepa_forward.1} parent=0 // pred_check
    _
  $region27: #{jepa_forward.1} parent=0 // pred_check_branch
    %42 = sbr.rel (0) target = $region29
  $region28: #{jepa_forward.1} parent=0 // pred_region
    _
  $region29: #{jepa_forward.1} parent=0 // pred_fallthru
    _
  // Predicated region
  $region30: #{jepa_forward.1} parent=0 // pred_check
    _
  $region31: #{jepa_forward.1} parent=0 // pred_check_branch
    %44 = sbr.rel (0) target = $region33
  $region32: #{jepa_forward.1} parent=0 // pred_region
    _
  $region33: #{jepa_forward.1} parent=0 // pred_fallthru
    _
  // Predicated region
  $region34: #{jepa_forward.1} parent=0 // pred_check
    _
  $region35: #{jepa_forward.1} parent=0 // pred_check_branch
    %46 = sbr.rel (0) target = $region37
  $region36: #{jepa_forward.1} parent=0 // pred_region
    _
  $region37: #{jepa_forward.1} parent=0 // pred_fallthru
    _
  // Predicated region
  $region38: #{jepa_forward.1} parent=0 // pred_check
    _
  $region39: #{jepa_forward.1} parent=0 // pred_check_branch
    %48 = sbr.rel (0) target = $region41
  $region40: #{jepa_forward.1} parent=0 // pred_region
    _
  $region41: #{jepa_forward.1} parent=0 // pred_fallthru
    _
  // Predicated region
  $region42: #{jepa_forward.1} parent=0 // pred_check
    _
  $region43: #{jepa_forward.1} parent=0 // pred_check_branch
    %50 = sbr.rel (0) target = $region45
  $region44: #{jepa_forward.1} parent=0 // pred_region
    _
  $region45: #{jepa_forward.1} parent=0 // pred_fallthru
    _
  // Predicated region
  $region46: #{jepa_forward.1} parent=0 // pred_check
    _
  $region47: #{jepa_forward.1} parent=0 // pred_check_branch
    %52 = sbr.rel (0) target = $region49
  $region48: #{jepa_forward.1} parent=0 // pred_region
    _
  $region49: #{jepa_forward.1} parent=0 // pred_fallthru
    _
  // Predicated region
  $region50: #{jepa_forward.1} parent=0 // pred_check
    _
  $region51: #{jepa_forward.1} parent=0 // pred_check_branch
    %54 = sbr.rel (0) target = $region53
  $region52: #{jepa_forward.1} parent=0 // pred_region
    _
  $region53: #{jepa_forward.1} parent=0 // pred_fallthru
    _
  // Predicated region
  $region54: #{jepa_forward.1} parent=0 // pred_check
    _
  $region55: #{jepa_forward.1} parent=0 // pred_check_branch
    %56 = sbr.rel (0) target = $region57
  $region56: #{jepa_forward.1} parent=0 // pred_region
    _
  $region57: #{jepa_forward.1} parent=0 // pred_fallthru
    _
  // Predicated region
  $region58: #{jepa_forward.1} parent=0 // pred_check
    _
  $region59: #{jepa_forward.1} parent=0 // pred_check_branch
    %58 = sbr.rel (0) target = $region61
  $region60: #{jepa_forward.1} parent=0 // pred_region
    _
  $region61: #{jepa_forward.1} parent=0 // pred_fallthru
    _
  // Predicated region
  $region62: #{jepa_forward.1} parent=0 // pred_check
    _
  $region63: #{jepa_forward.1} parent=0 // pred_check_branch
    %60 = sbr.rel (0) target = $region65
  $region64: #{jepa_forward.1} parent=0 // pred_region
    _
  $region65: #{jepa_forward.1} parent=0 // pred_fallthru
    _
  // Predicated region
  $region66: #{jepa_forward.1} parent=0 // pred_check
    _
  $region67: #{jepa_forward.1} parent=0 // pred_check_branch
    %62 = sbr.rel (0) target = $region69
  $region68: #{jepa_forward.1} parent=0 // pred_region
    _
  $region69: #{jepa_forward.1} parent=0 // pred_fallthru
    _
  // Predicated region
  $region70: #{jepa_forward.1} parent=0 // pred_check
    _
  $region71: #{jepa_forward.1} parent=0 // pred_check_branch
    %64 = sbr.rel (0) target = $region73
  $region72: #{jepa_forward.1} parent=0 // pred_region
    _
  $region73: #{jepa_forward.1} parent=0 // pred_fallthru
    _
  // Predicated region
  $region74: #{jepa_forward.1} parent=0 // pred_check
    _
  $region75: #{jepa_forward.1} parent=0 // pred_check_branch
    %66 = sbr.rel (0) target = $region77
  $region76: #{jepa_forward.1} parent=0 // pred_region
    _
  $region77: #{jepa_forward.1} parent=0 // pred_fallthru
    _
  // Predicated region
  $region78: #{jepa_forward.1} parent=0 // pred_check
    _
  $region79: #{jepa_forward.1} parent=0 // pred_check_branch
    %68 = sbr.rel (0) target = $region81
  $region80: #{jepa_forward.1} parent=0 // pred_region
    _
  $region81: #{jepa_forward.1} parent=0 // pred_fallthru
    _
  // Predicated region
  $region82: #{jepa_forward.1} parent=0 // pred_check
    _
  $region83: #{jepa_forward.1} parent=0 // pred_check_branch
    %70 = sbr.rel (0) target = $region85
  $region84: #{jepa_forward.1} parent=0 // pred_region
    _
  $region85: #{jepa_forward.1} parent=0 // pred_fallthru
    _
  // Predicated region
  $region86: #{jepa_forward.1} parent=0 // pred_check
    _
  $region87: #{jepa_forward.1} parent=0 // pred_check_branch
    %72 = sbr.rel (0) target = $region89
  $region88: #{jepa_forward.1} parent=0 // pred_region
    _
  $region89: #{jepa_forward.1} parent=0 // pred_fallthru
    _
  // Predicated region
  $region90: #{jepa_forward.1} parent=0 // pred_check
    _
  $region91: #{jepa_forward.1} parent=0 // pred_check_branch
    %74 = sbr.rel (0) target = $region93
  $region92: #{jepa_forward.1} parent=0 // pred_region
    _
  $region93: #{jepa_forward.1} parent=0 // pred_fallthru
    _
  // Predicated region
  $region94: #{jepa_forward.1} parent=0 // pred_check
    _
  $region95: #{jepa_forward.1} parent=0 // pred_check_branch
    %76 = sbr.rel (0) target = $region97
  $region96: #{jepa_forward.1} parent=0 // pred_region
    _
  $region97: #{jepa_forward.1} parent=0 // pred_fallthru
    _
  %v78 = vld [vmem:[%s0] sm:$0xf]
  %v79 = vld [vmem:[%s0 + $0x4] sm:$0xf]
  %v80 = vld [vmem:[%s0 + $0x8] sm:$0xf]
  %v81 = vld [vmem:[%s0 + $0xc] sm:$0xf]
  %v82 = vld [vmem:[%s0 + $0x10] sm:$0xf]
  %v83 = vld [vmem:[%s0 + $0x14] sm:$0xf]
  %v84 = vld [vmem:[%s0 + $0x18] sm:$0xf]
  %v85 = vld [vmem:[%s0 + $0x1c] sm:$0xf]
  %v86 = vld [vmem:[%s0 + $0x20] sm:$0xf]
  %v87 = vld [vmem:[%s0 + $0x24] sm:$0xf]
  %v88 = vld [vmem:[%s0 + $0x28] sm:$0xf]
  %v89 = vld [vmem:[%s0 + $0x2c] sm:$0xf]
  %v90 = vld [vmem:[%s0 + $0x30] sm:$0xf]
  %v91 = vld [vmem:[%s0 + $0x34] sm:$0xf]
  %v92 = vld [vmem:[%s0 + $0x38] sm:$0xf]
  %v93 = vld [vmem:[%s0 + $0x3c] sm:$0xf]
  %v94 = vld [vmem:[%s1] sm:$0xf]
  %v95 = vld [vmem:[%s1 + $0x4] sm:$0xf]
  %v96 = vld [vmem:[%s1 + $0x8] sm:$0xf]
  %v97 = vld [vmem:[%s1 + $0xc] sm:$0xf]
  %v98 = vld [vmem:[%s1 + $0x10] sm:$0xf]
  %v99 = vld [vmem:[%s1 + $0x14] sm:$0xf]
  %v100 = vld [vmem:[%s1 + $0x18] sm:$0xf]
  %v101 = vld [vmem:[%s1 + $0x1c] sm:$0xf]
  %v118 = vunpack.c.l.b16 %v78
  %v119 = vunpack.c.l.b16 %v79
  %v120 = vunpack.c.l.b16 %v80
  %v121 = vunpack.c.l.b16 %v81
  %v122 = vunpack.c.l.b16 %v82
  %v123 = vunpack.c.l.b16 %v83
  %v124 = vunpack.c.l.b16 %v84
  %v125 = vunpack.c.l.b16 %v85
  %v126 = vunpack.c.l.b16 %v86
  %v127 = vunpack.c.l.b16 %v87
  %v128 = vunpack.c.l.b16 %v88
  %v129 = vunpack.c.l.b16 %v89
  %v130 = vunpack.c.l.b16 %v90
  %v131 = vunpack.c.l.b16 %v91
  %v132 = vunpack.c.l.b16 %v92
  %v133 = vunpack.c.l.b16 %v93
  %v134 = vpack.c.b16 %v119, %v118
  %v135 = vpack.c.b16 %v121, %v120
  %v136 = vpack.c.b16 %v123, %v122
  %v137 = vpack.c.b16 %v125, %v124
  %v138 = vpack.c.b16 %v127, %v126
  %v139 = vpack.c.b16 %v129, %v128
  %v140 = vpack.c.b16 %v131, %v130
  %v141 = vpack.c.b16 %v133, %v132
  %v150 = vunpack.c.l.b16 %v94
  %v151 = vunpack.c.l.b16 %v95
  %v152 = vunpack.c.l.b16 %v96
  %v153 = vunpack.c.l.b16 %v97
  %v154 = vunpack.c.l.b16 %v98
  %v155 = vunpack.c.l.b16 %v99
  %v156 = vunpack.c.l.b16 %v100
  %v157 = vunpack.c.l.b16 %v101
  %v158 = vpack.c.b16 %v151, %v150
  %v159 = vpack.c.b16 %v153, %v152
  %v160 = vpack.c.b16 %v155, %v154
  %v161 = vpack.c.b16 %v157, %v156
  %vm166 = vcmask 523264
  %v168 = vsel %vm166, %v134, 0
  %v171 = vsel %vm166, %v135, 0
  %v174 = vsel %vm166, %v136, 0
  %v177 = vsel %vm166, %v137, 0
  %v180 = vsel %vm166, %v138, 0
  %v183 = vsel %vm166, %v139, 0
  %v186 = vsel %vm166, %v140, 0
  %v189 = vsel %vm166, %v141, 0
  %191 = vmatpush.bf16.msra.mxu0 0
  %192 = vmatpush.bf16.msra.mxu0 0
  %193 = vmatpush.bf16.msra.mxu0 0
  %194 = vmatpush.bf16.msra.mxu0 0
  %195 = vmatpush.bf16.msra.mxu0 %v161
  %196 = vmatpush.bf16.msra.mxu0 %v160
  %197 = vmatpush.bf16.msra.mxu0 %v159
  %198 = vmatpush.bf16.msra.mxu0 %v158
  %199 = vmatmul.bf16.gmra.mxu0 %v168
  %v200 = vpop.f32.mrf.mxu0
  %v201 = vadd.f32 0.0, %v200
  %v202 = vpop.f32.mrf.mxu0
  %v203 = vadd.f32 0.0, %v202
  %204 = vmatmul.bf16.gmra.mxu0 %v171
  %v205 = vpop.f32.mrf.mxu0
  %v206 = vadd.f32 0.0, %v205
  %v207 = vpop.f32.mrf.mxu0
  %v208 = vadd.f32 0.0, %v207
  %209 = vmatmul.bf16.gmra.mxu0 %v174
  %v210 = vpop.f32.mrf.mxu0
  %v211 = vadd.f32 0.0, %v210
  %v212 = vpop.f32.mrf.mxu0
  %v213 = vadd.f32 0.0, %v212
  %214 = vmatmul.bf16.gmra.mxu0 %v177
  %v215 = vpop.f32.mrf.mxu0
  %v216 = vadd.f32 0.0, %v215
  %v217 = vpop.f32.mrf.mxu0
  %v218 = vadd.f32 0.0, %v217
  %219 = vmatmul.bf16.gmra.mxu0 %v180
  %v220 = vpop.f32.mrf.mxu0
  %v221 = vadd.f32 0.0, %v220
  %v222 = vpop.f32.mrf.mxu0
  %v223 = vadd.f32 0.0, %v222
  %224 = vmatmul.bf16.gmra.mxu0 %v183
  %v225 = vpop.f32.mrf.mxu0
  %v226 = vadd.f32 0.0, %v225
  %v227 = vpop.f32.mrf.mxu0
  %v228 = vadd.f32 0.0, %v227
  %229 = vmatmul.bf16.gmra.mxu0 %v186
  %v230 = vpop.f32.mrf.mxu0
  %v231 = vadd.f32 0.0, %v230
  %v232 = vpop.f32.mrf.mxu0
  %v233 = vadd.f32 0.0, %v232
  %234 = vmatmul.bf16.gmra.mxu0 %v189
  %v235 = vpop.f32.mrf.mxu0
  %v236 = vadd.f32 0.0, %v235
  %v237 = vpop.f32.mrf.mxu0
  %v238 = vadd.f32 0.0, %v237
  %239 = vdwg.mxu0
  %v240 = vld [vmem:[%s2] sm:$0x1]
  %v242 = vperm.slane %v240, 0
  %v244 = vmul.f32 %v201, %v242
  %v245 = vmul.f32 %v203, %v242
  %v246 = vmul.f32 %v206, %v242
  %v247 = vmul.f32 %v208, %v242
  %v248 = vmul.f32 %v211, %v242
  %v249 = vmul.f32 %v213, %v242
  %v250 = vmul.f32 %v216, %v242
  %v251 = vmul.f32 %v218, %v242
  %v252 = vmul.f32 %v221, %v242
  %v253 = vmul.f32 %v223, %v242
  %v254 = vmul.f32 %v226, %v242
  %v255 = vmul.f32 %v228, %v242
  %v256 = vmul.f32 %v231, %v242
  %v257 = vmul.f32 %v233, %v242
  %v258 = vmul.f32 %v236, %v242
  %v259 = vmul.f32 %v238, %v242
  %v260 = vld [vmem:[%s3] sm:$0x1]
  %v262 = vperm.slane %v260, 0
  %v264 = vadd.f32 %v244, %v262
  %v265 = vadd.f32 %v245, %v262
  %v266 = vadd.f32 %v246, %v262
  %v267 = vadd.f32 %v247, %v262
  %v268 = vadd.f32 %v248, %v262
  %v269 = vadd.f32 %v249, %v262
  %v270 = vadd.f32 %v250, %v262
  %v271 = vadd.f32 %v251, %v262
  %v272 = vadd.f32 %v252, %v262
  %v273 = vadd.f32 %v253, %v262
  %v274 = vadd.f32 %v254, %v262
  %v275 = vadd.f32 %v255, %v262
  %v276 = vadd.f32 %v256, %v262
  %v277 = vadd.f32 %v257, %v262
  %v278 = vadd.f32 %v258, %v262
  %v279 = vadd.f32 %v259, %v262
  %v280 = vmax.f32 %v264, 0.0
  %v281 = vmax.f32 %v265, 0.0
  %v282 = vmax.f32 %v266, 0.0
  %v283 = vmax.f32 %v267, 0.0
  %v284 = vmax.f32 %v268, 0.0
  %v285 = vmax.f32 %v269, 0.0
  %v286 = vmax.f32 %v270, 0.0
  %v287 = vmax.f32 %v271, 0.0
  %v288 = vmax.f32 %v272, 0.0
  %v289 = vmax.f32 %v273, 0.0
  %v290 = vmax.f32 %v274, 0.0
  %v291 = vmax.f32 %v275, 0.0
  %v292 = vmax.f32 %v276, 0.0
  %v293 = vmax.f32 %v277, 0.0
  %v294 = vmax.f32 %v278, 0.0
  %v295 = vmax.f32 %v279, 0.0
  %v296 = vld [vmem:[%s4] sm:$0xff]
  %v297 = vld [vmem:[%s4 + $0x8] sm:$0xff]
  %v298 = vld [vmem:[%s4 + $0x10] sm:$0xff]
  %v299 = vld [vmem:[%s4 + $0x18] sm:$0xff]
  %v300 = vld [vmem:[%s4 + $0x20] sm:$0xff]
  %v301 = vld [vmem:[%s4 + $0x28] sm:$0xff]
  %v302 = vld [vmem:[%s4 + $0x30] sm:$0xff]
  %v303 = vld [vmem:[%s4 + $0x38] sm:$0xff]
  %v304 = vld [vmem:[%s4 + $0x40] sm:$0xff]
  %v305 = vld [vmem:[%s4 + $0x48] sm:$0xff]
  %v306 = vld [vmem:[%s4 + $0x50] sm:$0xff]
  %v307 = vld [vmem:[%s4 + $0x58] sm:$0xff]
  %v308 = vld [vmem:[%s4 + $0x60] sm:$0xff]
  %v309 = vld [vmem:[%s4 + $0x68] sm:$0xff]
  %v310 = vld [vmem:[%s4 + $0x70] sm:$0xff]
  %v311 = vld [vmem:[%s4 + $0x78] sm:$0xff]
  %vm314 = vcmask 1040384
  %v315 = vrot.slane %v294, 7
  %v316 = vrot.slane %v295, 7
  %v317 = vsel %vm314, %v315, %v316
  %v334 = vrot.slane %v280, 7
  %v335 = vrot.slane %v281, 7
  %v336 = vsel %vm314, %v334, %v335
  %v337 = vrot.slane %v282, 7
  %v338 = vsel %vm314, %v335, %v337
  %v339 = vrot.slane %v283, 7
  %v340 = vsel %vm314, %v337, %v339
  %v341 = vrot.slane %v284, 7
  %v342 = vsel %vm314, %v339, %v341
  %v343 = vrot.slane %v285, 7
  %v344 = vsel %vm314, %v341, %v343
  %v345 = vrot.slane %v286, 7
  %v346 = vsel %vm314, %v343, %v345
  %v347 = vrot.slane %v287, 7
  %v348 = vsel %vm314, %v345, %v347
  %v349 = vrot.slane %v288, 7
  %v350 = vsel %vm314, %v347, %v349
  %v351 = vrot.slane %v289, 7
  %v352 = vsel %vm314, %v349, %v351
  %v353 = vrot.slane %v290, 7
  %v354 = vsel %vm314, %v351, %v353
  %v355 = vrot.slane %v291, 7
  %v356 = vsel %vm314, %v353, %v355
  %v357 = vrot.slane %v292, 7
  %v358 = vsel %vm314, %v355, %v357
  %v359 = vrot.slane %v293, 7
  %v360 = vsel %vm314, %v357, %v359
  %v361 = vsel %vm314, %v359, %v315
  %v377 = vsel %vm314, %v316, %v334
  %379 = vset.pattern.permute.xlu0 0
  %380 = vperm.xlu0 %379, %v296
  %v381 = vpop.permute.xlu0 %380
  %384 = vset.pattern.permute.xlu0 0
  %385 = vperm.xlu0 %384, %v297
  %v386 = vpop.permute.xlu0 %385
  %389 = vset.pattern.permute.xlu0 0
  %390 = vperm.xlu0 %389, %v298
  %v391 = vpop.permute.xlu0 %390
  %394 = vset.pattern.permute.xlu0 0
  %395 = vperm.xlu0 %394, %v299
  %v396 = vpop.permute.xlu0 %395
  %399 = vset.pattern.permute.xlu0 0
  %400 = vperm.xlu0 %399, %v300
  %v401 = vpop.permute.xlu0 %400
  %404 = vset.pattern.permute.xlu0 0
  %405 = vperm.xlu0 %404, %v301
  %v406 = vpop.permute.xlu0 %405
  %409 = vset.pattern.permute.xlu0 0
  %410 = vperm.xlu0 %409, %v302
  %v411 = vpop.permute.xlu0 %410
  %414 = vset.pattern.permute.xlu0 0
  %415 = vperm.xlu0 %414, %v303
  %v416 = vpop.permute.xlu0 %415
  %419 = vset.pattern.permute.xlu0 0
  %420 = vperm.xlu0 %419, %v304
  %v421 = vpop.permute.xlu0 %420
  %424 = vset.pattern.permute.xlu0 0
  %425 = vperm.xlu0 %424, %v305
  %v426 = vpop.permute.xlu0 %425
  %429 = vset.pattern.permute.xlu0 0
  %430 = vperm.xlu0 %429, %v306
  %v431 = vpop.permute.xlu0 %430
  %434 = vset.pattern.permute.xlu0 0
  %435 = vperm.xlu0 %434, %v307
  %v436 = vpop.permute.xlu0 %435
  %439 = vset.pattern.permute.xlu0 0
  %440 = vperm.xlu0 %439, %v308
  %v441 = vpop.permute.xlu0 %440
  %444 = vset.pattern.permute.xlu0 0
  %445 = vperm.xlu0 %444, %v309
  %v446 = vpop.permute.xlu0 %445
  %449 = vset.pattern.permute.xlu0 0
  %450 = vperm.xlu0 %449, %v310
  %v451 = vpop.permute.xlu0 %450
  %454 = vset.pattern.permute.xlu0 0
  %455 = vperm.xlu0 %454, %v311
  %v456 = vpop.permute.xlu0 %455
  %v458 = vmul.f32 %v317, %v381
  %v459 = vmul.f32 %v377, %v386
  %v460 = vmul.f32 %v336, %v391
  %v461 = vmul.f32 %v338, %v396
  %v462 = vmul.f32 %v340, %v401
  %v463 = vmul.f32 %v342, %v406
  %v464 = vmul.f32 %v344, %v411
  %v465 = vmul.f32 %v346, %v416
  %v466 = vmul.f32 %v348, %v421
  %v467 = vmul.f32 %v350, %v426
  %v468 = vmul.f32 %v352, %v431
  %v469 = vmul.f32 %v354, %v436
  %v470 = vmul.f32 %v356, %v441
  %v471 = vmul.f32 %v358, %v446
  %v472 = vmul.f32 %v360, %v451
  %v473 = vmul.f32 %v361, %v456
  %474 = vset.pattern.permute.xlu0 1
  %475 = vperm.xlu0 %474, %v296
  %v476 = vpop.permute.xlu0 %475
  %478 = vset.pattern.permute.xlu0 1
  %479 = vperm.xlu0 %478, %v297
  %v480 = vpop.permute.xlu0 %479
  %482 = vset.pattern.permute.xlu0 1
  %483 = vperm.xlu0 %482, %v298
  %v484 = vpop.permute.xlu0 %483
  %486 = vset.pattern.permute.xlu0 1
  %487 = vperm.xlu0 %486, %v299
  %v488 = vpop.permute.xlu0 %487
  %490 = vset.pattern.permute.xlu0 1
  %491 = vperm.xlu0 %490, %v300
  %v492 = vpop.permute.xlu0 %491
  %494 = vset.pattern.permute.xlu0 1
  %495 = vperm.xlu0 %494, %v301
  %v496 = vpop.permute.xlu0 %495
  %498 = vset.pattern.permute.xlu0 1
  %499 = vperm.xlu0 %498, %v302
  %v500 = vpop.permute.xlu0 %499
  %502 = vset.pattern.permute.xlu0 1
  %503 = vperm.xlu0 %502, %v303
  %v504 = vpop.permute.xlu0 %503
  %506 = vset.pattern.permute.xlu0 1
  %507 = vperm.xlu0 %506, %v304
  %v508 = vpop.permute.xlu0 %507
  %510 = vset.pattern.permute.xlu0 1
  %511 = vperm.xlu0 %510, %v305
  %v512 = vpop.permute.xlu0 %511
  %514 = vset.pattern.permute.xlu0 1
  %515 = vperm.xlu0 %514, %v306
  %v516 = vpop.permute.xlu0 %515
  %518 = vset.pattern.permute.xlu0 1
  %519 = vperm.xlu0 %518, %v307
  %v520 = vpop.permute.xlu0 %519
  %522 = vset.pattern.permute.xlu0 1
  %523 = vperm.xlu0 %522, %v308
  %v524 = vpop.permute.xlu0 %523
  %526 = vset.pattern.permute.xlu0 1
  %527 = vperm.xlu0 %526, %v309
  %v528 = vpop.permute.xlu0 %527
  %530 = vset.pattern.permute.xlu0 1
  %531 = vperm.xlu0 %530, %v310
  %v532 = vpop.permute.xlu0 %531
  %534 = vset.pattern.permute.xlu0 1
  %535 = vperm.xlu0 %534, %v311
  %v536 = vpop.permute.xlu0 %535
  %v538 = vmul.f32 %v295, %v476
  %v539 = vmul.f32 %v280, %v480
  %v540 = vmul.f32 %v281, %v484
  %v541 = vmul.f32 %v282, %v488
  %v542 = vmul.f32 %v283, %v492
  %v543 = vmul.f32 %v284, %v496
  %v544 = vmul.f32 %v285, %v500
  %v545 = vmul.f32 %v286, %v504
  %v546 = vmul.f32 %v287, %v508
  %v547 = vmul.f32 %v288, %v512
  %v548 = vmul.f32 %v289, %v516
  %v549 = vmul.f32 %v290, %v520
  %v550 = vmul.f32 %v291, %v524
  %v551 = vmul.f32 %v292, %v528
  %v552 = vmul.f32 %v293, %v532
  %v553 = vmul.f32 %v294, %v536
  %v554 = vrot.slane %v295, 1
  %vm556 = vcmask 1046528
  %v557 = vrot.slane %v280, 1
  %v558 = vrot.slane %v281, 1
  %v559 = vsel %vm556, %v557, %v558
  %v560 = vrot.slane %v282, 1
  %v561 = vsel %vm556, %v558, %v560
  %v562 = vrot.slane %v283, 1
  %v563 = vsel %vm556, %v560, %v562
  %v564 = vrot.slane %v284, 1
  %v565 = vsel %vm556, %v562, %v564
  %v566 = vrot.slane %v285, 1
  %v567 = vsel %vm556, %v564, %v566
  %v568 = vrot.slane %v286, 1
  %v569 = vsel %vm556, %v566, %v568
  %v570 = vrot.slane %v287, 1
  %v571 = vsel %vm556, %v568, %v570
  %v572 = vrot.slane %v288, 1
  %v573 = vsel %vm556, %v570, %v572
  %v574 = vrot.slane %v289, 1
  %v575 = vsel %vm556, %v572, %v574
  %v576 = vrot.slane %v290, 1
  %v577 = vsel %vm556, %v574, %v576
  %v578 = vrot.slane %v291, 1
  %v579 = vsel %vm556, %v576, %v578
  %v580 = vrot.slane %v292, 1
  %v581 = vsel %vm556, %v578, %v580
  %v582 = vrot.slane %v293, 1
  %v583 = vsel %vm556, %v580, %v582
  %v584 = vrot.slane %v294, 1
  %v585 = vsel %vm556, %v582, %v584
  %v586 = vsel %vm556, %v584, %v554
  %v603 = vsel %vm556, %v554, %v557
  %604 = vset.pattern.permute.xlu0 2
  %605 = vperm.xlu0 %604, %v296
  %v606 = vpop.permute.xlu0 %605
  %608 = vset.pattern.permute.xlu0 2
  %609 = vperm.xlu0 %608, %v297
  %v610 = vpop.permute.xlu0 %609
  %612 = vset.pattern.permute.xlu0 2
  %613 = vperm.xlu0 %612, %v298
  %v614 = vpop.permute.xlu0 %613
  %616 = vset.pattern.permute.xlu0 2
  %617 = vperm.xlu0 %616, %v299
  %v618 = vpop.permute.xlu0 %617
  %620 = vset.pattern.permute.xlu0 2
  %621 = vperm.xlu0 %620, %v300
  %v622 = vpop.permute.xlu0 %621
  %624 = vset.pattern.permute.xlu0 2
  %625 = vperm.xlu0 %624, %v301
  %v626 = vpop.permute.xlu0 %625
  %628 = vset.pattern.permute.xlu0 2
  %629 = vperm.xlu0 %628, %v302
  %v630 = vpop.permute.xlu0 %629
  %632 = vset.pattern.permute.xlu0 2
  %633 = vperm.xlu0 %632, %v303
  %v634 = vpop.permute.xlu0 %633
  %636 = vset.pattern.permute.xlu0 2
  %637 = vperm.xlu0 %636, %v304
  %v638 = vpop.permute.xlu0 %637
  %640 = vset.pattern.permute.xlu0 2
  %641 = vperm.xlu0 %640, %v305
  %v642 = vpop.permute.xlu0 %641
  %644 = vset.pattern.permute.xlu0 2
  %645 = vperm.xlu0 %644, %v306
  %v646 = vpop.permute.xlu0 %645
  %648 = vset.pattern.permute.xlu0 2
  %649 = vperm.xlu0 %648, %v307
  %v650 = vpop.permute.xlu0 %649
  %652 = vset.pattern.permute.xlu0 2
  %653 = vperm.xlu0 %652, %v308
  %v654 = vpop.permute.xlu0 %653
  %656 = vset.pattern.permute.xlu0 2
  %657 = vperm.xlu0 %656, %v309
  %v658 = vpop.permute.xlu0 %657
  %660 = vset.pattern.permute.xlu0 2
  %661 = vperm.xlu0 %660, %v310
  %v662 = vpop.permute.xlu0 %661
  %664 = vset.pattern.permute.xlu0 2
  %665 = vperm.xlu0 %664, %v311
  %v666 = vpop.permute.xlu0 %665
  %v668 = vmul.f32 %v603, %v606
  %v669 = vmul.f32 %v559, %v610
  %v670 = vmul.f32 %v561, %v614
  %v671 = vmul.f32 %v563, %v618
  %v672 = vmul.f32 %v565, %v622
  %v673 = vmul.f32 %v567, %v626
  %v674 = vmul.f32 %v569, %v630
  %v675 = vmul.f32 %v571, %v634
  %v676 = vmul.f32 %v573, %v638
  %v677 = vmul.f32 %v575, %v642
  %v678 = vmul.f32 %v577, %v646
  %v679 = vmul.f32 %v579, %v650
  %v680 = vmul.f32 %v581, %v654
  %v681 = vmul.f32 %v583, %v658
  %v682 = vmul.f32 %v585, %v662
  %v683 = vmul.f32 %v586, %v666
  %684 = vset.pattern.permute.xlu0 3
  %685 = vperm.xlu0 %684, %v296
  %v686 = vpop.permute.xlu0 %685
  %688 = vset.pattern.permute.xlu0 3
  %689 = vperm.xlu0 %688, %v297
  %v690 = vpop.permute.xlu0 %689
  %692 = vset.pattern.permute.xlu0 3
  %693 = vperm.xlu0 %692, %v298
  %v694 = vpop.permute.xlu0 %693
  %696 = vset.pattern.permute.xlu0 3
  %697 = vperm.xlu0 %696, %v299
  %v698 = vpop.permute.xlu0 %697
  %700 = vset.pattern.permute.xlu0 3
  %701 = vperm.xlu0 %700, %v300
  %v702 = vpop.permute.xlu0 %701
  %704 = vset.pattern.permute.xlu0 3
  %705 = vperm.xlu0 %704, %v301
  %v706 = vpop.permute.xlu0 %705
  %708 = vset.pattern.permute.xlu0 3
  %709 = vperm.xlu0 %708, %v302
  %v710 = vpop.permute.xlu0 %709
  %712 = vset.pattern.permute.xlu0 3
  %713 = vperm.xlu0 %712, %v303
  %v714 = vpop.permute.xlu0 %713
  %716 = vset.pattern.permute.xlu0 3
  %717 = vperm.xlu0 %716, %v304
  %v718 = vpop.permute.xlu0 %717
  %720 = vset.pattern.permute.xlu0 3
  %721 = vperm.xlu0 %720, %v305
  %v722 = vpop.permute.xlu0 %721
  %724 = vset.pattern.permute.xlu0 3
  %725 = vperm.xlu0 %724, %v306
  %v726 = vpop.permute.xlu0 %725
  %728 = vset.pattern.permute.xlu0 3
  %729 = vperm.xlu0 %728, %v307
  %v730 = vpop.permute.xlu0 %729
  %732 = vset.pattern.permute.xlu0 3
  %733 = vperm.xlu0 %732, %v308
  %v734 = vpop.permute.xlu0 %733
  %736 = vset.pattern.permute.xlu0 3
  %737 = vperm.xlu0 %736, %v309
  %v738 = vpop.permute.xlu0 %737
  %740 = vset.pattern.permute.xlu0 3
  %741 = vperm.xlu0 %740, %v310
  %v742 = vpop.permute.xlu0 %741
  %744 = vset.pattern.permute.xlu0 3
  %745 = vperm.xlu0 %744, %v311
  %v746 = vpop.permute.xlu0 %745
  %v748 = vmul.f32 %v377, %v686
  %v749 = vmul.f32 %v336, %v690
  %v750 = vmul.f32 %v338, %v694
  %v751 = vmul.f32 %v340, %v698
  %v752 = vmul.f32 %v342, %v702
  %v753 = vmul.f32 %v344, %v706
  %v754 = vmul.f32 %v346, %v710
  %v755 = vmul.f32 %v348, %v714
  %v756 = vmul.f32 %v350, %v718
  %v757 = vmul.f32 %v352, %v722
  %v758 = vmul.f32 %v354, %v726
  %v759 = vmul.f32 %v356, %v730
  %v760 = vmul.f32 %v358, %v734
  %v761 = vmul.f32 %v360, %v738
  %v762 = vmul.f32 %v361, %v742
  %v763 = vmul.f32 %v317, %v746
  %764 = vset.pattern.permute.xlu0 4
  %765 = vperm.xlu0 %764, %v296
  %v766 = vpop.permute.xlu0 %765
  %768 = vset.pattern.permute.xlu0 4
  %769 = vperm.xlu0 %768, %v297
  %v770 = vpop.permute.xlu0 %769
  %772 = vset.pattern.permute.xlu0 4
  %773 = vperm.xlu0 %772, %v298
  %v774 = vpop.permute.xlu0 %773
  %776 = vset.pattern.permute.xlu0 4
  %777 = vperm.xlu0 %776, %v299
  %v778 = vpop.permute.xlu0 %777
  %780 = vset.pattern.permute.xlu0 4
  %781 = vperm.xlu0 %780, %v300
  %v782 = vpop.permute.xlu0 %781
  %784 = vset.pattern.permute.xlu0 4
  %785 = vperm.xlu0 %784, %v301
  %v786 = vpop.permute.xlu0 %785
  %788 = vset.pattern.permute.xlu0 4
  %789 = vperm.xlu0 %788, %v302
  %v790 = vpop.permute.xlu0 %789
  %792 = vset.pattern.permute.xlu0 4
  %793 = vperm.xlu0 %792, %v303
  %v794 = vpop.permute.xlu0 %793
  %796 = vset.pattern.permute.xlu0 4
  %797 = vperm.xlu0 %796, %v304
  %v798 = vpop.permute.xlu0 %797
  %800 = vset.pattern.permute.xlu0 4
  %801 = vperm.xlu0 %800, %v305
  %v802 = vpop.permute.xlu0 %801
  %804 = vset.pattern.permute.xlu0 4
  %805 = vperm.xlu0 %804, %v306
  %v806 = vpop.permute.xlu0 %805
  %808 = vset.pattern.permute.xlu0 4
  %809 = vperm.xlu0 %808, %v307
  %v810 = vpop.permute.xlu0 %809
  %812 = vset.pattern.permute.xlu0 4
  %813 = vperm.xlu0 %812, %v308
  %v814 = vpop.permute.xlu0 %813
  %816 = vset.pattern.permute.xlu0 4
  %817 = vperm.xlu0 %816, %v309
  %v818 = vpop.permute.xlu0 %817
  %820 = vset.pattern.permute.xlu0 4
  %821 = vperm.xlu0 %820, %v310
  %v822 = vpop.permute.xlu0 %821
  %824 = vset.pattern.permute.xlu0 4
  %825 = vperm.xlu0 %824, %v311
  %v826 = vpop.permute.xlu0 %825
  %v828 = vmul.f32 %v280, %v766
  %v829 = vmul.f32 %v281, %v770
  %v830 = vmul.f32 %v282, %v774
  %v831 = vmul.f32 %v283, %v778
  %v832 = vmul.f32 %v284, %v782
  %v833 = vmul.f32 %v285, %v786
  %v834 = vmul.f32 %v286, %v790
  %v835 = vmul.f32 %v287, %v794
  %v836 = vmul.f32 %v288, %v798
  %v837 = vmul.f32 %v289, %v802
  %v838 = vmul.f32 %v290, %v806
  %v839 = vmul.f32 %v291, %v810
  %v840 = vmul.f32 %v292, %v814
  %v841 = vmul.f32 %v293, %v818
  %v842 = vmul.f32 %v294, %v822
  %v843 = vmul.f32 %v295, %v826
  %844 = vset.pattern.permute.xlu0 5
  %845 = vperm.xlu0 %844, %v296
  %v846 = vpop.permute.xlu0 %845
  %848 = vset.pattern.permute.xlu0 5
  %849 = vperm.xlu0 %848, %v297
  %v850 = vpop.permute.xlu0 %849
  %852 = vset.pattern.permute.xlu0 5
  %853 = vperm.xlu0 %852, %v298
  %v854 = vpop.permute.xlu0 %853
  %856 = vset.pattern.permute.xlu0 5
  %857 = vperm.xlu0 %856, %v299
  %v858 = vpop.permute.xlu0 %857
  %860 = vset.pattern.permute.xlu0 5
  %861 = vperm.xlu0 %860, %v300
  %v862 = vpop.permute.xlu0 %861
  %864 = vset.pattern.permute.xlu0 5
  %865 = vperm.xlu0 %864, %v301
  %v866 = vpop.permute.xlu0 %865
  %868 = vset.pattern.permute.xlu0 5
  %869 = vperm.xlu0 %868, %v302
  %v870 = vpop.permute.xlu0 %869
  %872 = vset.pattern.permute.xlu0 5
  %873 = vperm.xlu0 %872, %v303
  %v874 = vpop.permute.xlu0 %873
  %876 = vset.pattern.permute.xlu0 5
  %877 = vperm.xlu0 %876, %v304
  %v878 = vpop.permute.xlu0 %877
  %880 = vset.pattern.permute.xlu0 5
  %881 = vperm.xlu0 %880, %v305
  %v882 = vpop.permute.xlu0 %881
  %884 = vset.pattern.permute.xlu0 5
  %885 = vperm.xlu0 %884, %v306
  %v886 = vpop.permute.xlu0 %885
  %888 = vset.pattern.permute.xlu0 5
  %889 = vperm.xlu0 %888, %v307
  %v890 = vpop.permute.xlu0 %889
  %892 = vset.pattern.permute.xlu0 5
  %893 = vperm.xlu0 %892, %v308
  %v894 = vpop.permute.xlu0 %893
  %896 = vset.pattern.permute.xlu0 5
  %897 = vperm.xlu0 %896, %v309
  %v898 = vpop.permute.xlu0 %897
  %900 = vset.pattern.permute.xlu0 5
  %901 = vperm.xlu0 %900, %v310
  %v902 = vpop.permute.xlu0 %901
  %904 = vset.pattern.permute.xlu0 5
  %905 = vperm.xlu0 %904, %v311
  %v906 = vpop.permute.xlu0 %905
  %v908 = vmul.f32 %v559, %v846
  %v909 = vmul.f32 %v561, %v850
  %v910 = vmul.f32 %v563, %v854
  %v911 = vmul.f32 %v565, %v858
  %v912 = vmul.f32 %v567, %v862
  %v913 = vmul.f32 %v569, %v866
  %v914 = vmul.f32 %v571, %v870
  %v915 = vmul.f32 %v573, %v874
  %v916 = vmul.f32 %v575, %v878
  %v917 = vmul.f32 %v577, %v882
  %v918 = vmul.f32 %v579, %v886
  %v919 = vmul.f32 %v581, %v890
  %v920 = vmul.f32 %v583, %v894
  %v921 = vmul.f32 %v585, %v898
  %v922 = vmul.f32 %v586, %v902
  %v923 = vmul.f32 %v603, %v906
  %924 = vset.pattern.permute.xlu0 6
  %925 = vperm.xlu0 %924, %v296
  %v926 = vpop.permute.xlu0 %925
  %928 = vset.pattern.permute.xlu0 6
  %929 = vperm.xlu0 %928, %v297
  %v930 = vpop.permute.xlu0 %929
  %932 = vset.pattern.permute.xlu0 6
  %933 = vperm.xlu0 %932, %v298
  %v934 = vpop.permute.xlu0 %933
  %936 = vset.pattern.permute.xlu0 6
  %937 = vperm.xlu0 %936, %v299
  %v938 = vpop.permute.xlu0 %937
  %940 = vset.pattern.permute.xlu0 6
  %941 = vperm.xlu0 %940, %v300
  %v942 = vpop.permute.xlu0 %941
  %944 = vset.pattern.permute.xlu0 6
  %945 = vperm.xlu0 %944, %v301
  %v946 = vpop.permute.xlu0 %945
  %948 = vset.pattern.permute.xlu0 6
  %949 = vperm.xlu0 %948, %v302
  %v950 = vpop.permute.xlu0 %949
  %952 = vset.pattern.permute.xlu0 6
  %953 = vperm.xlu0 %952, %v303
  %v954 = vpop.permute.xlu0 %953
  %956 = vset.pattern.permute.xlu0 6
  %957 = vperm.xlu0 %956, %v304
  %v958 = vpop.permute.xlu0 %957
  %960 = vset.pattern.permute.xlu0 6
  %961 = vperm.xlu0 %960, %v305
  %v962 = vpop.permute.xlu0 %961
  %964 = vset.pattern.permute.xlu0 6
  %965 = vperm.xlu0 %964, %v306
  %v966 = vpop.permute.xlu0 %965
  %968 = vset.pattern.permute.xlu0 6
  %969 = vperm.xlu0 %968, %v307
  %v970 = vpop.permute.xlu0 %969
  %972 = vset.pattern.permute.xlu0 6
  %973 = vperm.xlu0 %972, %v308
  %v974 = vpop.permute.xlu0 %973
  %976 = vset.pattern.permute.xlu0 6
  %977 = vperm.xlu0 %976, %v309
  %v978 = vpop.permute.xlu0 %977
  %980 = vset.pattern.permute.xlu0 6
  %981 = vperm.xlu0 %980, %v310
  %v982 = vpop.permute.xlu0 %981
  %984 = vset.pattern.permute.xlu0 6
  %985 = vperm.xlu0 %984, %v311
  %v986 = vpop.permute.xlu0 %985
  %v988 = vmul.f32 %v336, %v926
  %v989 = vmul.f32 %v338, %v930
  %v990 = vmul.f32 %v340, %v934
  %v991 = vmul.f32 %v342, %v938
  %v992 = vmul.f32 %v344, %v942
  %v993 = vmul.f32 %v346, %v946
  %v994 = vmul.f32 %v348, %v950
  %v995 = vmul.f32 %v350, %v954
  %v996 = vmul.f32 %v352, %v958
  %v997 = vmul.f32 %v354, %v962
  %v998 = vmul.f32 %v356, %v966
  %v999 = vmul.f32 %v358, %v970
  %v1000 = vmul.f32 %v360, %v974
  %v1001 = vmul.f32 %v361, %v978
  %v1002 = vmul.f32 %v317, %v982
  %v1003 = vmul.f32 %v377, %v986
  %1004 = vset.pattern.permute.xlu0 7
  %1005 = vperm.xlu0 %1004, %v296
  %v1006 = vpop.permute.xlu0 %1005
  %1008 = vset.pattern.permute.xlu0 7
  %1009 = vperm.xlu0 %1008, %v297
  %v1010 = vpop.permute.xlu0 %1009
  %1012 = vset.pattern.permute.xlu0 7
  %1013 = vperm.xlu0 %1012, %v298
  %v1014 = vpop.permute.xlu0 %1013
  %1016 = vset.pattern.permute.xlu0 7
  %1017 = vperm.xlu0 %1016, %v299
  %v1018 = vpop.permute.xlu0 %1017
  %1020 = vset.pattern.permute.xlu0 7
  %1021 = vperm.xlu0 %1020, %v300
  %v1022 = vpop.permute.xlu0 %1021
  %1024 = vset.pattern.permute.xlu0 7
  %1025 = vperm.xlu0 %1024, %v301
  %v1026 = vpop.permute.xlu0 %1025
  %1028 = vset.pattern.permute.xlu0 7
  %1029 = vperm.xlu0 %1028, %v302
  %v1030 = vpop.permute.xlu0 %1029
  %1032 = vset.pattern.permute.xlu0 7
  %1033 = vperm.xlu0 %1032, %v303
  %v1034 = vpop.permute.xlu0 %1033
  %1036 = vset.pattern.permute.xlu0 7
  %1037 = vperm.xlu0 %1036, %v304
  %v1038 = vpop.permute.xlu0 %1037
  %1040 = vset.pattern.permute.xlu0 7
  %1041 = vperm.xlu0 %1040, %v305
  %v1042 = vpop.permute.xlu0 %1041
  %1044 = vset.pattern.permute.xlu0 7
  %1045 = vperm.xlu0 %1044, %v306
  %v1046 = vpop.permute.xlu0 %1045
  %1048 = vset.pattern.permute.xlu0 7
  %1049 = vperm.xlu0 %1048, %v307
  %v1050 = vpop.permute.xlu0 %1049
  %1052 = vset.pattern.permute.xlu0 7
  %1053 = vperm.xlu0 %1052, %v308
  %v1054 = vpop.permute.xlu0 %1053
  %1056 = vset.pattern.permute.xlu0 7
  %1057 = vperm.xlu0 %1056, %v309
  %v1058 = vpop.permute.xlu0 %1057
  %1060 = vset.pattern.permute.xlu0 7
  %1061 = vperm.xlu0 %1060, %v310
  %v1062 = vpop.permute.xlu0 %1061
  %1064 = vset.pattern.permute.xlu0 7
  %1065 = vperm.xlu0 %1064, %v311
  %v1066 = vpop.permute.xlu0 %1065
  %v1068 = vmul.f32 %v281, %v1006
  %v1069 = vmul.f32 %v282, %v1010
  %v1070 = vmul.f32 %v283, %v1014
  %v1071 = vmul.f32 %v284, %v1018
  %v1072 = vmul.f32 %v285, %v1022
  %v1073 = vmul.f32 %v286, %v1026
  %v1074 = vmul.f32 %v287, %v1030
  %v1075 = vmul.f32 %v288, %v1034
  %v1076 = vmul.f32 %v289, %v1038
  %v1077 = vmul.f32 %v290, %v1042
  %v1078 = vmul.f32 %v291, %v1046
  %v1079 = vmul.f32 %v292, %v1050
  %v1080 = vmul.f32 %v293, %v1054
  %v1081 = vmul.f32 %v294, %v1058
  %v1082 = vmul.f32 %v295, %v1062
  %v1083 = vmul.f32 %v280, %v1066
  %1084 = vset.pattern.permute.xlu0 8
  %1085 = vperm.xlu0 %1084, %v296
  %v1086 = vpop.permute.xlu0 %1085
  %1088 = vset.pattern.permute.xlu0 8
  %1089 = vperm.xlu0 %1088, %v297
  %v1090 = vpop.permute.xlu0 %1089
  %1092 = vset.pattern.permute.xlu0 8
  %1093 = vperm.xlu0 %1092, %v298
  %v1094 = vpop.permute.xlu0 %1093
  %1096 = vset.pattern.permute.xlu0 8
  %1097 = vperm.xlu0 %1096, %v299
  %v1098 = vpop.permute.xlu0 %1097
  %1100 = vset.pattern.permute.xlu0 8
  %1101 = vperm.xlu0 %1100, %v300
  %v1102 = vpop.permute.xlu0 %1101
  %1104 = vset.pattern.permute.xlu0 8
  %1105 = vperm.xlu0 %1104, %v301
  %v1106 = vpop.permute.xlu0 %1105
  %1108 = vset.pattern.permute.xlu0 8
  %1109 = vperm.xlu0 %1108, %v302
  %v1110 = vpop.permute.xlu0 %1109
  %1112 = vset.pattern.permute.xlu0 8
  %1113 = vperm.xlu0 %1112, %v303
  %v1114 = vpop.permute.xlu0 %1113
  %1116 = vset.pattern.permute.xlu0 8
  %1117 = vperm.xlu0 %1116, %v304
  %v1118 = vpop.permute.xlu0 %1117
  %1120 = vset.pattern.permute.xlu0 8
  %1121 = vperm.xlu0 %1120, %v305
  %v1122 = vpop.permute.xlu0 %1121
  %1124 = vset.pattern.permute.xlu0 8
  %1125 = vperm.xlu0 %1124, %v306
  %v1126 = vpop.permute.xlu0 %1125
  %1128 = vset.pattern.permute.xlu0 8
  %1129 = vperm.xlu0 %1128, %v307
  %v1130 = vpop.permute.xlu0 %1129
  %1132 = vset.pattern.permute.xlu0 8
  %1133 = vperm.xlu0 %1132, %v308
  %v1134 = vpop.permute.xlu0 %1133
  %1136 = vset.pattern.permute.xlu0 8
  %1137 = vperm.xlu0 %1136, %v309
  %v1138 = vpop.permute.xlu0 %1137
  %1140 = vset.pattern.permute.xlu0 8
  %1141 = vperm.xlu0 %1140, %v310
  %v1142 = vpop.permute.xlu0 %1141
  %1144 = vset.pattern.permute.xlu0 8
  %1145 = vperm.xlu0 %1144, %v311
  %v1146 = vpop.permute.xlu0 %1145
  %v1148 = vmul.f32 %v561, %v1086
  %v1149 = vmul.f32 %v563, %v1090
  %v1150 = vmul.f32 %v565, %v1094
  %v1151 = vmul.f32 %v567, %v1098
  %v1152 = vmul.f32 %v569, %v1102
  %v1153 = vmul.f32 %v571, %v1106
  %v1154 = vmul.f32 %v573, %v1110
  %v1155 = vmul.f32 %v575, %v1114
  %v1156 = vmul.f32 %v577, %v1118
  %v1157 = vmul.f32 %v579, %v1122
  %v1158 = vmul.f32 %v581, %v1126
  %v1159 = vmul.f32 %v583, %v1130
  %v1160 = vmul.f32 %v585, %v1134
  %v1161 = vmul.f32 %v586, %v1138
  %v1162 = vmul.f32 %v603, %v1142
  %v1163 = vmul.f32 %v559, %v1146
  %1180 = vrot.lane.b32.xlu0 %v538, 64
  %v1181 = vpop.permute.xlu0 %1180
  %1182 = vrot.lane.b32.xlu0 %v539, 64
  %v1183 = vpop.permute.xlu0 %1182
  %1184 = vrot.lane.b32.xlu0 %v540, 64
  %v1185 = vpop.permute.xlu0 %1184
  %1186 = vrot.lane.b32.xlu0 %v541, 64
  %v1187 = vpop.permute.xlu0 %1186
  %1188 = vrot.lane.b32.xlu0 %v542, 64
  %v1189 = vpop.permute.xlu0 %1188
  %1190 = vrot.lane.b32.xlu0 %v543, 64
  %v1191 = vpop.permute.xlu0 %1190
  %1192 = vrot.lane.b32.xlu0 %v544, 64
  %v1193 = vpop.permute.xlu0 %1192
  %1194 = vrot.lane.b32.xlu0 %v545, 64
  %v1195 = vpop.permute.xlu0 %1194
  %1196 = vrot.lane.b32.xlu0 %v546, 64
  %v1197 = vpop.permute.xlu0 %1196
  %1198 = vrot.lane.b32.xlu0 %v547, 64
  %v1199 = vpop.permute.xlu0 %1198
  %1200 = vrot.lane.b32.xlu0 %v548, 64
  %v1201 = vpop.permute.xlu0 %1200
  %1202 = vrot.lane.b32.xlu0 %v549, 64
  %v1203 = vpop.permute.xlu0 %1202
  %1204 = vrot.lane.b32.xlu0 %v550, 64
  %v1205 = vpop.permute.xlu0 %1204
  %1206 = vrot.lane.b32.xlu0 %v551, 64
  %v1207 = vpop.permute.xlu0 %1206
  %1208 = vrot.lane.b32.xlu0 %v552, 64
  %v1209 = vpop.permute.xlu0 %1208
  %1210 = vrot.lane.b32.xlu0 %v553, 64
  %v1211 = vpop.permute.xlu0 %1210
  %1244 = vrot.lane.b32.xlu0 %v748, 64
  %v1245 = vpop.permute.xlu0 %1244
  %1246 = vrot.lane.b32.xlu0 %v749, 64
  %v1247 = vpop.permute.xlu0 %1246
  %1248 = vrot.lane.b32.xlu0 %v750, 64
  %v1249 = vpop.permute.xlu0 %1248
  %1250 = vrot.lane.b32.xlu0 %v751, 64
  %v1251 = vpop.permute.xlu0 %1250
  %1252 = vrot.lane.b32.xlu0 %v752, 64
  %v1253 = vpop.permute.xlu0 %1252
  %1254 = vrot.lane.b32.xlu0 %v753, 64
  %v1255 = vpop.permute.xlu0 %1254
  %1256 = vrot.lane.b32.xlu0 %v754, 64
  %v1257 = vpop.permute.xlu0 %1256
  %1258 = vrot.lane.b32.xlu0 %v755, 64
  %v1259 = vpop.permute.xlu0 %1258
  %1260 = vrot.lane.b32.xlu0 %v756, 64
  %v1261 = vpop.permute.xlu0 %1260
  %1262 = vrot.lane.b32.xlu0 %v757, 64
  %v1263 = vpop.permute.xlu0 %1262
  %1264 = vrot.lane.b32.xlu0 %v758, 64
  %v1265 = vpop.permute.xlu0 %1264
  %1266 = vrot.lane.b32.xlu0 %v759, 64
  %v1267 = vpop.permute.xlu0 %1266
  %1268 = vrot.lane.b32.xlu0 %v760, 64
  %v1269 = vpop.permute.xlu0 %1268
  %1270 = vrot.lane.b32.xlu0 %v761, 64
  %v1271 = vpop.permute.xlu0 %1270
  %1272 = vrot.lane.b32.xlu0 %v762, 64
  %v1273 = vpop.permute.xlu0 %1272
  %1274 = vrot.lane.b32.xlu0 %v763, 64
  %v1275 = vpop.permute.xlu0 %1274
  %1308 = vrot.lane.b32.xlu0 %v908, 64
  %v1309 = vpop.permute.xlu0 %1308
  %1310 = vrot.lane.b32.xlu0 %v909, 64
  %v1311 = vpop.permute.xlu0 %1310
  %1312 = vrot.lane.b32.xlu0 %v910, 64
  %v1313 = vpop.permute.xlu0 %1312
  %1314 = vrot.lane.b32.xlu0 %v911, 64
  %v1315 = vpop.permute.xlu0 %1314
  %1316 = vrot.lane.b32.xlu0 %v912, 64
  %v1317 = vpop.permute.xlu0 %1316
  %1318 = vrot.lane.b32.xlu0 %v913, 64
  %v1319 = vpop.permute.xlu0 %1318
  %1320 = vrot.lane.b32.xlu0 %v914, 64
  %v1321 = vpop.permute.xlu0 %1320
  %1322 = vrot.lane.b32.xlu0 %v915, 64
  %v1323 = vpop.permute.xlu0 %1322
  %1324 = vrot.lane.b32.xlu0 %v916, 64
  %v1325 = vpop.permute.xlu0 %1324
  %1326 = vrot.lane.b32.xlu0 %v917, 64
  %v1327 = vpop.permute.xlu0 %1326
  %1328 = vrot.lane.b32.xlu0 %v918, 64
  %v1329 = vpop.permute.xlu0 %1328
  %1330 = vrot.lane.b32.xlu0 %v919, 64
  %v1331 = vpop.permute.xlu0 %1330
  %1332 = vrot.lane.b32.xlu0 %v920, 64
  %v1333 = vpop.permute.xlu0 %1332
  %1334 = vrot.lane.b32.xlu0 %v921, 64
  %v1335 = vpop.permute.xlu0 %1334
  %1336 = vrot.lane.b32.xlu0 %v922, 64
  %v1337 = vpop.permute.xlu0 %1336
  %1338 = vrot.lane.b32.xlu0 %v923, 64
  %v1339 = vpop.permute.xlu0 %1338
  %1372 = vrot.lane.b32.xlu0 %v1068, 64
  %v1373 = vpop.permute.xlu0 %1372
  %1374 = vrot.lane.b32.xlu0 %v1069, 64
  %v1375 = vpop.permute.xlu0 %1374
  %1376 = vrot.lane.b32.xlu0 %v1070, 64
  %v1377 = vpop.permute.xlu0 %1376
  %1378 = vrot.lane.b32.xlu0 %v1071, 64
  %v1379 = vpop.permute.xlu0 %1378
  %1380 = vrot.lane.b32.xlu0 %v1072, 64
  %v1381 = vpop.permute.xlu0 %1380
  %1382 = vrot.lane.b32.xlu0 %v1073, 64
  %v1383 = vpop.permute.xlu0 %1382
  %1384 = vrot.lane.b32.xlu0 %v1074, 64
  %v1385 = vpop.permute.xlu0 %1384
  %1386 = vrot.lane.b32.xlu0 %v1075, 64
  %v1387 = vpop.permute.xlu0 %1386
  %1388 = vrot.lane.b32.xlu0 %v1076, 64
  %v1389 = vpop.permute.xlu0 %1388
  %1390 = vrot.lane.b32.xlu0 %v1077, 64
  %v1391 = vpop.permute.xlu0 %1390
  %1392 = vrot.lane.b32.xlu0 %v1078, 64
  %v1393 = vpop.permute.xlu0 %1392
  %1394 = vrot.lane.b32.xlu0 %v1079, 64
  %v1395 = vpop.permute.xlu0 %1394
  %1396 = vrot.lane.b32.xlu0 %v1080, 64
  %v1397 = vpop.permute.xlu0 %1396
  %1398 = vrot.lane.b32.xlu0 %v1081, 64
  %v1399 = vpop.permute.xlu0 %1398
  %1400 = vrot.lane.b32.xlu0 %v1082, 64
  %v1401 = vpop.permute.xlu0 %1400
  %1402 = vrot.lane.b32.xlu0 %v1083, 64
  %v1403 = vpop.permute.xlu0 %1402
  %v1420 = vsel %vm166, %v458, %v1181
  %v1421 = vsel %vm166, %v459, %v1183
  %v1422 = vsel %vm166, %v460, %v1185
  %v1423 = vsel %vm166, %v461, %v1187
  %v1424 = vsel %vm166, %v462, %v1189
  %v1425 = vsel %vm166, %v463, %v1191
  %v1426 = vsel %vm166, %v464, %v1193
  %v1427 = vsel %vm166, %v465, %v1195
  %v1428 = vsel %vm166, %v466, %v1197
  %v1429 = vsel %vm166, %v467, %v1199
  %v1430 = vsel %vm166, %v468, %v1201
  %v1431 = vsel %vm166, %v469, %v1203
  %v1432 = vsel %vm166, %v470, %v1205
  %v1433 = vsel %vm166, %v471, %v1207
  %v1434 = vsel %vm166, %v472, %v1209
  %v1435 = vsel %vm166, %v473, %v1211
  %v1436 = vsel %vm166, %v668, %v1245
  %v1437 = vsel %vm166, %v669, %v1247
  %v1438 = vsel %vm166, %v670, %v1249
  %v1439 = vsel %vm166, %v671, %v1251
  %v1440 = vsel %vm166, %v672, %v1253
  %v1441 = vsel %vm166, %v673, %v1255
  %v1442 = vsel %vm166, %v674, %v1257
  %v1443 = vsel %vm166, %v675, %v1259
  %v1444 = vsel %vm166, %v676, %v1261
  %v1445 = vsel %vm166, %v677, %v1263
  %v1446 = vsel %vm166, %v678, %v1265
  %v1447 = vsel %vm166, %v679, %v1267
  %v1448 = vsel %vm166, %v680, %v1269
  %v1449 = vsel %vm166, %v681, %v1271
  %v1450 = vsel %vm166, %v682, %v1273
  %v1451 = vsel %vm166, %v683, %v1275
  %v1452 = vsel %vm166, %v828, %v1309
  %v1453 = vsel %vm166, %v829, %v1311
  %v1454 = vsel %vm166, %v830, %v1313
  %v1455 = vsel %vm166, %v831, %v1315
  %v1456 = vsel %vm166, %v832, %v1317
  %v1457 = vsel %vm166, %v833, %v1319
  %v1458 = vsel %vm166, %v834, %v1321
  %v1459 = vsel %vm166, %v835, %v1323
  %v1460 = vsel %vm166, %v836, %v1325
  %v1461 = vsel %vm166, %v837, %v1327
  %v1462 = vsel %vm166, %v838, %v1329
  %v1463 = vsel %vm166, %v839, %v1331
  %v1464 = vsel %vm166, %v840, %v1333
  %v1465 = vsel %vm166, %v841, %v1335
  %v1466 = vsel %vm166, %v842, %v1337
  %v1467 = vsel %vm166, %v843, %v1339
  %v1468 = vsel %vm166, %v988, %v1373
  %v1469 = vsel %vm166, %v989, %v1375
  %v1470 = vsel %vm166, %v990, %v1377
  %v1471 = vsel %vm166, %v991, %v1379
  %v1472 = vsel %vm166, %v992, %v1381
  %v1473 = vsel %vm166, %v993, %v1383
  %v1474 = vsel %vm166, %v994, %v1385
  %v1475 = vsel %vm166, %v995, %v1387
  %v1476 = vsel %vm166, %v996, %v1389
  %v1477 = vsel %vm166, %v997, %v1391
  %v1478 = vsel %vm166, %v998, %v1393
  %v1479 = vsel %vm166, %v999, %v1395
  %v1480 = vsel %vm166, %v1000, %v1397
  %v1481 = vsel %vm166, %v1001, %v1399
  %v1482 = vsel %vm166, %v1002, %v1401
  %v1483 = vsel %vm166, %v1003, %v1403
  %v1484 = vpack.c.bf16 %v1421, %v1420
  %v1485 = vpack.c.bf16 %v1437, %v1436
  %v1486 = vpack.c.bf16 %v1453, %v1452
  %v1487 = vpack.c.bf16 %v1469, %v1468
  %v1488 = vpack.c.bf16 %v1149, %v1148
  %v1489 = vpack.c.bf16 %v1423, %v1422
  %v1490 = vpack.c.bf16 %v1439, %v1438
  %v1491 = vpack.c.bf16 %v1455, %v1454
  %v1492 = vpack.c.bf16 %v1471, %v1470
  %v1493 = vpack.c.bf16 %v1151, %v1150
  %v1494 = vpack.c.bf16 %v1425, %v1424
  %v1495 = vpack.c.bf16 %v1441, %v1440
  %v1496 = vpack.c.bf16 %v1457, %v1456
  %v1497 = vpack.c.bf16 %v1473, %v1472
  %v1498 = vpack.c.bf16 %v1153, %v1152
  %v1499 = vpack.c.bf16 %v1427, %v1426
  %v1500 = vpack.c.bf16 %v1443, %v1442
  %v1501 = vpack.c.bf16 %v1459, %v1458
  %v1502 = vpack.c.bf16 %v1475, %v1474
  %v1503 = vpack.c.bf16 %v1155, %v1154
  %v1504 = vpack.c.bf16 %v1429, %v1428
  %v1505 = vpack.c.bf16 %v1445, %v1444
  %v1506 = vpack.c.bf16 %v1461, %v1460
  %v1507 = vpack.c.bf16 %v1477, %v1476
  %v1508 = vpack.c.bf16 %v1157, %v1156
  %v1509 = vpack.c.bf16 %v1431, %v1430
  %v1510 = vpack.c.bf16 %v1447, %v1446
  %v1511 = vpack.c.bf16 %v1463, %v1462
  %v1512 = vpack.c.bf16 %v1479, %v1478
  %v1513 = vpack.c.bf16 %v1159, %v1158
  %v1514 = vpack.c.bf16 %v1433, %v1432
  %v1515 = vpack.c.bf16 %v1449, %v1448
  %v1516 = vpack.c.bf16 %v1465, %v1464
  %v1517 = vpack.c.bf16 %v1481, %v1480
  %v1518 = vpack.c.bf16 %v1161, %v1160
  %v1519 = vpack.c.bf16 %v1435, %v1434
  %v1520 = vpack.c.bf16 %v1451, %v1450
  %v1521 = vpack.c.bf16 %v1467, %v1466
  %v1522 = vpack.c.bf16 %v1483, %v1482
  %v1523 = vpack.c.bf16 %v1163, %v1162
  %v1524 = vld [vmem:[%s5] sm:$0xf]
  %v1525 = vld [vmem:[%s5 + $0x4] sm:$0xf]
  %v1526 = vld [vmem:[%s5 + $0x8] sm:$0xf]
  %v1527 = vld [vmem:[%s5 + $0xc] sm:$0xf]
  %v1528 = vld [vmem:[%s5 + $0x10] sm:$0xf]
  %v1529 = vld [vmem:[%s5 + $0x14] sm:$0xf]
  %v1530 = vld [vmem:[%s5 + $0x18] sm:$0xf]
  %v1531 = vld [vmem:[%s5 + $0x1c] sm:$0xf]
  %v1532 = vld [vmem:[%s5 + $0x20] sm:$0xf]
  %v1533 = vld [vmem:[%s5 + $0x24] sm:$0xf]
  %v1534 = vld [vmem:[%s5 + $0x28] sm:$0xf]
  %v1535 = vld [vmem:[%s5 + $0x2c] sm:$0xf]
  %v1536 = vld [vmem:[%s5 + $0x30] sm:$0xf]
  %v1537 = vld [vmem:[%s5 + $0x34] sm:$0xf]
  %v1538 = vld [vmem:[%s5 + $0x38] sm:$0xf]
  %v1539 = vld [vmem:[%s5 + $0x3c] sm:$0xf]
  %v1540 = vld [vmem:[%s5 + $0x40] sm:$0xf]
  %v1541 = vld [vmem:[%s5 + $0x44] sm:$0xf]
  %v1542 = vld [vmem:[%s5 + $0x48] sm:$0xf]
  %v1543 = vld [vmem:[%s5 + $0x4c] sm:$0xf]
  %v1544 = vld [vmem:[%s5 + $0x50] sm:$0xf]
  %v1545 = vld [vmem:[%s5 + $0x54] sm:$0xf]
  %v1546 = vld [vmem:[%s5 + $0x58] sm:$0xf]
  %v1547 = vld [vmem:[%s5 + $0x5c] sm:$0xf]
  %v1548 = vld [vmem:[%s5 + $0x60] sm:$0xf]
  %v1549 = vld [vmem:[%s5 + $0x64] sm:$0xf]
  %v1550 = vld [vmem:[%s5 + $0x68] sm:$0xf]
  %v1551 = vld [vmem:[%s5 + $0x6c] sm:$0xf]
  %v1552 = vld [vmem:[%s5 + $0x70] sm:$0xf]
  %v1553 = vld [vmem:[%s5 + $0x74] sm:$0xf]
  %v1554 = vld [vmem:[%s5 + $0x78] sm:$0xf]
  %v1555 = vld [vmem:[%s5 + $0x7c] sm:$0xf]
  %v1556 = vld [vmem:[%s5 + $0x80] sm:$0xf]
  %v1557 = vld [vmem:[%s5 + $0x84] sm:$0xf]
  %v1558 = vld [vmem:[%s5 + $0x88] sm:$0xf]
  %v1559 = vld [vmem:[%s5 + $0x8c] sm:$0xf]
  %v1560 = vld [vmem:[%s5 + $0x90] sm:$0xf]
  %v1561 = vld [vmem:[%s5 + $0x94] sm:$0xf]
  %v1562 = vld [vmem:[%s5 + $0x98] sm:$0xf]
  %v1563 = vld [vmem:[%s5 + $0x9c] sm:$0xf]
  %v1564 = vld [vmem:[%s5 + $0xa0] sm:$0xf]
  %v1565 = vld [vmem:[%s5 + $0xa4] sm:$0xf]
  %v1566 = vld [vmem:[%s5 + $0xa8] sm:$0xf]
  %v1567 = vld [vmem:[%s5 + $0xac] sm:$0xf]
  %v1568 = vld [vmem:[%s5 + $0xb0] sm:$0xf]
  %v1569 = vld [vmem:[%s5 + $0xb4] sm:$0xf]
  %v1570 = vld [vmem:[%s5 + $0xb8] sm:$0xf]
  %v1571 = vld [vmem:[%s5 + $0xbc] sm:$0xf]
  %v1572 = vld [vmem:[%s5 + $0xc0] sm:$0xf]
  %v1573 = vld [vmem:[%s5 + $0xc4] sm:$0xf]
  %v1574 = vld [vmem:[%s5 + $0xc8] sm:$0xf]
  %v1575 = vld [vmem:[%s5 + $0xcc] sm:$0xf]
  %v1576 = vld [vmem:[%s5 + $0xd0] sm:$0xf]
  %v1577 = vld [vmem:[%s5 + $0xd4] sm:$0xf]
  %v1578 = vld [vmem:[%s5 + $0xd8] sm:$0xf]
  %v1579 = vld [vmem:[%s5 + $0xdc] sm:$0xf]
  %v1580 = vld [vmem:[%s5 + $0xe0] sm:$0xf]
  %v1581 = vld [vmem:[%s5 + $0xe4] sm:$0xf]
  %v1582 = vld [vmem:[%s5 + $0xe8] sm:$0xf]
  %v1583 = vld [vmem:[%s5 + $0xec] sm:$0xf]
  %v1584 = vld [vmem:[%s5 + $0xf0] sm:$0xf]
  %v1585 = vld [vmem:[%s5 + $0xf4] sm:$0xf]
  %v1586 = vld [vmem:[%s5 + $0xf8] sm:$0xf]
  %v1587 = vld [vmem:[%s5 + $0xfc] sm:$0xf]
  %v1588 = vld [vmem:[%s5 + $0x100] sm:$0xf]
  %v1589 = vld [vmem:[%s5 + $0x104] sm:$0xf]
  %v1590 = vld [vmem:[%s5 + $0x108] sm:$0xf]
  %v1591 = vld [vmem:[%s5 + $0x10c] sm:$0xf]
  %v1592 = vld [vmem:[%s5 + $0x110] sm:$0xf]
  %v1593 = vld [vmem:[%s5 + $0x114] sm:$0xf]
  %v1594 = vld [vmem:[%s5 + $0x118] sm:$0xf]
  %v1595 = vld [vmem:[%s5 + $0x11c] sm:$0xf]
  %v1668 = vunpack.c.l.b16 %v1524
  %v1669 = vunpack.c.l.b16 %v1525
  %v1670 = vunpack.c.l.b16 %v1526
  %v1671 = vunpack.c.l.b16 %v1527
  %v1672 = vunpack.c.l.b16 %v1528
  %v1673 = vunpack.c.l.b16 %v1529
  %v1674 = vunpack.c.l.b16 %v1530
  %v1675 = vunpack.c.l.b16 %v1531
  %v1676 = vunpack.c.l.b16 %v1532
  %v1677 = vunpack.c.l.b16 %v1533
  %v1678 = vunpack.c.l.b16 %v1534
  %v1679 = vunpack.c.l.b16 %v1535
  %v1680 = vunpack.c.l.b16 %v1536
  %v1681 = vunpack.c.l.b16 %v1537
  %v1682 = vunpack.c.l.b16 %v1538
  %v1683 = vunpack.c.l.b16 %v1539
  %v1684 = vunpack.c.l.b16 %v1540
  %v1685 = vunpack.c.l.b16 %v1541
  %v1686 = vunpack.c.l.b16 %v1542
  %v1687 = vunpack.c.l.b16 %v1543
  %v1688 = vunpack.c.l.b16 %v1544
  %v1689 = vunpack.c.l.b16 %v1545
  %v1690 = vunpack.c.l.b16 %v1546
  %v1691 = vunpack.c.l.b16 %v1547
  %v1692 = vunpack.c.l.b16 %v1548
  %v1693 = vunpack.c.l.b16 %v1549
  %v1694 = vunpack.c.l.b16 %v1550
  %v1695 = vunpack.c.l.b16 %v1551
  %v1696 = vunpack.c.l.b16 %v1552
  %v1697 = vunpack.c.l.b16 %v1553
  %v1698 = vunpack.c.l.b16 %v1554
  %v1699 = vunpack.c.l.b16 %v1555
  %v1700 = vunpack.c.l.b16 %v1556
  %v1701 = vunpack.c.l.b16 %v1557
  %v1702 = vunpack.c.l.b16 %v1558
  %v1703 = vunpack.c.l.b16 %v1559
  %v1704 = vunpack.c.l.b16 %v1560
  %v1705 = vunpack.c.l.b16 %v1561
  %v1706 = vunpack.c.l.b16 %v1562
  %v1707 = vunpack.c.l.b16 %v1563
  %v1708 = vunpack.c.l.b16 %v1564
  %v1709 = vunpack.c.l.b16 %v1565
  %v1710 = vunpack.c.l.b16 %v1566
  %v1711 = vunpack.c.l.b16 %v1567
  %v1712 = vunpack.c.l.b16 %v1568
  %v1713 = vunpack.c.l.b16 %v1569
  %v1714 = vunpack.c.l.b16 %v1570
  %v1715 = vunpack.c.l.b16 %v1571
  %v1716 = vunpack.c.l.b16 %v1572
  %v1717 = vunpack.c.l.b16 %v1573
  %v1718 = vunpack.c.l.b16 %v1574
  %v1719 = vunpack.c.l.b16 %v1575
  %v1720 = vunpack.c.l.b16 %v1576
  %v1721 = vunpack.c.l.b16 %v1577
  %v1722 = vunpack.c.l.b16 %v1578
  %v1723 = vunpack.c.l.b16 %v1579
  %v1724 = vunpack.c.l.b16 %v1580
  %v1725 = vunpack.c.l.b16 %v1581
  %v1726 = vunpack.c.l.b16 %v1582
  %v1727 = vunpack.c.l.b16 %v1583
  %v1728 = vunpack.c.l.b16 %v1584
  %v1729 = vunpack.c.l.b16 %v1585
  %v1730 = vunpack.c.l.b16 %v1586
  %v1731 = vunpack.c.l.b16 %v1587
  %v1732 = vunpack.c.l.b16 %v1588
  %v1733 = vunpack.c.l.b16 %v1589
  %v1734 = vunpack.c.l.b16 %v1590
  %v1735 = vunpack.c.l.b16 %v1591
  %v1736 = vunpack.c.l.b16 %v1592
  %v1737 = vunpack.c.l.b16 %v1593
  %v1738 = vunpack.c.l.b16 %v1594
  %v1739 = vunpack.c.l.b16 %v1595
  %v1740 = vpack.c.b16 %v1669, %v1668
  %v1741 = vpack.c.b16 %v1671, %v1670
  %v1742 = vpack.c.b16 %v1673, %v1672
  %v1743 = vpack.c.b16 %v1675, %v1674
  %v1744 = vpack.c.b16 %v1677, %v1676
  %v1745 = vpack.c.b16 %v1679, %v1678
  %v1746 = vpack.c.b16 %v1681, %v1680
  %v1747 = vpack.c.b16 %v1683, %v1682
  %v1748 = vpack.c.b16 %v1685, %v1684
  %v1749 = vpack.c.b16 %v1687, %v1686
  %v1750 = vpack.c.b16 %v1689, %v1688
  %v1751 = vpack.c.b16 %v1691, %v1690
  %v1752 = vpack.c.b16 %v1693, %v1692
  %v1753 = vpack.c.b16 %v1695, %v1694
  %v1754 = vpack.c.b16 %v1697, %v1696
  %v1755 = vpack.c.b16 %v1699, %v1698
  %v1756 = vpack.c.b16 %v1701, %v1700
  %v1757 = vpack.c.b16 %v1703, %v1702
  %v1758 = vpack.c.b16 %v1705, %v1704
  %v1759 = vpack.c.b16 %v1707, %v1706
  %v1760 = vpack.c.b16 %v1709, %v1708
  %v1761 = vpack.c.b16 %v1711, %v1710
  %v1762 = vpack.c.b16 %v1713, %v1712
  %v1763 = vpack.c.b16 %v1715, %v1714
  %v1764 = vpack.c.b16 %v1717, %v1716
  %v1765 = vpack.c.b16 %v1719, %v1718
  %v1766 = vpack.c.b16 %v1721, %v1720
  %v1767 = vpack.c.b16 %v1723, %v1722
  %v1768 = vpack.c.b16 %v1725, %v1724
  %v1769 = vpack.c.b16 %v1727, %v1726
  %v1770 = vpack.c.b16 %v1729, %v1728
  %v1771 = vpack.c.b16 %v1731, %v1730
  %v1772 = vpack.c.b16 %v1733, %v1732
  %v1773 = vpack.c.b16 %v1735, %v1734
  %v1774 = vpack.c.b16 %v1737, %v1736
  %v1775 = vpack.c.b16 %v1739, %v1738
  %v1813 = vsel %vm166, %v1488, 0
  %v1816 = vsel %vm166, %v1493, 0
  %v1819 = vsel %vm166, %v1498, 0
  %v1822 = vsel %vm166, %v1503, 0
  %v1825 = vsel %vm166, %v1508, 0
  %v1828 = vsel %vm166, %v1513, 0
  %v1831 = vsel %vm166, %v1518, 0
  %v1834 = vsel %vm166, %v1523, 0
  %1836 = vmatpush.bf16.msra.mxu0 %v1747
  %1837 = vmatpush.bf16.msra.mxu0 %v1746
  %1838 = vmatpush.bf16.msra.mxu0 %v1745
  %1839 = vmatpush.bf16.msra.mxu0 %v1744
  %1840 = vmatpush.bf16.msra.mxu0 %v1743
  %1841 = vmatpush.bf16.msra.mxu0 %v1742
  %1842 = vmatpush.bf16.msra.mxu0 %v1741
  %1843 = vmatpush.bf16.msra.mxu0 %v1740
  %1844 = vmatmul.bf16.gmra.mxu0 %v1484
  %v1845 = vpop.f32.mrf.mxu0
  %v1846 = vadd.f32 0.0, %v1845
  %v1847 = vpop.f32.mrf.mxu0
  %v1848 = vadd.f32 0.0, %v1847
  %1849 = vmatmul.bf16.gmra.mxu0 %v1489
  %v1850 = vpop.f32.mrf.mxu0
  %v1851 = vadd.f32 0.0, %v1850
  %v1852 = vpop.f32.mrf.mxu0
  %v1853 = vadd.f32 0.0, %v1852
  %1854 = vmatmul.bf16.gmra.mxu0 %v1494
  %v1855 = vpop.f32.mrf.mxu0
  %v1856 = vadd.f32 0.0, %v1855
  %v1857 = vpop.f32.mrf.mxu0
  %v1858 = vadd.f32 0.0, %v1857
  %1859 = vmatmul.bf16.gmra.mxu0 %v1499
  %v1860 = vpop.f32.mrf.mxu0
  %v1861 = vadd.f32 0.0, %v1860
  %v1862 = vpop.f32.mrf.mxu0
  %v1863 = vadd.f32 0.0, %v1862
  %1864 = vmatmul.bf16.gmra.mxu0 %v1504
  %v1865 = vpop.f32.mrf.mxu0
  %v1866 = vadd.f32 0.0, %v1865
  %v1867 = vpop.f32.mrf.mxu0
  %v1868 = vadd.f32 0.0, %v1867
  %1869 = vmatmul.bf16.gmra.mxu0 %v1509
  %v1870 = vpop.f32.mrf.mxu0
  %v1871 = vadd.f32 0.0, %v1870
  %v1872 = vpop.f32.mrf.mxu0
  %v1873 = vadd.f32 0.0, %v1872
  %1874 = vmatmul.bf16.gmra.mxu0 %v1514
  %v1875 = vpop.f32.mrf.mxu0
  %v1876 = vadd.f32 0.0, %v1875
  %v1877 = vpop.f32.mrf.mxu0
  %v1878 = vadd.f32 0.0, %v1877
  %1879 = vmatmul.bf16.gmra.mxu0 %v1519
  %v1880 = vpop.f32.mrf.mxu0
  %v1881 = vadd.f32 0.0, %v1880
  %v1882 = vpop.f32.mrf.mxu0
  %v1883 = vadd.f32 0.0, %v1882
  %1884 = vdwg.mxu0
  %1885 = vmatpush.bf16.msra.mxu0 %v1755
  %1886 = vmatpush.bf16.msra.mxu0 %v1754
  %1887 = vmatpush.bf16.msra.mxu0 %v1753
  %1888 = vmatpush.bf16.msra.mxu0 %v1752
  %1889 = vmatpush.bf16.msra.mxu0 %v1751
  %1890 = vmatpush.bf16.msra.mxu0 %v1750
  %1891 = vmatpush.bf16.msra.mxu0 %v1749
  %1892 = vmatpush.bf16.msra.mxu0 %v1748
  %1893 = vmatmul.bf16.gmra.mxu0 %v1485
  %v1894 = vpop.f32.mrf.mxu0
  %v1895 = vadd.f32 %v1846, %v1894
  %v1896 = vpop.f32.mrf.mxu0
  %v1897 = vadd.f32 %v1848, %v1896
  %1898 = vmatmul.bf16.gmra.mxu0 %v1490
  %v1899 = vpop.f32.mrf.mxu0
  %v1900 = vadd.f32 %v1851, %v1899
  %v1901 = vpop.f32.mrf.mxu0
  %v1902 = vadd.f32 %v1853, %v1901
  %1903 = vmatmul.bf16.gmra.mxu0 %v1495
  %v1904 = vpop.f32.mrf.mxu0
  %v1905 = vadd.f32 %v1856, %v1904
  %v1906 = vpop.f32.mrf.mxu0
  %v1907 = vadd.f32 %v1858, %v1906
  %1908 = vmatmul.bf16.gmra.mxu0 %v1500
  %v1909 = vpop.f32.mrf.mxu0
  %v1910 = vadd.f32 %v1861, %v1909
  %v1911 = vpop.f32.mrf.mxu0
  %v1912 = vadd.f32 %v1863, %v1911
  %1913 = vmatmul.bf16.gmra.mxu0 %v1505
  %v1914 = vpop.f32.mrf.mxu0
  %v1915 = vadd.f32 %v1866, %v1914
  %v1916 = vpop.f32.mrf.mxu0
  %v1917 = vadd.f32 %v1868, %v1916
  %1918 = vmatmul.bf16.gmra.mxu0 %v1510
  %v1919 = vpop.f32.mrf.mxu0
  %v1920 = vadd.f32 %v1871, %v1919
  %v1921 = vpop.f32.mrf.mxu0
  %v1922 = vadd.f32 %v1873, %v1921
  %1923 = vmatmul.bf16.gmra.mxu0 %v1515
  %v1924 = vpop.f32.mrf.mxu0
  %v1925 = vadd.f32 %v1876, %v1924
  %v1926 = vpop.f32.mrf.mxu0
  %v1927 = vadd.f32 %v1878, %v1926
  %1928 = vmatmul.bf16.gmra.mxu0 %v1520
  %v1929 = vpop.f32.mrf.mxu0
  %v1930 = vadd.f32 %v1881, %v1929
  %v1931 = vpop.f32.mrf.mxu0
  %v1932 = vadd.f32 %v1883, %v1931
  %1933 = vdwg.mxu0
  %1934 = vmatpush.bf16.msra.mxu0 %v1763
  %1935 = vmatpush.bf16.msra.mxu0 %v1762
  %1936 = vmatpush.bf16.msra.mxu0 %v1761
  %1937 = vmatpush.bf16.msra.mxu0 %v1760
  %1938 = vmatpush.bf16.msra.mxu0 %v1759
  %1939 = vmatpush.bf16.msra.mxu0 %v1758
  %1940 = vmatpush.bf16.msra.mxu0 %v1757
  %1941 = vmatpush.bf16.msra.mxu0 %v1756
  %1942 = vmatmul.bf16.gmra.mxu0 %v1486
  %v1943 = vpop.f32.mrf.mxu0
  %v1944 = vadd.f32 %v1895, %v1943
  %v1945 = vpop.f32.mrf.mxu0
  %v1946 = vadd.f32 %v1897, %v1945
  %1947 = vmatmul.bf16.gmra.mxu0 %v1491
  %v1948 = vpop.f32.mrf.mxu0
  %v1949 = vadd.f32 %v1900, %v1948
  %v1950 = vpop.f32.mrf.mxu0
  %v1951 = vadd.f32 %v1902, %v1950
  %1952 = vmatmul.bf16.gmra.mxu0 %v1496
  %v1953 = vpop.f32.mrf.mxu0
  %v1954 = vadd.f32 %v1905, %v1953
  %v1955 = vpop.f32.mrf.mxu0
  %v1956 = vadd.f32 %v1907, %v1955
  %1957 = vmatmul.bf16.gmra.mxu0 %v1501
  %v1958 = vpop.f32.mrf.mxu0
  %v1959 = vadd.f32 %v1910, %v1958
  %v1960 = vpop.f32.mrf.mxu0
  %v1961 = vadd.f32 %v1912, %v1960
  %1962 = vmatmul.bf16.gmra.mxu0 %v1506
  %v1963 = vpop.f32.mrf.mxu0
  %v1964 = vadd.f32 %v1915, %v1963
  %v1965 = vpop.f32.mrf.mxu0
  %v1966 = vadd.f32 %v1917, %v1965
  %1967 = vmatmul.bf16.gmra.mxu0 %v1511
  %v1968 = vpop.f32.mrf.mxu0
  %v1969 = vadd.f32 %v1920, %v1968
  %v1970 = vpop.f32.mrf.mxu0
  %v1971 = vadd.f32 %v1922, %v1970
  %1972 = vmatmul.bf16.gmra.mxu0 %v1516
  %v1973 = vpop.f32.mrf.mxu0
  %v1974 = vadd.f32 %v1925, %v1973
  %v1975 = vpop.f32.mrf.mxu0
  %v1976 = vadd.f32 %v1927, %v1975
  %1977 = vmatmul.bf16.gmra.mxu0 %v1521
  %v1978 = vpop.f32.mrf.mxu0
  %v1979 = vadd.f32 %v1930, %v1978
  %v1980 = vpop.f32.mrf.mxu0
  %v1981 = vadd.f32 %v1932, %v1980
  %1982 = vdwg.mxu0
  %1983 = vmatpush.bf16.msra.mxu0 %v1771
  %1984 = vmatpush.bf16.msra.mxu0 %v1770
  %1985 = vmatpush.bf16.msra.mxu0 %v1769
  %1986 = vmatpush.bf16.msra.mxu0 %v1768
  %1987 = vmatpush.bf16.msra.mxu0 %v1767
  %1988 = vmatpush.bf16.msra.mxu0 %v1766
  %1989 = vmatpush.bf16.msra.mxu0 %v1765
  %1990 = vmatpush.bf16.msra.mxu0 %v1764
  %1991 = vmatmul.bf16.gmra.mxu0 %v1487
  %v1992 = vpop.f32.mrf.mxu0
  %v1993 = vadd.f32 %v1944, %v1992
  %v1994 = vpop.f32.mrf.mxu0
  %v1995 = vadd.f32 %v1946, %v1994
  %1996 = vmatmul.bf16.gmra.mxu0 %v1492
  %v1997 = vpop.f32.mrf.mxu0
  %v1998 = vadd.f32 %v1949, %v1997
  %v1999 = vpop.f32.mrf.mxu0
  %v2000 = vadd.f32 %v1951, %v1999
  %2001 = vmatmul.bf16.gmra.mxu0 %v1497
  %v2002 = vpop.f32.mrf.mxu0
  %v2003 = vadd.f32 %v1954, %v2002
  %v2004 = vpop.f32.mrf.mxu0
  %v2005 = vadd.f32 %v1956, %v2004
  %2006 = vmatmul.bf16.gmra.mxu0 %v1502
  %v2007 = vpop.f32.mrf.mxu0
  %v2008 = vadd.f32 %v1959, %v2007
  %v2009 = vpop.f32.mrf.mxu0
  %v2010 = vadd.f32 %v1961, %v2009
  %2011 = vmatmul.bf16.gmra.mxu0 %v1507
  %v2012 = vpop.f32.mrf.mxu0
  %v2013 = vadd.f32 %v1964, %v2012
  %v2014 = vpop.f32.mrf.mxu0
  %v2015 = vadd.f32 %v1966, %v2014
  %2016 = vmatmul.bf16.gmra.mxu0 %v1512
  %v2017 = vpop.f32.mrf.mxu0
  %v2018 = vadd.f32 %v1969, %v2017
  %v2019 = vpop.f32.mrf.mxu0
  %v2020 = vadd.f32 %v1971, %v2019
  %2021 = vmatmul.bf16.gmra.mxu0 %v1517
  %v2022 = vpop.f32.mrf.mxu0
  %v2023 = vadd.f32 %v1974, %v2022
  %v2024 = vpop.f32.mrf.mxu0
  %v2025 = vadd.f32 %v1976, %v2024
  %2026 = vmatmul.bf16.gmra.mxu0 %v1522
  %v2027 = vpop.f32.mrf.mxu0
  %v2028 = vadd.f32 %v1979, %v2027
  %v2029 = vpop.f32.mrf.mxu0
  %v2030 = vadd.f32 %v1981, %v2029
  %2031 = vdwg.mxu0
  %2032 = vmatpush.bf16.msra.mxu0 0
  %2033 = vmatpush.bf16.msra.mxu0 0
  %2034 = vmatpush.bf16.msra.mxu0 0
  %2035 = vmatpush.bf16.msra.mxu0 0
  %2036 = vmatpush.bf16.msra.mxu0 %v1775
  %2037 = vmatpush.bf16.msra.mxu0 %v1774
  %2038 = vmatpush.bf16.msra.mxu0 %v1773
  %2039 = vmatpush.bf16.msra.mxu0 %v1772
  %2040 = vmatmul.bf16.gmra.mxu0 %v1813
  %v2041 = vpop.f32.mrf.mxu0
  %v2042 = vadd.f32 %v1993, %v2041
  %v2043 = vpop.f32.mrf.mxu0
  %v2044 = vadd.f32 %v1995, %v2043
  %2045 = vmatmul.bf16.gmra.mxu0 %v1816
  %v2046 = vpop.f32.mrf.mxu0
  %v2047 = vadd.f32 %v1998, %v2046
  %v2048 = vpop.f32.mrf.mxu0
  %v2049 = vadd.f32 %v2000, %v2048
  %2050 = vmatmul.bf16.gmra.mxu0 %v1819
  %v2051 = vpop.f32.mrf.mxu0
  %v2052 = vadd.f32 %v2003, %v2051
  %v2053 = vpop.f32.mrf.mxu0
  %v2054 = vadd.f32 %v2005, %v2053
  %2055 = vmatmul.bf16.gmra.mxu0 %v1822
  %v2056 = vpop.f32.mrf.mxu0
  %v2057 = vadd.f32 %v2008, %v2056
  %v2058 = vpop.f32.mrf.mxu0
  %v2059 = vadd.f32 %v2010, %v2058
  %2060 = vmatmul.bf16.gmra.mxu0 %v1825
  %v2061 = vpop.f32.mrf.mxu0
  %v2062 = vadd.f32 %v2013, %v2061
  %v2063 = vpop.f32.mrf.mxu0
  %v2064 = vadd.f32 %v2015, %v2063
  %2065 = vmatmul.bf16.gmra.mxu0 %v1828
  %v2066 = vpop.f32.mrf.mxu0
  %v2067 = vadd.f32 %v2018, %v2066
  %v2068 = vpop.f32.mrf.mxu0
  %v2069 = vadd.f32 %v2020, %v2068
  %2070 = vmatmul.bf16.gmra.mxu0 %v1831
  %v2071 = vpop.f32.mrf.mxu0
  %v2072 = vadd.f32 %v2023, %v2071
  %v2073 = vpop.f32.mrf.mxu0
  %v2074 = vadd.f32 %v2025, %v2073
  %2075 = vmatmul.bf16.gmra.mxu0 %v1834
  %v2076 = vpop.f32.mrf.mxu0
  %v2077 = vadd.f32 %v2028, %v2076
  %v2078 = vpop.f32.mrf.mxu0
  %v2079 = vadd.f32 %v2030, %v2078
  %2080 = vdwg.mxu0
  %v2081 = vld [vmem:[%s6] sm:$0x1]
  %v2083 = vperm.slane %v2081, 0
  %v2085 = vmul.f32 %v2042, %v2083
  %v2086 = vmul.f32 %v2044, %v2083
  %v2087 = vmul.f32 %v2047, %v2083
  %v2088 = vmul.f32 %v2049, %v2083
  %v2089 = vmul.f32 %v2052, %v2083
  %v2090 = vmul.f32 %v2054, %v2083
  %v2091 = vmul.f32 %v2057, %v2083
  %v2092 = vmul.f32 %v2059, %v2083
  %v2093 = vmul.f32 %v2062, %v2083
  %v2094 = vmul.f32 %v2064, %v2083
  %v2095 = vmul.f32 %v2067, %v2083
  %v2096 = vmul.f32 %v2069, %v2083
  %v2097 = vmul.f32 %v2072, %v2083
  %v2098 = vmul.f32 %v2074, %v2083
  %v2099 = vmul.f32 %v2077, %v2083
  %v2100 = vmul.f32 %v2079, %v2083
  %v2101 = vld [vmem:[%s7] sm:$0x1]
  %v2103 = vperm.slane %v2101, 0
  %v2105 = vadd.f32 %v2085, %v2103
  %v2106 = vadd.f32 %v2086, %v2103
  %v2107 = vadd.f32 %v2087, %v2103
  %v2108 = vadd.f32 %v2088, %v2103
  %v2109 = vadd.f32 %v2089, %v2103
  %v2110 = vadd.f32 %v2090, %v2103
  %v2111 = vadd.f32 %v2091, %v2103
  %v2112 = vadd.f32 %v2092, %v2103
  %v2113 = vadd.f32 %v2093, %v2103
  %v2114 = vadd.f32 %v2094, %v2103
  %v2115 = vadd.f32 %v2095, %v2103
  %v2116 = vadd.f32 %v2096, %v2103
  %v2117 = vadd.f32 %v2097, %v2103
  %v2118 = vadd.f32 %v2098, %v2103
  %v2119 = vadd.f32 %v2099, %v2103
  %v2120 = vadd.f32 %v2100, %v2103
  %v2121 = vmax.f32 %v2105, 0.0
  %v2122 = vmax.f32 %v2106, 0.0
  %v2123 = vmax.f32 %v2107, 0.0
  %v2124 = vmax.f32 %v2108, 0.0
  %v2125 = vmax.f32 %v2109, 0.0
  %v2126 = vmax.f32 %v2110, 0.0
  %v2127 = vmax.f32 %v2111, 0.0
  %v2128 = vmax.f32 %v2112, 0.0
  %v2129 = vmax.f32 %v2113, 0.0
  %v2130 = vmax.f32 %v2114, 0.0
  %v2131 = vmax.f32 %v2115, 0.0
  %v2132 = vmax.f32 %v2116, 0.0
  %v2133 = vmax.f32 %v2117, 0.0
  %v2134 = vmax.f32 %v2118, 0.0
  %v2135 = vmax.f32 %v2119, 0.0
  %v2136 = vmax.f32 %v2120, 0.0
  %v2139 = vrot.slane %v2135, 7
  %v2140 = vrot.slane %v2136, 7
  %v2141 = vsel %vm314, %v2139, %v2140
  %v2158 = vrot.slane %v2121, 7
  %v2159 = vrot.slane %v2122, 7
  %v2160 = vsel %vm314, %v2158, %v2159
  %v2161 = vrot.slane %v2123, 7
  %v2162 = vsel %vm314, %v2159, %v2161
  %v2163 = vrot.slane %v2124, 7
  %v2164 = vsel %vm314, %v2161, %v2163
  %v2165 = vrot.slane %v2125, 7
  %v2166 = vsel %vm314, %v2163, %v2165
  %v2167 = vrot.slane %v2126, 7
  %v2168 = vsel %vm314, %v2165, %v2167
  %v2169 = vrot.slane %v2127, 7
  %v2170 = vsel %vm314, %v2167, %v2169
  %v2171 = vrot.slane %v2128, 7
  %v2172 = vsel %vm314, %v2169, %v2171
  %v2173 = vrot.slane %v2129, 7
  %v2174 = vsel %vm314, %v2171, %v2173
  %v2175 = vrot.slane %v2130, 7
  %v2176 = vsel %vm314, %v2173, %v2175
  %v2177 = vrot.slane %v2131, 7
  %v2178 = vsel %vm314, %v2175, %v2177
  %v2179 = vrot.slane %v2132, 7
  %v2180 = vsel %vm314, %v2177, %v2179
  %v2181 = vrot.slane %v2133, 7
  %v2182 = vsel %vm314, %v2179, %v2181
  %v2183 = vrot.slane %v2134, 7
  %v2184 = vsel %vm314, %v2181, %v2183
  %v2185 = vsel %vm314, %v2183, %v2139
  %v2201 = vsel %vm314, %v2140, %v2158
  %v2202 = vmul.f32 %v2141, %v381
  %v2203 = vmul.f32 %v2201, %v386
  %v2204 = vmul.f32 %v2160, %v391
  %v2205 = vmul.f32 %v2162, %v396
  %v2206 = vmul.f32 %v2164, %v401
  %v2207 = vmul.f32 %v2166, %v406
  %v2208 = vmul.f32 %v2168, %v411
  %v2209 = vmul.f32 %v2170, %v416
  %v2210 = vmul.f32 %v2172, %v421
  %v2211 = vmul.f32 %v2174, %v426
  %v2212 = vmul.f32 %v2176, %v431
  %v2213 = vmul.f32 %v2178, %v436
  %v2214 = vmul.f32 %v2180, %v441
  %v2215 = vmul.f32 %v2182, %v446
  %v2216 = vmul.f32 %v2184, %v451
  %v2217 = vmul.f32 %v2185, %v456
  %v2218 = vmul.f32 %v2136, %v476
  %v2219 = vmul.f32 %v2121, %v480
  %v2220 = vmul.f32 %v2122, %v484
  %v2221 = vmul.f32 %v2123, %v488
  %v2222 = vmul.f32 %v2124, %v492
  %v2223 = vmul.f32 %v2125, %v496
  %v2224 = vmul.f32 %v2126, %v500
  %v2225 = vmul.f32 %v2127, %v504
  %v2226 = vmul.f32 %v2128, %v508
  %v2227 = vmul.f32 %v2129, %v512
  %v2228 = vmul.f32 %v2130, %v516
  %v2229 = vmul.f32 %v2131, %v520
  %v2230 = vmul.f32 %v2132, %v524
  %v2231 = vmul.f32 %v2133, %v528
  %v2232 = vmul.f32 %v2134, %v532
  %v2233 = vmul.f32 %v2135, %v536
  %v2234 = vrot.slane %v2136, 1
  %v2236 = vrot.slane %v2121, 1
  %v2237 = vrot.slane %v2122, 1
  %v2238 = vsel %vm556, %v2236, %v2237
  %v2239 = vrot.slane %v2123, 1
  %v2240 = vsel %vm556, %v2237, %v2239
  %v2241 = vrot.slane %v2124, 1
  %v2242 = vsel %vm556, %v2239, %v2241
  %v2243 = vrot.slane %v2125, 1
  %v2244 = vsel %vm556, %v2241, %v2243
  %v2245 = vrot.slane %v2126, 1
  %v2246 = vsel %vm556, %v2243, %v2245
  %v2247 = vrot.slane %v2127, 1
  %v2248 = vsel %vm556, %v2245, %v2247
  %v2249 = vrot.slane %v2128, 1
  %v2250 = vsel %vm556, %v2247, %v2249
  %v2251 = vrot.slane %v2129, 1
  %v2252 = vsel %vm556, %v2249, %v2251
  %v2253 = vrot.slane %v2130, 1
  %v2254 = vsel %vm556, %v2251, %v2253
  %v2255 = vrot.slane %v2131, 1
  %v2256 = vsel %vm556, %v2253, %v2255
  %v2257 = vrot.slane %v2132, 1
  %v2258 = vsel %vm556, %v2255, %v2257
  %v2259 = vrot.slane %v2133, 1
  %v2260 = vsel %vm556, %v2257, %v2259
  %v2261 = vrot.slane %v2134, 1
  %v2262 = vsel %vm556, %v2259, %v2261
  %v2263 = vrot.slane %v2135, 1
  %v2264 = vsel %vm556, %v2261, %v2263
  %v2265 = vsel %vm556, %v2263, %v2234
  %v2282 = vsel %vm556, %v2234, %v2236
  %v2283 = vmul.f32 %v2282, %v606
  %v2284 = vmul.f32 %v2238, %v610
  %v2285 = vmul.f32 %v2240, %v614
  %v2286 = vmul.f32 %v2242, %v618
  %v2287 = vmul.f32 %v2244, %v622
  %v2288 = vmul.f32 %v2246, %v626
  %v2289 = vmul.f32 %v2248, %v630
  %v2290 = vmul.f32 %v2250, %v634
  %v2291 = vmul.f32 %v2252, %v638
  %v2292 = vmul.f32 %v2254, %v642
  %v2293 = vmul.f32 %v2256, %v646
  %v2294 = vmul.f32 %v2258, %v650
  %v2295 = vmul.f32 %v2260, %v654
  %v2296 = vmul.f32 %v2262, %v658
  %v2297 = vmul.f32 %v2264, %v662
  %v2298 = vmul.f32 %v2265, %v666
  %v2299 = vmul.f32 %v2201, %v686
  %v2300 = vmul.f32 %v2160, %v690
  %v2301 = vmul.f32 %v2162, %v694
  %v2302 = vmul.f32 %v2164, %v698
  %v2303 = vmul.f32 %v2166, %v702
  %v2304 = vmul.f32 %v2168, %v706
  %v2305 = vmul.f32 %v2170, %v710
  %v2306 = vmul.f32 %v2172, %v714
  %v2307 = vmul.f32 %v2174, %v718
  %v2308 = vmul.f32 %v2176, %v722
  %v2309 = vmul.f32 %v2178, %v726
  %v2310 = vmul.f32 %v2180, %v730
  %v2311 = vmul.f32 %v2182, %v734
  %v2312 = vmul.f32 %v2184, %v738
  %v2313 = vmul.f32 %v2185, %v742
  %v2314 = vmul.f32 %v2141, %v746
  %v2315 = vmul.f32 %v2121, %v766
  %v2316 = vmul.f32 %v2122, %v770
  %v2317 = vmul.f32 %v2123, %v774
  %v2318 = vmul.f32 %v2124, %v778
  %v2319 = vmul.f32 %v2125, %v782
  %v2320 = vmul.f32 %v2126, %v786
  %v2321 = vmul.f32 %v2127, %v790
  %v2322 = vmul.f32 %v2128, %v794
  %v2323 = vmul.f32 %v2129, %v798
  %v2324 = vmul.f32 %v2130, %v802
  %v2325 = vmul.f32 %v2131, %v806
  %v2326 = vmul.f32 %v2132, %v810
  %v2327 = vmul.f32 %v2133, %v814
  %v2328 = vmul.f32 %v2134, %v818
  %v2329 = vmul.f32 %v2135, %v822
  %v2330 = vmul.f32 %v2136, %v826
  %v2331 = vmul.f32 %v2238, %v846
  %v2332 = vmul.f32 %v2240, %v850
  %v2333 = vmul.f32 %v2242, %v854
  %v2334 = vmul.f32 %v2244, %v858
  %v2335 = vmul.f32 %v2246, %v862
  %v2336 = vmul.f32 %v2248, %v866
  %v2337 = vmul.f32 %v2250, %v870
  %v2338 = vmul.f32 %v2252, %v874
  %v2339 = vmul.f32 %v2254, %v878
  %v2340 = vmul.f32 %v2256, %v882
  %v2341 = vmul.f32 %v2258, %v886
  %v2342 = vmul.f32 %v2260, %v890
  %v2343 = vmul.f32 %v2262, %v894
  %v2344 = vmul.f32 %v2264, %v898
  %v2345 = vmul.f32 %v2265, %v902
  %v2346 = vmul.f32 %v2282, %v906
  %v2347 = vmul.f32 %v2160, %v926
  %v2348 = vmul.f32 %v2162, %v930
  %v2349 = vmul.f32 %v2164, %v934
  %v2350 = vmul.f32 %v2166, %v938
  %v2351 = vmul.f32 %v2168, %v942
  %v2352 = vmul.f32 %v2170, %v946
  %v2353 = vmul.f32 %v2172, %v950
  %v2354 = vmul.f32 %v2174, %v954
  %v2355 = vmul.f32 %v2176, %v958
  %v2356 = vmul.f32 %v2178, %v962
  %v2357 = vmul.f32 %v2180, %v966
  %v2358 = vmul.f32 %v2182, %v970
  %v2359 = vmul.f32 %v2184, %v974
  %v2360 = vmul.f32 %v2185, %v978
  %v2361 = vmul.f32 %v2141, %v982
  %v2362 = vmul.f32 %v2201, %v986
  %v2363 = vmul.f32 %v2122, %v1006
  %v2364 = vmul.f32 %v2123, %v1010
  %v2365 = vmul.f32 %v2124, %v1014
  %v2366 = vmul.f32 %v2125, %v1018
  %v2367 = vmul.f32 %v2126, %v1022
  %v2368 = vmul.f32 %v2127, %v1026
  %v2369 = vmul.f32 %v2128, %v1030
  %v2370 = vmul.f32 %v2129, %v1034
  %v2371 = vmul.f32 %v2130, %v1038
  %v2372 = vmul.f32 %v2131, %v1042
  %v2373 = vmul.f32 %v2132, %v1046
  %v2374 = vmul.f32 %v2133, %v1050
  %v2375 = vmul.f32 %v2134, %v1054
  %v2376 = vmul.f32 %v2135, %v1058
  %v2377 = vmul.f32 %v2136, %v1062
  %v2378 = vmul.f32 %v2121, %v1066
  %v2379 = vmul.f32 %v2240, %v1086
  %v2380 = vmul.f32 %v2242, %v1090
  %v2381 = vmul.f32 %v2244, %v1094
  %v2382 = vmul.f32 %v2246, %v1098
  %v2383 = vmul.f32 %v2248, %v1102
  %v2384 = vmul.f32 %v2250, %v1106
  %v2385 = vmul.f32 %v2252, %v1110
  %v2386 = vmul.f32 %v2254, %v1114
  %v2387 = vmul.f32 %v2256, %v1118
  %v2388 = vmul.f32 %v2258, %v1122
  %v2389 = vmul.f32 %v2260, %v1126
  %v2390 = vmul.f32 %v2262, %v1130
  %v2391 = vmul.f32 %v2264, %v1134
  %v2392 = vmul.f32 %v2265, %v1138
  %v2393 = vmul.f32 %v2282, %v1142
  %v2394 = vmul.f32 %v2238, %v1146
  %v2395 = vpack.c.bf16 %v2203, %v2202
  %v2396 = vpack.c.bf16 %v2219, %v2218
  %v2397 = vpack.c.bf16 %v2284, %v2283
  %v2398 = vpack.c.bf16 %v2300, %v2299
  %v2399 = vpack.c.bf16 %v2316, %v2315
  %v2400 = vpack.c.bf16 %v2332, %v2331
  %v2401 = vpack.c.bf16 %v2348, %v2347
  %v2402 = vpack.c.bf16 %v2364, %v2363
  %v2403 = vpack.c.bf16 %v2380, %v2379
  %v2404 = vpack.c.bf16 %v2205, %v2204
  %v2405 = vpack.c.bf16 %v2221, %v2220
  %v2406 = vpack.c.bf16 %v2286, %v2285
  %v2407 = vpack.c.bf16 %v2302, %v2301
  %v2408 = vpack.c.bf16 %v2318, %v2317
  %v2409 = vpack.c.bf16 %v2334, %v2333
  %v2410 = vpack.c.bf16 %v2350, %v2349
  %v2411 = vpack.c.bf16 %v2366, %v2365
  %v2412 = vpack.c.bf16 %v2382, %v2381
  %v2413 = vpack.c.bf16 %v2207, %v2206
  %v2414 = vpack.c.bf16 %v2223, %v2222
  %v2415 = vpack.c.bf16 %v2288, %v2287
  %v2416 = vpack.c.bf16 %v2304, %v2303
  %v2417 = vpack.c.bf16 %v2320, %v2319
  %v2418 = vpack.c.bf16 %v2336, %v2335
  %v2419 = vpack.c.bf16 %v2352, %v2351
  %v2420 = vpack.c.bf16 %v2368, %v2367
  %v2421 = vpack.c.bf16 %v2384, %v2383
  %v2422 = vpack.c.bf16 %v2209, %v2208
  %v2423 = vpack.c.bf16 %v2225, %v2224
  %v2424 = vpack.c.bf16 %v2290, %v2289
  %v2425 = vpack.c.bf16 %v2306, %v2305
  %v2426 = vpack.c.bf16 %v2322, %v2321
  %v2427 = vpack.c.bf16 %v2338, %v2337
  %v2428 = vpack.c.bf16 %v2354, %v2353
  %v2429 = vpack.c.bf16 %v2370, %v2369
  %v2430 = vpack.c.bf16 %v2386, %v2385
  %v2431 = vpack.c.bf16 %v2211, %v2210
  %v2432 = vpack.c.bf16 %v2227, %v2226
  %v2433 = vpack.c.bf16 %v2292, %v2291
  %v2434 = vpack.c.bf16 %v2308, %v2307
  %v2435 = vpack.c.bf16 %v2324, %v2323
  %v2436 = vpack.c.bf16 %v2340, %v2339
  %v2437 = vpack.c.bf16 %v2356, %v2355
  %v2438 = vpack.c.bf16 %v2372, %v2371
  %v2439 = vpack.c.bf16 %v2388, %v2387
  %v2440 = vpack.c.bf16 %v2213, %v2212
  %v2441 = vpack.c.bf16 %v2229, %v2228
  %v2442 = vpack.c.bf16 %v2294, %v2293
  %v2443 = vpack.c.bf16 %v2310, %v2309
  %v2444 = vpack.c.bf16 %v2326, %v2325
  %v2445 = vpack.c.bf16 %v2342, %v2341
  %v2446 = vpack.c.bf16 %v2358, %v2357
  %v2447 = vpack.c.bf16 %v2374, %v2373
  %v2448 = vpack.c.bf16 %v2390, %v2389
  %v2449 = vpack.c.bf16 %v2215, %v2214
  %v2450 = vpack.c.bf16 %v2231, %v2230
  %v2451 = vpack.c.bf16 %v2296, %v2295
  %v2452 = vpack.c.bf16 %v2312, %v2311
  %v2453 = vpack.c.bf16 %v2328, %v2327
  %v2454 = vpack.c.bf16 %v2344, %v2343
  %v2455 = vpack.c.bf16 %v2360, %v2359
  %v2456 = vpack.c.bf16 %v2376, %v2375
  %v2457 = vpack.c.bf16 %v2392, %v2391
  %v2458 = vpack.c.bf16 %v2217, %v2216
  %v2459 = vpack.c.bf16 %v2233, %v2232
  %v2460 = vpack.c.bf16 %v2298, %v2297
  %v2461 = vpack.c.bf16 %v2314, %v2313
  %v2462 = vpack.c.bf16 %v2330, %v2329
  %v2463 = vpack.c.bf16 %v2346, %v2345
  %v2464 = vpack.c.bf16 %v2362, %v2361
  %v2465 = vpack.c.bf16 %v2378, %v2377
  %v2466 = vpack.c.bf16 %v2394, %v2393
  %v2467 = vld [vmem:[%s8] sm:$0xf]
  %v2468 = vld [vmem:[%s8 + $0x4] sm:$0xf]
  %v2469 = vld [vmem:[%s8 + $0x8] sm:$0xf]
  %v2470 = vld [vmem:[%s8 + $0xc] sm:$0xf]
  %v2471 = vld [vmem:[%s8 + $0x10] sm:$0xf]
  %v2472 = vld [vmem:[%s8 + $0x14] sm:$0xf]
  %v2473 = vld [vmem:[%s8 + $0x18] sm:$0xf]
  %v2474 = vld [vmem:[%s8 + $0x1c] sm:$0xf]
  %v2475 = vld [vmem:[%s8 + $0x20] sm:$0xf]
  %v2476 = vld [vmem:[%s8 + $0x24] sm:$0xf]
  %v2477 = vld [vmem:[%s8 + $0x28] sm:$0xf]
  %v2478 = vld [vmem:[%s8 + $0x2c] sm:$0xf]
  %v2479 = vld [vmem:[%s8 + $0x30] sm:$0xf]
  %v2480 = vld [vmem:[%s8 + $0x34] sm:$0xf]
  %v2481 = vld [vmem:[%s8 + $0x38] sm:$0xf]
  %v2482 = vld [vmem:[%s8 + $0x3c] sm:$0xf]
  %v2483 = vld [vmem:[%s8 + $0x40] sm:$0xf]
  %v2484 = vld [vmem:[%s8 + $0x44] sm:$0xf]
  %v2485 = vld [vmem:[%s8 + $0x48] sm:$0xf]
  %v2486 = vld [vmem:[%s8 + $0x4c] sm:$0xf]
  %v2487 = vld [vmem:[%s8 + $0x50] sm:$0xf]
  %v2488 = vld [vmem:[%s8 + $0x54] sm:$0xf]
  %v2489 = vld [vmem:[%s8 + $0x58] sm:$0xf]
  %v2490 = vld [vmem:[%s8 + $0x5c] sm:$0xf]
  %v2491 = vld [vmem:[%s8 + $0x60] sm:$0xf]
  %v2492 = vld [vmem:[%s8 + $0x64] sm:$0xf]
  %v2493 = vld [vmem:[%s8 + $0x68] sm:$0xf]
  %v2494 = vld [vmem:[%s8 + $0x6c] sm:$0xf]
  %v2495 = vld [vmem:[%s8 + $0x70] sm:$0xf]
  %v2496 = vld [vmem:[%s8 + $0x74] sm:$0xf]
  %v2497 = vld [vmem:[%s8 + $0x78] sm:$0xf]
  %v2498 = vld [vmem:[%s8 + $0x7c] sm:$0xf]
  %v2499 = vld [vmem:[%s8 + $0x80] sm:$0xf]
  %v2500 = vld [vmem:[%s8 + $0x84] sm:$0xf]
  %v2501 = vld [vmem:[%s8 + $0x88] sm:$0xf]
  %v2502 = vld [vmem:[%s8 + $0x8c] sm:$0xf]
  %v2503 = vld [vmem:[%s8 + $0x90] sm:$0xf]
  %v2504 = vld [vmem:[%s8 + $0x94] sm:$0xf]
  %v2505 = vld [vmem:[%s8 + $0x98] sm:$0xf]
  %v2506 = vld [vmem:[%s8 + $0x9c] sm:$0xf]
  %v2507 = vld [vmem:[%s8 + $0xa0] sm:$0xf]
  %v2508 = vld [vmem:[%s8 + $0xa4] sm:$0xf]
  %v2509 = vld [vmem:[%s8 + $0xa8] sm:$0xf]
  %v2510 = vld [vmem:[%s8 + $0xac] sm:$0xf]
  %v2511 = vld [vmem:[%s8 + $0xb0] sm:$0xf]
  %v2512 = vld [vmem:[%s8 + $0xb4] sm:$0xf]
  %v2513 = vld [vmem:[%s8 + $0xb8] sm:$0xf]
  %v2514 = vld [vmem:[%s8 + $0xbc] sm:$0xf]
  %v2515 = vld [vmem:[%s8 + $0xc0] sm:$0xf]
  %v2516 = vld [vmem:[%s8 + $0xc4] sm:$0xf]
  %v2517 = vld [vmem:[%s8 + $0xc8] sm:$0xf]
  %v2518 = vld [vmem:[%s8 + $0xcc] sm:$0xf]
  %v2519 = vld [vmem:[%s8 + $0xd0] sm:$0xf]
  %v2520 = vld [vmem:[%s8 + $0xd4] sm:$0xf]
  %v2521 = vld [vmem:[%s8 + $0xd8] sm:$0xf]
  %v2522 = vld [vmem:[%s8 + $0xdc] sm:$0xf]
  %v2523 = vld [vmem:[%s8 + $0xe0] sm:$0xf]
  %v2524 = vld [vmem:[%s8 + $0xe4] sm:$0xf]
  %v2525 = vld [vmem:[%s8 + $0xe8] sm:$0xf]
  %v2526 = vld [vmem:[%s8 + $0xec] sm:$0xf]
  %v2527 = vld [vmem:[%s8 + $0xf0] sm:$0xf]
  %v2528 = vld [vmem:[%s8 + $0xf4] sm:$0xf]
  %v2529 = vld [vmem:[%s8 + $0xf8] sm:$0xf]
  %v2530 = vld [vmem:[%s8 + $0xfc] sm:$0xf]
  %v2531 = vld [vmem:[%s8 + $0x100] sm:$0xf]
  %v2532 = vld [vmem:[%s8 + $0x104] sm:$0xf]
  %v2533 = vld [vmem:[%s8 + $0x108] sm:$0xf]
  %v2534 = vld [vmem:[%s8 + $0x10c] sm:$0xf]
  %v2535 = vld [vmem:[%s8 + $0x110] sm:$0xf]
  %v2536 = vld [vmem:[%s8 + $0x114] sm:$0xf]
  %v2537 = vld [vmem:[%s8 + $0x118] sm:$0xf]
  %v2538 = vld [vmem:[%s8 + $0x11c] sm:$0xf]
  %v2539 = vld [vmem:[%s8 + $0x120] sm:$0xf]
  %v2540 = vld [vmem:[%s8 + $0x124] sm:$0xf]
  %v2541 = vld [vmem:[%s8 + $0x128] sm:$0xf]
  %v2542 = vld [vmem:[%s8 + $0x12c] sm:$0xf]
  %v2543 = vld [vmem:[%s8 + $0x130] sm:$0xf]
  %v2544 = vld [vmem:[%s8 + $0x134] sm:$0xf]
  %v2545 = vld [vmem:[%s8 + $0x138] sm:$0xf]
  %v2546 = vld [vmem:[%s8 + $0x13c] sm:$0xf]
  %v2547 = vld [vmem:[%s8 + $0x140] sm:$0xf]
  %v2548 = vld [vmem:[%s8 + $0x144] sm:$0xf]
  %v2549 = vld [vmem:[%s8 + $0x148] sm:$0xf]
  %v2550 = vld [vmem:[%s8 + $0x14c] sm:$0xf]
  %v2551 = vld [vmem:[%s8 + $0x150] sm:$0xf]
  %v2552 = vld [vmem:[%s8 + $0x154] sm:$0xf]
  %v2553 = vld [vmem:[%s8 + $0x158] sm:$0xf]
  %v2554 = vld [vmem:[%s8 + $0x15c] sm:$0xf]
  %v2555 = vld [vmem:[%s8 + $0x160] sm:$0xf]
  %v2556 = vld [vmem:[%s8 + $0x164] sm:$0xf]
  %v2557 = vld [vmem:[%s8 + $0x168] sm:$0xf]
  %v2558 = vld [vmem:[%s8 + $0x16c] sm:$0xf]
  %v2559 = vld [vmem:[%s8 + $0x170] sm:$0xf]
  %v2560 = vld [vmem:[%s8 + $0x174] sm:$0xf]
  %v2561 = vld [vmem:[%s8 + $0x178] sm:$0xf]
  %v2562 = vld [vmem:[%s8 + $0x17c] sm:$0xf]
  %v2563 = vld [vmem:[%s8 + $0x180] sm:$0xf]
  %v2564 = vld [vmem:[%s8 + $0x184] sm:$0xf]
  %v2565 = vld [vmem:[%s8 + $0x188] sm:$0xf]
  %v2566 = vld [vmem:[%s8 + $0x18c] sm:$0xf]
  %v2567 = vld [vmem:[%s8 + $0x190] sm:$0xf]
  %v2568 = vld [vmem:[%s8 + $0x194] sm:$0xf]
  %v2569 = vld [vmem:[%s8 + $0x198] sm:$0xf]
  %v2570 = vld [vmem:[%s8 + $0x19c] sm:$0xf]
  %v2571 = vld [vmem:[%s8 + $0x1a0] sm:$0xf]
  %v2572 = vld [vmem:[%s8 + $0x1a4] sm:$0xf]
  %v2573 = vld [vmem:[%s8 + $0x1a8] sm:$0xf]
  %v2574 = vld [vmem:[%s8 + $0x1ac] sm:$0xf]
  %v2575 = vld [vmem:[%s8 + $0x1b0] sm:$0xf]
  %v2576 = vld [vmem:[%s8 + $0x1b4] sm:$0xf]
  %v2577 = vld [vmem:[%s8 + $0x1b8] sm:$0xf]
  %v2578 = vld [vmem:[%s8 + $0x1bc] sm:$0xf]
  %v2579 = vld [vmem:[%s8 + $0x1c0] sm:$0xf]
  %v2580 = vld [vmem:[%s8 + $0x1c4] sm:$0xf]
  %v2581 = vld [vmem:[%s8 + $0x1c8] sm:$0xf]
  %v2582 = vld [vmem:[%s8 + $0x1cc] sm:$0xf]
  %v2583 = vld [vmem:[%s8 + $0x1d0] sm:$0xf]
  %v2584 = vld [vmem:[%s8 + $0x1d4] sm:$0xf]
  %v2585 = vld [vmem:[%s8 + $0x1d8] sm:$0xf]
  %v2586 = vld [vmem:[%s8 + $0x1dc] sm:$0xf]
  %v2587 = vld [vmem:[%s8 + $0x1e0] sm:$0xf]
  %v2588 = vld [vmem:[%s8 + $0x1e4] sm:$0xf]
  %v2589 = vld [vmem:[%s8 + $0x1e8] sm:$0xf]
  %v2590 = vld [vmem:[%s8 + $0x1ec] sm:$0xf]
  %v2591 = vld [vmem:[%s8 + $0x1f0] sm:$0xf]
  %v2592 = vld [vmem:[%s8 + $0x1f4] sm:$0xf]
  %v2593 = vld [vmem:[%s8 + $0x1f8] sm:$0xf]
  %v2594 = vld [vmem:[%s8 + $0x1fc] sm:$0xf]
  %v2595 = vld [vmem:[%s8 + $0x200] sm:$0xf]
  %v2596 = vld [vmem:[%s8 + $0x204] sm:$0xf]
  %v2597 = vld [vmem:[%s8 + $0x208] sm:$0xf]
  %v2598 = vld [vmem:[%s8 + $0x20c] sm:$0xf]
  %v2599 = vld [vmem:[%s8 + $0x210] sm:$0xf]
  %v2600 = vld [vmem:[%s8 + $0x214] sm:$0xf]
  %v2601 = vld [vmem:[%s8 + $0x218] sm:$0xf]
  %v2602 = vld [vmem:[%s8 + $0x21c] sm:$0xf]
  %v2603 = vld [vmem:[%s8 + $0x220] sm:$0xf]
  %v2604 = vld [vmem:[%s8 + $0x224] sm:$0xf]
  %v2605 = vld [vmem:[%s8 + $0x228] sm:$0xf]
  %v2606 = vld [vmem:[%s8 + $0x22c] sm:$0xf]
  %v2607 = vld [vmem:[%s8 + $0x230] sm:$0xf]
  %v2608 = vld [vmem:[%s8 + $0x234] sm:$0xf]
  %v2609 = vld [vmem:[%s8 + $0x238] sm:$0xf]
  %v2610 = vld [vmem:[%s8 + $0x23c] sm:$0xf]
  %v2755 = vunpack.c.l.b16 %v2467
  %v2756 = vunpack.c.l.b16 %v2468
  %v2757 = vunpack.c.l.b16 %v2469
  %v2758 = vunpack.c.l.b16 %v2470
  %v2759 = vunpack.c.l.b16 %v2471
  %v2760 = vunpack.c.l.b16 %v2472
  %v2761 = vunpack.c.l.b16 %v2473
  %v2762 = vunpack.c.l.b16 %v2474
  %v2763 = vunpack.c.l.b16 %v2475
  %v2764 = vunpack.c.l.b16 %v2476
  %v2765 = vunpack.c.l.b16 %v2477
  %v2766 = vunpack.c.l.b16 %v2478
  %v2767 = vunpack.c.l.b16 %v2479
  %v2768 = vunpack.c.l.b16 %v2480
  %v2769 = vunpack.c.l.b16 %v2481
  %v2770 = vunpack.c.l.b16 %v2482
  %v2771 = vunpack.c.l.b16 %v2483
  %v2772 = vunpack.c.l.b16 %v2484
  %v2773 = vunpack.c.l.b16 %v2485
  %v2774 = vunpack.c.l.b16 %v2486
  %v2775 = vunpack.c.l.b16 %v2487
  %v2776 = vunpack.c.l.b16 %v2488
  %v2777 = vunpack.c.l.b16 %v2489
  %v2778 = vunpack.c.l.b16 %v2490
  %v2779 = vunpack.c.l.b16 %v2491
  %v2780 = vunpack.c.l.b16 %v2492
  %v2781 = vunpack.c.l.b16 %v2493
  %v2782 = vunpack.c.l.b16 %v2494
  %v2783 = vunpack.c.l.b16 %v2495
  %v2784 = vunpack.c.l.b16 %v2496
  %v2785 = vunpack.c.l.b16 %v2497
  %v2786 = vunpack.c.l.b16 %v2498
  %v2787 = vunpack.c.l.b16 %v2499
  %v2788 = vunpack.c.l.b16 %v2500
  %v2789 = vunpack.c.l.b16 %v2501
  %v2790 = vunpack.c.l.b16 %v2502
  %v2791 = vunpack.c.l.b16 %v2503
  %v2792 = vunpack.c.l.b16 %v2504
  %v2793 = vunpack.c.l.b16 %v2505
  %v2794 = vunpack.c.l.b16 %v2506
  %v2795 = vunpack.c.l.b16 %v2507
  %v2796 = vunpack.c.l.b16 %v2508
  %v2797 = vunpack.c.l.b16 %v2509
  %v2798 = vunpack.c.l.b16 %v2510
  %v2799 = vunpack.c.l.b16 %v2511
  %v2800 = vunpack.c.l.b16 %v2512
  %v2801 = vunpack.c.l.b16 %v2513
  %v2802 = vunpack.c.l.b16 %v2514
  %v2803 = vunpack.c.l.b16 %v2515
  %v2804 = vunpack.c.l.b16 %v2516
  %v2805 = vunpack.c.l.b16 %v2517
  %v2806 = vunpack.c.l.b16 %v2518
  %v2807 = vunpack.c.l.b16 %v2519
  %v2808 = vunpack.c.l.b16 %v2520
  %v2809 = vunpack.c.l.b16 %v2521
  %v2810 = vunpack.c.l.b16 %v2522
  %v2811 = vunpack.c.l.b16 %v2523
  %v2812 = vunpack.c.l.b16 %v2524
  %v2813 = vunpack.c.l.b16 %v2525
  %v2814 = vunpack.c.l.b16 %v2526
  %v2815 = vunpack.c.l.b16 %v2527
  %v2816 = vunpack.c.l.b16 %v2528
  %v2817 = vunpack.c.l.b16 %v2529
  %v2818 = vunpack.c.l.b16 %v2530
  %v2819 = vunpack.c.l.b16 %v2531
  %v2820 = vunpack.c.l.b16 %v2532
  %v2821 = vunpack.c.l.b16 %v2533
  %v2822 = vunpack.c.l.b16 %v2534
  %v2823 = vunpack.c.l.b16 %v2535
  %v2824 = vunpack.c.l.b16 %v2536
  %v2825 = vunpack.c.l.b16 %v2537
  %v2826 = vunpack.c.l.b16 %v2538
  %v2827 = vunpack.c.l.b16 %v2539
  %v2828 = vunpack.c.l.b16 %v2540
  %v2829 = vunpack.c.l.b16 %v2541
  %v2830 = vunpack.c.l.b16 %v2542
  %v2831 = vunpack.c.l.b16 %v2543
  %v2832 = vunpack.c.l.b16 %v2544
  %v2833 = vunpack.c.l.b16 %v2545
  %v2834 = vunpack.c.l.b16 %v2546
  %v2835 = vunpack.c.l.b16 %v2547
  %v2836 = vunpack.c.l.b16 %v2548
  %v2837 = vunpack.c.l.b16 %v2549
  %v2838 = vunpack.c.l.b16 %v2550
  %v2839 = vunpack.c.l.b16 %v2551
  %v2840 = vunpack.c.l.b16 %v2552
  %v2841 = vunpack.c.l.b16 %v2553
  %v2842 = vunpack.c.l.b16 %v2554
  %v2843 = vunpack.c.l.b16 %v2555
  %v2844 = vunpack.c.l.b16 %v2556
  %v2845 = vunpack.c.l.b16 %v2557
  %v2846 = vunpack.c.l.b16 %v2558
  %v2847 = vunpack.c.l.b16 %v2559
  %v2848 = vunpack.c.l.b16 %v2560
  %v2849 = vunpack.c.l.b16 %v2561
  %v2850 = vunpack.c.l.b16 %v2562
  %v2851 = vunpack.c.l.b16 %v2563
  %v2852 = vunpack.c.l.b16 %v2564
  %v2853 = vunpack.c.l.b16 %v2565
  %v2854 = vunpack.c.l.b16 %v2566
  %v2855 = vunpack.c.l.b16 %v2567
  %v2856 = vunpack.c.l.b16 %v2568
  %v2857 = vunpack.c.l.b16 %v2569
  %v2858 = vunpack.c.l.b16 %v2570
  %v2859 = vunpack.c.l.b16 %v2571
  %v2860 = vunpack.c.l.b16 %v2572
  %v2861 = vunpack.c.l.b16 %v2573
  %v2862 = vunpack.c.l.b16 %v2574
  %v2863 = vunpack.c.l.b16 %v2575
  %v2864 = vunpack.c.l.b16 %v2576
  %v2865 = vunpack.c.l.b16 %v2577
  %v2866 = vunpack.c.l.b16 %v2578
  %v2867 = vunpack.c.l.b16 %v2579
  %v2868 = vunpack.c.l.b16 %v2580
  %v2869 = vunpack.c.l.b16 %v2581
  %v2870 = vunpack.c.l.b16 %v2582
  %v2871 = vunpack.c.l.b16 %v2583
  %v2872 = vunpack.c.l.b16 %v2584
  %v2873 = vunpack.c.l.b16 %v2585
  %v2874 = vunpack.c.l.b16 %v2586
  %v2875 = vunpack.c.l.b16 %v2587
  %v2876 = vunpack.c.l.b16 %v2588
  %v2877 = vunpack.c.l.b16 %v2589
  %v2878 = vunpack.c.l.b16 %v2590
  %v2879 = vunpack.c.l.b16 %v2591
  %v2880 = vunpack.c.l.b16 %v2592
  %v2881 = vunpack.c.l.b16 %v2593
  %v2882 = vunpack.c.l.b16 %v2594
  %v2883 = vunpack.c.l.b16 %v2595
  %v2884 = vunpack.c.l.b16 %v2596
  %v2885 = vunpack.c.l.b16 %v2597
  %v2886 = vunpack.c.l.b16 %v2598
  %v2887 = vunpack.c.l.b16 %v2599
  %v2888 = vunpack.c.l.b16 %v2600
  %v2889 = vunpack.c.l.b16 %v2601
  %v2890 = vunpack.c.l.b16 %v2602
  %v2891 = vunpack.c.l.b16 %v2603
  %v2892 = vunpack.c.l.b16 %v2604
  %v2893 = vunpack.c.l.b16 %v2605
  %v2894 = vunpack.c.l.b16 %v2606
  %v2895 = vunpack.c.l.b16 %v2607
  %v2896 = vunpack.c.l.b16 %v2608
  %v2897 = vunpack.c.l.b16 %v2609
  %v2898 = vunpack.c.l.b16 %v2610
  %v2899 = vpack.c.b16 %v2756, %v2755
  %v2900 = vpack.c.b16 %v2758, %v2757
  %v2901 = vpack.c.b16 %v2760, %v2759
  %v2902 = vpack.c.b16 %v2762, %v2761
  %v2903 = vpack.c.b16 %v2764, %v2763
  %v2904 = vpack.c.b16 %v2766, %v2765
  %v2905 = vpack.c.b16 %v2768, %v2767
  %v2906 = vpack.c.b16 %v2770, %v2769
  %v2907 = vpack.c.b16 %v2772, %v2771
  %v2908 = vpack.c.b16 %v2774, %v2773
  %v2909 = vpack.c.b16 %v2776, %v2775
  %v2910 = vpack.c.b16 %v2778, %v2777
  %v2911 = vpack.c.b16 %v2780, %v2779
  %v2912 = vpack.c.b16 %v2782, %v2781
  %v2913 = vpack.c.b16 %v2784, %v2783
  %v2914 = vpack.c.b16 %v2786, %v2785
  %v2915 = vpack.c.b16 %v2788, %v2787
  %v2916 = vpack.c.b16 %v2790, %v2789
  %v2917 = vpack.c.b16 %v2792, %v2791
  %v2918 = vpack.c.b16 %v2794, %v2793
  %v2919 = vpack.c.b16 %v2796, %v2795
  %v2920 = vpack.c.b16 %v2798, %v2797
  %v2921 = vpack.c.b16 %v2800, %v2799
  %v2922 = vpack.c.b16 %v2802, %v2801
  %v2923 = vpack.c.b16 %v2804, %v2803
  %v2924 = vpack.c.b16 %v2806, %v2805
  %v2925 = vpack.c.b16 %v2808, %v2807
  %v2926 = vpack.c.b16 %v2810, %v2809
  %v2927 = vpack.c.b16 %v2812, %v2811
  %v2928 = vpack.c.b16 %v2814, %v2813
  %v2929 = vpack.c.b16 %v2816, %v2815
  %v2930 = vpack.c.b16 %v2818, %v2817
  %v2931 = vpack.c.b16 %v2820, %v2819
  %v2932 = vpack.c.b16 %v2822, %v2821
  %v2933 = vpack.c.b16 %v2824, %v2823
  %v2934 = vpack.c.b16 %v2826, %v2825
  %v2935 = vpack.c.b16 %v2828, %v2827
  %v2936 = vpack.c.b16 %v2830, %v2829
  %v2937 = vpack.c.b16 %v2832, %v2831
  %v2938 = vpack.c.b16 %v2834, %v2833
  %v2939 = vpack.c.b16 %v2836, %v2835
  %v2940 = vpack.c.b16 %v2838, %v2837
  %v2941 = vpack.c.b16 %v2840, %v2839
  %v2942 = vpack.c.b16 %v2842, %v2841
  %v2943 = vpack.c.b16 %v2844, %v2843
  %v2944 = vpack.c.b16 %v2846, %v2845
  %v2945 = vpack.c.b16 %v2848, %v2847
  %v2946 = vpack.c.b16 %v2850, %v2849
  %v2947 = vpack.c.b16 %v2852, %v2851
  %v2948 = vpack.c.b16 %v2854, %v2853
  %v2949 = vpack.c.b16 %v2856, %v2855
  %v2950 = vpack.c.b16 %v2858, %v2857
  %v2951 = vpack.c.b16 %v2860, %v2859
  %v2952 = vpack.c.b16 %v2862, %v2861
  %v2953 = vpack.c.b16 %v2864, %v2863
  %v2954 = vpack.c.b16 %v2866, %v2865
  %v2955 = vpack.c.b16 %v2868, %v2867
  %v2956 = vpack.c.b16 %v2870, %v2869
  %v2957 = vpack.c.b16 %v2872, %v2871
  %v2958 = vpack.c.b16 %v2874, %v2873
  %v2959 = vpack.c.b16 %v2876, %v2875
  %v2960 = vpack.c.b16 %v2878, %v2877
  %v2961 = vpack.c.b16 %v2880, %v2879
  %v2962 = vpack.c.b16 %v2882, %v2881
  %v2963 = vpack.c.b16 %v2884, %v2883
  %v2964 = vpack.c.b16 %v2886, %v2885
  %v2965 = vpack.c.b16 %v2888, %v2887
  %v2966 = vpack.c.b16 %v2890, %v2889
  %v2967 = vpack.c.b16 %v2892, %v2891
  %v2968 = vpack.c.b16 %v2894, %v2893
  %v2969 = vpack.c.b16 %v2896, %v2895
  %v2970 = vpack.c.b16 %v2898, %v2897
  %3043 = vmatpush.bf16.msra.mxu0 %v2906
  %3044 = vmatpush.bf16.msra.mxu0 %v2905
  %3045 = vmatpush.bf16.msra.mxu0 %v2904
  %3046 = vmatpush.bf16.msra.mxu0 %v2903
  %3047 = vmatpush.bf16.msra.mxu0 %v2902
  %3048 = vmatpush.bf16.msra.mxu0 %v2901
  %3049 = vmatpush.bf16.msra.mxu0 %v2900
  %3050 = vmatpush.bf16.msra.mxu0 %v2899
  %3051 = vmatmul.bf16.gmra.mxu0 %v2395
  %v3052 = vpop.f32.mrf.mxu0
  %v3053 = vadd.f32 0.0, %v3052
  %v3054 = vpop.f32.mrf.mxu0
  %v3055 = vadd.f32 0.0, %v3054
  %3056 = vmatmul.bf16.gmra.mxu0 %v2404
  %v3057 = vpop.f32.mrf.mxu0
  %v3058 = vadd.f32 0.0, %v3057
  %v3059 = vpop.f32.mrf.mxu0
  %v3060 = vadd.f32 0.0, %v3059
  %3061 = vmatmul.bf16.gmra.mxu0 %v2413
  %v3062 = vpop.f32.mrf.mxu0
  %v3063 = vadd.f32 0.0, %v3062
  %v3064 = vpop.f32.mrf.mxu0
  %v3065 = vadd.f32 0.0, %v3064
  %3066 = vmatmul.bf16.gmra.mxu0 %v2422
  %v3067 = vpop.f32.mrf.mxu0
  %v3068 = vadd.f32 0.0, %v3067
  %v3069 = vpop.f32.mrf.mxu0
  %v3070 = vadd.f32 0.0, %v3069
  %3071 = vmatmul.bf16.gmra.mxu0 %v2431
  %v3072 = vpop.f32.mrf.mxu0
  %v3073 = vadd.f32 0.0, %v3072
  %v3074 = vpop.f32.mrf.mxu0
  %v3075 = vadd.f32 0.0, %v3074
  %3076 = vmatmul.bf16.gmra.mxu0 %v2440
  %v3077 = vpop.f32.mrf.mxu0
  %v3078 = vadd.f32 0.0, %v3077
  %v3079 = vpop.f32.mrf.mxu0
  %v3080 = vadd.f32 0.0, %v3079
  %3081 = vmatmul.bf16.gmra.mxu0 %v2449
  %v3082 = vpop.f32.mrf.mxu0
  %v3083 = vadd.f32 0.0, %v3082
  %v3084 = vpop.f32.mrf.mxu0
  %v3085 = vadd.f32 0.0, %v3084
  %3086 = vmatmul.bf16.gmra.mxu0 %v2458
  %v3087 = vpop.f32.mrf.mxu0
  %v3088 = vadd.f32 0.0, %v3087
  %v3089 = vpop.f32.mrf.mxu0
  %v3090 = vadd.f32 0.0, %v3089
  %3091 = vdwg.mxu0
  %3092 = vmatpush.bf16.msra.mxu0 %v2914
  %3093 = vmatpush.bf16.msra.mxu0 %v2913
  %3094 = vmatpush.bf16.msra.mxu0 %v2912
  %3095 = vmatpush.bf16.msra.mxu0 %v2911
  %3096 = vmatpush.bf16.msra.mxu0 %v2910
  %3097 = vmatpush.bf16.msra.mxu0 %v2909
  %3098 = vmatpush.bf16.msra.mxu0 %v2908
  %3099 = vmatpush.bf16.msra.mxu0 %v2907
  %3100 = vmatmul.bf16.gmra.mxu0 %v2396
  %v3101 = vpop.f32.mrf.mxu0
  %v3102 = vadd.f32 %v3053, %v3101
  %v3103 = vpop.f32.mrf.mxu0
  %v3104 = vadd.f32 %v3055, %v3103
  %3105 = vmatmul.bf16.gmra.mxu0 %v2405
  %v3106 = vpop.f32.mrf.mxu0
  %v3107 = vadd.f32 %v3058, %v3106
  %v3108 = vpop.f32.mrf.mxu0
  %v3109 = vadd.f32 %v3060, %v3108
  %3110 = vmatmul.bf16.gmra.mxu0 %v2414
  %v3111 = vpop.f32.mrf.mxu0
  %v3112 = vadd.f32 %v3063, %v3111
  %v3113 = vpop.f32.mrf.mxu0
  %v3114 = vadd.f32 %v3065, %v3113
  %3115 = vmatmul.bf16.gmra.mxu0 %v2423
  %v3116 = vpop.f32.mrf.mxu0
  %v3117 = vadd.f32 %v3068, %v3116
  %v3118 = vpop.f32.mrf.mxu0
  %v3119 = vadd.f32 %v3070, %v3118
  %3120 = vmatmul.bf16.gmra.mxu0 %v2432
  %v3121 = vpop.f32.mrf.mxu0
  %v3122 = vadd.f32 %v3073, %v3121
  %v3123 = vpop.f32.mrf.mxu0
  %v3124 = vadd.f32 %v3075, %v3123
  %3125 = vmatmul.bf16.gmra.mxu0 %v2441
  %v3126 = vpop.f32.mrf.mxu0
  %v3127 = vadd.f32 %v3078, %v3126
  %v3128 = vpop.f32.mrf.mxu0
  %v3129 = vadd.f32 %v3080, %v3128
  %3130 = vmatmul.bf16.gmra.mxu0 %v2450
  %v3131 = vpop.f32.mrf.mxu0
  %v3132 = vadd.f32 %v3083, %v3131
  %v3133 = vpop.f32.mrf.mxu0
  %v3134 = vadd.f32 %v3085, %v3133
  %3135 = vmatmul.bf16.gmra.mxu0 %v2459
  %v3136 = vpop.f32.mrf.mxu0
  %v3137 = vadd.f32 %v3088, %v3136
  %v3138 = vpop.f32.mrf.mxu0
  %v3139 = vadd.f32 %v3090, %v3138
  %3140 = vdwg.mxu0
  %3141 = vmatpush.bf16.msra.mxu0 %v2922
  %3142 = vmatpush.bf16.msra.mxu0 %v2921
  %3143 = vmatpush.bf16.msra.mxu0 %v2920
  %3144 = vmatpush.bf16.msra.mxu0 %v2919
  %3145 = vmatpush.bf16.msra.mxu0 %v2918
  %3146 = vmatpush.bf16.msra.mxu0 %v2917
  %3147 = vmatpush.bf16.msra.mxu0 %v2916
  %3148 = vmatpush.bf16.msra.mxu0 %v2915
  %3149 = vmatmul.bf16.gmra.mxu0 %v2397
  %v3150 = vpop.f32.mrf.mxu0
  %v3151 = vadd.f32 %v3102, %v3150
  %v3152 = vpop.f32.mrf.mxu0
  %v3153 = vadd.f32 %v3104, %v3152
  %3154 = vmatmul.bf16.gmra.mxu0 %v2406
  %v3155 = vpop.f32.mrf.mxu0
  %v3156 = vadd.f32 %v3107, %v3155
  %v3157 = vpop.f32.mrf.mxu0
  %v3158 = vadd.f32 %v3109, %v3157
  %3159 = vmatmul.bf16.gmra.mxu0 %v2415
  %v3160 = vpop.f32.mrf.mxu0
  %v3161 = vadd.f32 %v3112, %v3160
  %v3162 = vpop.f32.mrf.mxu0
  %v3163 = vadd.f32 %v3114, %v3162
  %3164 = vmatmul.bf16.gmra.mxu0 %v2424
  %v3165 = vpop.f32.mrf.mxu0
  %v3166 = vadd.f32 %v3117, %v3165
  %v3167 = vpop.f32.mrf.mxu0
  %v3168 = vadd.f32 %v3119, %v3167
  %3169 = vmatmul.bf16.gmra.mxu0 %v2433
  %v3170 = vpop.f32.mrf.mxu0
  %v3171 = vadd.f32 %v3122, %v3170
  %v3172 = vpop.f32.mrf.mxu0
  %v3173 = vadd.f32 %v3124, %v3172
  %3174 = vmatmul.bf16.gmra.mxu0 %v2442
  %v3175 = vpop.f32.mrf.mxu0
  %v3176 = vadd.f32 %v3127, %v3175
  %v3177 = vpop.f32.mrf.mxu0
  %v3178 = vadd.f32 %v3129, %v3177
  %3179 = vmatmul.bf16.gmra.mxu0 %v2451
  %v3180 = vpop.f32.mrf.mxu0
  %v3181 = vadd.f32 %v3132, %v3180
  %v3182 = vpop.f32.mrf.mxu0
  %v3183 = vadd.f32 %v3134, %v3182
  %3184 = vmatmul.bf16.gmra.mxu0 %v2460
  %v3185 = vpop.f32.mrf.mxu0
  %v3186 = vadd.f32 %v3137, %v3185
  %v3187 = vpop.f32.mrf.mxu0
  %v3188 = vadd.f32 %v3139, %v3187
  %3189 = vdwg.mxu0
  %3190 = vmatpush.bf16.msra.mxu0 %v2930
  %3191 = vmatpush.bf16.msra.mxu0 %v2929
  %3192 = vmatpush.bf16.msra.mxu0 %v2928
  %3193 = vmatpush.bf16.msra.mxu0 %v2927
  %3194 = vmatpush.bf16.msra.mxu0 %v2926
  %3195 = vmatpush.bf16.msra.mxu0 %v2925
  %3196 = vmatpush.bf16.msra.mxu0 %v2924
  %3197 = vmatpush.bf16.msra.mxu0 %v2923
  %3198 = vmatmul.bf16.gmra.mxu0 %v2398
  %v3199 = vpop.f32.mrf.mxu0
  %v3200 = vadd.f32 %v3151, %v3199
  %v3201 = vpop.f32.mrf.mxu0
  %v3202 = vadd.f32 %v3153, %v3201
  %3203 = vmatmul.bf16.gmra.mxu0 %v2407
  %v3204 = vpop.f32.mrf.mxu0
  %v3205 = vadd.f32 %v3156, %v3204
  %v3206 = vpop.f32.mrf.mxu0
  %v3207 = vadd.f32 %v3158, %v3206
  %3208 = vmatmul.bf16.gmra.mxu0 %v2416
  %v3209 = vpop.f32.mrf.mxu0
  %v3210 = vadd.f32 %v3161, %v3209
  %v3211 = vpop.f32.mrf.mxu0
  %v3212 = vadd.f32 %v3163, %v3211
  %3213 = vmatmul.bf16.gmra.mxu0 %v2425
  %v3214 = vpop.f32.mrf.mxu0
  %v3215 = vadd.f32 %v3166, %v3214
  %v3216 = vpop.f32.mrf.mxu0
  %v3217 = vadd.f32 %v3168, %v3216
  %3218 = vmatmul.bf16.gmra.mxu0 %v2434
  %v3219 = vpop.f32.mrf.mxu0
  %v3220 = vadd.f32 %v3171, %v3219
  %v3221 = vpop.f32.mrf.mxu0
  %v3222 = vadd.f32 %v3173, %v3221
  %3223 = vmatmul.bf16.gmra.mxu0 %v2443
  %v3224 = vpop.f32.mrf.mxu0
  %v3225 = vadd.f32 %v3176, %v3224
  %v3226 = vpop.f32.mrf.mxu0
  %v3227 = vadd.f32 %v3178, %v3226
  %3228 = vmatmul.bf16.gmra.mxu0 %v2452
  %v3229 = vpop.f32.mrf.mxu0
  %v3230 = vadd.f32 %v3181, %v3229
  %v3231 = vpop.f32.mrf.mxu0
  %v3232 = vadd.f32 %v3183, %v3231
  %3233 = vmatmul.bf16.gmra.mxu0 %v2461
  %v3234 = vpop.f32.mrf.mxu0
  %v3235 = vadd.f32 %v3186, %v3234
  %v3236 = vpop.f32.mrf.mxu0
  %v3237 = vadd.f32 %v3188, %v3236
  %3238 = vdwg.mxu0
  %3239 = vmatpush.bf16.msra.mxu0 %v2938
  %3240 = vmatpush.bf16.msra.mxu0 %v2937
  %3241 = vmatpush.bf16.msra.mxu0 %v2936
  %3242 = vmatpush.bf16.msra.mxu0 %v2935
  %3243 = vmatpush.bf16.msra.mxu0 %v2934
  %3244 = vmatpush.bf16.msra.mxu0 %v2933
  %3245 = vmatpush.bf16.msra.mxu0 %v2932
  %3246 = vmatpush.bf16.msra.mxu0 %v2931
  %3247 = vmatmul.bf16.gmra.mxu0 %v2399
  %v3248 = vpop.f32.mrf.mxu0
  %v3249 = vadd.f32 %v3200, %v3248
  %v3250 = vpop.f32.mrf.mxu0
  %v3251 = vadd.f32 %v3202, %v3250
  %3252 = vmatmul.bf16.gmra.mxu0 %v2408
  %v3253 = vpop.f32.mrf.mxu0
  %v3254 = vadd.f32 %v3205, %v3253
  %v3255 = vpop.f32.mrf.mxu0
  %v3256 = vadd.f32 %v3207, %v3255
  %3257 = vmatmul.bf16.gmra.mxu0 %v2417
  %v3258 = vpop.f32.mrf.mxu0
  %v3259 = vadd.f32 %v3210, %v3258
  %v3260 = vpop.f32.mrf.mxu0
  %v3261 = vadd.f32 %v3212, %v3260
  %3262 = vmatmul.bf16.gmra.mxu0 %v2426
  %v3263 = vpop.f32.mrf.mxu0
  %v3264 = vadd.f32 %v3215, %v3263
  %v3265 = vpop.f32.mrf.mxu0
  %v3266 = vadd.f32 %v3217, %v3265
  %3267 = vmatmul.bf16.gmra.mxu0 %v2435
  %v3268 = vpop.f32.mrf.mxu0
  %v3269 = vadd.f32 %v3220, %v3268
  %v3270 = vpop.f32.mrf.mxu0
  %v3271 = vadd.f32 %v3222, %v3270
  %3272 = vmatmul.bf16.gmra.mxu0 %v2444
  %v3273 = vpop.f32.mrf.mxu0
  %v3274 = vadd.f32 %v3225, %v3273
  %v3275 = vpop.f32.mrf.mxu0
  %v3276 = vadd.f32 %v3227, %v3275
  %3277 = vmatmul.bf16.gmra.mxu0 %v2453
  %v3278 = vpop.f32.mrf.mxu0
  %v3279 = vadd.f32 %v3230, %v3278
  %v3280 = vpop.f32.mrf.mxu0
  %v3281 = vadd.f32 %v3232, %v3280
  %3282 = vmatmul.bf16.gmra.mxu0 %v2462
  %v3283 = vpop.f32.mrf.mxu0
  %v3284 = vadd.f32 %v3235, %v3283
  %v3285 = vpop.f32.mrf.mxu0
  %v3286 = vadd.f32 %v3237, %v3285
  %3287 = vdwg.mxu0
  %3288 = vmatpush.bf16.msra.mxu0 %v2946
  %3289 = vmatpush.bf16.msra.mxu0 %v2945
  %3290 = vmatpush.bf16.msra.mxu0 %v2944
  %3291 = vmatpush.bf16.msra.mxu0 %v2943
  %3292 = vmatpush.bf16.msra.mxu0 %v2942
  %3293 = vmatpush.bf16.msra.mxu0 %v2941
  %3294 = vmatpush.bf16.msra.mxu0 %v2940
  %3295 = vmatpush.bf16.msra.mxu0 %v2939
  %3296 = vmatmul.bf16.gmra.mxu0 %v2400
  %v3297 = vpop.f32.mrf.mxu0
  %v3298 = vadd.f32 %v3249, %v3297
  %v3299 = vpop.f32.mrf.mxu0
  %v3300 = vadd.f32 %v3251, %v3299
  %3301 = vmatmul.bf16.gmra.mxu0 %v2409
  %v3302 = vpop.f32.mrf.mxu0
  %v3303 = vadd.f32 %v3254, %v3302
  %v3304 = vpop.f32.mrf.mxu0
  %v3305 = vadd.f32 %v3256, %v3304
  %3306 = vmatmul.bf16.gmra.mxu0 %v2418
  %v3307 = vpop.f32.mrf.mxu0
  %v3308 = vadd.f32 %v3259, %v3307
  %v3309 = vpop.f32.mrf.mxu0
  %v3310 = vadd.f32 %v3261, %v3309
  %3311 = vmatmul.bf16.gmra.mxu0 %v2427
  %v3312 = vpop.f32.mrf.mxu0
  %v3313 = vadd.f32 %v3264, %v3312
  %v3314 = vpop.f32.mrf.mxu0
  %v3315 = vadd.f32 %v3266, %v3314
  %3316 = vmatmul.bf16.gmra.mxu0 %v2436
  %v3317 = vpop.f32.mrf.mxu0
  %v3318 = vadd.f32 %v3269, %v3317
  %v3319 = vpop.f32.mrf.mxu0
  %v3320 = vadd.f32 %v3271, %v3319
  %3321 = vmatmul.bf16.gmra.mxu0 %v2445
  %v3322 = vpop.f32.mrf.mxu0
  %v3323 = vadd.f32 %v3274, %v3322
  %v3324 = vpop.f32.mrf.mxu0
  %v3325 = vadd.f32 %v3276, %v3324
  %3326 = vmatmul.bf16.gmra.mxu0 %v2454
  %v3327 = vpop.f32.mrf.mxu0
  %v3328 = vadd.f32 %v3279, %v3327
  %v3329 = vpop.f32.mrf.mxu0
  %v3330 = vadd.f32 %v3281, %v3329
  %3331 = vmatmul.bf16.gmra.mxu0 %v2463
  %v3332 = vpop.f32.mrf.mxu0
  %v3333 = vadd.f32 %v3284, %v3332
  %v3334 = vpop.f32.mrf.mxu0
  %v3335 = vadd.f32 %v3286, %v3334
  %3336 = vdwg.mxu0
  %3337 = vmatpush.bf16.msra.mxu0 %v2954
  %3338 = vmatpush.bf16.msra.mxu0 %v2953
  %3339 = vmatpush.bf16.msra.mxu0 %v2952
  %3340 = vmatpush.bf16.msra.mxu0 %v2951
  %3341 = vmatpush.bf16.msra.mxu0 %v2950
  %3342 = vmatpush.bf16.msra.mxu0 %v2949
  %3343 = vmatpush.bf16.msra.mxu0 %v2948
  %3344 = vmatpush.bf16.msra.mxu0 %v2947
  %3345 = vmatmul.bf16.gmra.mxu0 %v2401
  %v3346 = vpop.f32.mrf.mxu0
  %v3347 = vadd.f32 %v3298, %v3346
  %v3348 = vpop.f32.mrf.mxu0
  %v3349 = vadd.f32 %v3300, %v3348
  %3350 = vmatmul.bf16.gmra.mxu0 %v2410
  %v3351 = vpop.f32.mrf.mxu0
  %v3352 = vadd.f32 %v3303, %v3351
  %v3353 = vpop.f32.mrf.mxu0
  %v3354 = vadd.f32 %v3305, %v3353
  %3355 = vmatmul.bf16.gmra.mxu0 %v2419
  %v3356 = vpop.f32.mrf.mxu0
  %v3357 = vadd.f32 %v3308, %v3356
  %v3358 = vpop.f32.mrf.mxu0
  %v3359 = vadd.f32 %v3310, %v3358
  %3360 = vmatmul.bf16.gmra.mxu0 %v2428
  %v3361 = vpop.f32.mrf.mxu0
  %v3362 = vadd.f32 %v3313, %v3361
  %v3363 = vpop.f32.mrf.mxu0
  %v3364 = vadd.f32 %v3315, %v3363
  %3365 = vmatmul.bf16.gmra.mxu0 %v2437
  %v3366 = vpop.f32.mrf.mxu0
  %v3367 = vadd.f32 %v3318, %v3366
  %v3368 = vpop.f32.mrf.mxu0
  %v3369 = vadd.f32 %v3320, %v3368
  %3370 = vmatmul.bf16.gmra.mxu0 %v2446
  %v3371 = vpop.f32.mrf.mxu0
  %v3372 = vadd.f32 %v3323, %v3371
  %v3373 = vpop.f32.mrf.mxu0
  %v3374 = vadd.f32 %v3325, %v3373
  %3375 = vmatmul.bf16.gmra.mxu0 %v2455
  %v3376 = vpop.f32.mrf.mxu0
  %v3377 = vadd.f32 %v3328, %v3376
  %v3378 = vpop.f32.mrf.mxu0
  %v3379 = vadd.f32 %v3330, %v3378
  %3380 = vmatmul.bf16.gmra.mxu0 %v2464
  %v3381 = vpop.f32.mrf.mxu0
  %v3382 = vadd.f32 %v3333, %v3381
  %v3383 = vpop.f32.mrf.mxu0
  %v3384 = vadd.f32 %v3335, %v3383
  %3385 = vdwg.mxu0
  %3386 = vmatpush.bf16.msra.mxu0 %v2962
  %3387 = vmatpush.bf16.msra.mxu0 %v2961
  %3388 = vmatpush.bf16.msra.mxu0 %v2960
  %3389 = vmatpush.bf16.msra.mxu0 %v2959
  %3390 = vmatpush.bf16.msra.mxu0 %v2958
  %3391 = vmatpush.bf16.msra.mxu0 %v2957
  %3392 = vmatpush.bf16.msra.mxu0 %v2956
  %3393 = vmatpush.bf16.msra.mxu0 %v2955
  %3394 = vmatmul.bf16.gmra.mxu0 %v2402
  %v3395 = vpop.f32.mrf.mxu0
  %v3396 = vadd.f32 %v3347, %v3395
  %v3397 = vpop.f32.mrf.mxu0
  %v3398 = vadd.f32 %v3349, %v3397
  %3399 = vmatmul.bf16.gmra.mxu0 %v2411
  %v3400 = vpop.f32.mrf.mxu0
  %v3401 = vadd.f32 %v3352, %v3400
  %v3402 = vpop.f32.mrf.mxu0
  %v3403 = vadd.f32 %v3354, %v3402
  %3404 = vmatmul.bf16.gmra.mxu0 %v2420
  %v3405 = vpop.f32.mrf.mxu0
  %v3406 = vadd.f32 %v3357, %v3405
  %v3407 = vpop.f32.mrf.mxu0
  %v3408 = vadd.f32 %v3359, %v3407
  %3409 = vmatmul.bf16.gmra.mxu0 %v2429
  %v3410 = vpop.f32.mrf.mxu0
  %v3411 = vadd.f32 %v3362, %v3410
  %v3412 = vpop.f32.mrf.mxu0
  %v3413 = vadd.f32 %v3364, %v3412
  %3414 = vmatmul.bf16.gmra.mxu0 %v2438
  %v3415 = vpop.f32.mrf.mxu0
  %v3416 = vadd.f32 %v3367, %v3415
  %v3417 = vpop.f32.mrf.mxu0
  %v3418 = vadd.f32 %v3369, %v3417
  %3419 = vmatmul.bf16.gmra.mxu0 %v2447
  %v3420 = vpop.f32.mrf.mxu0
  %v3421 = vadd.f32 %v3372, %v3420
  %v3422 = vpop.f32.mrf.mxu0
  %v3423 = vadd.f32 %v3374, %v3422
  %3424 = vmatmul.bf16.gmra.mxu0 %v2456
  %v3425 = vpop.f32.mrf.mxu0
  %v3426 = vadd.f32 %v3377, %v3425
  %v3427 = vpop.f32.mrf.mxu0
  %v3428 = vadd.f32 %v3379, %v3427
  %3429 = vmatmul.bf16.gmra.mxu0 %v2465
  %v3430 = vpop.f32.mrf.mxu0
  %v3431 = vadd.f32 %v3382, %v3430
  %v3432 = vpop.f32.mrf.mxu0
  %v3433 = vadd.f32 %v3384, %v3432
  %3434 = vdwg.mxu0
  %3435 = vmatpush.bf16.msra.mxu0 %v2970
  %3436 = vmatpush.bf16.msra.mxu0 %v2969
  %3437 = vmatpush.bf16.msra.mxu0 %v2968
  %3438 = vmatpush.bf16.msra.mxu0 %v2967
  %3439 = vmatpush.bf16.msra.mxu0 %v2966
  %3440 = vmatpush.bf16.msra.mxu0 %v2965
  %3441 = vmatpush.bf16.msra.mxu0 %v2964
  %3442 = vmatpush.bf16.msra.mxu0 %v2963
  %3443 = vmatmul.bf16.gmra.mxu0 %v2403
  %v3444 = vpop.f32.mrf.mxu0
  %v3445 = vadd.f32 %v3396, %v3444
  %v3446 = vpop.f32.mrf.mxu0
  %v3447 = vadd.f32 %v3398, %v3446
  %3448 = vmatmul.bf16.gmra.mxu0 %v2412
  %v3449 = vpop.f32.mrf.mxu0
  %v3450 = vadd.f32 %v3401, %v3449
  %v3451 = vpop.f32.mrf.mxu0
  %v3452 = vadd.f32 %v3403, %v3451
  %3453 = vmatmul.bf16.gmra.mxu0 %v2421
  %v3454 = vpop.f32.mrf.mxu0
  %v3455 = vadd.f32 %v3406, %v3454
  %v3456 = vpop.f32.mrf.mxu0
  %v3457 = vadd.f32 %v3408, %v3456
  %3458 = vmatmul.bf16.gmra.mxu0 %v2430
  %v3459 = vpop.f32.mrf.mxu0
  %v3460 = vadd.f32 %v3411, %v3459
  %v3461 = vpop.f32.mrf.mxu0
  %v3462 = vadd.f32 %v3413, %v3461
  %3463 = vmatmul.bf16.gmra.mxu0 %v2439
  %v3464 = vpop.f32.mrf.mxu0
  %v3465 = vadd.f32 %v3416, %v3464
  %v3466 = vpop.f32.mrf.mxu0
  %v3467 = vadd.f32 %v3418, %v3466
  %3468 = vmatmul.bf16.gmra.mxu0 %v2448
  %v3469 = vpop.f32.mrf.mxu0
  %v3470 = vadd.f32 %v3421, %v3469
  %v3471 = vpop.f32.mrf.mxu0
  %v3472 = vadd.f32 %v3423, %v3471
  %3473 = vmatmul.bf16.gmra.mxu0 %v2457
  %v3474 = vpop.f32.mrf.mxu0
  %v3475 = vadd.f32 %v3426, %v3474
  %v3476 = vpop.f32.mrf.mxu0
  %v3477 = vadd.f32 %v3428, %v3476
  %3478 = vmatmul.bf16.gmra.mxu0 %v2466
  %v3479 = vpop.f32.mrf.mxu0
  %v3480 = vadd.f32 %v3431, %v3479
  %v3481 = vpop.f32.mrf.mxu0
  %v3482 = vadd.f32 %v3433, %v3481
  %3483 = vdwg.mxu0
  %v3484 = vld [vmem:[%s9] sm:$0x1]
  %v3486 = vperm.slane %v3484, 0
  %v3488 = vmul.f32 %v3445, %v3486
  %v3489 = vmul.f32 %v3447, %v3486
  %v3490 = vmul.f32 %v3450, %v3486
  %v3491 = vmul.f32 %v3452, %v3486
  %v3492 = vmul.f32 %v3455, %v3486
  %v3493 = vmul.f32 %v3457, %v3486
  %v3494 = vmul.f32 %v3460, %v3486
  %v3495 = vmul.f32 %v3462, %v3486
  %v3496 = vmul.f32 %v3465, %v3486
  %v3497 = vmul.f32 %v3467, %v3486
  %v3498 = vmul.f32 %v3470, %v3486
  %v3499 = vmul.f32 %v3472, %v3486
  %v3500 = vmul.f32 %v3475, %v3486
  %v3501 = vmul.f32 %v3477, %v3486
  %v3502 = vmul.f32 %v3480, %v3486
  %v3503 = vmul.f32 %v3482, %v3486
  %v3504 = vld [vmem:[%s10] sm:$0x1]
  %v3506 = vperm.slane %v3504, 0
  %v3508 = vadd.f32 %v3488, %v3506
  %v3509 = vadd.f32 %v3489, %v3506
  %v3510 = vadd.f32 %v3490, %v3506
  %v3511 = vadd.f32 %v3491, %v3506
  %v3512 = vadd.f32 %v3492, %v3506
  %v3513 = vadd.f32 %v3493, %v3506
  %v3514 = vadd.f32 %v3494, %v3506
  %v3515 = vadd.f32 %v3495, %v3506
  %v3516 = vadd.f32 %v3496, %v3506
  %v3517 = vadd.f32 %v3497, %v3506
  %v3518 = vadd.f32 %v3498, %v3506
  %v3519 = vadd.f32 %v3499, %v3506
  %v3520 = vadd.f32 %v3500, %v3506
  %v3521 = vadd.f32 %v3501, %v3506
  %v3522 = vadd.f32 %v3502, %v3506
  %v3523 = vadd.f32 %v3503, %v3506
  %v3524 = vadd.f32 %v3508, %v280
  %v3525 = vadd.f32 %v3509, %v281
  %v3526 = vadd.f32 %v3510, %v282
  %v3527 = vadd.f32 %v3511, %v283
  %v3528 = vadd.f32 %v3512, %v284
  %v3529 = vadd.f32 %v3513, %v285
  %v3530 = vadd.f32 %v3514, %v286
  %v3531 = vadd.f32 %v3515, %v287
  %v3532 = vadd.f32 %v3516, %v288
  %v3533 = vadd.f32 %v3517, %v289
  %v3534 = vadd.f32 %v3518, %v290
  %v3535 = vadd.f32 %v3519, %v291
  %v3536 = vadd.f32 %v3520, %v292
  %v3537 = vadd.f32 %v3521, %v293
  %v3538 = vadd.f32 %v3522, %v294
  %v3539 = vadd.f32 %v3523, %v295
  %v3540 = vmax.f32 %v3524, 0.0
  %v3541 = vmax.f32 %v3525, 0.0
  %v3542 = vmax.f32 %v3526, 0.0
  %v3543 = vmax.f32 %v3527, 0.0
  %v3544 = vmax.f32 %v3528, 0.0
  %v3545 = vmax.f32 %v3529, 0.0
  %v3546 = vmax.f32 %v3530, 0.0
  %v3547 = vmax.f32 %v3531, 0.0
  %v3548 = vmax.f32 %v3532, 0.0
  %v3549 = vmax.f32 %v3533, 0.0
  %v3550 = vmax.f32 %v3534, 0.0
  %v3551 = vmax.f32 %v3535, 0.0
  %v3552 = vmax.f32 %v3536, 0.0
  %v3553 = vmax.f32 %v3537, 0.0
  %v3554 = vmax.f32 %v3538, 0.0
  %v3555 = vmax.f32 %v3539, 0.0
  %v3558 = vrot.slane %v3554, 7
  %v3559 = vrot.slane %v3555, 7
  %v3560 = vsel %vm314, %v3558, %v3559
  %v3577 = vrot.slane %v3540, 7
  %v3578 = vrot.slane %v3541, 7
  %v3579 = vsel %vm314, %v3577, %v3578
  %v3580 = vrot.slane %v3542, 7
  %v3581 = vsel %vm314, %v3578, %v3580
  %v3582 = vrot.slane %v3543, 7
  %v3583 = vsel %vm314, %v3580, %v3582
  %v3584 = vrot.slane %v3544, 7
  %v3585 = vsel %vm314, %v3582, %v3584
  %v3586 = vrot.slane %v3545, 7
  %v3587 = vsel %vm314, %v3584, %v3586
  %v3588 = vrot.slane %v3546, 7
  %v3589 = vsel %vm314, %v3586, %v3588
  %v3590 = vrot.slane %v3547, 7
  %v3591 = vsel %vm314, %v3588, %v3590
  %v3592 = vrot.slane %v3548, 7
  %v3593 = vsel %vm314, %v3590, %v3592
  %v3594 = vrot.slane %v3549, 7
  %v3595 = vsel %vm314, %v3592, %v3594
  %v3596 = vrot.slane %v3550, 7
  %v3597 = vsel %vm314, %v3594, %v3596
  %v3598 = vrot.slane %v3551, 7
  %v3599 = vsel %vm314, %v3596, %v3598
  %v3600 = vrot.slane %v3552, 7
  %v3601 = vsel %vm314, %v3598, %v3600
  %v3602 = vrot.slane %v3553, 7
  %v3603 = vsel %vm314, %v3600, %v3602
  %v3604 = vsel %vm314, %v3602, %v3558
  %v3620 = vsel %vm314, %v3559, %v3577
  %v3621 = vmul.f32 %v3560, %v381
  %v3622 = vmul.f32 %v3620, %v386
  %v3623 = vmul.f32 %v3579, %v391
  %v3624 = vmul.f32 %v3581, %v396
  %v3625 = vmul.f32 %v3583, %v401
  %v3626 = vmul.f32 %v3585, %v406
  %v3627 = vmul.f32 %v3587, %v411
  %v3628 = vmul.f32 %v3589, %v416
  %v3629 = vmul.f32 %v3591, %v421
  %v3630 = vmul.f32 %v3593, %v426
  %v3631 = vmul.f32 %v3595, %v431
  %v3632 = vmul.f32 %v3597, %v436
  %v3633 = vmul.f32 %v3599, %v441
  %v3634 = vmul.f32 %v3601, %v446
  %v3635 = vmul.f32 %v3603, %v451
  %v3636 = vmul.f32 %v3604, %v456
  %v3637 = vmul.f32 %v3555, %v476
  %v3638 = vmul.f32 %v3540, %v480
  %v3639 = vmul.f32 %v3541, %v484
  %v3640 = vmul.f32 %v3542, %v488
  %v3641 = vmul.f32 %v3543, %v492
  %v3642 = vmul.f32 %v3544, %v496
  %v3643 = vmul.f32 %v3545, %v500
  %v3644 = vmul.f32 %v3546, %v504
  %v3645 = vmul.f32 %v3547, %v508
  %v3646 = vmul.f32 %v3548, %v512
  %v3647 = vmul.f32 %v3549, %v516
  %v3648 = vmul.f32 %v3550, %v520
  %v3649 = vmul.f32 %v3551, %v524
  %v3650 = vmul.f32 %v3552, %v528
  %v3651 = vmul.f32 %v3553, %v532
  %v3652 = vmul.f32 %v3554, %v536
  %v3653 = vrot.slane %v3555, 1
  %v3655 = vrot.slane %v3540, 1
  %v3656 = vrot.slane %v3541, 1
  %v3657 = vsel %vm556, %v3655, %v3656
  %v3658 = vrot.slane %v3542, 1
  %v3659 = vsel %vm556, %v3656, %v3658
  %v3660 = vrot.slane %v3543, 1
  %v3661 = vsel %vm556, %v3658, %v3660
  %v3662 = vrot.slane %v3544, 1
  %v3663 = vsel %vm556, %v3660, %v3662
  %v3664 = vrot.slane %v3545, 1
  %v3665 = vsel %vm556, %v3662, %v3664
  %v3666 = vrot.slane %v3546, 1
  %v3667 = vsel %vm556, %v3664, %v3666
  %v3668 = vrot.slane %v3547, 1
  %v3669 = vsel %vm556, %v3666, %v3668
  %v3670 = vrot.slane %v3548, 1
  %v3671 = vsel %vm556, %v3668, %v3670
  %v3672 = vrot.slane %v3549, 1
  %v3673 = vsel %vm556, %v3670, %v3672
  %v3674 = vrot.slane %v3550, 1
  %v3675 = vsel %vm556, %v3672, %v3674
  %v3676 = vrot.slane %v3551, 1
  %v3677 = vsel %vm556, %v3674, %v3676
  %v3678 = vrot.slane %v3552, 1
  %v3679 = vsel %vm556, %v3676, %v3678
  %v3680 = vrot.slane %v3553, 1
  %v3681 = vsel %vm556, %v3678, %v3680
  %v3682 = vrot.slane %v3554, 1
  %v3683 = vsel %vm556, %v3680, %v3682
  %v3684 = vsel %vm556, %v3682, %v3653
  %v3701 = vsel %vm556, %v3653, %v3655
  %v3702 = vmul.f32 %v3701, %v606
  %v3703 = vmul.f32 %v3657, %v610
  %v3704 = vmul.f32 %v3659, %v614
  %v3705 = vmul.f32 %v3661, %v618
  %v3706 = vmul.f32 %v3663, %v622
  %v3707 = vmul.f32 %v3665, %v626
  %v3708 = vmul.f32 %v3667, %v630
  %v3709 = vmul.f32 %v3669, %v634
  %v3710 = vmul.f32 %v3671, %v638
  %v3711 = vmul.f32 %v3673, %v642
  %v3712 = vmul.f32 %v3675, %v646
  %v3713 = vmul.f32 %v3677, %v650
  %v3714 = vmul.f32 %v3679, %v654
  %v3715 = vmul.f32 %v3681, %v658
  %v3716 = vmul.f32 %v3683, %v662
  %v3717 = vmul.f32 %v3684, %v666
  %v3718 = vmul.f32 %v3620, %v686
  %v3719 = vmul.f32 %v3579, %v690
  %v3720 = vmul.f32 %v3581, %v694
  %v3721 = vmul.f32 %v3583, %v698
  %v3722 = vmul.f32 %v3585, %v702
  %v3723 = vmul.f32 %v3587, %v706
  %v3724 = vmul.f32 %v3589, %v710
  %v3725 = vmul.f32 %v3591, %v714
  %v3726 = vmul.f32 %v3593, %v718
  %v3727 = vmul.f32 %v3595, %v722
  %v3728 = vmul.f32 %v3597, %v726
  %v3729 = vmul.f32 %v3599, %v730
  %v3730 = vmul.f32 %v3601, %v734
  %v3731 = vmul.f32 %v3603, %v738
  %v3732 = vmul.f32 %v3604, %v742
  %v3733 = vmul.f32 %v3560, %v746
  %v3734 = vmul.f32 %v3540, %v766
  %v3735 = vmul.f32 %v3541, %v770
  %v3736 = vmul.f32 %v3542, %v774
  %v3737 = vmul.f32 %v3543, %v778
  %v3738 = vmul.f32 %v3544, %v782
  %v3739 = vmul.f32 %v3545, %v786
  %v3740 = vmul.f32 %v3546, %v790
  %v3741 = vmul.f32 %v3547, %v794
  %v3742 = vmul.f32 %v3548, %v798
  %v3743 = vmul.f32 %v3549, %v802
  %v3744 = vmul.f32 %v3550, %v806
  %v3745 = vmul.f32 %v3551, %v810
  %v3746 = vmul.f32 %v3552, %v814
  %v3747 = vmul.f32 %v3553, %v818
  %v3748 = vmul.f32 %v3554, %v822
  %v3749 = vmul.f32 %v3555, %v826
  %v3750 = vmul.f32 %v3657, %v846
  %v3751 = vmul.f32 %v3659, %v850
  %v3752 = vmul.f32 %v3661, %v854
  %v3753 = vmul.f32 %v3663, %v858
  %v3754 = vmul.f32 %v3665, %v862
  %v3755 = vmul.f32 %v3667, %v866
  %v3756 = vmul.f32 %v3669, %v870
  %v3757 = vmul.f32 %v3671, %v874
  %v3758 = vmul.f32 %v3673, %v878
  %v3759 = vmul.f32 %v3675, %v882
  %v3760 = vmul.f32 %v3677, %v886
  %v3761 = vmul.f32 %v3679, %v890
  %v3762 = vmul.f32 %v3681, %v894
  %v3763 = vmul.f32 %v3683, %v898
  %v3764 = vmul.f32 %v3684, %v902
  %v3765 = vmul.f32 %v3701, %v906
  %v3766 = vmul.f32 %v3579, %v926
  %v3767 = vmul.f32 %v3581, %v930
  %v3768 = vmul.f32 %v3583, %v934
  %v3769 = vmul.f32 %v3585, %v938
  %v3770 = vmul.f32 %v3587, %v942
  %v3771 = vmul.f32 %v3589, %v946
  %v3772 = vmul.f32 %v3591, %v950
  %v3773 = vmul.f32 %v3593, %v954
  %v3774 = vmul.f32 %v3595, %v958
  %v3775 = vmul.f32 %v3597, %v962
  %v3776 = vmul.f32 %v3599, %v966
  %v3777 = vmul.f32 %v3601, %v970
  %v3778 = vmul.f32 %v3603, %v974
  %v3779 = vmul.f32 %v3604, %v978
  %v3780 = vmul.f32 %v3560, %v982
  %v3781 = vmul.f32 %v3620, %v986
  %v3782 = vmul.f32 %v3541, %v1006
  %v3783 = vmul.f32 %v3542, %v1010
  %v3784 = vmul.f32 %v3543, %v1014
  %v3785 = vmul.f32 %v3544, %v1018
  %v3786 = vmul.f32 %v3545, %v1022
  %v3787 = vmul.f32 %v3546, %v1026
  %v3788 = vmul.f32 %v3547, %v1030
  %v3789 = vmul.f32 %v3548, %v1034
  %v3790 = vmul.f32 %v3549, %v1038
  %v3791 = vmul.f32 %v3550, %v1042
  %v3792 = vmul.f32 %v3551, %v1046
  %v3793 = vmul.f32 %v3552, %v1050
  %v3794 = vmul.f32 %v3553, %v1054
  %v3795 = vmul.f32 %v3554, %v1058
  %v3796 = vmul.f32 %v3555, %v1062
  %v3797 = vmul.f32 %v3540, %v1066
  %v3798 = vmul.f32 %v3659, %v1086
  %v3799 = vmul.f32 %v3661, %v1090
  %v3800 = vmul.f32 %v3663, %v1094
  %v3801 = vmul.f32 %v3665, %v1098
  %v3802 = vmul.f32 %v3667, %v1102
  %v3803 = vmul.f32 %v3669, %v1106
  %v3804 = vmul.f32 %v3671, %v1110
  %v3805 = vmul.f32 %v3673, %v1114
  %v3806 = vmul.f32 %v3675, %v1118
  %v3807 = vmul.f32 %v3677, %v1122
  %v3808 = vmul.f32 %v3679, %v1126
  %v3809 = vmul.f32 %v3681, %v1130
  %v3810 = vmul.f32 %v3683, %v1134
  %v3811 = vmul.f32 %v3684, %v1138
  %v3812 = vmul.f32 %v3701, %v1142
  %v3813 = vmul.f32 %v3657, %v1146
  %3830 = vrot.lane.b32.xlu0 %v3637, 64
  %v3831 = vpop.permute.xlu0 %3830
  %3832 = vrot.lane.b32.xlu0 %v3638, 64
  %v3833 = vpop.permute.xlu0 %3832
  %3834 = vrot.lane.b32.xlu0 %v3639, 64
  %v3835 = vpop.permute.xlu0 %3834
  %3836 = vrot.lane.b32.xlu0 %v3640, 64
  %v3837 = vpop.permute.xlu0 %3836
  %3838 = vrot.lane.b32.xlu0 %v3641, 64
  %v3839 = vpop.permute.xlu0 %3838
  %3840 = vrot.lane.b32.xlu0 %v3642, 64
  %v3841 = vpop.permute.xlu0 %3840
  %3842 = vrot.lane.b32.xlu0 %v3643, 64
  %v3843 = vpop.permute.xlu0 %3842
  %3844 = vrot.lane.b32.xlu0 %v3644, 64
  %v3845 = vpop.permute.xlu0 %3844
  %3846 = vrot.lane.b32.xlu0 %v3645, 64
  %v3847 = vpop.permute.xlu0 %3846
  %3848 = vrot.lane.b32.xlu0 %v3646, 64
  %v3849 = vpop.permute.xlu0 %3848
  %3850 = vrot.lane.b32.xlu0 %v3647, 64
  %v3851 = vpop.permute.xlu0 %3850
  %3852 = vrot.lane.b32.xlu0 %v3648, 64
  %v3853 = vpop.permute.xlu0 %3852
  %3854 = vrot.lane.b32.xlu0 %v3649, 64
  %v3855 = vpop.permute.xlu0 %3854
  %3856 = vrot.lane.b32.xlu0 %v3650, 64
  %v3857 = vpop.permute.xlu0 %3856
  %3858 = vrot.lane.b32.xlu0 %v3651, 64
  %v3859 = vpop.permute.xlu0 %3858
  %3860 = vrot.lane.b32.xlu0 %v3652, 64
  %v3861 = vpop.permute.xlu0 %3860
  %3894 = vrot.lane.b32.xlu0 %v3718, 64
  %v3895 = vpop.permute.xlu0 %3894
  %3896 = vrot.lane.b32.xlu0 %v3719, 64
  %v3897 = vpop.permute.xlu0 %3896
  %3898 = vrot.lane.b32.xlu0 %v3720, 64
  %v3899 = vpop.permute.xlu0 %3898
  %3900 = vrot.lane.b32.xlu0 %v3721, 64
  %v3901 = vpop.permute.xlu0 %3900
  %3902 = vrot.lane.b32.xlu0 %v3722, 64
  %v3903 = vpop.permute.xlu0 %3902
  %3904 = vrot.lane.b32.xlu0 %v3723, 64
  %v3905 = vpop.permute.xlu0 %3904
  %3906 = vrot.lane.b32.xlu0 %v3724, 64
  %v3907 = vpop.permute.xlu0 %3906
  %3908 = vrot.lane.b32.xlu0 %v3725, 64
  %v3909 = vpop.permute.xlu0 %3908
  %3910 = vrot.lane.b32.xlu0 %v3726, 64
  %v3911 = vpop.permute.xlu0 %3910
  %3912 = vrot.lane.b32.xlu0 %v3727, 64
  %v3913 = vpop.permute.xlu0 %3912
  %3914 = vrot.lane.b32.xlu0 %v3728, 64
  %v3915 = vpop.permute.xlu0 %3914
  %3916 = vrot.lane.b32.xlu0 %v3729, 64
  %v3917 = vpop.permute.xlu0 %3916
  %3918 = vrot.lane.b32.xlu0 %v3730, 64
  %v3919 = vpop.permute.xlu0 %3918
  %3920 = vrot.lane.b32.xlu0 %v3731, 64
  %v3921 = vpop.permute.xlu0 %3920
  %3922 = vrot.lane.b32.xlu0 %v3732, 64
  %v3923 = vpop.permute.xlu0 %3922
  %3924 = vrot.lane.b32.xlu0 %v3733, 64
  %v3925 = vpop.permute.xlu0 %3924
  %3958 = vrot.lane.b32.xlu0 %v3750, 64
  %v3959 = vpop.permute.xlu0 %3958
  %3960 = vrot.lane.b32.xlu0 %v3751, 64
  %v3961 = vpop.permute.xlu0 %3960
  %3962 = vrot.lane.b32.xlu0 %v3752, 64
  %v3963 = vpop.permute.xlu0 %3962
  %3964 = vrot.lane.b32.xlu0 %v3753, 64
  %v3965 = vpop.permute.xlu0 %3964
  %3966 = vrot.lane.b32.xlu0 %v3754, 64
  %v3967 = vpop.permute.xlu0 %3966
  %3968 = vrot.lane.b32.xlu0 %v3755, 64
  %v3969 = vpop.permute.xlu0 %3968
  %3970 = vrot.lane.b32.xlu0 %v3756, 64
  %v3971 = vpop.permute.xlu0 %3970
  %3972 = vrot.lane.b32.xlu0 %v3757, 64
  %v3973 = vpop.permute.xlu0 %3972
  %3974 = vrot.lane.b32.xlu0 %v3758, 64
  %v3975 = vpop.permute.xlu0 %3974
  %3976 = vrot.lane.b32.xlu0 %v3759, 64
  %v3977 = vpop.permute.xlu0 %3976
  %3978 = vrot.lane.b32.xlu0 %v3760, 64
  %v3979 = vpop.permute.xlu0 %3978
  %3980 = vrot.lane.b32.xlu0 %v3761, 64
  %v3981 = vpop.permute.xlu0 %3980
  %3982 = vrot.lane.b32.xlu0 %v3762, 64
  %v3983 = vpop.permute.xlu0 %3982
  %3984 = vrot.lane.b32.xlu0 %v3763, 64
  %v3985 = vpop.permute.xlu0 %3984
  %3986 = vrot.lane.b32.xlu0 %v3764, 64
  %v3987 = vpop.permute.xlu0 %3986
  %3988 = vrot.lane.b32.xlu0 %v3765, 64
  %v3989 = vpop.permute.xlu0 %3988
  %4022 = vrot.lane.b32.xlu0 %v3782, 64
  %v4023 = vpop.permute.xlu0 %4022
  %4024 = vrot.lane.b32.xlu0 %v3783, 64
  %v4025 = vpop.permute.xlu0 %4024
  %4026 = vrot.lane.b32.xlu0 %v3784, 64
  %v4027 = vpop.permute.xlu0 %4026
  %4028 = vrot.lane.b32.xlu0 %v3785, 64
  %v4029 = vpop.permute.xlu0 %4028
  %4030 = vrot.lane.b32.xlu0 %v3786, 64
  %v4031 = vpop.permute.xlu0 %4030
  %4032 = vrot.lane.b32.xlu0 %v3787, 64
  %v4033 = vpop.permute.xlu0 %4032
  %4034 = vrot.lane.b32.xlu0 %v3788, 64
  %v4035 = vpop.permute.xlu0 %4034
  %4036 = vrot.lane.b32.xlu0 %v3789, 64
  %v4037 = vpop.permute.xlu0 %4036
  %4038 = vrot.lane.b32.xlu0 %v3790, 64
  %v4039 = vpop.permute.xlu0 %4038
  %4040 = vrot.lane.b32.xlu0 %v3791, 64
  %v4041 = vpop.permute.xlu0 %4040
  %4042 = vrot.lane.b32.xlu0 %v3792, 64
  %v4043 = vpop.permute.xlu0 %4042
  %4044 = vrot.lane.b32.xlu0 %v3793, 64
  %v4045 = vpop.permute.xlu0 %4044
  %4046 = vrot.lane.b32.xlu0 %v3794, 64
  %v4047 = vpop.permute.xlu0 %4046
  %4048 = vrot.lane.b32.xlu0 %v3795, 64
  %v4049 = vpop.permute.xlu0 %4048
  %4050 = vrot.lane.b32.xlu0 %v3796, 64
  %v4051 = vpop.permute.xlu0 %4050
  %4052 = vrot.lane.b32.xlu0 %v3797, 64
  %v4053 = vpop.permute.xlu0 %4052
  %v4070 = vsel %vm166, %v3621, %v3831
  %v4071 = vsel %vm166, %v3622, %v3833
  %v4072 = vsel %vm166, %v3623, %v3835
  %v4073 = vsel %vm166, %v3624, %v3837
  %v4074 = vsel %vm166, %v3625, %v3839
  %v4075 = vsel %vm166, %v3626, %v3841
  %v4076 = vsel %vm166, %v3627, %v3843
  %v4077 = vsel %vm166, %v3628, %v3845
  %v4078 = vsel %vm166, %v3629, %v3847
  %v4079 = vsel %vm166, %v3630, %v3849
  %v4080 = vsel %vm166, %v3631, %v3851
  %v4081 = vsel %vm166, %v3632, %v3853
  %v4082 = vsel %vm166, %v3633, %v3855
  %v4083 = vsel %vm166, %v3634, %v3857
  %v4084 = vsel %vm166, %v3635, %v3859
  %v4085 = vsel %vm166, %v3636, %v3861
  %v4086 = vsel %vm166, %v3702, %v3895
  %v4087 = vsel %vm166, %v3703, %v3897
  %v4088 = vsel %vm166, %v3704, %v3899
  %v4089 = vsel %vm166, %v3705, %v3901
  %v4090 = vsel %vm166, %v3706, %v3903
  %v4091 = vsel %vm166, %v3707, %v3905
  %v4092 = vsel %vm166, %v3708, %v3907
  %v4093 = vsel %vm166, %v3709, %v3909
  %v4094 = vsel %vm166, %v3710, %v3911
  %v4095 = vsel %vm166, %v3711, %v3913
  %v4096 = vsel %vm166, %v3712, %v3915
  %v4097 = vsel %vm166, %v3713, %v3917
  %v4098 = vsel %vm166, %v3714, %v3919
  %v4099 = vsel %vm166, %v3715, %v3921
  %v4100 = vsel %vm166, %v3716, %v3923
  %v4101 = vsel %vm166, %v3717, %v3925
  %v4102 = vsel %vm166, %v3734, %v3959
  %v4103 = vsel %vm166, %v3735, %v3961
  %v4104 = vsel %vm166, %v3736, %v3963
  %v4105 = vsel %vm166, %v3737, %v3965
  %v4106 = vsel %vm166, %v3738, %v3967
  %v4107 = vsel %vm166, %v3739, %v3969
  %v4108 = vsel %vm166, %v3740, %v3971
  %v4109 = vsel %vm166, %v3741, %v3973
  %v4110 = vsel %vm166, %v3742, %v3975
  %v4111 = vsel %vm166, %v3743, %v3977
  %v4112 = vsel %vm166, %v3744, %v3979
  %v4113 = vsel %vm166, %v3745, %v3981
  %v4114 = vsel %vm166, %v3746, %v3983
  %v4115 = vsel %vm166, %v3747, %v3985
  %v4116 = vsel %vm166, %v3748, %v3987
  %v4117 = vsel %vm166, %v3749, %v3989
  %v4118 = vsel %vm166, %v3766, %v4023
  %v4119 = vsel %vm166, %v3767, %v4025
  %v4120 = vsel %vm166, %v3768, %v4027
  %v4121 = vsel %vm166, %v3769, %v4029
  %v4122 = vsel %vm166, %v3770, %v4031
  %v4123 = vsel %vm166, %v3771, %v4033
  %v4124 = vsel %vm166, %v3772, %v4035
  %v4125 = vsel %vm166, %v3773, %v4037
  %v4126 = vsel %vm166, %v3774, %v4039
  %v4127 = vsel %vm166, %v3775, %v4041
  %v4128 = vsel %vm166, %v3776, %v4043
  %v4129 = vsel %vm166, %v3777, %v4045
  %v4130 = vsel %vm166, %v3778, %v4047
  %v4131 = vsel %vm166, %v3779, %v4049
  %v4132 = vsel %vm166, %v3780, %v4051
  %v4133 = vsel %vm166, %v3781, %v4053
  %v4134 = vpack.c.bf16 %v4071, %v4070
  %v4135 = vpack.c.bf16 %v4087, %v4086
  %v4136 = vpack.c.bf16 %v4103, %v4102
  %v4137 = vpack.c.bf16 %v4119, %v4118
  %v4138 = vpack.c.bf16 %v3799, %v3798
  %v4139 = vpack.c.bf16 %v4073, %v4072
  %v4140 = vpack.c.bf16 %v4089, %v4088
  %v4141 = vpack.c.bf16 %v4105, %v4104
  %v4142 = vpack.c.bf16 %v4121, %v4120
  %v4143 = vpack.c.bf16 %v3801, %v3800
  %v4144 = vpack.c.bf16 %v4075, %v4074
  %v4145 = vpack.c.bf16 %v4091, %v4090
  %v4146 = vpack.c.bf16 %v4107, %v4106
  %v4147 = vpack.c.bf16 %v4123, %v4122
  %v4148 = vpack.c.bf16 %v3803, %v3802
  %v4149 = vpack.c.bf16 %v4077, %v4076
  %v4150 = vpack.c.bf16 %v4093, %v4092
  %v4151 = vpack.c.bf16 %v4109, %v4108
  %v4152 = vpack.c.bf16 %v4125, %v4124
  %v4153 = vpack.c.bf16 %v3805, %v3804
  %v4154 = vpack.c.bf16 %v4079, %v4078
  %v4155 = vpack.c.bf16 %v4095, %v4094
  %v4156 = vpack.c.bf16 %v4111, %v4110
  %v4157 = vpack.c.bf16 %v4127, %v4126
  %v4158 = vpack.c.bf16 %v3807, %v3806
  %v4159 = vpack.c.bf16 %v4081, %v4080
  %v4160 = vpack.c.bf16 %v4097, %v4096
  %v4161 = vpack.c.bf16 %v4113, %v4112
  %v4162 = vpack.c.bf16 %v4129, %v4128
  %v4163 = vpack.c.bf16 %v3809, %v3808
  %v4164 = vpack.c.bf16 %v4083, %v4082
  %v4165 = vpack.c.bf16 %v4099, %v4098
  %v4166 = vpack.c.bf16 %v4115, %v4114
  %v4167 = vpack.c.bf16 %v4131, %v4130
  %v4168 = vpack.c.bf16 %v3811, %v3810
  %v4169 = vpack.c.bf16 %v4085, %v4084
  %v4170 = vpack.c.bf16 %v4101, %v4100
  %v4171 = vpack.c.bf16 %v4117, %v4116
  %v4172 = vpack.c.bf16 %v4133, %v4132
  %v4173 = vpack.c.bf16 %v3813, %v3812
  %s4174 = scalar_lea.vmem %s5, 288
  %v4175 = vld [vmem:[%s4174] sm:$0xf]
  %v4176 = vld [vmem:[%s4174 + $0x4] sm:$0xf]
  %v4177 = vld [vmem:[%s4174 + $0x8] sm:$0xf]
  %v4178 = vld [vmem:[%s4174 + $0xc] sm:$0xf]
  %v4179 = vld [vmem:[%s4174 + $0x10] sm:$0xf]
  %v4180 = vld [vmem:[%s4174 + $0x14] sm:$0xf]
  %v4181 = vld [vmem:[%s4174 + $0x18] sm:$0xf]
  %v4182 = vld [vmem:[%s4174 + $0x1c] sm:$0xf]
  %v4183 = vld [vmem:[%s4174 + $0x20] sm:$0xf]
  %v4184 = vld [vmem:[%s4174 + $0x24] sm:$0xf]
  %v4185 = vld [vmem:[%s4174 + $0x28] sm:$0xf]
  %v4186 = vld [vmem:[%s4174 + $0x2c] sm:$0xf]
  %v4187 = vld [vmem:[%s4174 + $0x30] sm:$0xf]
  %v4188 = vld [vmem:[%s4174 + $0x34] sm:$0xf]
  %v4189 = vld [vmem:[%s4174 + $0x38] sm:$0xf]
  %v4190 = vld [vmem:[%s4174 + $0x3c] sm:$0xf]
  %v4191 = vld [vmem:[%s4174 + $0x40] sm:$0xf]
  %v4192 = vld [vmem:[%s4174 + $0x44] sm:$0xf]
  %v4193 = vld [vmem:[%s4174 + $0x48] sm:$0xf]
  %v4194 = vld [vmem:[%s4174 + $0x4c] sm:$0xf]
  %v4195 = vld [vmem:[%s4174 + $0x50] sm:$0xf]
  %v4196 = vld [vmem:[%s4174 + $0x54] sm:$0xf]
  %v4197 = vld [vmem:[%s4174 + $0x58] sm:$0xf]
  %v4198 = vld [vmem:[%s4174 + $0x5c] sm:$0xf]
  %v4199 = vld [vmem:[%s4174 + $0x60] sm:$0xf]
  %v4200 = vld [vmem:[%s4174 + $0x64] sm:$0xf]
  %v4201 = vld [vmem:[%s4174 + $0x68] sm:$0xf]
  %v4202 = vld [vmem:[%s4174 + $0x6c] sm:$0xf]
  %v4203 = vld [vmem:[%s4174 + $0x70] sm:$0xf]
  %v4204 = vld [vmem:[%s4174 + $0x74] sm:$0xf]
  %v4205 = vld [vmem:[%s4174 + $0x78] sm:$0xf]
  %v4206 = vld [vmem:[%s4174 + $0x7c] sm:$0xf]
  %v4207 = vld [vmem:[%s4174 + $0x80] sm:$0xf]
  %v4208 = vld [vmem:[%s4174 + $0x84] sm:$0xf]
  %v4209 = vld [vmem:[%s4174 + $0x88] sm:$0xf]
  %v4210 = vld [vmem:[%s4174 + $0x8c] sm:$0xf]
  %v4211 = vld [vmem:[%s4174 + $0x90] sm:$0xf]
  %v4212 = vld [vmem:[%s4174 + $0x94] sm:$0xf]
  %v4213 = vld [vmem:[%s4174 + $0x98] sm:$0xf]
  %v4214 = vld [vmem:[%s4174 + $0x9c] sm:$0xf]
  %v4215 = vld [vmem:[%s4174 + $0xa0] sm:$0xf]
  %v4216 = vld [vmem:[%s4174 + $0xa4] sm:$0xf]
  %v4217 = vld [vmem:[%s4174 + $0xa8] sm:$0xf]
  %v4218 = vld [vmem:[%s4174 + $0xac] sm:$0xf]
  %v4219 = vld [vmem:[%s4174 + $0xb0] sm:$0xf]
  %v4220 = vld [vmem:[%s4174 + $0xb4] sm:$0xf]
  %v4221 = vld [vmem:[%s4174 + $0xb8] sm:$0xf]
  %v4222 = vld [vmem:[%s4174 + $0xbc] sm:$0xf]
  %v4223 = vld [vmem:[%s4174 + $0xc0] sm:$0xf]
  %v4224 = vld [vmem:[%s4174 + $0xc4] sm:$0xf]
  %v4225 = vld [vmem:[%s4174 + $0xc8] sm:$0xf]
  %v4226 = vld [vmem:[%s4174 + $0xcc] sm:$0xf]
  %v4227 = vld [vmem:[%s4174 + $0xd0] sm:$0xf]
  %v4228 = vld [vmem:[%s4174 + $0xd4] sm:$0xf]
  %v4229 = vld [vmem:[%s4174 + $0xd8] sm:$0xf]
  %v4230 = vld [vmem:[%s4174 + $0xdc] sm:$0xf]
  %v4231 = vld [vmem:[%s4174 + $0xe0] sm:$0xf]
  %v4232 = vld [vmem:[%s4174 + $0xe4] sm:$0xf]
  %v4233 = vld [vmem:[%s4174 + $0xe8] sm:$0xf]
  %v4234 = vld [vmem:[%s4174 + $0xec] sm:$0xf]
  %v4235 = vld [vmem:[%s4174 + $0xf0] sm:$0xf]
  %v4236 = vld [vmem:[%s4174 + $0xf4] sm:$0xf]
  %v4237 = vld [vmem:[%s4174 + $0xf8] sm:$0xf]
  %v4238 = vld [vmem:[%s4174 + $0xfc] sm:$0xf]
  %v4239 = vld [vmem:[%s4174 + $0x100] sm:$0xf]
  %v4240 = vld [vmem:[%s4174 + $0x104] sm:$0xf]
  %v4241 = vld [vmem:[%s4174 + $0x108] sm:$0xf]
  %v4242 = vld [vmem:[%s4174 + $0x10c] sm:$0xf]
  %v4243 = vld [vmem:[%s4174 + $0x110] sm:$0xf]
  %v4244 = vld [vmem:[%s4174 + $0x114] sm:$0xf]
  %v4245 = vld [vmem:[%s4174 + $0x118] sm:$0xf]
  %v4246 = vld [vmem:[%s4174 + $0x11c] sm:$0xf]
  %v4319 = vunpack.c.l.b16 %v4175
  %v4320 = vunpack.c.l.b16 %v4176
  %v4321 = vunpack.c.l.b16 %v4177
  %v4322 = vunpack.c.l.b16 %v4178
  %v4323 = vunpack.c.l.b16 %v4179
  %v4324 = vunpack.c.l.b16 %v4180
  %v4325 = vunpack.c.l.b16 %v4181
  %v4326 = vunpack.c.l.b16 %v4182
  %v4327 = vunpack.c.l.b16 %v4183
  %v4328 = vunpack.c.l.b16 %v4184
  %v4329 = vunpack.c.l.b16 %v4185
  %v4330 = vunpack.c.l.b16 %v4186
  %v4331 = vunpack.c.l.b16 %v4187
  %v4332 = vunpack.c.l.b16 %v4188
  %v4333 = vunpack.c.l.b16 %v4189
  %v4334 = vunpack.c.l.b16 %v4190
  %v4335 = vunpack.c.l.b16 %v4191
  %v4336 = vunpack.c.l.b16 %v4192
  %v4337 = vunpack.c.l.b16 %v4193
  %v4338 = vunpack.c.l.b16 %v4194
  %v4339 = vunpack.c.l.b16 %v4195
  %v4340 = vunpack.c.l.b16 %v4196
  %v4341 = vunpack.c.l.b16 %v4197
  %v4342 = vunpack.c.l.b16 %v4198
  %v4343 = vunpack.c.l.b16 %v4199
  %v4344 = vunpack.c.l.b16 %v4200
  %v4345 = vunpack.c.l.b16 %v4201
  %v4346 = vunpack.c.l.b16 %v4202
  %v4347 = vunpack.c.l.b16 %v4203
  %v4348 = vunpack.c.l.b16 %v4204
  %v4349 = vunpack.c.l.b16 %v4205
  %v4350 = vunpack.c.l.b16 %v4206
  %v4351 = vunpack.c.l.b16 %v4207
  %v4352 = vunpack.c.l.b16 %v4208
  %v4353 = vunpack.c.l.b16 %v4209
  %v4354 = vunpack.c.l.b16 %v4210
  %v4355 = vunpack.c.l.b16 %v4211
  %v4356 = vunpack.c.l.b16 %v4212
  %v4357 = vunpack.c.l.b16 %v4213
  %v4358 = vunpack.c.l.b16 %v4214
  %v4359 = vunpack.c.l.b16 %v4215
  %v4360 = vunpack.c.l.b16 %v4216
  %v4361 = vunpack.c.l.b16 %v4217
  %v4362 = vunpack.c.l.b16 %v4218
  %v4363 = vunpack.c.l.b16 %v4219
  %v4364 = vunpack.c.l.b16 %v4220
  %v4365 = vunpack.c.l.b16 %v4221
  %v4366 = vunpack.c.l.b16 %v4222
  %v4367 = vunpack.c.l.b16 %v4223
  %v4368 = vunpack.c.l.b16 %v4224
  %v4369 = vunpack.c.l.b16 %v4225
  %v4370 = vunpack.c.l.b16 %v4226
  %v4371 = vunpack.c.l.b16 %v4227
  %v4372 = vunpack.c.l.b16 %v4228
  %v4373 = vunpack.c.l.b16 %v4229
  %v4374 = vunpack.c.l.b16 %v4230
  %v4375 = vunpack.c.l.b16 %v4231
  %v4376 = vunpack.c.l.b16 %v4232
  %v4377 = vunpack.c.l.b16 %v4233
  %v4378 = vunpack.c.l.b16 %v4234
  %v4379 = vunpack.c.l.b16 %v4235
  %v4380 = vunpack.c.l.b16 %v4236
  %v4381 = vunpack.c.l.b16 %v4237
  %v4382 = vunpack.c.l.b16 %v4238
  %v4383 = vunpack.c.l.b16 %v4239
  %v4384 = vunpack.c.l.b16 %v4240
  %v4385 = vunpack.c.l.b16 %v4241
  %v4386 = vunpack.c.l.b16 %v4242
  %v4387 = vunpack.c.l.b16 %v4243
  %v4388 = vunpack.c.l.b16 %v4244
  %v4389 = vunpack.c.l.b16 %v4245
  %v4390 = vunpack.c.l.b16 %v4246
  %v4391 = vpack.c.b16 %v4320, %v4319
  %v4392 = vpack.c.b16 %v4322, %v4321
  %v4393 = vpack.c.b16 %v4324, %v4323
  %v4394 = vpack.c.b16 %v4326, %v4325
  %v4395 = vpack.c.b16 %v4328, %v4327
  %v4396 = vpack.c.b16 %v4330, %v4329
  %v4397 = vpack.c.b16 %v4332, %v4331
  %v4398 = vpack.c.b16 %v4334, %v4333
  %v4399 = vpack.c.b16 %v4336, %v4335
  %v4400 = vpack.c.b16 %v4338, %v4337
  %v4401 = vpack.c.b16 %v4340, %v4339
  %v4402 = vpack.c.b16 %v4342, %v4341
  %v4403 = vpack.c.b16 %v4344, %v4343
  %v4404 = vpack.c.b16 %v4346, %v4345
  %v4405 = vpack.c.b16 %v4348, %v4347
  %v4406 = vpack.c.b16 %v4350, %v4349
  %v4407 = vpack.c.b16 %v4352, %v4351
  %v4408 = vpack.c.b16 %v4354, %v4353
  %v4409 = vpack.c.b16 %v4356, %v4355
  %v4410 = vpack.c.b16 %v4358, %v4357
  %v4411 = vpack.c.b16 %v4360, %v4359
  %v4412 = vpack.c.b16 %v4362, %v4361
  %v4413 = vpack.c.b16 %v4364, %v4363
  %v4414 = vpack.c.b16 %v4366, %v4365
  %v4415 = vpack.c.b16 %v4368, %v4367
  %v4416 = vpack.c.b16 %v4370, %v4369
  %v4417 = vpack.c.b16 %v4372, %v4371
  %v4418 = vpack.c.b16 %v4374, %v4373
  %v4419 = vpack.c.b16 %v4376, %v4375
  %v4420 = vpack.c.b16 %v4378, %v4377
  %v4421 = vpack.c.b16 %v4380, %v4379
  %v4422 = vpack.c.b16 %v4382, %v4381
  %v4423 = vpack.c.b16 %v4384, %v4383
  %v4424 = vpack.c.b16 %v4386, %v4385
  %v4425 = vpack.c.b16 %v4388, %v4387
  %v4426 = vpack.c.b16 %v4390, %v4389
  %v4464 = vsel %vm166, %v4138, 0
  %v4467 = vsel %vm166, %v4143, 0
  %v4470 = vsel %vm166, %v4148, 0
  %v4473 = vsel %vm166, %v4153, 0
  %v4476 = vsel %vm166, %v4158, 0
  %v4479 = vsel %vm166, %v4163, 0
  %v4482 = vsel %vm166, %v4168, 0
  %v4485 = vsel %vm166, %v4173, 0
  %4487 = vmatpush.bf16.msra.mxu0 %v4398
  %4488 = vmatpush.bf16.msra.mxu0 %v4397
  %4489 = vmatpush.bf16.msra.mxu0 %v4396
  %4490 = vmatpush.bf16.msra.mxu0 %v4395
  %4491 = vmatpush.bf16.msra.mxu0 %v4394
  %4492 = vmatpush.bf16.msra.mxu0 %v4393
  %4493 = vmatpush.bf16.msra.mxu0 %v4392
  %4494 = vmatpush.bf16.msra.mxu0 %v4391
  %4495 = vmatmul.bf16.gmra.mxu0 %v4134
  %v4496 = vpop.f32.mrf.mxu0
  %v4497 = vadd.f32 0.0, %v4496
  %v4498 = vpop.f32.mrf.mxu0
  %v4499 = vadd.f32 0.0, %v4498
  %4500 = vmatmul.bf16.gmra.mxu0 %v4139
  %v4501 = vpop.f32.mrf.mxu0
  %v4502 = vadd.f32 0.0, %v4501
  %v4503 = vpop.f32.mrf.mxu0
  %v4504 = vadd.f32 0.0, %v4503
  %4505 = vmatmul.bf16.gmra.mxu0 %v4144
  %v4506 = vpop.f32.mrf.mxu0
  %v4507 = vadd.f32 0.0, %v4506
  %v4508 = vpop.f32.mrf.mxu0
  %v4509 = vadd.f32 0.0, %v4508
  %4510 = vmatmul.bf16.gmra.mxu0 %v4149
  %v4511 = vpop.f32.mrf.mxu0
  %v4512 = vadd.f32 0.0, %v4511
  %v4513 = vpop.f32.mrf.mxu0
  %v4514 = vadd.f32 0.0, %v4513
  %4515 = vmatmul.bf16.gmra.mxu0 %v4154
  %v4516 = vpop.f32.mrf.mxu0
  %v4517 = vadd.f32 0.0, %v4516
  %v4518 = vpop.f32.mrf.mxu0
  %v4519 = vadd.f32 0.0, %v4518
  %4520 = vmatmul.bf16.gmra.mxu0 %v4159
  %v4521 = vpop.f32.mrf.mxu0
  %v4522 = vadd.f32 0.0, %v4521
  %v4523 = vpop.f32.mrf.mxu0
  %v4524 = vadd.f32 0.0, %v4523
  %4525 = vmatmul.bf16.gmra.mxu0 %v4164
  %v4526 = vpop.f32.mrf.mxu0
  %v4527 = vadd.f32 0.0, %v4526
  %v4528 = vpop.f32.mrf.mxu0
  %v4529 = vadd.f32 0.0, %v4528
  %4530 = vmatmul.bf16.gmra.mxu0 %v4169
  %v4531 = vpop.f32.mrf.mxu0
  %v4532 = vadd.f32 0.0, %v4531
  %v4533 = vpop.f32.mrf.mxu0
  %v4534 = vadd.f32 0.0, %v4533
  %4535 = vdwg.mxu0
  %4536 = vmatpush.bf16.msra.mxu0 %v4406
  %4537 = vmatpush.bf16.msra.mxu0 %v4405
  %4538 = vmatpush.bf16.msra.mxu0 %v4404
  %4539 = vmatpush.bf16.msra.mxu0 %v4403
  %4540 = vmatpush.bf16.msra.mxu0 %v4402
  %4541 = vmatpush.bf16.msra.mxu0 %v4401
  %4542 = vmatpush.bf16.msra.mxu0 %v4400
  %4543 = vmatpush.bf16.msra.mxu0 %v4399
  %4544 = vmatmul.bf16.gmra.mxu0 %v4135
  %v4545 = vpop.f32.mrf.mxu0
  %v4546 = vadd.f32 %v4497, %v4545
  %v4547 = vpop.f32.mrf.mxu0
  %v4548 = vadd.f32 %v4499, %v4547
  %4549 = vmatmul.bf16.gmra.mxu0 %v4140
  %v4550 = vpop.f32.mrf.mxu0
  %v4551 = vadd.f32 %v4502, %v4550
  %v4552 = vpop.f32.mrf.mxu0
  %v4553 = vadd.f32 %v4504, %v4552
  %4554 = vmatmul.bf16.gmra.mxu0 %v4145
  %v4555 = vpop.f32.mrf.mxu0
  %v4556 = vadd.f32 %v4507, %v4555
  %v4557 = vpop.f32.mrf.mxu0
  %v4558 = vadd.f32 %v4509, %v4557
  %4559 = vmatmul.bf16.gmra.mxu0 %v4150
  %v4560 = vpop.f32.mrf.mxu0
  %v4561 = vadd.f32 %v4512, %v4560
  %v4562 = vpop.f32.mrf.mxu0
  %v4563 = vadd.f32 %v4514, %v4562
  %4564 = vmatmul.bf16.gmra.mxu0 %v4155
  %v4565 = vpop.f32.mrf.mxu0
  %v4566 = vadd.f32 %v4517, %v4565
  %v4567 = vpop.f32.mrf.mxu0
  %v4568 = vadd.f32 %v4519, %v4567
  %4569 = vmatmul.bf16.gmra.mxu0 %v4160
  %v4570 = vpop.f32.mrf.mxu0
  %v4571 = vadd.f32 %v4522, %v4570
  %v4572 = vpop.f32.mrf.mxu0
  %v4573 = vadd.f32 %v4524, %v4572
  %4574 = vmatmul.bf16.gmra.mxu0 %v4165
  %v4575 = vpop.f32.mrf.mxu0
  %v4576 = vadd.f32 %v4527, %v4575
  %v4577 = vpop.f32.mrf.mxu0
  %v4578 = vadd.f32 %v4529, %v4577
  %4579 = vmatmul.bf16.gmra.mxu0 %v4170
  %v4580 = vpop.f32.mrf.mxu0
  %v4581 = vadd.f32 %v4532, %v4580
  %v4582 = vpop.f32.mrf.mxu0
  %v4583 = vadd.f32 %v4534, %v4582
  %4584 = vdwg.mxu0
  %4585 = vmatpush.bf16.msra.mxu0 %v4414
  %4586 = vmatpush.bf16.msra.mxu0 %v4413
  %4587 = vmatpush.bf16.msra.mxu0 %v4412
  %4588 = vmatpush.bf16.msra.mxu0 %v4411
  %4589 = vmatpush.bf16.msra.mxu0 %v4410
  %4590 = vmatpush.bf16.msra.mxu0 %v4409
  %4591 = vmatpush.bf16.msra.mxu0 %v4408
  %4592 = vmatpush.bf16.msra.mxu0 %v4407
  %4593 = vmatmul.bf16.gmra.mxu0 %v4136
  %v4594 = vpop.f32.mrf.mxu0
  %v4595 = vadd.f32 %v4546, %v4594
  %v4596 = vpop.f32.mrf.mxu0
  %v4597 = vadd.f32 %v4548, %v4596
  %4598 = vmatmul.bf16.gmra.mxu0 %v4141
  %v4599 = vpop.f32.mrf.mxu0
  %v4600 = vadd.f32 %v4551, %v4599
  %v4601 = vpop.f32.mrf.mxu0
  %v4602 = vadd.f32 %v4553, %v4601
  %4603 = vmatmul.bf16.gmra.mxu0 %v4146
  %v4604 = vpop.f32.mrf.mxu0
  %v4605 = vadd.f32 %v4556, %v4604
  %v4606 = vpop.f32.mrf.mxu0
  %v4607 = vadd.f32 %v4558, %v4606
  %4608 = vmatmul.bf16.gmra.mxu0 %v4151
  %v4609 = vpop.f32.mrf.mxu0
  %v4610 = vadd.f32 %v4561, %v4609
  %v4611 = vpop.f32.mrf.mxu0
  %v4612 = vadd.f32 %v4563, %v4611
  %4613 = vmatmul.bf16.gmra.mxu0 %v4156
  %v4614 = vpop.f32.mrf.mxu0
  %v4615 = vadd.f32 %v4566, %v4614
  %v4616 = vpop.f32.mrf.mxu0
  %v4617 = vadd.f32 %v4568, %v4616
  %4618 = vmatmul.bf16.gmra.mxu0 %v4161
  %v4619 = vpop.f32.mrf.mxu0
  %v4620 = vadd.f32 %v4571, %v4619
  %v4621 = vpop.f32.mrf.mxu0
  %v4622 = vadd.f32 %v4573, %v4621
  %4623 = vmatmul.bf16.gmra.mxu0 %v4166
  %v4624 = vpop.f32.mrf.mxu0
  %v4625 = vadd.f32 %v4576, %v4624
  %v4626 = vpop.f32.mrf.mxu0
  %v4627 = vadd.f32 %v4578, %v4626
  %4628 = vmatmul.bf16.gmra.mxu0 %v4171
  %v4629 = vpop.f32.mrf.mxu0
  %v4630 = vadd.f32 %v4581, %v4629
  %v4631 = vpop.f32.mrf.mxu0
  %v4632 = vadd.f32 %v4583, %v4631
  %4633 = vdwg.mxu0
  %4634 = vmatpush.bf16.msra.mxu0 %v4422
  %4635 = vmatpush.bf16.msra.mxu0 %v4421
  %4636 = vmatpush.bf16.msra.mxu0 %v4420
  %4637 = vmatpush.bf16.msra.mxu0 %v4419
  %4638 = vmatpush.bf16.msra.mxu0 %v4418
  %4639 = vmatpush.bf16.msra.mxu0 %v4417
  %4640 = vmatpush.bf16.msra.mxu0 %v4416
  %4641 = vmatpush.bf16.msra.mxu0 %v4415
  %4642 = vmatmul.bf16.gmra.mxu0 %v4137
  %v4643 = vpop.f32.mrf.mxu0
  %v4644 = vadd.f32 %v4595, %v4643
  %v4645 = vpop.f32.mrf.mxu0
  %v4646 = vadd.f32 %v4597, %v4645
  %4647 = vmatmul.bf16.gmra.mxu0 %v4142
  %v4648 = vpop.f32.mrf.mxu0
  %v4649 = vadd.f32 %v4600, %v4648
  %v4650 = vpop.f32.mrf.mxu0
  %v4651 = vadd.f32 %v4602, %v4650
  %4652 = vmatmul.bf16.gmra.mxu0 %v4147
  %v4653 = vpop.f32.mrf.mxu0
  %v4654 = vadd.f32 %v4605, %v4653
  %v4655 = vpop.f32.mrf.mxu0
  %v4656 = vadd.f32 %v4607, %v4655
  %4657 = vmatmul.bf16.gmra.mxu0 %v4152
  %v4658 = vpop.f32.mrf.mxu0
  %v4659 = vadd.f32 %v4610, %v4658
  %v4660 = vpop.f32.mrf.mxu0
  %v4661 = vadd.f32 %v4612, %v4660
  %4662 = vmatmul.bf16.gmra.mxu0 %v4157
  %v4663 = vpop.f32.mrf.mxu0
  %v4664 = vadd.f32 %v4615, %v4663
  %v4665 = vpop.f32.mrf.mxu0
  %v4666 = vadd.f32 %v4617, %v4665
  %4667 = vmatmul.bf16.gmra.mxu0 %v4162
  %v4668 = vpop.f32.mrf.mxu0
  %v4669 = vadd.f32 %v4620, %v4668
  %v4670 = vpop.f32.mrf.mxu0
  %v4671 = vadd.f32 %v4622, %v4670
  %4672 = vmatmul.bf16.gmra.mxu0 %v4167
  %v4673 = vpop.f32.mrf.mxu0
  %v4674 = vadd.f32 %v4625, %v4673
  %v4675 = vpop.f32.mrf.mxu0
  %v4676 = vadd.f32 %v4627, %v4675
  %4677 = vmatmul.bf16.gmra.mxu0 %v4172
  %v4678 = vpop.f32.mrf.mxu0
  %v4679 = vadd.f32 %v4630, %v4678
  %v4680 = vpop.f32.mrf.mxu0
  %v4681 = vadd.f32 %v4632, %v4680
  %4682 = vdwg.mxu0
  %4683 = vmatpush.bf16.msra.mxu0 0
  %4684 = vmatpush.bf16.msra.mxu0 0
  %4685 = vmatpush.bf16.msra.mxu0 0
  %4686 = vmatpush.bf16.msra.mxu0 0
  %4687 = vmatpush.bf16.msra.mxu0 %v4426
  %4688 = vmatpush.bf16.msra.mxu0 %v4425
  %4689 = vmatpush.bf16.msra.mxu0 %v4424
  %4690 = vmatpush.bf16.msra.mxu0 %v4423
  %4691 = vmatmul.bf16.gmra.mxu0 %v4464
  %v4692 = vpop.f32.mrf.mxu0
  %v4693 = vadd.f32 %v4644, %v4692
  %v4694 = vpop.f32.mrf.mxu0
  %v4695 = vadd.f32 %v4646, %v4694
  %4696 = vmatmul.bf16.gmra.mxu0 %v4467
  %v4697 = vpop.f32.mrf.mxu0
  %v4698 = vadd.f32 %v4649, %v4697
  %v4699 = vpop.f32.mrf.mxu0
  %v4700 = vadd.f32 %v4651, %v4699
  %4701 = vmatmul.bf16.gmra.mxu0 %v4470
  %v4702 = vpop.f32.mrf.mxu0
  %v4703 = vadd.f32 %v4654, %v4702
  %v4704 = vpop.f32.mrf.mxu0
  %v4705 = vadd.f32 %v4656, %v4704
  %4706 = vmatmul.bf16.gmra.mxu0 %v4473
  %v4707 = vpop.f32.mrf.mxu0
  %v4708 = vadd.f32 %v4659, %v4707
  %v4709 = vpop.f32.mrf.mxu0
  %v4710 = vadd.f32 %v4661, %v4709
  %4711 = vmatmul.bf16.gmra.mxu0 %v4476
  %v4712 = vpop.f32.mrf.mxu0
  %v4713 = vadd.f32 %v4664, %v4712
  %v4714 = vpop.f32.mrf.mxu0
  %v4715 = vadd.f32 %v4666, %v4714
  %4716 = vmatmul.bf16.gmra.mxu0 %v4479
  %v4717 = vpop.f32.mrf.mxu0
  %v4718 = vadd.f32 %v4669, %v4717
  %v4719 = vpop.f32.mrf.mxu0
  %v4720 = vadd.f32 %v4671, %v4719
  %4721 = vmatmul.bf16.gmra.mxu0 %v4482
  %v4722 = vpop.f32.mrf.mxu0
  %v4723 = vadd.f32 %v4674, %v4722
  %v4724 = vpop.f32.mrf.mxu0
  %v4725 = vadd.f32 %v4676, %v4724
  %4726 = vmatmul.bf16.gmra.mxu0 %v4485
  %v4727 = vpop.f32.mrf.mxu0
  %v4728 = vadd.f32 %v4679, %v4727
  %v4729 = vpop.f32.mrf.mxu0
  %v4730 = vadd.f32 %v4681, %v4729
  %4731 = vdwg.mxu0
  %s4732 = scalar_lea.vmem %s6, 1
  %v4733 = vld [vmem:[%s4732] sm:$0x1]
  %v4735 = vperm.slane %v4733, 0
  %v4737 = vmul.f32 %v4693, %v4735
  %v4738 = vmul.f32 %v4695, %v4735
  %v4739 = vmul.f32 %v4698, %v4735
  %v4740 = vmul.f32 %v4700, %v4735
  %v4741 = vmul.f32 %v4703, %v4735
  %v4742 = vmul.f32 %v4705, %v4735
  %v4743 = vmul.f32 %v4708, %v4735
  %v4744 = vmul.f32 %v4710, %v4735
  %v4745 = vmul.f32 %v4713, %v4735
  %v4746 = vmul.f32 %v4715, %v4735
  %v4747 = vmul.f32 %v4718, %v4735
  %v4748 = vmul.f32 %v4720, %v4735
  %v4749 = vmul.f32 %v4723, %v4735
  %v4750 = vmul.f32 %v4725, %v4735
  %v4751 = vmul.f32 %v4728, %v4735
  %v4752 = vmul.f32 %v4730, %v4735
  %s4753 = scalar_lea.vmem %s7, 1
  %v4754 = vld [vmem:[%s4753] sm:$0x1]
  %v4756 = vperm.slane %v4754, 0
  %v4758 = vadd.f32 %v4737, %v4756
  %v4759 = vadd.f32 %v4738, %v4756
  %v4760 = vadd.f32 %v4739, %v4756
  %v4761 = vadd.f32 %v4740, %v4756
  %v4762 = vadd.f32 %v4741, %v4756
  %v4763 = vadd.f32 %v4742, %v4756
  %v4764 = vadd.f32 %v4743, %v4756
  %v4765 = vadd.f32 %v4744, %v4756
  %v4766 = vadd.f32 %v4745, %v4756
  %v4767 = vadd.f32 %v4746, %v4756
  %v4768 = vadd.f32 %v4747, %v4756
  %v4769 = vadd.f32 %v4748, %v4756
  %v4770 = vadd.f32 %v4749, %v4756
  %v4771 = vadd.f32 %v4750, %v4756
  %v4772 = vadd.f32 %v4751, %v4756
  %v4773 = vadd.f32 %v4752, %v4756
  %v4774 = vmax.f32 %v4758, 0.0
  %v4775 = vmax.f32 %v4759, 0.0
  %v4776 = vmax.f32 %v4760, 0.0
  %v4777 = vmax.f32 %v4761, 0.0
  %v4778 = vmax.f32 %v4762, 0.0
  %v4779 = vmax.f32 %v4763, 0.0
  %v4780 = vmax.f32 %v4764, 0.0
  %v4781 = vmax.f32 %v4765, 0.0
  %v4782 = vmax.f32 %v4766, 0.0
  %v4783 = vmax.f32 %v4767, 0.0
  %v4784 = vmax.f32 %v4768, 0.0
  %v4785 = vmax.f32 %v4769, 0.0
  %v4786 = vmax.f32 %v4770, 0.0
  %v4787 = vmax.f32 %v4771, 0.0
  %v4788 = vmax.f32 %v4772, 0.0
  %v4789 = vmax.f32 %v4773, 0.0
  %v4792 = vrot.slane %v4788, 7
  %v4793 = vrot.slane %v4789, 7
  %v4794 = vsel %vm314, %v4792, %v4793
  %v4811 = vrot.slane %v4774, 7
  %v4812 = vrot.slane %v4775, 7
  %v4813 = vsel %vm314, %v4811, %v4812
  %v4814 = vrot.slane %v4776, 7
  %v4815 = vsel %vm314, %v4812, %v4814
  %v4816 = vrot.slane %v4777, 7
  %v4817 = vsel %vm314, %v4814, %v4816
  %v4818 = vrot.slane %v4778, 7
  %v4819 = vsel %vm314, %v4816, %v4818
  %v4820 = vrot.slane %v4779, 7
  %v4821 = vsel %vm314, %v4818, %v4820
  %v4822 = vrot.slane %v4780, 7
  %v4823 = vsel %vm314, %v4820, %v4822
  %v4824 = vrot.slane %v4781, 7
  %v4825 = vsel %vm314, %v4822, %v4824
  %v4826 = vrot.slane %v4782, 7
  %v4827 = vsel %vm314, %v4824, %v4826
  %v4828 = vrot.slane %v4783, 7
  %v4829 = vsel %vm314, %v4826, %v4828
  %v4830 = vrot.slane %v4784, 7
  %v4831 = vsel %vm314, %v4828, %v4830
  %v4832 = vrot.slane %v4785, 7
  %v4833 = vsel %vm314, %v4830, %v4832
  %v4834 = vrot.slane %v4786, 7
  %v4835 = vsel %vm314, %v4832, %v4834
  %v4836 = vrot.slane %v4787, 7
  %v4837 = vsel %vm314, %v4834, %v4836
  %v4838 = vsel %vm314, %v4836, %v4792
  %v4854 = vsel %vm314, %v4793, %v4811
  %v4855 = vmul.f32 %v4794, %v381
  %v4856 = vmul.f32 %v4854, %v386
  %v4857 = vmul.f32 %v4813, %v391
  %v4858 = vmul.f32 %v4815, %v396
  %v4859 = vmul.f32 %v4817, %v401
  %v4860 = vmul.f32 %v4819, %v406
  %v4861 = vmul.f32 %v4821, %v411
  %v4862 = vmul.f32 %v4823, %v416
  %v4863 = vmul.f32 %v4825, %v421
  %v4864 = vmul.f32 %v4827, %v426
  %v4865 = vmul.f32 %v4829, %v431
  %v4866 = vmul.f32 %v4831, %v436
  %v4867 = vmul.f32 %v4833, %v441
  %v4868 = vmul.f32 %v4835, %v446
  %v4869 = vmul.f32 %v4837, %v451
  %v4870 = vmul.f32 %v4838, %v456
  %v4871 = vmul.f32 %v4789, %v476
  %v4872 = vmul.f32 %v4774, %v480
  %v4873 = vmul.f32 %v4775, %v484
  %v4874 = vmul.f32 %v4776, %v488
  %v4875 = vmul.f32 %v4777, %v492
  %v4876 = vmul.f32 %v4778, %v496
  %v4877 = vmul.f32 %v4779, %v500
  %v4878 = vmul.f32 %v4780, %v504
  %v4879 = vmul.f32 %v4781, %v508
  %v4880 = vmul.f32 %v4782, %v512
  %v4881 = vmul.f32 %v4783, %v516
  %v4882 = vmul.f32 %v4784, %v520
  %v4883 = vmul.f32 %v4785, %v524
  %v4884 = vmul.f32 %v4786, %v528
  %v4885 = vmul.f32 %v4787, %v532
  %v4886 = vmul.f32 %v4788, %v536
  %v4887 = vrot.slane %v4789, 1
  %v4889 = vrot.slane %v4774, 1
  %v4890 = vrot.slane %v4775, 1
  %v4891 = vsel %vm556, %v4889, %v4890
  %v4892 = vrot.slane %v4776, 1
  %v4893 = vsel %vm556, %v4890, %v4892
  %v4894 = vrot.slane %v4777, 1
  %v4895 = vsel %vm556, %v4892, %v4894
  %v4896 = vrot.slane %v4778, 1
  %v4897 = vsel %vm556, %v4894, %v4896
  %v4898 = vrot.slane %v4779, 1
  %v4899 = vsel %vm556, %v4896, %v4898
  %v4900 = vrot.slane %v4780, 1
  %v4901 = vsel %vm556, %v4898, %v4900
  %v4902 = vrot.slane %v4781, 1
  %v4903 = vsel %vm556, %v4900, %v4902
  %v4904 = vrot.slane %v4782, 1
  %v4905 = vsel %vm556, %v4902, %v4904
  %v4906 = vrot.slane %v4783, 1
  %v4907 = vsel %vm556, %v4904, %v4906
  %v4908 = vrot.slane %v4784, 1
  %v4909 = vsel %vm556, %v4906, %v4908
  %v4910 = vrot.slane %v4785, 1
  %v4911 = vsel %vm556, %v4908, %v4910
  %v4912 = vrot.slane %v4786, 1
  %v4913 = vsel %vm556, %v4910, %v4912
  %v4914 = vrot.slane %v4787, 1
  %v4915 = vsel %vm556, %v4912, %v4914
  %v4916 = vrot.slane %v4788, 1
  %v4917 = vsel %vm556, %v4914, %v4916
  %v4918 = vsel %vm556, %v4916, %v4887
  %v4935 = vsel %vm556, %v4887, %v4889
  %v4936 = vmul.f32 %v4935, %v606
  %v4937 = vmul.f32 %v4891, %v610
  %v4938 = vmul.f32 %v4893, %v614
  %v4939 = vmul.f32 %v4895, %v618
  %v4940 = vmul.f32 %v4897, %v622
  %v4941 = vmul.f32 %v4899, %v626
  %v4942 = vmul.f32 %v4901, %v630
  %v4943 = vmul.f32 %v4903, %v634
  %v4944 = vmul.f32 %v4905, %v638
  %v4945 = vmul.f32 %v4907, %v642
  %v4946 = vmul.f32 %v4909, %v646
  %v4947 = vmul.f32 %v4911, %v650
  %v4948 = vmul.f32 %v4913, %v654
  %v4949 = vmul.f32 %v4915, %v658
  %v4950 = vmul.f32 %v4917, %v662
  %v4951 = vmul.f32 %v4918, %v666
  %v4952 = vmul.f32 %v4854, %v686
  %v4953 = vmul.f32 %v4813, %v690
  %v4954 = vmul.f32 %v4815, %v694
  %v4955 = vmul.f32 %v4817, %v698
  %v4956 = vmul.f32 %v4819, %v702
  %v4957 = vmul.f32 %v4821, %v706
  %v4958 = vmul.f32 %v4823, %v710
  %v4959 = vmul.f32 %v4825, %v714
  %v4960 = vmul.f32 %v4827, %v718
  %v4961 = vmul.f32 %v4829, %v722
  %v4962 = vmul.f32 %v4831, %v726
  %v4963 = vmul.f32 %v4833, %v730
  %v4964 = vmul.f32 %v4835, %v734
  %v4965 = vmul.f32 %v4837, %v738
  %v4966 = vmul.f32 %v4838, %v742
  %v4967 = vmul.f32 %v4794, %v746
  %v4968 = vmul.f32 %v4774, %v766
  %v4969 = vmul.f32 %v4775, %v770
  %v4970 = vmul.f32 %v4776, %v774
  %v4971 = vmul.f32 %v4777, %v778
  %v4972 = vmul.f32 %v4778, %v782
  %v4973 = vmul.f32 %v4779, %v786
  %v4974 = vmul.f32 %v4780, %v790
  %v4975 = vmul.f32 %v4781, %v794
  %v4976 = vmul.f32 %v4782, %v798
  %v4977 = vmul.f32 %v4783, %v802
  %v4978 = vmul.f32 %v4784, %v806
  %v4979 = vmul.f32 %v4785, %v810
  %v4980 = vmul.f32 %v4786, %v814
  %v4981 = vmul.f32 %v4787, %v818
  %v4982 = vmul.f32 %v4788, %v822
  %v4983 = vmul.f32 %v4789, %v826
  %v4984 = vmul.f32 %v4891, %v846
  %v4985 = vmul.f32 %v4893, %v850
  %v4986 = vmul.f32 %v4895, %v854
  %v4987 = vmul.f32 %v4897, %v858
  %v4988 = vmul.f32 %v4899, %v862
  %v4989 = vmul.f32 %v4901, %v866
  %v4990 = vmul.f32 %v4903, %v870
  %v4991 = vmul.f32 %v4905, %v874
  %v4992 = vmul.f32 %v4907, %v878
  %v4993 = vmul.f32 %v4909, %v882
  %v4994 = vmul.f32 %v4911, %v886
  %v4995 = vmul.f32 %v4913, %v890
  %v4996 = vmul.f32 %v4915, %v894
  %v4997 = vmul.f32 %v4917, %v898
  %v4998 = vmul.f32 %v4918, %v902
  %v4999 = vmul.f32 %v4935, %v906
  %v5000 = vmul.f32 %v4813, %v926
  %v5001 = vmul.f32 %v4815, %v930
  %v5002 = vmul.f32 %v4817, %v934
  %v5003 = vmul.f32 %v4819, %v938
  %v5004 = vmul.f32 %v4821, %v942
  %v5005 = vmul.f32 %v4823, %v946
  %v5006 = vmul.f32 %v4825, %v950
  %v5007 = vmul.f32 %v4827, %v954
  %v5008 = vmul.f32 %v4829, %v958
  %v5009 = vmul.f32 %v4831, %v962
  %v5010 = vmul.f32 %v4833, %v966
  %v5011 = vmul.f32 %v4835, %v970
  %v5012 = vmul.f32 %v4837, %v974
  %v5013 = vmul.f32 %v4838, %v978
  %v5014 = vmul.f32 %v4794, %v982
  %v5015 = vmul.f32 %v4854, %v986
  %v5016 = vmul.f32 %v4775, %v1006
  %v5017 = vmul.f32 %v4776, %v1010
  %v5018 = vmul.f32 %v4777, %v1014
  %v5019 = vmul.f32 %v4778, %v1018
  %v5020 = vmul.f32 %v4779, %v1022
  %v5021 = vmul.f32 %v4780, %v1026
  %v5022 = vmul.f32 %v4781, %v1030
  %v5023 = vmul.f32 %v4782, %v1034
  %v5024 = vmul.f32 %v4783, %v1038
  %v5025 = vmul.f32 %v4784, %v1042
  %v5026 = vmul.f32 %v4785, %v1046
  %v5027 = vmul.f32 %v4786, %v1050
  %v5028 = vmul.f32 %v4787, %v1054
  %v5029 = vmul.f32 %v4788, %v1058
  %v5030 = vmul.f32 %v4789, %v1062
  %v5031 = vmul.f32 %v4774, %v1066
  %v5032 = vmul.f32 %v4893, %v1086
  %v5033 = vmul.f32 %v4895, %v1090
  %v5034 = vmul.f32 %v4897, %v1094
  %v5035 = vmul.f32 %v4899, %v1098
  %v5036 = vmul.f32 %v4901, %v1102
  %v5037 = vmul.f32 %v4903, %v1106
  %v5038 = vmul.f32 %v4905, %v1110
  %v5039 = vmul.f32 %v4907, %v1114
  %v5040 = vmul.f32 %v4909, %v1118
  %v5041 = vmul.f32 %v4911, %v1122
  %v5042 = vmul.f32 %v4913, %v1126
  %v5043 = vmul.f32 %v4915, %v1130
  %v5044 = vmul.f32 %v4917, %v1134
  %v5045 = vmul.f32 %v4918, %v1138
  %v5046 = vmul.f32 %v4935, %v1142
  %v5047 = vmul.f32 %v4891, %v1146
  %v5048 = vpack.c.bf16 %v4856, %v4855
  %v5049 = vpack.c.bf16 %v4872, %v4871
  %v5050 = vpack.c.bf16 %v4937, %v4936
  %v5051 = vpack.c.bf16 %v4953, %v4952
  %v5052 = vpack.c.bf16 %v4969, %v4968
  %v5053 = vpack.c.bf16 %v4985, %v4984
  %v5054 = vpack.c.bf16 %v5001, %v5000
  %v5055 = vpack.c.bf16 %v5017, %v5016
  %v5056 = vpack.c.bf16 %v5033, %v5032
  %v5057 = vpack.c.bf16 %v4858, %v4857
  %v5058 = vpack.c.bf16 %v4874, %v4873
  %v5059 = vpack.c.bf16 %v4939, %v4938
  %v5060 = vpack.c.bf16 %v4955, %v4954
  %v5061 = vpack.c.bf16 %v4971, %v4970
  %v5062 = vpack.c.bf16 %v4987, %v4986
  %v5063 = vpack.c.bf16 %v5003, %v5002
  %v5064 = vpack.c.bf16 %v5019, %v5018
  %v5065 = vpack.c.bf16 %v5035, %v5034
  %v5066 = vpack.c.bf16 %v4860, %v4859
  %v5067 = vpack.c.bf16 %v4876, %v4875
  %v5068 = vpack.c.bf16 %v4941, %v4940
  %v5069 = vpack.c.bf16 %v4957, %v4956
  %v5070 = vpack.c.bf16 %v4973, %v4972
  %v5071 = vpack.c.bf16 %v4989, %v4988
  %v5072 = vpack.c.bf16 %v5005, %v5004
  %v5073 = vpack.c.bf16 %v5021, %v5020
  %v5074 = vpack.c.bf16 %v5037, %v5036
  %v5075 = vpack.c.bf16 %v4862, %v4861
  %v5076 = vpack.c.bf16 %v4878, %v4877
  %v5077 = vpack.c.bf16 %v4943, %v4942
  %v5078 = vpack.c.bf16 %v4959, %v4958
  %v5079 = vpack.c.bf16 %v4975, %v4974
  %v5080 = vpack.c.bf16 %v4991, %v4990
  %v5081 = vpack.c.bf16 %v5007, %v5006
  %v5082 = vpack.c.bf16 %v5023, %v5022
  %v5083 = vpack.c.bf16 %v5039, %v5038
  %v5084 = vpack.c.bf16 %v4864, %v4863
  %v5085 = vpack.c.bf16 %v4880, %v4879
  %v5086 = vpack.c.bf16 %v4945, %v4944
  %v5087 = vpack.c.bf16 %v4961, %v4960
  %v5088 = vpack.c.bf16 %v4977, %v4976
  %v5089 = vpack.c.bf16 %v4993, %v4992
  %v5090 = vpack.c.bf16 %v5009, %v5008
  %v5091 = vpack.c.bf16 %v5025, %v5024
  %v5092 = vpack.c.bf16 %v5041, %v5040
  %v5093 = vpack.c.bf16 %v4866, %v4865
  %v5094 = vpack.c.bf16 %v4882, %v4881
  %v5095 = vpack.c.bf16 %v4947, %v4946
  %v5096 = vpack.c.bf16 %v4963, %v4962
  %v5097 = vpack.c.bf16 %v4979, %v4978
  %v5098 = vpack.c.bf16 %v4995, %v4994
  %v5099 = vpack.c.bf16 %v5011, %v5010
  %v5100 = vpack.c.bf16 %v5027, %v5026
  %v5101 = vpack.c.bf16 %v5043, %v5042
  %v5102 = vpack.c.bf16 %v4868, %v4867
  %v5103 = vpack.c.bf16 %v4884, %v4883
  %v5104 = vpack.c.bf16 %v4949, %v4948
  %v5105 = vpack.c.bf16 %v4965, %v4964
  %v5106 = vpack.c.bf16 %v4981, %v4980
  %v5107 = vpack.c.bf16 %v4997, %v4996
  %v5108 = vpack.c.bf16 %v5013, %v5012
  %v5109 = vpack.c.bf16 %v5029, %v5028
  %v5110 = vpack.c.bf16 %v5045, %v5044
  %v5111 = vpack.c.bf16 %v4870, %v4869
  %v5112 = vpack.c.bf16 %v4886, %v4885
  %v5113 = vpack.c.bf16 %v4951, %v4950
  %v5114 = vpack.c.bf16 %v4967, %v4966
  %v5115 = vpack.c.bf16 %v4983, %v4982
  %v5116 = vpack.c.bf16 %v4999, %v4998
  %v5117 = vpack.c.bf16 %v5015, %v5014
  %v5118 = vpack.c.bf16 %v5031, %v5030
  %v5119 = vpack.c.bf16 %v5047, %v5046
  %s5120 = scalar_lea.vmem %s8, 576
  %v5121 = vld [vmem:[%s5120] sm:$0xf]
  %v5122 = vld [vmem:[%s5120 + $0x4] sm:$0xf]
  %v5123 = vld [vmem:[%s5120 + $0x8] sm:$0xf]
  %v5124 = vld [vmem:[%s5120 + $0xc] sm:$0xf]
  %v5125 = vld [vmem:[%s5120 + $0x10] sm:$0xf]
  %v5126 = vld [vmem:[%s5120 + $0x14] sm:$0xf]
  %v5127 = vld [vmem:[%s5120 + $0x18] sm:$0xf]
  %v5128 = vld [vmem:[%s5120 + $0x1c] sm:$0xf]
  %v5129 = vld [vmem:[%s5120 + $0x20] sm:$0xf]
  %v5130 = vld [vmem:[%s5120 + $0x24] sm:$0xf]
  %v5131 = vld [vmem:[%s5120 + $0x28] sm:$0xf]
  %v5132 = vld [vmem:[%s5120 + $0x2c] sm:$0xf]
  %v5133 = vld [vmem:[%s5120 + $0x30] sm:$0xf]
  %v5134 = vld [vmem:[%s5120 + $0x34] sm:$0xf]
  %v5135 = vld [vmem:[%s5120 + $0x38] sm:$0xf]
  %v5136 = vld [vmem:[%s5120 + $0x3c] sm:$0xf]
  %v5137 = vld [vmem:[%s5120 + $0x40] sm:$0xf]
  %v5138 = vld [vmem:[%s5120 + $0x44] sm:$0xf]
  %v5139 = vld [vmem:[%s5120 + $0x48] sm:$0xf]
  %v5140 = vld [vmem:[%s5120 + $0x4c] sm:$0xf]
  %v5141 = vld [vmem:[%s5120 + $0x50] sm:$0xf]
  %v5142 = vld [vmem:[%s5120 + $0x54] sm:$0xf]
  %v5143 = vld [vmem:[%s5120 + $0x58] sm:$0xf]
  %v5144 = vld [vmem:[%s5120 + $0x5c] sm:$0xf]
  %v5145 = vld [vmem:[%s5120 + $0x60] sm:$0xf]
  %v5146 = vld [vmem:[%s5120 + $0x64] sm:$0xf]
  %v5147 = vld [vmem:[%s5120 + $0x68] sm:$0xf]
  %v5148 = vld [vmem:[%s5120 + $0x6c] sm:$0xf]
  %v5149 = vld [vmem:[%s5120 + $0x70] sm:$0xf]
  %v5150 = vld [vmem:[%s5120 + $0x74] sm:$0xf]
  %v5151 = vld [vmem:[%s5120 + $0x78] sm:$0xf]
  %v5152 = vld [vmem:[%s5120 + $0x7c] sm:$0xf]
  %v5153 = vld [vmem:[%s5120 + $0x80] sm:$0xf]
  %v5154 = vld [vmem:[%s5120 + $0x84] sm:$0xf]
  %v5155 = vld [vmem:[%s5120 + $0x88] sm:$0xf]
  %v5156 = vld [vmem:[%s5120 + $0x8c] sm:$0xf]
  %v5157 = vld [vmem:[%s5120 + $0x90] sm:$0xf]
  %v5158 = vld [vmem:[%s5120 + $0x94] sm:$0xf]
  %v5159 = vld [vmem:[%s5120 + $0x98] sm:$0xf]
  %v5160 = vld [vmem:[%s5120 + $0x9c] sm:$0xf]
  %v5161 = vld [vmem:[%s5120 + $0xa0] sm:$0xf]
  %v5162 = vld [vmem:[%s5120 + $0xa4] sm:$0xf]
  %v5163 = vld [vmem:[%s5120 + $0xa8] sm:$0xf]
  %v5164 = vld [vmem:[%s5120 + $0xac] sm:$0xf]
  %v5165 = vld [vmem:[%s5120 + $0xb0] sm:$0xf]
  %v5166 = vld [vmem:[%s5120 + $0xb4] sm:$0xf]
  %v5167 = vld [vmem:[%s5120 + $0xb8] sm:$0xf]
  %v5168 = vld [vmem:[%s5120 + $0xbc] sm:$0xf]
  %v5169 = vld [vmem:[%s5120 + $0xc0] sm:$0xf]
  %v5170 = vld [vmem:[%s5120 + $0xc4] sm:$0xf]
  %v5171 = vld [vmem:[%s5120 + $0xc8] sm:$0xf]
  %v5172 = vld [vmem:[%s5120 + $0xcc] sm:$0xf]
  %v5173 = vld [vmem:[%s5120 + $0xd0] sm:$0xf]
  %v5174 = vld [vmem:[%s5120 + $0xd4] sm:$0xf]
  %v5175 = vld [vmem:[%s5120 + $0xd8] sm:$0xf]
  %v5176 = vld [vmem:[%s5120 + $0xdc] sm:$0xf]
  %v5177 = vld [vmem:[%s5120 + $0xe0] sm:$0xf]
  %v5178 = vld [vmem:[%s5120 + $0xe4] sm:$0xf]
  %v5179 = vld [vmem:[%s5120 + $0xe8] sm:$0xf]
  %v5180 = vld [vmem:[%s5120 + $0xec] sm:$0xf]
  %v5181 = vld [vmem:[%s5120 + $0xf0] sm:$0xf]
  %v5182 = vld [vmem:[%s5120 + $0xf4] sm:$0xf]
  %v5183 = vld [vmem:[%s5120 + $0xf8] sm:$0xf]
  %v5184 = vld [vmem:[%s5120 + $0xfc] sm:$0xf]
  %v5185 = vld [vmem:[%s5120 + $0x100] sm:$0xf]
  %v5186 = vld [vmem:[%s5120 + $0x104] sm:$0xf]
  %v5187 = vld [vmem:[%s5120 + $0x108] sm:$0xf]
  %v5188 = vld [vmem:[%s5120 + $0x10c] sm:$0xf]
  %v5189 = vld [vmem:[%s5120 + $0x110] sm:$0xf]
  %v5190 = vld [vmem:[%s5120 + $0x114] sm:$0xf]
  %v5191 = vld [vmem:[%s5120 + $0x118] sm:$0xf]
  %v5192 = vld [vmem:[%s5120 + $0x11c] sm:$0xf]
  %v5193 = vld [vmem:[%s5120 + $0x120] sm:$0xf]
  %v5194 = vld [vmem:[%s5120 + $0x124] sm:$0xf]
  %v5195 = vld [vmem:[%s5120 + $0x128] sm:$0xf]
  %v5196 = vld [vmem:[%s5120 + $0x12c] sm:$0xf]
  %v5197 = vld [vmem:[%s5120 + $0x130] sm:$0xf]
  %v5198 = vld [vmem:[%s5120 + $0x134] sm:$0xf]
  %v5199 = vld [vmem:[%s5120 + $0x138] sm:$0xf]
  %v5200 = vld [vmem:[%s5120 + $0x13c] sm:$0xf]
  %v5201 = vld [vmem:[%s5120 + $0x140] sm:$0xf]
  %v5202 = vld [vmem:[%s5120 + $0x144] sm:$0xf]
  %v5203 = vld [vmem:[%s5120 + $0x148] sm:$0xf]
  %v5204 = vld [vmem:[%s5120 + $0x14c] sm:$0xf]
  %v5205 = vld [vmem:[%s5120 + $0x150] sm:$0xf]
  %v5206 = vld [vmem:[%s5120 + $0x154] sm:$0xf]
  %v5207 = vld [vmem:[%s5120 + $0x158] sm:$0xf]
  %v5208 = vld [vmem:[%s5120 + $0x15c] sm:$0xf]
  %v5209 = vld [vmem:[%s5120 + $0x160] sm:$0xf]
  %v5210 = vld [vmem:[%s5120 + $0x164] sm:$0xf]
  %v5211 = vld [vmem:[%s5120 + $0x168] sm:$0xf]
  %v5212 = vld [vmem:[%s5120 + $0x16c] sm:$0xf]
  %v5213 = vld [vmem:[%s5120 + $0x170] sm:$0xf]
  %v5214 = vld [vmem:[%s5120 + $0x174] sm:$0xf]
  %v5215 = vld [vmem:[%s5120 + $0x178] sm:$0xf]
  %v5216 = vld [vmem:[%s5120 + $0x17c] sm:$0xf]
  %v5217 = vld [vmem:[%s5120 + $0x180] sm:$0xf]
  %v5218 = vld [vmem:[%s5120 + $0x184] sm:$0xf]
  %v5219 = vld [vmem:[%s5120 + $0x188] sm:$0xf]
  %v5220 = vld [vmem:[%s5120 + $0x18c] sm:$0xf]
  %v5221 = vld [vmem:[%s5120 + $0x190] sm:$0xf]
  %v5222 = vld [vmem:[%s5120 + $0x194] sm:$0xf]
  %v5223 = vld [vmem:[%s5120 + $0x198] sm:$0xf]
  %v5224 = vld [vmem:[%s5120 + $0x19c] sm:$0xf]
  %v5225 = vld [vmem:[%s5120 + $0x1a0] sm:$0xf]
  %v5226 = vld [vmem:[%s5120 + $0x1a4] sm:$0xf]
  %v5227 = vld [vmem:[%s5120 + $0x1a8] sm:$0xf]
  %v5228 = vld [vmem:[%s5120 + $0x1ac] sm:$0xf]
  %v5229 = vld [vmem:[%s5120 + $0x1b0] sm:$0xf]
  %v5230 = vld [vmem:[%s5120 + $0x1b4] sm:$0xf]
  %v5231 = vld [vmem:[%s5120 + $0x1b8] sm:$0xf]
  %v5232 = vld [vmem:[%s5120 + $0x1bc] sm:$0xf]
  %v5233 = vld [vmem:[%s5120 + $0x1c0] sm:$0xf]
  %v5234 = vld [vmem:[%s5120 + $0x1c4] sm:$0xf]
  %v5235 = vld [vmem:[%s5120 + $0x1c8] sm:$0xf]
  %v5236 = vld [vmem:[%s5120 + $0x1cc] sm:$0xf]
  %v5237 = vld [vmem:[%s5120 + $0x1d0] sm:$0xf]
  %v5238 = vld [vmem:[%s5120 + $0x1d4] sm:$0xf]
  %v5239 = vld [vmem:[%s5120 + $0x1d8] sm:$0xf]
  %v5240 = vld [vmem:[%s5120 + $0x1dc] sm:$0xf]
  %v5241 = vld [vmem:[%s5120 + $0x1e0] sm:$0xf]
  %v5242 = vld [vmem:[%s5120 + $0x1e4] sm:$0xf]
  %v5243 = vld [vmem:[%s5120 + $0x1e8] sm:$0xf]
  %v5244 = vld [vmem:[%s5120 + $0x1ec] sm:$0xf]
  %v5245 = vld [vmem:[%s5120 + $0x1f0] sm:$0xf]
  %v5246 = vld [vmem:[%s5120 + $0x1f4] sm:$0xf]
  %v5247 = vld [vmem:[%s5120 + $0x1f8] sm:$0xf]
  %v5248 = vld [vmem:[%s5120 + $0x1fc] sm:$0xf]
  %v5249 = vld [vmem:[%s5120 + $0x200] sm:$0xf]
  %v5250 = vld [vmem:[%s5120 + $0x204] sm:$0xf]
  %v5251 = vld [vmem:[%s5120 + $0x208] sm:$0xf]
  %v5252 = vld [vmem:[%s5120 + $0x20c] sm:$0xf]
  %v5253 = vld [vmem:[%s5120 + $0x210] sm:$0xf]
  %v5254 = vld [vmem:[%s5120 + $0x214] sm:$0xf]
  %v5255 = vld [vmem:[%s5120 + $0x218] sm:$0xf]
  %v5256 = vld [vmem:[%s5120 + $0x21c] sm:$0xf]
  %v5257 = vld [vmem:[%s5120 + $0x220] sm:$0xf]
  %v5258 = vld [vmem:[%s5120 + $0x224] sm:$0xf]
  %v5259 = vld [vmem:[%s5120 + $0x228] sm:$0xf]
  %v5260 = vld [vmem:[%s5120 + $0x22c] sm:$0xf]
  %v5261 = vld [vmem:[%s5120 + $0x230] sm:$0xf]
  %v5262 = vld [vmem:[%s5120 + $0x234] sm:$0xf]
  %v5263 = vld [vmem:[%s5120 + $0x238] sm:$0xf]
  %v5264 = vld [vmem:[%s5120 + $0x23c] sm:$0xf]
  %v5409 = vunpack.c.l.b16 %v5121
  %v5410 = vunpack.c.l.b16 %v5122
  %v5411 = vunpack.c.l.b16 %v5123
  %v5412 = vunpack.c.l.b16 %v5124
  %v5413 = vunpack.c.l.b16 %v5125
  %v5414 = vunpack.c.l.b16 %v5126
  %v5415 = vunpack.c.l.b16 %v5127
  %v5416 = vunpack.c.l.b16 %v5128
  %v5417 = vunpack.c.l.b16 %v5129
  %v5418 = vunpack.c.l.b16 %v5130
  %v5419 = vunpack.c.l.b16 %v5131
  %v5420 = vunpack.c.l.b16 %v5132
  %v5421 = vunpack.c.l.b16 %v5133
  %v5422 = vunpack.c.l.b16 %v5134
  %v5423 = vunpack.c.l.b16 %v5135
  %v5424 = vunpack.c.l.b16 %v5136
  %v5425 = vunpack.c.l.b16 %v5137
  %v5426 = vunpack.c.l.b16 %v5138
  %v5427 = vunpack.c.l.b16 %v5139
  %v5428 = vunpack.c.l.b16 %v5140
  %v5429 = vunpack.c.l.b16 %v5141
  %v5430 = vunpack.c.l.b16 %v5142
  %v5431 = vunpack.c.l.b16 %v5143
  %v5432 = vunpack.c.l.b16 %v5144
  %v5433 = vunpack.c.l.b16 %v5145
  %v5434 = vunpack.c.l.b16 %v5146
  %v5435 = vunpack.c.l.b16 %v5147
  %v5436 = vunpack.c.l.b16 %v5148
  %v5437 = vunpack.c.l.b16 %v5149
  %v5438 = vunpack.c.l.b16 %v5150
  %v5439 = vunpack.c.l.b16 %v5151
  %v5440 = vunpack.c.l.b16 %v5152
  %v5441 = vunpack.c.l.b16 %v5153
  %v5442 = vunpack.c.l.b16 %v5154
  %v5443 = vunpack.c.l.b16 %v5155
  %v5444 = vunpack.c.l.b16 %v5156
  %v5445 = vunpack.c.l.b16 %v5157
  %v5446 = vunpack.c.l.b16 %v5158
  %v5447 = vunpack.c.l.b16 %v5159
  %v5448 = vunpack.c.l.b16 %v5160
  %v5449 = vunpack.c.l.b16 %v5161
  %v5450 = vunpack.c.l.b16 %v5162
  %v5451 = vunpack.c.l.b16 %v5163
  %v5452 = vunpack.c.l.b16 %v5164
  %v5453 = vunpack.c.l.b16 %v5165
  %v5454 = vunpack.c.l.b16 %v5166
  %v5455 = vunpack.c.l.b16 %v5167
  %v5456 = vunpack.c.l.b16 %v5168
  %v5457 = vunpack.c.l.b16 %v5169
  %v5458 = vunpack.c.l.b16 %v5170
  %v5459 = vunpack.c.l.b16 %v5171
  %v5460 = vunpack.c.l.b16 %v5172
  %v5461 = vunpack.c.l.b16 %v5173
  %v5462 = vunpack.c.l.b16 %v5174
  %v5463 = vunpack.c.l.b16 %v5175
  %v5464 = vunpack.c.l.b16 %v5176
  %v5465 = vunpack.c.l.b16 %v5177
  %v5466 = vunpack.c.l.b16 %v5178
  %v5467 = vunpack.c.l.b16 %v5179
  %v5468 = vunpack.c.l.b16 %v5180
  %v5469 = vunpack.c.l.b16 %v5181
  %v5470 = vunpack.c.l.b16 %v5182
  %v5471 = vunpack.c.l.b16 %v5183
  %v5472 = vunpack.c.l.b16 %v5184
  %v5473 = vunpack.c.l.b16 %v5185
  %v5474 = vunpack.c.l.b16 %v5186
  %v5475 = vunpack.c.l.b16 %v5187
  %v5476 = vunpack.c.l.b16 %v5188
  %v5477 = vunpack.c.l.b16 %v5189
  %v5478 = vunpack.c.l.b16 %v5190
  %v5479 = vunpack.c.l.b16 %v5191
  %v5480 = vunpack.c.l.b16 %v5192
  %v5481 = vunpack.c.l.b16 %v5193
  %v5482 = vunpack.c.l.b16 %v5194
  %v5483 = vunpack.c.l.b16 %v5195
  %v5484 = vunpack.c.l.b16 %v5196
  %v5485 = vunpack.c.l.b16 %v5197
  %v5486 = vunpack.c.l.b16 %v5198
  %v5487 = vunpack.c.l.b16 %v5199
  %v5488 = vunpack.c.l.b16 %v5200
  %v5489 = vunpack.c.l.b16 %v5201
  %v5490 = vunpack.c.l.b16 %v5202
  %v5491 = vunpack.c.l.b16 %v5203
  %v5492 = vunpack.c.l.b16 %v5204
  %v5493 = vunpack.c.l.b16 %v5205
  %v5494 = vunpack.c.l.b16 %v5206
  %v5495 = vunpack.c.l.b16 %v5207
  %v5496 = vunpack.c.l.b16 %v5208
  %v5497 = vunpack.c.l.b16 %v5209
  %v5498 = vunpack.c.l.b16 %v5210
  %v5499 = vunpack.c.l.b16 %v5211
  %v5500 = vunpack.c.l.b16 %v5212
  %v5501 = vunpack.c.l.b16 %v5213
  %v5502 = vunpack.c.l.b16 %v5214
  %v5503 = vunpack.c.l.b16 %v5215
  %v5504 = vunpack.c.l.b16 %v5216
  %v5505 = vunpack.c.l.b16 %v5217
  %v5506 = vunpack.c.l.b16 %v5218
  %v5507 = vunpack.c.l.b16 %v5219
  %v5508 = vunpack.c.l.b16 %v5220
  %v5509 = vunpack.c.l.b16 %v5221
  %v5510 = vunpack.c.l.b16 %v5222
  %v5511 = vunpack.c.l.b16 %v5223
  %v5512 = vunpack.c.l.b16 %v5224
  %v5513 = vunpack.c.l.b16 %v5225
  %v5514 = vunpack.c.l.b16 %v5226
  %v5515 = vunpack.c.l.b16 %v5227
  %v5516 = vunpack.c.l.b16 %v5228
  %v5517 = vunpack.c.l.b16 %v5229
  %v5518 = vunpack.c.l.b16 %v5230
  %v5519 = vunpack.c.l.b16 %v5231
  %v5520 = vunpack.c.l.b16 %v5232
  %v5521 = vunpack.c.l.b16 %v5233
  %v5522 = vunpack.c.l.b16 %v5234
  %v5523 = vunpack.c.l.b16 %v5235
  %v5524 = vunpack.c.l.b16 %v5236
  %v5525 = vunpack.c.l.b16 %v5237
  %v5526 = vunpack.c.l.b16 %v5238
  %v5527 = vunpack.c.l.b16 %v5239
  %v5528 = vunpack.c.l.b16 %v5240
  %v5529 = vunpack.c.l.b16 %v5241
  %v5530 = vunpack.c.l.b16 %v5242
  %v5531 = vunpack.c.l.b16 %v5243
  %v5532 = vunpack.c.l.b16 %v5244
  %v5533 = vunpack.c.l.b16 %v5245
  %v5534 = vunpack.c.l.b16 %v5246
  %v5535 = vunpack.c.l.b16 %v5247
  %v5536 = vunpack.c.l.b16 %v5248
  %v5537 = vunpack.c.l.b16 %v5249
  %v5538 = vunpack.c.l.b16 %v5250
  %v5539 = vunpack.c.l.b16 %v5251
  %v5540 = vunpack.c.l.b16 %v5252
  %v5541 = vunpack.c.l.b16 %v5253
  %v5542 = vunpack.c.l.b16 %v5254
  %v5543 = vunpack.c.l.b16 %v5255
  %v5544 = vunpack.c.l.b16 %v5256
  %v5545 = vunpack.c.l.b16 %v5257
  %v5546 = vunpack.c.l.b16 %v5258
  %v5547 = vunpack.c.l.b16 %v5259
  %v5548 = vunpack.c.l.b16 %v5260
  %v5549 = vunpack.c.l.b16 %v5261
  %v5550 = vunpack.c.l.b16 %v5262
  %v5551 = vunpack.c.l.b16 %v5263
  %v5552 = vunpack.c.l.b16 %v5264
  %v5553 = vpack.c.b16 %v5410, %v5409
  %v5554 = vpack.c.b16 %v5412, %v5411
  %v5555 = vpack.c.b16 %v5414, %v5413
  %v5556 = vpack.c.b16 %v5416, %v5415
  %v5557 = vpack.c.b16 %v5418, %v5417
  %v5558 = vpack.c.b16 %v5420, %v5419
  %v5559 = vpack.c.b16 %v5422, %v5421
  %v5560 = vpack.c.b16 %v5424, %v5423
  %v5561 = vpack.c.b16 %v5426, %v5425
  %v5562 = vpack.c.b16 %v5428, %v5427
  %v5563 = vpack.c.b16 %v5430, %v5429
  %v5564 = vpack.c.b16 %v5432, %v5431
  %v5565 = vpack.c.b16 %v5434, %v5433
  %v5566 = vpack.c.b16 %v5436, %v5435
  %v5567 = vpack.c.b16 %v5438, %v5437
  %v5568 = vpack.c.b16 %v5440, %v5439
  %v5569 = vpack.c.b16 %v5442, %v5441
  %v5570 = vpack.c.b16 %v5444, %v5443
  %v5571 = vpack.c.b16 %v5446, %v5445
  %v5572 = vpack.c.b16 %v5448, %v5447
  %v5573 = vpack.c.b16 %v5450, %v5449
  %v5574 = vpack.c.b16 %v5452, %v5451
  %v5575 = vpack.c.b16 %v5454, %v5453
  %v5576 = vpack.c.b16 %v5456, %v5455
  %v5577 = vpack.c.b16 %v5458, %v5457
  %v5578 = vpack.c.b16 %v5460, %v5459
  %v5579 = vpack.c.b16 %v5462, %v5461
  %v5580 = vpack.c.b16 %v5464, %v5463
  %v5581 = vpack.c.b16 %v5466, %v5465
  %v5582 = vpack.c.b16 %v5468, %v5467
  %v5583 = vpack.c.b16 %v5470, %v5469
  %v5584 = vpack.c.b16 %v5472, %v5471
  %v5585 = vpack.c.b16 %v5474, %v5473
  %v5586 = vpack.c.b16 %v5476, %v5475
  %v5587 = vpack.c.b16 %v5478, %v5477
  %v5588 = vpack.c.b16 %v5480, %v5479
  %v5589 = vpack.c.b16 %v5482, %v5481
  %v5590 = vpack.c.b16 %v5484, %v5483
  %v5591 = vpack.c.b16 %v5486, %v5485
  %v5592 = vpack.c.b16 %v5488, %v5487
  %v5593 = vpack.c.b16 %v5490, %v5489
  %v5594 = vpack.c.b16 %v5492, %v5491
  %v5595 = vpack.c.b16 %v5494, %v5493
  %v5596 = vpack.c.b16 %v5496, %v5495
  %v5597 = vpack.c.b16 %v5498, %v5497
  %v5598 = vpack.c.b16 %v5500, %v5499
  %v5599 = vpack.c.b16 %v5502, %v5501
  %v5600 = vpack.c.b16 %v5504, %v5503
  %v5601 = vpack.c.b16 %v5506, %v5505
  %v5602 = vpack.c.b16 %v5508, %v5507
  %v5603 = vpack.c.b16 %v5510, %v5509
  %v5604 = vpack.c.b16 %v5512, %v5511
  %v5605 = vpack.c.b16 %v5514, %v5513
  %v5606 = vpack.c.b16 %v5516, %v5515
  %v5607 = vpack.c.b16 %v5518, %v5517
  %v5608 = vpack.c.b16 %v5520, %v5519
  %v5609 = vpack.c.b16 %v5522, %v5521
  %v5610 = vpack.c.b16 %v5524, %v5523
  %v5611 = vpack.c.b16 %v5526, %v5525
  %v5612 = vpack.c.b16 %v5528, %v5527
  %v5613 = vpack.c.b16 %v5530, %v5529
  %v5614 = vpack.c.b16 %v5532, %v5531
  %v5615 = vpack.c.b16 %v5534, %v5533
  %v5616 = vpack.c.b16 %v5536, %v5535
  %v5617 = vpack.c.b16 %v5538, %v5537
  %v5618 = vpack.c.b16 %v5540, %v5539
  %v5619 = vpack.c.b16 %v5542, %v5541
  %v5620 = vpack.c.b16 %v5544, %v5543
  %v5621 = vpack.c.b16 %v5546, %v5545
  %v5622 = vpack.c.b16 %v5548, %v5547
  %v5623 = vpack.c.b16 %v5550, %v5549
  %v5624 = vpack.c.b16 %v5552, %v5551
  %5697 = vmatpush.bf16.msra.mxu0 %v5560
  %5698 = vmatpush.bf16.msra.mxu0 %v5559
  %5699 = vmatpush.bf16.msra.mxu0 %v5558
  %5700 = vmatpush.bf16.msra.mxu0 %v5557
  %5701 = vmatpush.bf16.msra.mxu0 %v5556
  %5702 = vmatpush.bf16.msra.mxu0 %v5555
  %5703 = vmatpush.bf16.msra.mxu0 %v5554
  %5704 = vmatpush.bf16.msra.mxu0 %v5553
  %5705 = vmatmul.bf16.gmra.mxu0 %v5048
  %v5706 = vpop.f32.mrf.mxu0
  %v5707 = vadd.f32 0.0, %v5706
  %v5708 = vpop.f32.mrf.mxu0
  %v5709 = vadd.f32 0.0, %v5708
  %5710 = vmatmul.bf16.gmra.mxu0 %v5057
  %v5711 = vpop.f32.mrf.mxu0
  %v5712 = vadd.f32 0.0, %v5711
  %v5713 = vpop.f32.mrf.mxu0
  %v5714 = vadd.f32 0.0, %v5713
  %5715 = vmatmul.bf16.gmra.mxu0 %v5066
  %v5716 = vpop.f32.mrf.mxu0
  %v5717 = vadd.f32 0.0, %v5716
  %v5718 = vpop.f32.mrf.mxu0
  %v5719 = vadd.f32 0.0, %v5718
  %5720 = vmatmul.bf16.gmra.mxu0 %v5075
  %v5721 = vpop.f32.mrf.mxu0
  %v5722 = vadd.f32 0.0, %v5721
  %v5723 = vpop.f32.mrf.mxu0
  %v5724 = vadd.f32 0.0, %v5723
  %5725 = vmatmul.bf16.gmra.mxu0 %v5084
  %v5726 = vpop.f32.mrf.mxu0
  %v5727 = vadd.f32 0.0, %v5726
  %v5728 = vpop.f32.mrf.mxu0
  %v5729 = vadd.f32 0.0, %v5728
  %5730 = vmatmul.bf16.gmra.mxu0 %v5093
  %v5731 = vpop.f32.mrf.mxu0
  %v5732 = vadd.f32 0.0, %v5731
  %v5733 = vpop.f32.mrf.mxu0
  %v5734 = vadd.f32 0.0, %v5733
  %5735 = vmatmul.bf16.gmra.mxu0 %v5102
  %v5736 = vpop.f32.mrf.mxu0
  %v5737 = vadd.f32 0.0, %v5736
  %v5738 = vpop.f32.mrf.mxu0
  %v5739 = vadd.f32 0.0, %v5738
  %5740 = vmatmul.bf16.gmra.mxu0 %v5111
  %v5741 = vpop.f32.mrf.mxu0
  %v5742 = vadd.f32 0.0, %v5741
  %v5743 = vpop.f32.mrf.mxu0
  %v5744 = vadd.f32 0.0, %v5743
  %5745 = vdwg.mxu0
  %5746 = vmatpush.bf16.msra.mxu0 %v5568
  %5747 = vmatpush.bf16.msra.mxu0 %v5567
  %5748 = vmatpush.bf16.msra.mxu0 %v5566
  %5749 = vmatpush.bf16.msra.mxu0 %v5565
  %5750 = vmatpush.bf16.msra.mxu0 %v5564
  %5751 = vmatpush.bf16.msra.mxu0 %v5563
  %5752 = vmatpush.bf16.msra.mxu0 %v5562
  %5753 = vmatpush.bf16.msra.mxu0 %v5561
  %5754 = vmatmul.bf16.gmra.mxu0 %v5049
  %v5755 = vpop.f32.mrf.mxu0
  %v5756 = vadd.f32 %v5707, %v5755
  %v5757 = vpop.f32.mrf.mxu0
  %v5758 = vadd.f32 %v5709, %v5757
  %5759 = vmatmul.bf16.gmra.mxu0 %v5058
  %v5760 = vpop.f32.mrf.mxu0
  %v5761 = vadd.f32 %v5712, %v5760
  %v5762 = vpop.f32.mrf.mxu0
  %v5763 = vadd.f32 %v5714, %v5762
  %5764 = vmatmul.bf16.gmra.mxu0 %v5067
  %v5765 = vpop.f32.mrf.mxu0
  %v5766 = vadd.f32 %v5717, %v5765
  %v5767 = vpop.f32.mrf.mxu0
  %v5768 = vadd.f32 %v5719, %v5767
  %5769 = vmatmul.bf16.gmra.mxu0 %v5076
  %v5770 = vpop.f32.mrf.mxu0
  %v5771 = vadd.f32 %v5722, %v5770
  %v5772 = vpop.f32.mrf.mxu0
  %v5773 = vadd.f32 %v5724, %v5772
  %5774 = vmatmul.bf16.gmra.mxu0 %v5085
  %v5775 = vpop.f32.mrf.mxu0
  %v5776 = vadd.f32 %v5727, %v5775
  %v5777 = vpop.f32.mrf.mxu0
  %v5778 = vadd.f32 %v5729, %v5777
  %5779 = vmatmul.bf16.gmra.mxu0 %v5094
  %v5780 = vpop.f32.mrf.mxu0
  %v5781 = vadd.f32 %v5732, %v5780
  %v5782 = vpop.f32.mrf.mxu0
  %v5783 = vadd.f32 %v5734, %v5782
  %5784 = vmatmul.bf16.gmra.mxu0 %v5103
  %v5785 = vpop.f32.mrf.mxu0
  %v5786 = vadd.f32 %v5737, %v5785
  %v5787 = vpop.f32.mrf.mxu0
  %v5788 = vadd.f32 %v5739, %v5787
  %5789 = vmatmul.bf16.gmra.mxu0 %v5112
  %v5790 = vpop.f32.mrf.mxu0
  %v5791 = vadd.f32 %v5742, %v5790
  %v5792 = vpop.f32.mrf.mxu0
  %v5793 = vadd.f32 %v5744, %v5792
  %5794 = vdwg.mxu0
  %5795 = vmatpush.bf16.msra.mxu0 %v5576
  %5796 = vmatpush.bf16.msra.mxu0 %v5575
  %5797 = vmatpush.bf16.msra.mxu0 %v5574
  %5798 = vmatpush.bf16.msra.mxu0 %v5573
  %5799 = vmatpush.bf16.msra.mxu0 %v5572
  %5800 = vmatpush.bf16.msra.mxu0 %v5571
  %5801 = vmatpush.bf16.msra.mxu0 %v5570
  %5802 = vmatpush.bf16.msra.mxu0 %v5569
  %5803 = vmatmul.bf16.gmra.mxu0 %v5050
  %v5804 = vpop.f32.mrf.mxu0
  %v5805 = vadd.f32 %v5756, %v5804
  %v5806 = vpop.f32.mrf.mxu0
  %v5807 = vadd.f32 %v5758, %v5806
  %5808 = vmatmul.bf16.gmra.mxu0 %v5059
  %v5809 = vpop.f32.mrf.mxu0
  %v5810 = vadd.f32 %v5761, %v5809
  %v5811 = vpop.f32.mrf.mxu0
  %v5812 = vadd.f32 %v5763, %v5811
  %5813 = vmatmul.bf16.gmra.mxu0 %v5068
  %v5814 = vpop.f32.mrf.mxu0
  %v5815 = vadd.f32 %v5766, %v5814
  %v5816 = vpop.f32.mrf.mxu0
  %v5817 = vadd.f32 %v5768, %v5816
  %5818 = vmatmul.bf16.gmra.mxu0 %v5077
  %v5819 = vpop.f32.mrf.mxu0
  %v5820 = vadd.f32 %v5771, %v5819
  %v5821 = vpop.f32.mrf.mxu0
  %v5822 = vadd.f32 %v5773, %v5821
  %5823 = vmatmul.bf16.gmra.mxu0 %v5086
  %v5824 = vpop.f32.mrf.mxu0
  %v5825 = vadd.f32 %v5776, %v5824
  %v5826 = vpop.f32.mrf.mxu0
  %v5827 = vadd.f32 %v5778, %v5826
  %5828 = vmatmul.bf16.gmra.mxu0 %v5095
  %v5829 = vpop.f32.mrf.mxu0
  %v5830 = vadd.f32 %v5781, %v5829
  %v5831 = vpop.f32.mrf.mxu0
  %v5832 = vadd.f32 %v5783, %v5831
  %5833 = vmatmul.bf16.gmra.mxu0 %v5104
  %v5834 = vpop.f32.mrf.mxu0
  %v5835 = vadd.f32 %v5786, %v5834
  %v5836 = vpop.f32.mrf.mxu0
  %v5837 = vadd.f32 %v5788, %v5836
  %5838 = vmatmul.bf16.gmra.mxu0 %v5113
  %v5839 = vpop.f32.mrf.mxu0
  %v5840 = vadd.f32 %v5791, %v5839
  %v5841 = vpop.f32.mrf.mxu0
  %v5842 = vadd.f32 %v5793, %v5841
  %5843 = vdwg.mxu0
  %5844 = vmatpush.bf16.msra.mxu0 %v5584
  %5845 = vmatpush.bf16.msra.mxu0 %v5583
  %5846 = vmatpush.bf16.msra.mxu0 %v5582
  %5847 = vmatpush.bf16.msra.mxu0 %v5581
  %5848 = vmatpush.bf16.msra.mxu0 %v5580
  %5849 = vmatpush.bf16.msra.mxu0 %v5579
  %5850 = vmatpush.bf16.msra.mxu0 %v5578
  %5851 = vmatpush.bf16.msra.mxu0 %v5577
  %5852 = vmatmul.bf16.gmra.mxu0 %v5051
  %v5853 = vpop.f32.mrf.mxu0
  %v5854 = vadd.f32 %v5805, %v5853
  %v5855 = vpop.f32.mrf.mxu0
  %v5856 = vadd.f32 %v5807, %v5855
  %5857 = vmatmul.bf16.gmra.mxu0 %v5060
  %v5858 = vpop.f32.mrf.mxu0
  %v5859 = vadd.f32 %v5810, %v5858
  %v5860 = vpop.f32.mrf.mxu0
  %v5861 = vadd.f32 %v5812, %v5860
  %5862 = vmatmul.bf16.gmra.mxu0 %v5069
  %v5863 = vpop.f32.mrf.mxu0
  %v5864 = vadd.f32 %v5815, %v5863
  %v5865 = vpop.f32.mrf.mxu0
  %v5866 = vadd.f32 %v5817, %v5865
  %5867 = vmatmul.bf16.gmra.mxu0 %v5078
  %v5868 = vpop.f32.mrf.mxu0
  %v5869 = vadd.f32 %v5820, %v5868
  %v5870 = vpop.f32.mrf.mxu0
  %v5871 = vadd.f32 %v5822, %v5870
  %5872 = vmatmul.bf16.gmra.mxu0 %v5087
  %v5873 = vpop.f32.mrf.mxu0
  %v5874 = vadd.f32 %v5825, %v5873
  %v5875 = vpop.f32.mrf.mxu0
  %v5876 = vadd.f32 %v5827, %v5875
  %5877 = vmatmul.bf16.gmra.mxu0 %v5096
  %v5878 = vpop.f32.mrf.mxu0
  %v5879 = vadd.f32 %v5830, %v5878
  %v5880 = vpop.f32.mrf.mxu0
  %v5881 = vadd.f32 %v5832, %v5880
  %5882 = vmatmul.bf16.gmra.mxu0 %v5105
  %v5883 = vpop.f32.mrf.mxu0
  %v5884 = vadd.f32 %v5835, %v5883
  %v5885 = vpop.f32.mrf.mxu0
  %v5886 = vadd.f32 %v5837, %v5885
  %5887 = vmatmul.bf16.gmra.mxu0 %v5114
  %v5888 = vpop.f32.mrf.mxu0
  %v5889 = vadd.f32 %v5840, %v5888
  %v5890 = vpop.f32.mrf.mxu0
  %v5891 = vadd.f32 %v5842, %v5890
  %5892 = vdwg.mxu0
  %5893 = vmatpush.bf16.msra.mxu0 %v5592
  %5894 = vmatpush.bf16.msra.mxu0 %v5591
  %5895 = vmatpush.bf16.msra.mxu0 %v5590
  %5896 = vmatpush.bf16.msra.mxu0 %v5589
  %5897 = vmatpush.bf16.msra.mxu0 %v5588
  %5898 = vmatpush.bf16.msra.mxu0 %v5587
  %5899 = vmatpush.bf16.msra.mxu0 %v5586
  %5900 = vmatpush.bf16.msra.mxu0 %v5585
  %5901 = vmatmul.bf16.gmra.mxu0 %v5052
  %v5902 = vpop.f32.mrf.mxu0
  %v5903 = vadd.f32 %v5854, %v5902
  %v5904 = vpop.f32.mrf.mxu0
  %v5905 = vadd.f32 %v5856, %v5904
  %5906 = vmatmul.bf16.gmra.mxu0 %v5061
  %v5907 = vpop.f32.mrf.mxu0
  %v5908 = vadd.f32 %v5859, %v5907
  %v5909 = vpop.f32.mrf.mxu0
  %v5910 = vadd.f32 %v5861, %v5909
  %5911 = vmatmul.bf16.gmra.mxu0 %v5070
  %v5912 = vpop.f32.mrf.mxu0
  %v5913 = vadd.f32 %v5864, %v5912
  %v5914 = vpop.f32.mrf.mxu0
  %v5915 = vadd.f32 %v5866, %v5914
  %5916 = vmatmul.bf16.gmra.mxu0 %v5079
  %v5917 = vpop.f32.mrf.mxu0
  %v5918 = vadd.f32 %v5869, %v5917
  %v5919 = vpop.f32.mrf.mxu0
  %v5920 = vadd.f32 %v5871, %v5919
  %5921 = vmatmul.bf16.gmra.mxu0 %v5088
  %v5922 = vpop.f32.mrf.mxu0
  %v5923 = vadd.f32 %v5874, %v5922
  %v5924 = vpop.f32.mrf.mxu0
  %v5925 = vadd.f32 %v5876, %v5924
  %5926 = vmatmul.bf16.gmra.mxu0 %v5097
  %v5927 = vpop.f32.mrf.mxu0
  %v5928 = vadd.f32 %v5879, %v5927
  %v5929 = vpop.f32.mrf.mxu0
  %v5930 = vadd.f32 %v5881, %v5929
  %5931 = vmatmul.bf16.gmra.mxu0 %v5106
  %v5932 = vpop.f32.mrf.mxu0
  %v5933 = vadd.f32 %v5884, %v5932
  %v5934 = vpop.f32.mrf.mxu0
  %v5935 = vadd.f32 %v5886, %v5934
  %5936 = vmatmul.bf16.gmra.mxu0 %v5115
  %v5937 = vpop.f32.mrf.mxu0
  %v5938 = vadd.f32 %v5889, %v5937
  %v5939 = vpop.f32.mrf.mxu0
  %v5940 = vadd.f32 %v5891, %v5939
  %5941 = vdwg.mxu0
  %5942 = vmatpush.bf16.msra.mxu0 %v5600
  %5943 = vmatpush.bf16.msra.mxu0 %v5599
  %5944 = vmatpush.bf16.msra.mxu0 %v5598
  %5945 = vmatpush.bf16.msra.mxu0 %v5597
  %5946 = vmatpush.bf16.msra.mxu0 %v5596
  %5947 = vmatpush.bf16.msra.mxu0 %v5595
  %5948 = vmatpush.bf16.msra.mxu0 %v5594
  %5949 = vmatpush.bf16.msra.mxu0 %v5593
  %5950 = vmatmul.bf16.gmra.mxu0 %v5053
  %v5951 = vpop.f32.mrf.mxu0
  %v5952 = vadd.f32 %v5903, %v5951
  %v5953 = vpop.f32.mrf.mxu0
  %v5954 = vadd.f32 %v5905, %v5953
  %5955 = vmatmul.bf16.gmra.mxu0 %v5062
  %v5956 = vpop.f32.mrf.mxu0
  %v5957 = vadd.f32 %v5908, %v5956
  %v5958 = vpop.f32.mrf.mxu0
  %v5959 = vadd.f32 %v5910, %v5958
  %5960 = vmatmul.bf16.gmra.mxu0 %v5071
  %v5961 = vpop.f32.mrf.mxu0
  %v5962 = vadd.f32 %v5913, %v5961
  %v5963 = vpop.f32.mrf.mxu0
  %v5964 = vadd.f32 %v5915, %v5963
  %5965 = vmatmul.bf16.gmra.mxu0 %v5080
  %v5966 = vpop.f32.mrf.mxu0
  %v5967 = vadd.f32 %v5918, %v5966
  %v5968 = vpop.f32.mrf.mxu0
  %v5969 = vadd.f32 %v5920, %v5968
  %5970 = vmatmul.bf16.gmra.mxu0 %v5089
  %v5971 = vpop.f32.mrf.mxu0
  %v5972 = vadd.f32 %v5923, %v5971
  %v5973 = vpop.f32.mrf.mxu0
  %v5974 = vadd.f32 %v5925, %v5973
  %5975 = vmatmul.bf16.gmra.mxu0 %v5098
  %v5976 = vpop.f32.mrf.mxu0
  %v5977 = vadd.f32 %v5928, %v5976
  %v5978 = vpop.f32.mrf.mxu0
  %v5979 = vadd.f32 %v5930, %v5978
  %5980 = vmatmul.bf16.gmra.mxu0 %v5107
  %v5981 = vpop.f32.mrf.mxu0
  %v5982 = vadd.f32 %v5933, %v5981
  %v5983 = vpop.f32.mrf.mxu0
  %v5984 = vadd.f32 %v5935, %v5983
  %5985 = vmatmul.bf16.gmra.mxu0 %v5116
  %v5986 = vpop.f32.mrf.mxu0
  %v5987 = vadd.f32 %v5938, %v5986
  %v5988 = vpop.f32.mrf.mxu0
  %v5989 = vadd.f32 %v5940, %v5988
  %5990 = vdwg.mxu0
  %5991 = vmatpush.bf16.msra.mxu0 %v5608
  %5992 = vmatpush.bf16.msra.mxu0 %v5607
  %5993 = vmatpush.bf16.msra.mxu0 %v5606
  %5994 = vmatpush.bf16.msra.mxu0 %v5605
  %5995 = vmatpush.bf16.msra.mxu0 %v5604
  %5996 = vmatpush.bf16.msra.mxu0 %v5603
  %5997 = vmatpush.bf16.msra.mxu0 %v5602
  %5998 = vmatpush.bf16.msra.mxu0 %v5601
  %5999 = vmatmul.bf16.gmra.mxu0 %v5054
  %v6000 = vpop.f32.mrf.mxu0
  %v6001 = vadd.f32 %v5952, %v6000
  %v6002 = vpop.f32.mrf.mxu0
  %v6003 = vadd.f32 %v5954, %v6002
  %6004 = vmatmul.bf16.gmra.mxu0 %v5063
  %v6005 = vpop.f32.mrf.mxu0
  %v6006 = vadd.f32 %v5957, %v6005
  %v6007 = vpop.f32.mrf.mxu0
  %v6008 = vadd.f32 %v5959, %v6007
  %6009 = vmatmul.bf16.gmra.mxu0 %v5072
  %v6010 = vpop.f32.mrf.mxu0
  %v6011 = vadd.f32 %v5962, %v6010
  %v6012 = vpop.f32.mrf.mxu0
  %v6013 = vadd.f32 %v5964, %v6012
  %6014 = vmatmul.bf16.gmra.mxu0 %v5081
  %v6015 = vpop.f32.mrf.mxu0
  %v6016 = vadd.f32 %v5967, %v6015
  %v6017 = vpop.f32.mrf.mxu0
  %v6018 = vadd.f32 %v5969, %v6017
  %6019 = vmatmul.bf16.gmra.mxu0 %v5090
  %v6020 = vpop.f32.mrf.mxu0
  %v6021 = vadd.f32 %v5972, %v6020
  %v6022 = vpop.f32.mrf.mxu0
  %v6023 = vadd.f32 %v5974, %v6022
  %6024 = vmatmul.bf16.gmra.mxu0 %v5099
  %v6025 = vpop.f32.mrf.mxu0
  %v6026 = vadd.f32 %v5977, %v6025
  %v6027 = vpop.f32.mrf.mxu0
  %v6028 = vadd.f32 %v5979, %v6027
  %6029 = vmatmul.bf16.gmra.mxu0 %v5108
  %v6030 = vpop.f32.mrf.mxu0
  %v6031 = vadd.f32 %v5982, %v6030
  %v6032 = vpop.f32.mrf.mxu0
  %v6033 = vadd.f32 %v5984, %v6032
  %6034 = vmatmul.bf16.gmra.mxu0 %v5117
  %v6035 = vpop.f32.mrf.mxu0
  %v6036 = vadd.f32 %v5987, %v6035
  %v6037 = vpop.f32.mrf.mxu0
  %v6038 = vadd.f32 %v5989, %v6037
  %6039 = vdwg.mxu0
  %6040 = vmatpush.bf16.msra.mxu0 %v5616
  %6041 = vmatpush.bf16.msra.mxu0 %v5615
  %6042 = vmatpush.bf16.msra.mxu0 %v5614
  %6043 = vmatpush.bf16.msra.mxu0 %v5613
  %6044 = vmatpush.bf16.msra.mxu0 %v5612
  %6045 = vmatpush.bf16.msra.mxu0 %v5611
  %6046 = vmatpush.bf16.msra.mxu0 %v5610
  %6047 = vmatpush.bf16.msra.mxu0 %v5609
  %6048 = vmatmul.bf16.gmra.mxu0 %v5055
  %v6049 = vpop.f32.mrf.mxu0
  %v6050 = vadd.f32 %v6001, %v6049
  %v6051 = vpop.f32.mrf.mxu0
  %v6052 = vadd.f32 %v6003, %v6051
  %6053 = vmatmul.bf16.gmra.mxu0 %v5064
  %v6054 = vpop.f32.mrf.mxu0
  %v6055 = vadd.f32 %v6006, %v6054
  %v6056 = vpop.f32.mrf.mxu0
  %v6057 = vadd.f32 %v6008, %v6056
  %6058 = vmatmul.bf16.gmra.mxu0 %v5073
  %v6059 = vpop.f32.mrf.mxu0
  %v6060 = vadd.f32 %v6011, %v6059
  %v6061 = vpop.f32.mrf.mxu0
  %v6062 = vadd.f32 %v6013, %v6061
  %6063 = vmatmul.bf16.gmra.mxu0 %v5082
  %v6064 = vpop.f32.mrf.mxu0
  %v6065 = vadd.f32 %v6016, %v6064
  %v6066 = vpop.f32.mrf.mxu0
  %v6067 = vadd.f32 %v6018, %v6066
  %6068 = vmatmul.bf16.gmra.mxu0 %v5091
  %v6069 = vpop.f32.mrf.mxu0
  %v6070 = vadd.f32 %v6021, %v6069
  %v6071 = vpop.f32.mrf.mxu0
  %v6072 = vadd.f32 %v6023, %v6071
  %6073 = vmatmul.bf16.gmra.mxu0 %v5100
  %v6074 = vpop.f32.mrf.mxu0
  %v6075 = vadd.f32 %v6026, %v6074
  %v6076 = vpop.f32.mrf.mxu0
  %v6077 = vadd.f32 %v6028, %v6076
  %6078 = vmatmul.bf16.gmra.mxu0 %v5109
  %v6079 = vpop.f32.mrf.mxu0
  %v6080 = vadd.f32 %v6031, %v6079
  %v6081 = vpop.f32.mrf.mxu0
  %v6082 = vadd.f32 %v6033, %v6081
  %6083 = vmatmul.bf16.gmra.mxu0 %v5118
  %v6084 = vpop.f32.mrf.mxu0
  %v6085 = vadd.f32 %v6036, %v6084
  %v6086 = vpop.f32.mrf.mxu0
  %v6087 = vadd.f32 %v6038, %v6086
  %6088 = vdwg.mxu0
  %6089 = vmatpush.bf16.msra.mxu0 %v5624
  %6090 = vmatpush.bf16.msra.mxu0 %v5623
  %6091 = vmatpush.bf16.msra.mxu0 %v5622
  %6092 = vmatpush.bf16.msra.mxu0 %v5621
  %6093 = vmatpush.bf16.msra.mxu0 %v5620
  %6094 = vmatpush.bf16.msra.mxu0 %v5619
  %6095 = vmatpush.bf16.msra.mxu0 %v5618
  %6096 = vmatpush.bf16.msra.mxu0 %v5617
  %6097 = vmatmul.bf16.gmra.mxu0 %v5056
  %v6098 = vpop.f32.mrf.mxu0
  %v6099 = vadd.f32 %v6050, %v6098
  %v6100 = vpop.f32.mrf.mxu0
  %v6101 = vadd.f32 %v6052, %v6100
  %6102 = vmatmul.bf16.gmra.mxu0 %v5065
  %v6103 = vpop.f32.mrf.mxu0
  %v6104 = vadd.f32 %v6055, %v6103
  %v6105 = vpop.f32.mrf.mxu0
  %v6106 = vadd.f32 %v6057, %v6105
  %6107 = vmatmul.bf16.gmra.mxu0 %v5074
  %v6108 = vpop.f32.mrf.mxu0
  %v6109 = vadd.f32 %v6060, %v6108
  %v6110 = vpop.f32.mrf.mxu0
  %v6111 = vadd.f32 %v6062, %v6110
  %6112 = vmatmul.bf16.gmra.mxu0 %v5083
  %v6113 = vpop.f32.mrf.mxu0
  %v6114 = vadd.f32 %v6065, %v6113
  %v6115 = vpop.f32.mrf.mxu0
  %v6116 = vadd.f32 %v6067, %v6115
  %6117 = vmatmul.bf16.gmra.mxu0 %v5092
  %v6118 = vpop.f32.mrf.mxu0
  %v6119 = vadd.f32 %v6070, %v6118
  %v6120 = vpop.f32.mrf.mxu0
  %v6121 = vadd.f32 %v6072, %v6120
  %6122 = vmatmul.bf16.gmra.mxu0 %v5101
  %v6123 = vpop.f32.mrf.mxu0
  %v6124 = vadd.f32 %v6075, %v6123
  %v6125 = vpop.f32.mrf.mxu0
  %v6126 = vadd.f32 %v6077, %v6125
  %6127 = vmatmul.bf16.gmra.mxu0 %v5110
  %v6128 = vpop.f32.mrf.mxu0
  %v6129 = vadd.f32 %v6080, %v6128
  %v6130 = vpop.f32.mrf.mxu0
  %v6131 = vadd.f32 %v6082, %v6130
  %6132 = vmatmul.bf16.gmra.mxu0 %v5119
  %v6133 = vpop.f32.mrf.mxu0
  %v6134 = vadd.f32 %v6085, %v6133
  %v6135 = vpop.f32.mrf.mxu0
  %v6136 = vadd.f32 %v6087, %v6135
  %6137 = vdwg.mxu0
  %s6138 = scalar_lea.vmem %s9, 1
  %v6139 = vld [vmem:[%s6138] sm:$0x1]
  %v6141 = vperm.slane %v6139, 0
  %v6143 = vmul.f32 %v6099, %v6141
  %v6144 = vmul.f32 %v6101, %v6141
  %v6145 = vmul.f32 %v6104, %v6141
  %v6146 = vmul.f32 %v6106, %v6141
  %v6147 = vmul.f32 %v6109, %v6141
  %v6148 = vmul.f32 %v6111, %v6141
  %v6149 = vmul.f32 %v6114, %v6141
  %v6150 = vmul.f32 %v6116, %v6141
  %v6151 = vmul.f32 %v6119, %v6141
  %v6152 = vmul.f32 %v6121, %v6141
  %v6153 = vmul.f32 %v6124, %v6141
  %v6154 = vmul.f32 %v6126, %v6141
  %v6155 = vmul.f32 %v6129, %v6141
  %v6156 = vmul.f32 %v6131, %v6141
  %v6157 = vmul.f32 %v6134, %v6141
  %v6158 = vmul.f32 %v6136, %v6141
  %s6159 = scalar_lea.vmem %s10, 1
  %v6160 = vld [vmem:[%s6159] sm:$0x1]
  %v6162 = vperm.slane %v6160, 0
  %v6164 = vadd.f32 %v6143, %v6162
  %v6165 = vadd.f32 %v6144, %v6162
  %v6166 = vadd.f32 %v6145, %v6162
  %v6167 = vadd.f32 %v6146, %v6162
  %v6168 = vadd.f32 %v6147, %v6162
  %v6169 = vadd.f32 %v6148, %v6162
  %v6170 = vadd.f32 %v6149, %v6162
  %v6171 = vadd.f32 %v6150, %v6162
  %v6172 = vadd.f32 %v6151, %v6162
  %v6173 = vadd.f32 %v6152, %v6162
  %v6174 = vadd.f32 %v6153, %v6162
  %v6175 = vadd.f32 %v6154, %v6162
  %v6176 = vadd.f32 %v6155, %v6162
  %v6177 = vadd.f32 %v6156, %v6162
  %v6178 = vadd.f32 %v6157, %v6162
  %v6179 = vadd.f32 %v6158, %v6162
  %v6180 = vadd.f32 %v6164, %v3540
  %v6181 = vadd.f32 %v6165, %v3541
  %v6182 = vadd.f32 %v6166, %v3542
  %v6183 = vadd.f32 %v6167, %v3543
  %v6184 = vadd.f32 %v6168, %v3544
  %v6185 = vadd.f32 %v6169, %v3545
  %v6186 = vadd.f32 %v6170, %v3546
  %v6187 = vadd.f32 %v6171, %v3547
  %v6188 = vadd.f32 %v6172, %v3548
  %v6189 = vadd.f32 %v6173, %v3549
  %v6190 = vadd.f32 %v6174, %v3550
  %v6191 = vadd.f32 %v6175, %v3551
  %v6192 = vadd.f32 %v6176, %v3552
  %v6193 = vadd.f32 %v6177, %v3553
  %v6194 = vadd.f32 %v6178, %v3554
  %v6195 = vadd.f32 %v6179, %v3555
  %v6196 = vmax.f32 %v6180, 0.0
  %v6197 = vmax.f32 %v6181, 0.0
  %v6198 = vmax.f32 %v6182, 0.0
  %v6199 = vmax.f32 %v6183, 0.0
  %v6200 = vmax.f32 %v6184, 0.0
  %v6201 = vmax.f32 %v6185, 0.0
  %v6202 = vmax.f32 %v6186, 0.0
  %v6203 = vmax.f32 %v6187, 0.0
  %v6204 = vmax.f32 %v6188, 0.0
  %v6205 = vmax.f32 %v6189, 0.0
  %v6206 = vmax.f32 %v6190, 0.0
  %v6207 = vmax.f32 %v6191, 0.0
  %v6208 = vmax.f32 %v6192, 0.0
  %v6209 = vmax.f32 %v6193, 0.0
  %v6210 = vmax.f32 %v6194, 0.0
  %v6211 = vmax.f32 %v6195, 0.0
  %v6212 = vld [vmem:[%s11] sm:$0x3]
  %6213 = vmatpush.msra.mxu0 %v6211
  %6214 = vmatpush.msra.mxu0 %v6210
  %6215 = vmatpush.msra.mxu0 %v6209
  %6216 = vmatpush.msra.mxu0 %v6208
  %6217 = vmatpush.msra.mxu0 %v6207
  %6218 = vmatpush.msra.mxu0 %v6206
  %6219 = vmatpush.msra.mxu0 %v6205
  %6220 = vmatpush.msra.mxu0 %v6204
  %6221 = vmatpush.msra.mxu0 %v6203
  %6222 = vmatpush.msra.mxu0 %v6202
  %6223 = vmatpush.msra.mxu0 %v6201
  %6224 = vmatpush.msra.mxu0 %v6200
  %6225 = vmatpush.msra.mxu0 %v6199
  %6226 = vmatpush.msra.mxu0 %v6198
  %6227 = vmatpush.msra.mxu0 %v6197
  %6228 = vmatpush.msra.mxu0 %v6196
  %6229 = vmatmul.f32.gmra.mxu0 %v6212
  %v6230 = vpop.f32.mrf.mxu0
  %v6231 = vadd.f32 0.0, %v6230
  %6232 = vdwg.mxu0
  %v6233 = vld [vmem:[%s12] sm:$0xff]
  %v6234 = vld [vmem:[%s12 + $0x8] sm:$0xff]
  %v6235 = vld [vmem:[%s12 + $0x10] sm:$0xff]
  %v6236 = vld [vmem:[%s12 + $0x18] sm:$0xff]
  %v6237 = vld [vmem:[%s12 + $0x20] sm:$0xff]
  %v6238 = vld [vmem:[%s12 + $0x28] sm:$0xff]
  %v6239 = vld [vmem:[%s12 + $0x30] sm:$0xff]
  %v6240 = vld [vmem:[%s12 + $0x38] sm:$0xff]
  %v6241 = vld [vmem:[%s13] sm:$0x1]
  %v6243 = vperm.slane %v6241, 0
  %v6246 = vsel %vm166, %v6231, 0
  %6248 = vmatpush.msra.mxu0 0.0
  %6249 = vmatpush.msra.mxu0 0.0
  %6250 = vmatpush.msra.mxu0 0.0
  %6251 = vmatpush.msra.mxu0 0.0
  %6252 = vmatpush.msra.mxu0 0.0
  %6253 = vmatpush.msra.mxu0 0.0
  %6254 = vmatpush.msra.mxu0 0.0
  %6255 = vmatpush.msra.mxu0 0.0
  %6256 = vmatpush.msra.mxu0 %v6240
  %6257 = vmatpush.msra.mxu0 %v6239
  %6258 = vmatpush.msra.mxu0 %v6238
  %6259 = vmatpush.msra.mxu0 %v6237
  %6260 = vmatpush.msra.mxu0 %v6236
  %6261 = vmatpush.msra.mxu0 %v6235
  %6262 = vmatpush.msra.mxu0 %v6234
  %6263 = vmatpush.msra.mxu0 %v6233
  %6264 = vmatmul.f32.gmra.mxu0 %v6246
  %v6265 = vpop.f32.mrf.mxu0
  %v6266 = vadd.f32 %v6243, %v6265
  %6267 = vdwg.mxu0
  %v6268 = vld [vmem:[%s14] sm:$0x1]
  %v6269 = vld [vmem:[%s14 + $0x4] sm:$0x1]
  %v6270 = vld [vmem:[%s15] sm:$0xff]
  %v6271 = vld [vmem:[%s15 + $0x8] sm:$0xff]
  %v6272 = vld [vmem:[%s15 + $0x10] sm:$0xff]
  %v6273 = vld [vmem:[%s15 + $0x18] sm:$0xff]
  %v6274 = vld [vmem:[%s16] sm:$0xff]
  %v6277 = vrot.slane %v6269, 7
  %vm6278 = vcmask 1041409
  %v6279 = vsel %vm6278, %v6277, %v6268
  %vm6280 = vcmask 64512
  %v6281 = vsel %vm6280, %v6279, 0
  %6283 = vmatpush.msra.mxu0 0.0
  %6284 = vmatpush.msra.mxu0 0.0
  %6285 = vmatpush.msra.mxu0 0.0
  %6286 = vmatpush.msra.mxu0 0.0
  %6287 = vmatpush.msra.mxu0 0.0
  %6288 = vmatpush.msra.mxu0 0.0
  %6289 = vmatpush.msra.mxu0 0.0
  %6290 = vmatpush.msra.mxu0 0.0
  %6291 = vmatpush.msra.mxu0 0.0
  %6292 = vmatpush.msra.mxu0 0.0
  %6293 = vmatpush.msra.mxu0 0.0
  %6294 = vmatpush.msra.mxu0 0.0
  %6295 = vmatpush.msra.mxu0 0.0
  %6296 = vmatpush.msra.mxu0 0.0
  %6297 = vmatpush.msra.mxu0 0.0
  %6298 = vmatpush.msra.mxu0 %v6274
  %6299 = vmatmul.f32.gmra.mxu0 %v6281
  %v6300 = vpop.f32.mrf.mxu0
  %v6301 = vadd.f32 0.0, %v6300
  %6302 = vdwg.mxu0
  %vm6303 = vcmask 261120
  %v6305 = vsel %vm6303, %v6266, 0
  %6307 = vmatpush.msra.mxu0 0.0
  %6308 = vmatpush.msra.mxu0 0.0
  %6309 = vmatpush.msra.mxu0 0.0
  %6310 = vmatpush.msra.mxu0 0.0
  %6311 = vmatpush.msra.mxu0 0.0
  %6312 = vmatpush.msra.mxu0 0.0
  %6313 = vmatpush.msra.mxu0 0.0
  %6314 = vmatpush.msra.mxu0 0.0
  %6315 = vmatpush.msra.mxu0 0.0
  %6316 = vmatpush.msra.mxu0 0.0
  %6317 = vmatpush.msra.mxu0 0.0
  %6318 = vmatpush.msra.mxu0 0.0
  %6319 = vmatpush.msra.mxu0 %v6273
  %6320 = vmatpush.msra.mxu0 %v6272
  %6321 = vmatpush.msra.mxu0 %v6271
  %6322 = vmatpush.msra.mxu0 %v6270
  %6323 = vmatmul.f32.gmra.mxu0 %v6305
  %v6324 = vpop.f32.mrf.mxu0
  %v6325 = vadd.f32 %v6301, %v6324
  %6326 = vdwg.mxu0
  %v6327 = vld [vmem:[%s17] sm:$0x1]
  %v6329 = vperm.slane %v6327, 0
  %v6331 = vmul.f32 %v6325, %v6329
  %v6332 = vld [vmem:[%s18] sm:$0x1]
  %v6334 = vperm.slane %v6332, 0
  %v6336 = vadd.f32 %v6331, %v6334
  %v6337 = vmax.f32 %v6336, 0.0
  %v6338 = vld [vmem:[%s19] sm:$0xff]
  %v6339 = vld [vmem:[%s19 + $0x8] sm:$0xff]
  %v6340 = vld [vmem:[%s19 + $0x10] sm:$0xff]
  %v6341 = vld [vmem:[%s19 + $0x18] sm:$0xff]
  %v6342 = vld [vmem:[%s19 + $0x20] sm:$0xff]
  %v6343 = vld [vmem:[%s19 + $0x28] sm:$0xff]
  %v6344 = vld [vmem:[%s19 + $0x30] sm:$0xff]
  %v6345 = vld [vmem:[%s19 + $0x38] sm:$0xff]
  %v6347 = vsel %vm166, %v6337, 0
  %6349 = vmatpush.msra.mxu0 0.0
  %6350 = vmatpush.msra.mxu0 0.0
  %6351 = vmatpush.msra.mxu0 0.0
  %6352 = vmatpush.msra.mxu0 0.0
  %6353 = vmatpush.msra.mxu0 0.0
  %6354 = vmatpush.msra.mxu0 0.0
  %6355 = vmatpush.msra.mxu0 0.0
  %6356 = vmatpush.msra.mxu0 0.0
  %6357 = vmatpush.msra.mxu0 %v6345
  %6358 = vmatpush.msra.mxu0 %v6344
  %6359 = vmatpush.msra.mxu0 %v6343
  %6360 = vmatpush.msra.mxu0 %v6342
  %6361 = vmatpush.msra.mxu0 %v6341
  %6362 = vmatpush.msra.mxu0 %v6340
  %6363 = vmatpush.msra.mxu0 %v6339
  %6364 = vmatpush.msra.mxu0 %v6338
  %6365 = vmatmul.f32.gmra.mxu0 %v6347
  %v6366 = vpop.f32.mrf.mxu0
  %v6367 = vadd.f32 0.0, %v6366
  %6368 = vdwg.mxu0
  %v6369 = vld [vmem:[%s20] sm:$0x1]
  %v6371 = vperm.slane %v6369, 0
  %v6373 = vmul.f32 %v6367, %v6371
  %v6374 = vld [vmem:[%s21] sm:$0x1]
  %v6376 = vperm.slane %v6374, 0
  %v6378 = vadd.f32 %v6373, %v6376
  %v6379 = vmax.f32 %v6378, 0.0
  %v6380 = vld [vmem:[%s22] sm:$0xff]
  %v6381 = vld [vmem:[%s22 + $0x8] sm:$0xff]
  %v6382 = vld [vmem:[%s22 + $0x10] sm:$0xff]
  %v6383 = vld [vmem:[%s22 + $0x18] sm:$0xff]
  %v6384 = vld [vmem:[%s23] sm:$0x1]
  %v6386 = vperm.slane %v6384, 0
  %v6389 = vsel %vm6303, %v6379, 0
  %6391 = vmatpush.msra.mxu0 0.0
  %6392 = vmatpush.msra.mxu0 0.0
  %6393 = vmatpush.msra.mxu0 0.0
  %6394 = vmatpush.msra.mxu0 0.0
  %6395 = vmatpush.msra.mxu0 0.0
  %6396 = vmatpush.msra.mxu0 0.0
  %6397 = vmatpush.msra.mxu0 0.0
  %6398 = vmatpush.msra.mxu0 0.0
  %6399 = vmatpush.msra.mxu0 0.0
  %6400 = vmatpush.msra.mxu0 0.0
  %6401 = vmatpush.msra.mxu0 0.0
  %6402 = vmatpush.msra.mxu0 0.0
  %6403 = vmatpush.msra.mxu0 %v6383
  %6404 = vmatpush.msra.mxu0 %v6382
  %6405 = vmatpush.msra.mxu0 %v6381
  %6406 = vmatpush.msra.mxu0 %v6380
  %6407 = vmatmul.f32.gmra.mxu0 %v6389
  %v6408 = vpop.f32.mrf.mxu0
  %v6409 = vadd.f32 %v6386, %v6408
  %6410 = vdwg.mxu0
  %v6411 = vld [vmem:[%s14 + $0x1] sm:$0x1]
  %v6412 = vld [vmem:[%s14 + $0x5] sm:$0x1]
  %v6415 = vrot.slane %v6412, 7
  %v6416 = vsel %vm6278, %v6415, %v6411
  %v6417 = vsel %vm6280, %v6416, 0
  %6419 = vmatpush.msra.mxu0 0.0
  %6420 = vmatpush.msra.mxu0 0.0
  %6421 = vmatpush.msra.mxu0 0.0
  %6422 = vmatpush.msra.mxu0 0.0
  %6423 = vmatpush.msra.mxu0 0.0
  %6424 = vmatpush.msra.mxu0 0.0
  %6425 = vmatpush.msra.mxu0 0.0
  %6426 = vmatpush.msra.mxu0 0.0
  %6427 = vmatpush.msra.mxu0 0.0
  %6428 = vmatpush.msra.mxu0 0.0
  %6429 = vmatpush.msra.mxu0 0.0
  %6430 = vmatpush.msra.mxu0 0.0
  %6431 = vmatpush.msra.mxu0 0.0
  %6432 = vmatpush.msra.mxu0 0.0
  %6433 = vmatpush.msra.mxu0 0.0
  %6434 = vmatpush.msra.mxu0 %v6274
  %6435 = vmatmul.f32.gmra.mxu0 %v6417
  %v6436 = vpop.f32.mrf.mxu0
  %v6437 = vadd.f32 0.0, %v6436
  %6438 = vdwg.mxu0
  %v6440 = vsel %vm6303, %v6409, 0
  %6442 = vmatpush.msra.mxu0 0.0
  %6443 = vmatpush.msra.mxu0 0.0
  %6444 = vmatpush.msra.mxu0 0.0
  %6445 = vmatpush.msra.mxu0 0.0
  %6446 = vmatpush.msra.mxu0 0.0
  %6447 = vmatpush.msra.mxu0 0.0
  %6448 = vmatpush.msra.mxu0 0.0
  %6449 = vmatpush.msra.mxu0 0.0
  %6450 = vmatpush.msra.mxu0 0.0
  %6451 = vmatpush.msra.mxu0 0.0
  %6452 = vmatpush.msra.mxu0 0.0
  %6453 = vmatpush.msra.mxu0 0.0
  %6454 = vmatpush.msra.mxu0 %v6273
  %6455 = vmatpush.msra.mxu0 %v6272
  %6456 = vmatpush.msra.mxu0 %v6271
  %6457 = vmatpush.msra.mxu0 %v6270
  %6458 = vmatmul.f32.gmra.mxu0 %v6440
  %v6459 = vpop.f32.mrf.mxu0
  %v6460 = vadd.f32 %v6437, %v6459
  %6461 = vdwg.mxu0
  %v6462 = vmul.f32 %v6460, %v6329
  %v6463 = vadd.f32 %v6462, %v6334
  %v6464 = vmax.f32 %v6463, 0.0
  %v6466 = vsel %vm166, %v6464, 0
  %6468 = vmatpush.msra.mxu0 0.0
  %6469 = vmatpush.msra.mxu0 0.0
  %6470 = vmatpush.msra.mxu0 0.0
  %6471 = vmatpush.msra.mxu0 0.0
  %6472 = vmatpush.msra.mxu0 0.0
  %6473 = vmatpush.msra.mxu0 0.0
  %6474 = vmatpush.msra.mxu0 0.0
  %6475 = vmatpush.msra.mxu0 0.0
  %6476 = vmatpush.msra.mxu0 %v6345
  %6477 = vmatpush.msra.mxu0 %v6344
  %6478 = vmatpush.msra.mxu0 %v6343
  %6479 = vmatpush.msra.mxu0 %v6342
  %6480 = vmatpush.msra.mxu0 %v6341
  %6481 = vmatpush.msra.mxu0 %v6340
  %6482 = vmatpush.msra.mxu0 %v6339
  %6483 = vmatpush.msra.mxu0 %v6338
  %6484 = vmatmul.f32.gmra.mxu0 %v6466
  %v6485 = vpop.f32.mrf.mxu0
  %v6486 = vadd.f32 0.0, %v6485
  %6487 = vdwg.mxu0
  %v6488 = vmul.f32 %v6486, %v6371
  %v6489 = vadd.f32 %v6488, %v6376
  %v6490 = vmax.f32 %v6489, 0.0
  %v6492 = vsel %vm6303, %v6490, 0
  %6494 = vmatpush.msra.mxu0 0.0
  %6495 = vmatpush.msra.mxu0 0.0
  %6496 = vmatpush.msra.mxu0 0.0
  %6497 = vmatpush.msra.mxu0 0.0
  %6498 = vmatpush.msra.mxu0 0.0
  %6499 = vmatpush.msra.mxu0 0.0
  %6500 = vmatpush.msra.mxu0 0.0
  %6501 = vmatpush.msra.mxu0 0.0
  %6502 = vmatpush.msra.mxu0 0.0
  %6503 = vmatpush.msra.mxu0 0.0
  %6504 = vmatpush.msra.mxu0 0.0
  %6505 = vmatpush.msra.mxu0 0.0
  %6506 = vmatpush.msra.mxu0 %v6383
  %6507 = vmatpush.msra.mxu0 %v6382
  %6508 = vmatpush.msra.mxu0 %v6381
  %6509 = vmatpush.msra.mxu0 %v6380
  %6510 = vmatmul.f32.gmra.mxu0 %v6492
  %v6511 = vpop.f32.mrf.mxu0
  %v6512 = vadd.f32 %v6386, %v6511
  %6513 = vdwg.mxu0
  %v6514 = vld [vmem:[%s14 + $0x2] sm:$0x1]
  %v6515 = vld [vmem:[%s14 + $0x6] sm:$0x1]
  %v6518 = vrot.slane %v6515, 7
  %v6519 = vsel %vm6278, %v6518, %v6514
  %v6520 = vsel %vm6280, %v6519, 0
  %6522 = vmatpush.msra.mxu0 0.0
  %6523 = vmatpush.msra.mxu0 0.0
  %6524 = vmatpush.msra.mxu0 0.0
  %6525 = vmatpush.msra.mxu0 0.0
  %6526 = vmatpush.msra.mxu0 0.0
  %6527 = vmatpush.msra.mxu0 0.0
  %6528 = vmatpush.msra.mxu0 0.0
  %6529 = vmatpush.msra.mxu0 0.0
  %6530 = vmatpush.msra.mxu0 0.0
  %6531 = vmatpush.msra.mxu0 0.0
  %6532 = vmatpush.msra.mxu0 0.0
  %6533 = vmatpush.msra.mxu0 0.0
  %6534 = vmatpush.msra.mxu0 0.0
  %6535 = vmatpush.msra.mxu0 0.0
  %6536 = vmatpush.msra.mxu0 0.0
  %6537 = vmatpush.msra.mxu0 %v6274
  %6538 = vmatmul.f32.gmra.mxu0 %v6520
  %v6539 = vpop.f32.mrf.mxu0
  %v6540 = vadd.f32 0.0, %v6539
  %6541 = vdwg.mxu0
  %v6543 = vsel %vm6303, %v6512, 0
  %6545 = vmatpush.msra.mxu0 0.0
  %6546 = vmatpush.msra.mxu0 0.0
  %6547 = vmatpush.msra.mxu0 0.0
  %6548 = vmatpush.msra.mxu0 0.0
  %6549 = vmatpush.msra.mxu0 0.0
  %6550 = vmatpush.msra.mxu0 0.0
  %6551 = vmatpush.msra.mxu0 0.0
  %6552 = vmatpush.msra.mxu0 0.0
  %6553 = vmatpush.msra.mxu0 0.0
  %6554 = vmatpush.msra.mxu0 0.0
  %6555 = vmatpush.msra.mxu0 0.0
  %6556 = vmatpush.msra.mxu0 0.0
  %6557 = vmatpush.msra.mxu0 %v6273
  %6558 = vmatpush.msra.mxu0 %v6272
  %6559 = vmatpush.msra.mxu0 %v6271
  %6560 = vmatpush.msra.mxu0 %v6270
  %6561 = vmatmul.f32.gmra.mxu0 %v6543
  %v6562 = vpop.f32.mrf.mxu0
  %v6563 = vadd.f32 %v6540, %v6562
  %6564 = vdwg.mxu0
  %v6565 = vmul.f32 %v6563, %v6329
  %v6566 = vadd.f32 %v6565, %v6334
  %v6567 = vmax.f32 %v6566, 0.0
  %v6569 = vsel %vm166, %v6567, 0
  %6571 = vmatpush.msra.mxu0 0.0
  %6572 = vmatpush.msra.mxu0 0.0
  %6573 = vmatpush.msra.mxu0 0.0
  %6574 = vmatpush.msra.mxu0 0.0
  %6575 = vmatpush.msra.mxu0 0.0
  %6576 = vmatpush.msra.mxu0 0.0
  %6577 = vmatpush.msra.mxu0 0.0
  %6578 = vmatpush.msra.mxu0 0.0
  %6579 = vmatpush.msra.mxu0 %v6345
  %6580 = vmatpush.msra.mxu0 %v6344
  %6581 = vmatpush.msra.mxu0 %v6343
  %6582 = vmatpush.msra.mxu0 %v6342
  %6583 = vmatpush.msra.mxu0 %v6341
  %6584 = vmatpush.msra.mxu0 %v6340
  %6585 = vmatpush.msra.mxu0 %v6339
  %6586 = vmatpush.msra.mxu0 %v6338
  %6587 = vmatmul.f32.gmra.mxu0 %v6569
  %v6588 = vpop.f32.mrf.mxu0
  %v6589 = vadd.f32 0.0, %v6588
  %6590 = vdwg.mxu0
  %v6591 = vmul.f32 %v6589, %v6371
  %v6592 = vadd.f32 %v6591, %v6376
  %v6593 = vmax.f32 %v6592, 0.0
  %v6595 = vsel %vm6303, %v6593, 0
  %6597 = vmatpush.msra.mxu0 0.0
  %6598 = vmatpush.msra.mxu0 0.0
  %6599 = vmatpush.msra.mxu0 0.0
  %6600 = vmatpush.msra.mxu0 0.0
  %6601 = vmatpush.msra.mxu0 0.0
  %6602 = vmatpush.msra.mxu0 0.0
  %6603 = vmatpush.msra.mxu0 0.0
  %6604 = vmatpush.msra.mxu0 0.0
  %6605 = vmatpush.msra.mxu0 0.0
  %6606 = vmatpush.msra.mxu0 0.0
  %6607 = vmatpush.msra.mxu0 0.0
  %6608 = vmatpush.msra.mxu0 0.0
  %6609 = vmatpush.msra.mxu0 %v6383
  %6610 = vmatpush.msra.mxu0 %v6382
  %6611 = vmatpush.msra.mxu0 %v6381
  %6612 = vmatpush.msra.mxu0 %v6380
  %6613 = vmatmul.f32.gmra.mxu0 %v6595
  %v6614 = vpop.f32.mrf.mxu0
  %v6615 = vadd.f32 %v6386, %v6614
  %6616 = vdwg.mxu0
  %v6617 = vld [vmem:[%s14 + $0x3] sm:$0x1]
  %v6618 = vld [vmem:[%s14 + $0x7] sm:$0x1]
  %v6621 = vrot.slane %v6618, 7
  %v6622 = vsel %vm6278, %v6621, %v6617
  %v6623 = vsel %vm6280, %v6622, 0
  %6625 = vmatpush.msra.mxu0 0.0
  %6626 = vmatpush.msra.mxu0 0.0
  %6627 = vmatpush.msra.mxu0 0.0
  %6628 = vmatpush.msra.mxu0 0.0
  %6629 = vmatpush.msra.mxu0 0.0
  %6630 = vmatpush.msra.mxu0 0.0
  %6631 = vmatpush.msra.mxu0 0.0
  %6632 = vmatpush.msra.mxu0 0.0
  %6633 = vmatpush.msra.mxu0 0.0
  %6634 = vmatpush.msra.mxu0 0.0
  %6635 = vmatpush.msra.mxu0 0.0
  %6636 = vmatpush.msra.mxu0 0.0
  %6637 = vmatpush.msra.mxu0 0.0
  %6638 = vmatpush.msra.mxu0 0.0
  %6639 = vmatpush.msra.mxu0 0.0
  %6640 = vmatpush.msra.mxu0 %v6274
  %6641 = vmatmul.f32.gmra.mxu0 %v6623
  %v6642 = vpop.f32.mrf.mxu0
  %v6643 = vadd.f32 0.0, %v6642
  %6644 = vdwg.mxu0
  %v6646 = vsel %vm6303, %v6615, 0
  %6648 = vmatpush.msra.mxu0 0.0
  %6649 = vmatpush.msra.mxu0 0.0
  %6650 = vmatpush.msra.mxu0 0.0
  %6651 = vmatpush.msra.mxu0 0.0
  %6652 = vmatpush.msra.mxu0 0.0
  %6653 = vmatpush.msra.mxu0 0.0
  %6654 = vmatpush.msra.mxu0 0.0
  %6655 = vmatpush.msra.mxu0 0.0
  %6656 = vmatpush.msra.mxu0 0.0
  %6657 = vmatpush.msra.mxu0 0.0
  %6658 = vmatpush.msra.mxu0 0.0
  %6659 = vmatpush.msra.mxu0 0.0
  %6660 = vmatpush.msra.mxu0 %v6273
  %6661 = vmatpush.msra.mxu0 %v6272
  %6662 = vmatpush.msra.mxu0 %v6271
  %6663 = vmatpush.msra.mxu0 %v6270
  %6664 = vmatmul.f32.gmra.mxu0 %v6646
  %v6665 = vpop.f32.mrf.mxu0
  %v6666 = vadd.f32 %v6643, %v6665
  %6667 = vdwg.mxu0
  %v6668 = vmul.f32 %v6666, %v6329
  %v6669 = vadd.f32 %v6668, %v6334
  %v6670 = vmax.f32 %v6669, 0.0
  %v6672 = vsel %vm166, %v6670, 0
  %6674 = vmatpush.msra.mxu0 0.0
  %6675 = vmatpush.msra.mxu0 0.0
  %6676 = vmatpush.msra.mxu0 0.0
  %6677 = vmatpush.msra.mxu0 0.0
  %6678 = vmatpush.msra.mxu0 0.0
  %6679 = vmatpush.msra.mxu0 0.0
  %6680 = vmatpush.msra.mxu0 0.0
  %6681 = vmatpush.msra.mxu0 0.0
  %6682 = vmatpush.msra.mxu0 %v6345
  %6683 = vmatpush.msra.mxu0 %v6344
  %6684 = vmatpush.msra.mxu0 %v6343
  %6685 = vmatpush.msra.mxu0 %v6342
  %6686 = vmatpush.msra.mxu0 %v6341
  %6687 = vmatpush.msra.mxu0 %v6340
  %6688 = vmatpush.msra.mxu0 %v6339
  %6689 = vmatpush.msra.mxu0 %v6338
  %6690 = vmatmul.f32.gmra.mxu0 %v6672
  %v6691 = vpop.f32.mrf.mxu0
  %v6692 = vadd.f32 0.0, %v6691
  %6693 = vdwg.mxu0
  %v6694 = vmul.f32 %v6692, %v6371
  %v6695 = vadd.f32 %v6694, %v6376
  %v6696 = vmax.f32 %v6695, 0.0
  %v6698 = vsel %vm6303, %v6696, 0
  %6700 = vmatpush.msra.mxu0 0.0
  %6701 = vmatpush.msra.mxu0 0.0
  %6702 = vmatpush.msra.mxu0 0.0
  %6703 = vmatpush.msra.mxu0 0.0
  %6704 = vmatpush.msra.mxu0 0.0
  %6705 = vmatpush.msra.mxu0 0.0
  %6706 = vmatpush.msra.mxu0 0.0
  %6707 = vmatpush.msra.mxu0 0.0
  %6708 = vmatpush.msra.mxu0 0.0
  %6709 = vmatpush.msra.mxu0 0.0
  %6710 = vmatpush.msra.mxu0 0.0
  %6711 = vmatpush.msra.mxu0 0.0
  %6712 = vmatpush.msra.mxu0 %v6383
  %6713 = vmatpush.msra.mxu0 %v6382
  %6714 = vmatpush.msra.mxu0 %v6381
  %6715 = vmatpush.msra.mxu0 %v6380
  %6716 = vmatmul.f32.gmra.mxu0 %v6698
  %v6717 = vpop.f32.mrf.mxu0
  %v6718 = vadd.f32 %v6386, %v6717
  %6719 = vdwg.mxu0
  %6720 = vrot.lane.b32.xlu0 %v6409, 32
  %v6721 = vpop.permute.xlu0 %6720
  %6723 = vrot.lane.b32.xlu0 %v6512, 64
  %v6724 = vpop.permute.xlu0 %6723
  %6726 = vrot.lane.b32.xlu0 %v6615, 96
  %v6727 = vpop.permute.xlu0 %6726
  %v6729 = vsel %vm6303, %v6266, %v6721
  %v6730 = vsel %vm166, %v6729, %v6724
  %vm6731 = vcmask 785408
  %v6732 = vsel %vm6731, %v6730, %v6727
  %v6735 = vrot.slane %v6718, 6
  %vm6736 = vcmask 1041408
  %v6737 = vsel %vm6736, %v6732, %v6735
  %vm6739 = vcmask 257026
  %vm6740 = vmor %vm6739, %vm6736
  %6741 = vst.msk [vmem:[%s24] sm:$0xf] %vm6740, %v6737
  // Predicated region
  $region98: #{jepa_forward.1} parent=0 // pred_check
    _
  $region99: #{jepa_forward.1} parent=0 // pred_check_branch
    %6743 = sbr.rel (0) target = $region101
  $region100: #{jepa_forward.1} parent=0 // pred_region
    _
  $region101: #{jepa_forward.1} parent=0 // pred_fallthru
    _
  // Predicated region
  $region102: #{jepa_forward.1} parent=0 // pred_check
    _
  $region103: #{jepa_forward.1} parent=0 // pred_check_branch
    %6745 = sbr.rel (0) target = $region105
  $region104: #{jepa_forward.1} parent=0 // pred_region
    _
  $region105: #{jepa_forward.1} parent=0 // pred_fallthru
    _

</llo_original>
